<compile_context>
chip_gen: v6e
topology: v6e:2x2x1
jax: 0.10.0
libtpu: 0.0.40
codegen_flags: <defaults>
</compile_context>

<pallas_src>
import functools

import jax
import jax.numpy as jnp
from jax import lax
from jax.experimental import pallas as pl
from jax.experimental.pallas import tpu as pltpu

EPS = 1e-5  # BatchNorm2d eps


def _round_up(x, m):
    return (x + m - 1) // m * m


# ---------------------------------------------------------------------------
# Pallas kernels
# ---------------------------------------------------------------------------
def _conv_bn_relu_pool_kernel(p_ref, w_ref, b_ref, o_ref, *, qp):
    """Fused conv(im2col matmul) + folded-BN shift + ReLU + 2x2 maxpool.

    p_ref: (4*qp, Kd)  im2col rows, grouped into 4 quadrant blocks of qp rows each
                       (pool-window members tl/tr/bl/br, row-major over pooled (i,j)).
    w_ref: (Kd, Cout)  conv weights with the BN scale pre-folded per output channel.
    b_ref: (1, Cout)   folded bias/shift.
    o_ref: (qp, Cout)  pooled output (rows past Ho*Wo are padding, sliced off in glue).
    """
    y = jnp.dot(p_ref[...], w_ref[...], preferred_element_type=jnp.float32)
    y = jnp.maximum(y + b_ref[...], 0.0)
    tl = y[0 * qp:1 * qp, :]
    tr = y[1 * qp:2 * qp, :]
    bl = y[2 * qp:3 * qp, :]
    br = y[3 * qp:4 * qp, :]
    o_ref[...] = jnp.maximum(jnp.maximum(tl, tr),
                             jnp.maximum(bl, br)).astype(o_ref.dtype)


def _fc_kernel(x_ref, w_ref, b_ref, o_ref):
    o_ref[...] = (jnp.dot(x_ref[...], w_ref[...],
                          preferred_element_type=jnp.float32) + b_ref[...])


# ---------------------------------------------------------------------------
# Wrappers
# ---------------------------------------------------------------------------
def conv_bn_relu_pool(x_nhwc, w_mat_scaled, shift, k=5, pad=2):
    """x_nhwc: [N,H,W,Cin]; w_mat_scaled: [k*k*Cin, Cout] (kh,kw,cin order, BN scale
    folded in); shift: [Cout].  Returns pooled activations [N, H//2, W//2, Cout]."""
    N, H, W, Cin = x_nhwc.shape
    Kd, Cout = w_mat_scaled.shape
    assert Kd == k * k * Cin and H % 2 == 0 and W % 2 == 0
    Ho, Wo = H // 2, W // 2
    Q = Ho * Wo
    Qp = _round_up(Q, 8)

    # im2col (host glue): patches[n, h, w, :] is the (kh, kw, cin)-ordered 5x5 patch.
    xp = jnp.pad(x_nhwc, ((0, 0), (pad, pad), (pad, pad), (0, 0)))
    cols = []
    for dy in range(k):
        for dx in range(k):
            cols.append(xp[:, dy:dy + H, dx:dx + W, :])
    patches = jnp.concatenate(cols, axis=-1)               # (N, H, W, Kd)

    # Quadrant reorder: block q=(qy,qx), row i*Wo+j holds the patch for conv output
    # (2i+qy, 2j+qx), so the fused 2x2 max-pool in the kernel is a max over the four
    # contiguous blocks.  Each block is zero-padded to Qp rows (multiple of 8).
    quads = [patches[:, qy::2, qx::2, :].reshape(N, Q, Kd)
             for qy in (0, 1) for qx in (0, 1)]
    if Qp != Q:
        zpad = jnp.zeros((N, Qp - Q, Kd), patches.dtype)
        quads = [jnp.concatenate([q, zpad], axis=1) for q in quads]
    p4 = jnp.concatenate(quads, axis=1)                     # (N, 4*Qp, Kd)

    out = pl.pallas_call(
        functools.partial(_conv_bn_relu_pool_kernel, qp=Qp),
        out_shape=jax.ShapeDtypeStruct((N, Qp, Cout), jnp.float32),
        grid=(N,),
        in_specs=[
            pl.BlockSpec((None, 4 * Qp, Kd), lambda i: (i, 0, 0)),
            pl.BlockSpec((Kd, Cout), lambda i: (0, 0)),
            pl.BlockSpec((1, Cout), lambda i: (0, 0)),
        ],
        out_specs=pl.BlockSpec((None, Qp, Cout), lambda i: (i, 0, 0)),
        compiler_params=pltpu.CompilerParams(dimension_semantics=("parallel",)),
    )(p4, w_mat_scaled, shift.reshape(1, Cout))
    return out[:, :Q, :].reshape(N, Ho, Wo, Cout)


def fc(x, w, b, lane_pad=128):
    """Linear layer; output channels zero-padded to 128 lanes for unmasked stores."""
    N, Din = x.shape
    Dout = w.shape[1]
    Dp = _round_up(Dout, lane_pad)
    wp = jnp.zeros((Din, Dp), w.dtype).at[:, :Dout].set(w)
    bp = jnp.zeros((1, Dp), b.dtype).at[:, :Dout].set(b)
    out = pl.pallas_call(
        _fc_kernel,
        out_shape=jax.ShapeDtypeStruct((N, Dp), jnp.float32),
    )(x, wp, bp)
    return out[:, :Dout]


# ---------------------------------------------------------------------------
# Parameters (deterministic, synthetic)
# ---------------------------------------------------------------------------
def init_params(key):
    ks = jax.random.split(key, 8)

    def conv_block(kw, kb, cin, cout, ksz=5):
        w = jax.random.normal(kw, (ksz, ksz, cin, cout), jnp.float32) * 0.05
        b = jax.random.normal(kb, (cout,), jnp.float32) * 0.05
        # BatchNorm2d default params (eval): gamma=1, beta=0, running_mean=0, running_var=1
        gamma = jnp.ones((cout,), jnp.float32)
        beta = jnp.zeros((cout,), jnp.float32)
        mean = jnp.zeros((cout,), jnp.float32)
        var = jnp.ones((cout,), jnp.float32)
        scale = gamma / jnp.sqrt(var + EPS)
        shift = (b - mean) * scale + beta
        w_mat_scaled = w.reshape(ksz * ksz * cin, cout) * scale[None, :]
        return dict(w=w, w_mat_scaled=w_mat_scaled, scale=scale, shift=shift)

    p1 = conv_block(ks[0], ks[1], 1, 16)
    p2 = conv_block(ks[2], ks[3], 16, 32)
    p3 = conv_block(ks[4], ks[5], 32, 32)
    fc_w = jax.random.normal(ks[6], (7 * 7 * 32, 10), jnp.float32) * 0.02
    fc_b = jax.random.normal(ks[7], (10,), jnp.float32) * 0.02
    return p1, p2, p3, fc_w, fc_b


# ---------------------------------------------------------------------------
# Forward passes
# ---------------------------------------------------------------------------
@jax.jit
def cnn_forward(x_nchw, params):
    p1, p2, p3, fc_w, fc_b = params
    x = jnp.transpose(x_nchw, (0, 2, 3, 1)).astype(jnp.float32)  # NCHW -> NHWC
    x = conv_bn_relu_pool(x, p1["w_mat_scaled"], p1["shift"])
    x = conv_bn_relu_pool(x, p2["w_mat_scaled"], p2["shift"])
    x = conv_bn_relu_pool(x, p3["w_mat_scaled"], p3["shift"])
    # PyTorch flattens NCHW: permute back before view(N, -1)
    x = jnp.transpose(x, (0, 3, 1, 2)).reshape(x.shape[0], -1)
    return fc(x, fc_w, fc_b)


def cnn_reference(x_nchw, params):
    """Pure-JAX reference for correctness checking."""
    p1, p2, p3, fc_w, fc_b = params
    x = jnp.transpose(x_nchw, (0, 2, 3, 1)).astype(jnp.float32)

    def block(x, p):
        y = lax.conv_general_dilated(
            x, p["w"], window_strides=(1, 1), padding="SAME",
            dimension_numbers=("NHWC", "HWIO", "NHWC"))
        y = jnp.maximum(y * p["scale"] + p["shift"], 0.0)
        return lax.reduce_window(y, -jnp.inf, lax.max,
                                 (1, 2, 2, 1), (1, 2, 2, 1), "VALID")

    x = block(x, p1)
    x = block(x, p2)
    x = block(x, p3)
    x = jnp.transpose(x, (0, 3, 1, 2)).reshape(x.shape[0], -1)
    return x @ fc_w + fc_b


# ---------------------------------------------------------------------------
if __name__ == "__main__":
    key = jax.random.PRNGKey(0)
    k_x, k_p = jax.random.split(key)
    # batch=2, channels=1, spatial=56x56 (required so 3 maxpools give 7*7*32 fc features)
    x = jax.random.normal(k_x, (2, 1, 56, 56), jnp.float32)
    params = init_params(k_p)

    out = jax.block_until_ready(cnn_forward(x, params))
    assert out.shape == (2, 10), out.shape

    ref = jax.block_until_ready(cnn_reference(x, params))
    assert jnp.allclose(out, ref, atol=1e-3, rtol=1e-3), \
        float(jnp.max(jnp.abs(out - ref)))

    print("KERNEL_OK")
</pallas_src>

<mosaic_0001>
module attributes {stable_mosaic.version = 11 : i64} {
  func.func @_conv_bn_relu_pool_kernel(%arg0: i32, %arg1: memref<1x3136x25xf32, #tpu.memory_space<vmem>>, %arg2: memref<25x16xf32, #tpu.memory_space<vmem>>, %arg3: memref<1x16xf32, #tpu.memory_space<vmem>>, %arg4: memref<1x784x16xf32, #tpu.memory_space<vmem>>) attributes {dimension_semantics = [#tpu.dimension_semantics<parallel>], iteration_bounds = array<i64: 2>, scalar_prefetch = 0 : i64, scratch_operands = 0 : i64, tpu.core_type = #tpu.core_type<tc>, window_params = [{transform_indices = @transform_0, window_bounds = array<i64: 1, 3136, 25>}, {pipeline_mode = #tpu.pipeline_mode<synchronous>, transform_indices = @transform_1, window_bounds = array<i64: 25, 16>}, {pipeline_mode = #tpu.pipeline_mode<synchronous>, transform_indices = @transform_2, window_bounds = array<i64: 1, 16>}, {transform_indices = @transform_3, window_bounds = array<i64: 1, 784, 16>}]} {
    %c0 = arith.constant 0 : index
    %c0_0 = arith.constant 0 : index
    %c0_1 = arith.constant 0 : index
    %0 = vector.load %arg1[%c0, %c0_0, %c0_1] : memref<1x3136x25xf32, #tpu.memory_space<vmem>>, vector<1x3136x25xf32>
    %1 = vector.shape_cast %0 : vector<1x3136x25xf32> to vector<3136x25xf32>
    %c0_2 = arith.constant 0 : index
    %c0_3 = arith.constant 0 : index
    %2 = vector.load %arg2[%c0_2, %c0_3] : memref<25x16xf32, #tpu.memory_space<vmem>>, vector<25x16xf32>
    %cst = arith.constant dense<0.000000e+00> : vector<3136x16xf32>
    %3 = tpu.matmul %1, %2, %cst {dimension_numbers = #tpu.dot_dimension_numbers<[1], [0], [0], [1], [0, 0, 1, 1], [], []>} : vector<3136x25xf32>, vector<25x16xf32>, vector<3136x16xf32> -> vector<3136x16xf32>
    %c0_4 = arith.constant 0 : index
    %c0_5 = arith.constant 0 : index
    %4 = vector.load %arg3[%c0_4, %c0_5] : memref<1x16xf32, #tpu.memory_space<vmem>>, vector<1x16xf32>
    %5 = vector.broadcast %4 : vector<1x16xf32> to vector<3136x16xf32>
    %6 = arith.addf %3, %5 : vector<3136x16xf32>
    %cst_6 = arith.constant 0.000000e+00 : f32
    %7 = vector.broadcast %cst_6 : f32 to vector<3136x16xf32>
    %8 = arith.maximumf %6, %7 : vector<3136x16xf32>
    %9 = vector.extract_strided_slice %8 {offsets = [0, 0], sizes = [784, 16], strides = [1, 1]} : vector<3136x16xf32> to vector<784x16xf32>
    %10 = vector.extract_strided_slice %8 {offsets = [784, 0], sizes = [784, 16], strides = [1, 1]} : vector<3136x16xf32> to vector<784x16xf32>
    %11 = vector.extract_strided_slice %8 {offsets = [1568, 0], sizes = [784, 16], strides = [1, 1]} : vector<3136x16xf32> to vector<784x16xf32>
    %12 = vector.extract_strided_slice %8 {offsets = [2352, 0], sizes = [784, 16], strides = [1, 1]} : vector<3136x16xf32> to vector<784x16xf32>
    %13 = arith.maximumf %9, %10 : vector<784x16xf32>
    %14 = arith.maximumf %11, %12 : vector<784x16xf32>
    %15 = arith.maximumf %13, %14 : vector<784x16xf32>
    %c0_7 = arith.constant 0 : index
    %c0_8 = arith.constant 0 : index
    %c0_9 = arith.constant 0 : index
    %16 = vector.load %arg4[%c0_7, %c0_8, %c0_9] : memref<1x784x16xf32, #tpu.memory_space<vmem>>, vector<1x784x16xf32>
    %17 = vector.shape_cast %16 : vector<1x784x16xf32> to vector<784x16xf32>
    %18 = vector.shape_cast %15 : vector<784x16xf32> to vector<1x784x16xf32>
    tpu.vector_store %arg4[%c0_7, %c0_8, %c0_9], %18 {strides = array<i32>} : memref<1x784x16xf32, #tpu.memory_space<vmem>>, vector<1x784x16xf32>,
    return
  }
  func.func @transform_0(%arg0: i32) -> (i32, i32, i32) {
    %c0_i32 = arith.constant 0 : i32
    %c0_i32_0 = arith.constant 0 : i32
    %c0_i32_1 = arith.constant 0 : i32
    return %arg0, %c0_i32, %c0_i32_0 : i32, i32, i32
  }
  func.func @transform_1(%arg0: i32) -> (i32, i32) {
    %c0_i32 = arith.constant 0 : i32
    %c0_i32_0 = arith.constant 0 : i32
    %c0_i32_1 = arith.constant 0 : i32
    return %c0_i32, %c0_i32_0 : i32, i32
  }
  func.func @transform_2(%arg0: i32) -> (i32, i32) {
    %c0_i32 = arith.constant 0 : i32
    %c0_i32_0 = arith.constant 0 : i32
    %c0_i32_1 = arith.constant 0 : i32
    return %c0_i32, %c0_i32_0 : i32, i32
  }
  func.func @transform_3(%arg0: i32) -> (i32, i32, i32) {
    %c0_i32 = arith.constant 0 : i32
    %c0_i32_0 = arith.constant 0 : i32
    %c0_i32_1 = arith.constant 0 : i32
    return %arg0, %c0_i32, %c0_i32_0 : i32, i32, i32
  }
}

module attributes {stable_mosaic.version = 11 : i64} {
  func.func @_conv_bn_relu_pool_kernel(%arg0: i32, %arg1: memref<1x800x400xf32, #tpu.memory_space<vmem>>, %arg2: memref<400x32xf32, #tpu.memory_space<vmem>>, %arg3: memref<1x32xf32, #tpu.memory_space<vmem>>, %arg4: memref<1x200x32xf32, #tpu.memory_space<vmem>>) attributes {dimension_semantics = [#tpu.dimension_semantics<parallel>], iteration_bounds = array<i64: 2>, scalar_prefetch = 0 : i64, scratch_operands = 0 : i64, tpu.core_type = #tpu.core_type<tc>, window_params = [{transform_indices = @transform_0, window_bounds = array<i64: 1, 800, 400>}, {pipeline_mode = #tpu.pipeline_mode<synchronous>, transform_indices = @transform_1, window_bounds = array<i64: 400, 32>}, {pipeline_mode = #tpu.pipeline_mode<synchronous>, transform_indices = @transform_2, window_bounds = array<i64: 1, 32>}, {transform_indices = @transform_3, window_bounds = array<i64: 1, 200, 32>}]} {
    %c0 = arith.constant 0 : index
    %c0_0 = arith.constant 0 : index
    %c0_1 = arith.constant 0 : index
    %0 = vector.load %arg1[%c0, %c0_0, %c0_1] : memref<1x800x400xf32, #tpu.memory_space<vmem>>, vector<1x800x400xf32>
    %1 = vector.shape_cast %0 : vector<1x800x400xf32> to vector<800x400xf32>
    %c0_2 = arith.constant 0 : index
    %c0_3 = arith.constant 0 : index
    %2 = vector.load %arg2[%c0_2, %c0_3] : memref<400x32xf32, #tpu.memory_space<vmem>>, vector<400x32xf32>
    %cst = arith.constant dense<0.000000e+00> : vector<800x32xf32>
    %3 = tpu.matmul %1, %2, %cst {dimension_numbers = #tpu.dot_dimension_numbers<[1], [0], [0], [1], [0, 0, 1, 1], [], []>} : vector<800x400xf32>, vector<400x32xf32>, vector<800x32xf32> -> vector<800x32xf32>
    %c0_4 = arith.constant 0 : index
    %c0_5 = arith.constant 0 : index
    %4 = vector.load %arg3[%c0_4, %c0_5] : memref<1x32xf32, #tpu.memory_space<vmem>>, vector<1x32xf32>
    %5 = vector.broadcast %4 : vector<1x32xf32> to vector<800x32xf32>
    %6 = arith.addf %3, %5 : vector<800x32xf32>
    %cst_6 = arith.constant 0.000000e+00 : f32
    %7 = vector.broadcast %cst_6 : f32 to vector<800x32xf32>
    %8 = arith.maximumf %6, %7 : vector<800x32xf32>
    %9 = vector.extract_strided_slice %8 {offsets = [0, 0], sizes = [200, 32], strides = [1, 1]} : vector<800x32xf32> to vector<200x32xf32>
    %10 = vector.extract_strided_slice %8 {offsets = [200, 0], sizes = [200, 32], strides = [1, 1]} : vector<800x32xf32> to vector<200x32xf32>
    %11 = vector.extract_strided_slice %8 {offsets = [400, 0], sizes = [200, 32], strides = [1, 1]} : vector<800x32xf32> to vector<200x32xf32>
    %12 = vector.extract_strided_slice %8 {offsets = [600, 0], sizes = [200, 32], strides = [1, 1]} : vector<800x32xf32> to vector<200x32xf32>
    %13 = arith.maximumf %9, %10 : vector<200x32xf32>
    %14 = arith.maximumf %11, %12 : vector<200x32xf32>
    %15 = arith.maximumf %13, %14 : vector<200x32xf32>
    %c0_7 = arith.constant 0 : index
    %c0_8 = arith.constant 0 : index
    %c0_9 = arith.constant 0 : index
    %16 = vector.load %arg4[%c0_7, %c0_8, %c0_9] : memref<1x200x32xf32, #tpu.memory_space<vmem>>, vector<1x200x32xf32>
    %17 = vector.shape_cast %16 : vector<1x200x32xf32> to vector<200x32xf32>
    %18 = vector.shape_cast %15 : vector<200x32xf32> to vector<1x200x32xf32>
    tpu.vector_store %arg4[%c0_7, %c0_8, %c0_9], %18 {strides = array<i32>} : memref<1x200x32xf32, #tpu.memory_space<vmem>>, vector<1x200x32xf32>,
    return
  }
  func.func @transform_0(%arg0: i32) -> (i32, i32, i32) {
    %c0_i32 = arith.constant 0 : i32
    %c0_i32_0 = arith.constant 0 : i32
    %c0_i32_1 = arith.constant 0 : i32
    return %arg0, %c0_i32, %c0_i32_0 : i32, i32, i32
  }
  func.func @transform_1(%arg0: i32) -> (i32, i32) {
    %c0_i32 = arith.constant 0 : i32
    %c0_i32_0 = arith.constant 0 : i32
    %c0_i32_1 = arith.constant 0 : i32
    return %c0_i32, %c0_i32_0 : i32, i32
  }
  func.func @transform_2(%arg0: i32) -> (i32, i32) {
    %c0_i32 = arith.constant 0 : i32
    %c0_i32_0 = arith.constant 0 : i32
    %c0_i32_1 = arith.constant 0 : i32
    return %c0_i32, %c0_i32_0 : i32, i32
  }
  func.func @transform_3(%arg0: i32) -> (i32, i32, i32) {
    %c0_i32 = arith.constant 0 : i32
    %c0_i32_0 = arith.constant 0 : i32
    %c0_i32_1 = arith.constant 0 : i32
    return %arg0, %c0_i32, %c0_i32_0 : i32, i32, i32
  }
}

module attributes {stable_mosaic.version = 11 : i64} {
  func.func @_conv_bn_relu_pool_kernel(%arg0: i32, %arg1: memref<1x224x800xf32, #tpu.memory_space<vmem>>, %arg2: memref<800x32xf32, #tpu.memory_space<vmem>>, %arg3: memref<1x32xf32, #tpu.memory_space<vmem>>, %arg4: memref<1x56x32xf32, #tpu.memory_space<vmem>>) attributes {dimension_semantics = [#tpu.dimension_semantics<parallel>], iteration_bounds = array<i64: 2>, scalar_prefetch = 0 : i64, scratch_operands = 0 : i64, tpu.core_type = #tpu.core_type<tc>, window_params = [{transform_indices = @transform_0, window_bounds = array<i64: 1, 224, 800>}, {pipeline_mode = #tpu.pipeline_mode<synchronous>, transform_indices = @transform_1, window_bounds = array<i64: 800, 32>}, {pipeline_mode = #tpu.pipeline_mode<synchronous>, transform_indices = @transform_2, window_bounds = array<i64: 1, 32>}, {transform_indices = @transform_3, window_bounds = array<i64: 1, 56, 32>}]} {
    %c0 = arith.constant 0 : index
    %c0_0 = arith.constant 0 : index
    %c0_1 = arith.constant 0 : index
    %0 = vector.load %arg1[%c0, %c0_0, %c0_1] : memref<1x224x800xf32, #tpu.memory_space<vmem>>, vector<1x224x800xf32>
    %1 = vector.shape_cast %0 : vector<1x224x800xf32> to vector<224x800xf32>
    %c0_2 = arith.constant 0 : index
    %c0_3 = arith.constant 0 : index
    %2 = vector.load %arg2[%c0_2, %c0_3] : memref<800x32xf32, #tpu.memory_space<vmem>>, vector<800x32xf32>
    %cst = arith.constant dense<0.000000e+00> : vector<224x32xf32>
    %3 = tpu.matmul %1, %2, %cst {dimension_numbers = #tpu.dot_dimension_numbers<[1], [0], [0], [1], [0, 0, 1, 1], [], []>} : vector<224x800xf32>, vector<800x32xf32>, vector<224x32xf32> -> vector<224x32xf32>
    %c0_4 = arith.constant 0 : index
    %c0_5 = arith.constant 0 : index
    %4 = vector.load %arg3[%c0_4, %c0_5] : memref<1x32xf32, #tpu.memory_space<vmem>>, vector<1x32xf32>
    %5 = vector.broadcast %4 : vector<1x32xf32> to vector<224x32xf32>
    %6 = arith.addf %3, %5 : vector<224x32xf32>
    %cst_6 = arith.constant 0.000000e+00 : f32
    %7 = vector.broadcast %cst_6 : f32 to vector<224x32xf32>
    %8 = arith.maximumf %6, %7 : vector<224x32xf32>
    %9 = vector.extract_strided_slice %8 {offsets = [0, 0], sizes = [56, 32], strides = [1, 1]} : vector<224x32xf32> to vector<56x32xf32>
    %10 = vector.extract_strided_slice %8 {offsets = [56, 0], sizes = [56, 32], strides = [1, 1]} : vector<224x32xf32> to vector<56x32xf32>
    %11 = vector.extract_strided_slice %8 {offsets = [112, 0], sizes = [56, 32], strides = [1, 1]} : vector<224x32xf32> to vector<56x32xf32>
    %12 = vector.extract_strided_slice %8 {offsets = [168, 0], sizes = [56, 32], strides = [1, 1]} : vector<224x32xf32> to vector<56x32xf32>
    %13 = arith.maximumf %9, %10 : vector<56x32xf32>
    %14 = arith.maximumf %11, %12 : vector<56x32xf32>
    %15 = arith.maximumf %13, %14 : vector<56x32xf32>
    %c0_7 = arith.constant 0 : index
    %c0_8 = arith.constant 0 : index
    %c0_9 = arith.constant 0 : index
    %16 = vector.load %arg4[%c0_7, %c0_8, %c0_9] : memref<1x56x32xf32, #tpu.memory_space<vmem>>, vector<1x56x32xf32>
    %17 = vector.shape_cast %16 : vector<1x56x32xf32> to vector<56x32xf32>
    %18 = vector.shape_cast %15 : vector<56x32xf32> to vector<1x56x32xf32>
    tpu.vector_store %arg4[%c0_7, %c0_8, %c0_9], %18 {strides = array<i32>} : memref<1x56x32xf32, #tpu.memory_space<vmem>>, vector<1x56x32xf32>,
    return
  }
  func.func @transform_0(%arg0: i32) -> (i32, i32, i32) {
    %c0_i32 = arith.constant 0 : i32
    %c0_i32_0 = arith.constant 0 : i32
    %c0_i32_1 = arith.constant 0 : i32
    return %arg0, %c0_i32, %c0_i32_0 : i32, i32, i32
  }
  func.func @transform_1(%arg0: i32) -> (i32, i32) {
    %c0_i32 = arith.constant 0 : i32
    %c0_i32_0 = arith.constant 0 : i32
    %c0_i32_1 = arith.constant 0 : i32
    return %c0_i32, %c0_i32_0 : i32, i32
  }
  func.func @transform_2(%arg0: i32) -> (i32, i32) {
    %c0_i32 = arith.constant 0 : i32
    %c0_i32_0 = arith.constant 0 : i32
    %c0_i32_1 = arith.constant 0 : i32
    return %c0_i32, %c0_i32_0 : i32, i32
  }
  func.func @transform_3(%arg0: i32) -> (i32, i32, i32) {
    %c0_i32 = arith.constant 0 : i32
    %c0_i32_0 = arith.constant 0 : i32
    %c0_i32_1 = arith.constant 0 : i32
    return %arg0, %c0_i32, %c0_i32_0 : i32, i32, i32
  }
}

module attributes {stable_mosaic.version = 11 : i64} {
  func.func @_fc_kernel(%arg0: memref<2x1568xf32, #tpu.memory_space<vmem>>, %arg1: memref<1568x128xf32, #tpu.memory_space<vmem>>, %arg2: memref<1x128xf32, #tpu.memory_space<vmem>>, %arg3: memref<2x128xf32, #tpu.memory_space<vmem>>) attributes {dimension_semantics = [], scalar_prefetch = 0 : i64, scratch_operands = 0 : i64, tpu.core_type = #tpu.core_type<tc>} {
    %c0 = arith.constant 0 : index
    %c0_0 = arith.constant 0 : index
    %0 = vector.load %arg0[%c0, %c0_0] : memref<2x1568xf32, #tpu.memory_space<vmem>>, vector<2x1568xf32>
    %c0_1 = arith.constant 0 : index
    %c0_2 = arith.constant 0 : index
    %1 = vector.load %arg1[%c0_1, %c0_2] : memref<1568x128xf32, #tpu.memory_space<vmem>>, vector<1568x128xf32>
    %cst = arith.constant dense<0.000000e+00> : vector<2x128xf32>
    %2 = tpu.matmul %0, %1, %cst {dimension_numbers = #tpu.dot_dimension_numbers<[1], [0], [0], [1], [0, 0, 1, 1], [], []>} : vector<2x1568xf32>, vector<1568x128xf32>, vector<2x128xf32> -> vector<2x128xf32>
    %c0_3 = arith.constant 0 : index
    %c0_4 = arith.constant 0 : index
    %3 = vector.load %arg2[%c0_3, %c0_4] : memref<1x128xf32, #tpu.memory_space<vmem>>, vector<1x128xf32>
    %4 = vector.broadcast %3 : vector<1x128xf32> to vector<2x128xf32>
    %5 = arith.addf %2, %4 : vector<2x128xf32>
    %c0_5 = arith.constant 0 : index
    %c0_6 = arith.constant 0 : index
    %6 = vector.load %arg3[%c0_5, %c0_6] : memref<2x128xf32, #tpu.memory_space<vmem>>, vector<2x128xf32>
    tpu.vector_store %arg3[%c0_5, %c0_6], %5 {strides = array<i32>} : memref<2x128xf32, #tpu.memory_space<vmem>>, vector<2x128xf32>,
    return
  }
}

</mosaic_0001>

<llo_original>
// kernel: cnn_forward.4
$region0: #{cnn_forward.4}
  #allocation0 [shape = 'u32[]', space=smem, size = 0x4, offset = 0x4, fixed_abs, tag = 'smem constant byte address 0x4 - core index']
  #allocation1 [shape = 'u32[144,128]{1,0:T(1,128)}', space=vmem, size = 0x12000, scoped, tag = 'internal scratch']
  %s0 = inlined_call_operand.vmem [shape: f32[2,3136,25], index: 0, kind: input, shape index: {}]
  %s1 = inlined_call_operand.vmem [shape: f32[25,16], index: 1, kind: input, shape index: {}]
  %s2 = inlined_call_operand.vmem [shape: f32[1,16], index: 2, kind: input, shape index: {}]
  %s3 = inlined_call_operand.vmem [shape: f32[2,784,16], index: 3, kind: output, shape index: {}]
  %s4 = sld [smem:[#allocation0]]
  $region45: #{cnn_forward.4} parent=0
    _
  %s6 = ssub.s32 1, %s4
  %s7 = scalar_select 0, %s6, %s4
  loop: start=0, step=1, limit=4
  $region2: #{cnn_forward.4} parent=0 // loop_pre_header
    _
  $region3: #{cnn_forward.4} parent=0 // loop_header
    %s9 = sphi 0, %s13
    %p10 = scmp.ge.s32.totalorder %s9, 4
    %s19 = sphi 0, %s21
    %s22 = sphi 0, %s19
    %s23 = sphi 0, %s22
    %s39 = sphi 0, %s23
    %s43 = sphi 0, %s43
    %s45 = sphi 0, %s43
    %s46 = sphi 0, %s45
    %s60 = sphi 0, %s46
    %s64 = sphi 0, %s64
    %s66 = sphi 0, %s64
    %s67 = sphi 0, %s66
    %s81 = sphi 0, %s67
    %s87 = sphi 0, %s89
    %s90 = sphi 0, %s87
    %s91 = sphi 0, %s90
    %s107 = sphi 0, %s91
  $region4: #{cnn_forward.4} parent=0 // loop_header_branch
    %12 = sbr.rel (%p10) target = $region8
  $region5: #{cnn_forward.4} parent=0 // loop_body
    %s14 = ssub.s32 %s9, 1
    %s15 = ssub.s32 %s9, 2
    %s16 = sadd.s32 %s9, 1
    %s17 = ssub.s32 %s9, %s16
    %p18 = scmp.eq.s32.totalorder %s17, 0
    %s20 = sadd.s32 %s19, 1
    %s21 = scalar_select %p18, %s19, %s20
    %p24 = pneg %p18
    %p25 = scmp.eq.s32.totalorder %s9, 1
    %p26 = por %p24, %p25
    %p27 = scmp.ne.s32.totalorder %s19, %s22
    %p28 = scmp.eq.s32.totalorder %s9, 0
    %p29 = por %p27, %p28
    %p30 = scmp.ne.s32.totalorder %s19, %s22
    %p31 = scmp.eq.s32.totalorder %s14, 1
    %p32 = por %p30, %p31
    %p33 = scmp.ne.s32.totalorder %s22, %s23
    %p34 = scmp.eq.s32.totalorder %s14, 0
    %p35 = por %p33, %p34
    %p36 = scmp.ne.s32.totalorder %s22, %s23
    %p37 = scmp.eq.s32.totalorder %s15, 1
    %p38 = por %p36, %p37
    %p40 = scmp.ne.s32.totalorder %s23, %s39
    %p41 = scmp.eq.s32.totalorder %s15, 0
    %p42 = por %p40, %p41
    %s44 = sadd.s32 %s43, 1
    %p47 = scmp.eq.s32.totalorder %s9, 1
    %p48 = scmp.ne.s32.totalorder %s43, %s45
    %p49 = scmp.eq.s32.totalorder %s9, 0
    %p50 = por %p48, %p49
    %p51 = scmp.ne.s32.totalorder %s43, %s45
    %p52 = scmp.eq.s32.totalorder %s14, 1
    %p53 = por %p51, %p52
    %p54 = scmp.ne.s32.totalorder %s45, %s46
    %p55 = scmp.eq.s32.totalorder %s14, 0
    %p56 = por %p54, %p55
    %p57 = scmp.ne.s32.totalorder %s45, %s46
    %p58 = scmp.eq.s32.totalorder %s15, 1
    %p59 = por %p57, %p58
    %p61 = scmp.ne.s32.totalorder %s46, %s60
    %p62 = scmp.eq.s32.totalorder %s15, 0
    %p63 = por %p61, %p62
    %s65 = sadd.s32 %s64, 1
    %p68 = scmp.eq.s32.totalorder %s9, 1
    %p69 = scmp.ne.s32.totalorder %s64, %s66
    %p70 = scmp.eq.s32.totalorder %s9, 0
    %p71 = por %p69, %p70
    %p72 = scmp.ne.s32.totalorder %s64, %s66
    %p73 = scmp.eq.s32.totalorder %s14, 1
    %p74 = por %p72, %p73
    %p75 = scmp.ne.s32.totalorder %s66, %s67
    %p76 = scmp.eq.s32.totalorder %s14, 0
    %p77 = por %p75, %p76
    %p78 = scmp.ne.s32.totalorder %s66, %s67
    %p79 = scmp.eq.s32.totalorder %s15, 1
    %p80 = por %p78, %p79
    %p82 = scmp.ne.s32.totalorder %s67, %s81
    %p83 = scmp.eq.s32.totalorder %s15, 0
    %p84 = por %p82, %p83
    %s85 = ssub.s32 %s9, %s16
    %p86 = scmp.eq.s32.totalorder %s85, 0
    %s88 = sadd.s32 %s87, 1
    %s89 = scalar_select %p86, %s87, %s88
    %p92 = pneg %p86
    %p93 = scmp.eq.s32.totalorder %s9, 1
    %p94 = por %p92, %p93
    %p95 = scmp.ne.s32.totalorder %s87, %s90
    %p96 = scmp.eq.s32.totalorder %s9, 0
    %p97 = por %p95, %p96
    %p98 = scmp.ne.s32.totalorder %s87, %s90
    %p99 = scmp.eq.s32.totalorder %s14, 1
    %p100 = por %p98, %p99
    %p101 = scmp.ne.s32.totalorder %s90, %s91
    %p102 = scmp.eq.s32.totalorder %s14, 0
    %p103 = por %p101, %p102
    %p104 = scmp.ne.s32.totalorder %s90, %s91
    %p105 = scmp.eq.s32.totalorder %s15, 1
    %p106 = por %p104, %p105
    %p108 = scmp.ne.s32.totalorder %s91, %s107
    %p109 = scmp.eq.s32.totalorder %s15, 0
    %p110 = por %p108, %p109
    %p111 = scmp.le.s32.totalorder 1, %s9
    %p112 = scmp.lt.s32.totalorder %s9, 3
    %p113 = pnand %p111, %p112
    %p114 = pneg %p113
    // Predicated region
    $region9: #{cnn_forward.4} parent=5 // pred_check
      _
    $region10: #{cnn_forward.4} parent=5 // pred_check_branch
      %116 = sbr.rel (%p113) target = $region12
    $region11: #{cnn_forward.4} parent=5 // pred_region
      %s117 = ssub.s32 %s9, 1
      // Predicated region
      $region13: #{cnn_forward.4} parent=11 // pred_check
        %p118 = pneg %p56
      $region14: #{cnn_forward.4} parent=11 // pred_check_branch
        %120 = sbr.rel (%p118) target = $region16
      $region15: #{cnn_forward.4} parent=11 // pred_region
        _
      $region16: #{cnn_forward.4} parent=11 // pred_fallthru
        _
      // Predicated region
      $region17: #{cnn_forward.4} parent=11 // pred_check
        %p121 = pneg %p77
      $region18: #{cnn_forward.4} parent=11 // pred_check_branch
        %123 = sbr.rel (%p121) target = $region20
      $region19: #{cnn_forward.4} parent=11 // pred_region
        _
      $region20: #{cnn_forward.4} parent=11 // pred_fallthru
        _
    $region12: #{cnn_forward.4} parent=5 // pred_fallthru
      _
    %p124 = scmp.lt.s32.totalorder %s9, 2
    // Predicated region
    $region21: #{cnn_forward.4} parent=5 // pred_check
      %p125 = pneg %p124
    $region22: #{cnn_forward.4} parent=5 // pred_check_branch
      %127 = sbr.rel (%p125) target = $region24
    $region23: #{cnn_forward.4} parent=5 // pred_region
      // Predicated region
      $region25: #{cnn_forward.4} parent=23 // pred_check
        %p128 = pneg %p29
      $region26: #{cnn_forward.4} parent=23 // pred_check_branch
        %130 = sbr.rel (%p128) target = $region28
      $region27: #{cnn_forward.4} parent=23 // pred_region
        %p131 = scmp.lt.s32.totalorder %s9, 1
        %s132 = scalar_select %p131, %s9, 1
        %s133 = smul.addr %s132, 392
        %s134 = smul.addr %s133, 8
        %s135 = scalar_lea.vmem %s0, %s134
      $region28: #{cnn_forward.4} parent=23 // pred_fallthru
        _
    $region24: #{cnn_forward.4} parent=5 // pred_fallthru
      _
    %p136 = scmp.le.s32.totalorder 1, %s9
    %p137 = scmp.lt.s32.totalorder %s9, 3
    %p138 = pnand %p136, %p137
    %p139 = pneg %p138
    // Predicated region
    $region29: #{cnn_forward.4} parent=5 // pred_check
      _
    $region30: #{cnn_forward.4} parent=5 // pred_check_branch
      %141 = sbr.rel (%p138) target = $region32
    $region31: #{cnn_forward.4} parent=5 // pred_region
      %s142 = ssub.s32 %s9, 1
      %p143 = scmp.lt.s32.totalorder %s14, 1
      %s144 = scalar_select %p143, %s14, 1
      %s145 = smul.addr %s144, 392
      %s146 = smul.addr %s145, 8
      %s147 = scalar_lea.vmem %s0, %s146
      %p148 = pneg %p35
      %p149 = pneg %p32
      %p150 = pneg %p56
      %p151 = pneg %p53
      %p152 = pneg %p77
      %p153 = pneg %p74
      %p154 = pneg %p103
      %p155 = pneg %p100
      %p156 = scmp.lt.s32.totalorder %s14, 1
      %s157 = scalar_select %p156, %s14, 1
      %s158 = smul.addr %s157, 98
      %s159 = smul.addr %s158, 8
      %s160 = scalar_lea.vmem %s3, %s159
      %p161 = scmp.lt.s32.totalorder %s14, 1
      %s162 = scalar_select %p161, %s14, 1
      %s163 = smul.addr %s162, 392
      %s164 = smul.addr %s163, 8
      %s165 = scalar_lea.vmem %s0, %s164
      %p166 = scmp.lt.s32.totalorder %s14, 1
      %s167 = scalar_select %p166, %s14, 1
      %s168 = smul.addr %s167, 98
      %s169 = smul.addr %s168, 8
      %s170 = scalar_lea.vmem %s3, %s169
      %v171 = vld [vmem:[%s165] sm:$0xff]
      %v172 = vld [vmem:[%s165 + $0x8] sm:$0xff]
      %v173 = vld [vmem:[%s165 + $0x10] sm:$0xff]
      %v174 = vld [vmem:[%s165 + $0x18] sm:$0xff]
      %v175 = vld [vmem:[%s165 + $0x20] sm:$0xff]
      %v176 = vld [vmem:[%s165 + $0x28] sm:$0xff]
      %v177 = vld [vmem:[%s165 + $0x30] sm:$0xff]
      %v178 = vld [vmem:[%s165 + $0x38] sm:$0xff]
      %v179 = vld [vmem:[%s165 + $0x40] sm:$0xff]
      %v180 = vld [vmem:[%s165 + $0x48] sm:$0xff]
      %v181 = vld [vmem:[%s165 + $0x50] sm:$0xff]
      %v182 = vld [vmem:[%s165 + $0x58] sm:$0xff]
      %v183 = vld [vmem:[%s165 + $0x60] sm:$0xff]
      %v184 = vld [vmem:[%s165 + $0x68] sm:$0xff]
      %v185 = vld [vmem:[%s165 + $0x70] sm:$0xff]
      %v186 = vld [vmem:[%s165 + $0x78] sm:$0xff]
      %v187 = vld [vmem:[%s165 + $0x80] sm:$0xff]
      %v188 = vld [vmem:[%s165 + $0x88] sm:$0xff]
      %v189 = vld [vmem:[%s165 + $0x90] sm:$0xff]
      %v190 = vld [vmem:[%s165 + $0x98] sm:$0xff]
      %v191 = vld [vmem:[%s165 + $0xa0] sm:$0xff]
      %v192 = vld [vmem:[%s165 + $0xa8] sm:$0xff]
      %v193 = vld [vmem:[%s165 + $0xb0] sm:$0xff]
      %v194 = vld [vmem:[%s165 + $0xb8] sm:$0xff]
      %v195 = vld [vmem:[%s165 + $0xc0] sm:$0xff]
      %v196 = vld [vmem:[%s165 + $0xc8] sm:$0xff]
      %v197 = vld [vmem:[%s165 + $0xd0] sm:$0xff]
      %v198 = vld [vmem:[%s165 + $0xd8] sm:$0xff]
      %v199 = vld [vmem:[%s165 + $0xe0] sm:$0xff]
      %v200 = vld [vmem:[%s165 + $0xe8] sm:$0xff]
      %v201 = vld [vmem:[%s165 + $0xf0] sm:$0xff]
      %v202 = vld [vmem:[%s165 + $0xf8] sm:$0xff]
      %v203 = vld [vmem:[%s165 + $0x100] sm:$0xff]
      %v204 = vld [vmem:[%s165 + $0x108] sm:$0xff]
      %v205 = vld [vmem:[%s165 + $0x110] sm:$0xff]
      %v206 = vld [vmem:[%s165 + $0x118] sm:$0xff]
      %v207 = vld [vmem:[%s165 + $0x120] sm:$0xff]
      %v208 = vld [vmem:[%s165 + $0x128] sm:$0xff]
      %v209 = vld [vmem:[%s165 + $0x130] sm:$0xff]
      %v210 = vld [vmem:[%s165 + $0x138] sm:$0xff]
      %v211 = vld [vmem:[%s165 + $0x140] sm:$0xff]
      %v212 = vld [vmem:[%s165 + $0x148] sm:$0xff]
      %v213 = vld [vmem:[%s165 + $0x150] sm:$0xff]
      %v214 = vld [vmem:[%s165 + $0x158] sm:$0xff]
      %v215 = vld [vmem:[%s165 + $0x160] sm:$0xff]
      %v216 = vld [vmem:[%s165 + $0x168] sm:$0xff]
      %v217 = vld [vmem:[%s165 + $0x170] sm:$0xff]
      %v218 = vld [vmem:[%s165 + $0x178] sm:$0xff]
      %v219 = vld [vmem:[%s165 + $0x180] sm:$0xff]
      %v220 = vld [vmem:[%s165 + $0x188] sm:$0xff]
      %v221 = vld [vmem:[%s165 + $0x190] sm:$0xff]
      %v222 = vld [vmem:[%s165 + $0x198] sm:$0xff]
      %v223 = vld [vmem:[%s165 + $0x1a0] sm:$0xff]
      %v224 = vld [vmem:[%s165 + $0x1a8] sm:$0xff]
      %v225 = vld [vmem:[%s165 + $0x1b0] sm:$0xff]
      %v226 = vld [vmem:[%s165 + $0x1b8] sm:$0xff]
      %v227 = vld [vmem:[%s165 + $0x1c0] sm:$0xff]
      %v228 = vld [vmem:[%s165 + $0x1c8] sm:$0xff]
      %v229 = vld [vmem:[%s165 + $0x1d0] sm:$0xff]
      %v230 = vld [vmem:[%s165 + $0x1d8] sm:$0xff]
      %v231 = vld [vmem:[%s165 + $0x1e0] sm:$0xff]
      %v232 = vld [vmem:[%s165 + $0x1e8] sm:$0xff]
      %v233 = vld [vmem:[%s165 + $0x1f0] sm:$0xff]
      %v234 = vld [vmem:[%s165 + $0x1f8] sm:$0xff]
      %v235 = vld [vmem:[%s165 + $0x200] sm:$0xff]
      %v236 = vld [vmem:[%s165 + $0x208] sm:$0xff]
      %v237 = vld [vmem:[%s165 + $0x210] sm:$0xff]
      %v238 = vld [vmem:[%s165 + $0x218] sm:$0xff]
      %v239 = vld [vmem:[%s165 + $0x220] sm:$0xff]
      %v240 = vld [vmem:[%s165 + $0x228] sm:$0xff]
      %v241 = vld [vmem:[%s165 + $0x230] sm:$0xff]
      %v242 = vld [vmem:[%s165 + $0x238] sm:$0xff]
      %v243 = vld [vmem:[%s165 + $0x240] sm:$0xff]
      %v244 = vld [vmem:[%s165 + $0x248] sm:$0xff]
      %v245 = vld [vmem:[%s165 + $0x250] sm:$0xff]
      %v246 = vld [vmem:[%s165 + $0x258] sm:$0xff]
      %v247 = vld [vmem:[%s165 + $0x260] sm:$0xff]
      %v248 = vld [vmem:[%s165 + $0x268] sm:$0xff]
      %v249 = vld [vmem:[%s165 + $0x270] sm:$0xff]
      %v250 = vld [vmem:[%s165 + $0x278] sm:$0xff]
      %v251 = vld [vmem:[%s165 + $0x280] sm:$0xff]
      %v252 = vld [vmem:[%s165 + $0x288] sm:$0xff]
      %v253 = vld [vmem:[%s165 + $0x290] sm:$0xff]
      %v254 = vld [vmem:[%s165 + $0x298] sm:$0xff]
      %v255 = vld [vmem:[%s165 + $0x2a0] sm:$0xff]
      %v256 = vld [vmem:[%s165 + $0x2a8] sm:$0xff]
      %v257 = vld [vmem:[%s165 + $0x2b0] sm:$0xff]
      %v258 = vld [vmem:[%s165 + $0x2b8] sm:$0xff]
      %v259 = vld [vmem:[%s165 + $0x2c0] sm:$0xff]
      %v260 = vld [vmem:[%s165 + $0x2c8] sm:$0xff]
      %v261 = vld [vmem:[%s165 + $0x2d0] sm:$0xff]
      %v262 = vld [vmem:[%s165 + $0x2d8] sm:$0xff]
      %v263 = vld [vmem:[%s165 + $0x2e0] sm:$0xff]
      %v264 = vld [vmem:[%s165 + $0x2e8] sm:$0xff]
      %v265 = vld [vmem:[%s165 + $0x2f0] sm:$0xff]
      %v266 = vld [vmem:[%s165 + $0x2f8] sm:$0xff]
      %v267 = vld [vmem:[%s165 + $0x300] sm:$0xff]
      %v268 = vld [vmem:[%s165 + $0x308] sm:$0xff]
      %v269 = vld [vmem:[%s165 + $0x310] sm:$0xff]
      %v270 = vld [vmem:[%s165 + $0x318] sm:$0xff]
      %v271 = vld [vmem:[%s165 + $0x320] sm:$0xff]
      %v272 = vld [vmem:[%s165 + $0x328] sm:$0xff]
      %v273 = vld [vmem:[%s165 + $0x330] sm:$0xff]
      %v274 = vld [vmem:[%s165 + $0x338] sm:$0xff]
      %v275 = vld [vmem:[%s165 + $0x340] sm:$0xff]
      %v276 = vld [vmem:[%s165 + $0x348] sm:$0xff]
      %v277 = vld [vmem:[%s165 + $0x350] sm:$0xff]
      %v278 = vld [vmem:[%s165 + $0x358] sm:$0xff]
      %v279 = vld [vmem:[%s165 + $0x360] sm:$0xff]
      %v280 = vld [vmem:[%s165 + $0x368] sm:$0xff]
      %v281 = vld [vmem:[%s165 + $0x370] sm:$0xff]
      %v282 = vld [vmem:[%s165 + $0x378] sm:$0xff]
      %v283 = vld [vmem:[%s165 + $0x380] sm:$0xff]
      %v284 = vld [vmem:[%s165 + $0x388] sm:$0xff]
      %v285 = vld [vmem:[%s165 + $0x390] sm:$0xff]
      %v286 = vld [vmem:[%s165 + $0x398] sm:$0xff]
      %v287 = vld [vmem:[%s165 + $0x3a0] sm:$0xff]
      %v288 = vld [vmem:[%s165 + $0x3a8] sm:$0xff]
      %v289 = vld [vmem:[%s165 + $0x3b0] sm:$0xff]
      %v290 = vld [vmem:[%s165 + $0x3b8] sm:$0xff]
      %v291 = vld [vmem:[%s165 + $0x3c0] sm:$0xff]
      %v292 = vld [vmem:[%s165 + $0x3c8] sm:$0xff]
      %v293 = vld [vmem:[%s165 + $0x3d0] sm:$0xff]
      %v294 = vld [vmem:[%s165 + $0x3d8] sm:$0xff]
      %v295 = vld [vmem:[%s165 + $0x3e0] sm:$0xff]
      %v296 = vld [vmem:[%s165 + $0x3e8] sm:$0xff]
      %v297 = vld [vmem:[%s165 + $0x3f0] sm:$0xff]
      %v298 = vld [vmem:[%s165 + $0x3f8] sm:$0xff]
      %v299 = vld [vmem:[%s165 + $0x400] sm:$0xff]
      %v300 = vld [vmem:[%s165 + $0x408] sm:$0xff]
      %v301 = vld [vmem:[%s165 + $0x410] sm:$0xff]
      %v302 = vld [vmem:[%s165 + $0x418] sm:$0xff]
      %v303 = vld [vmem:[%s165 + $0x420] sm:$0xff]
      %v304 = vld [vmem:[%s165 + $0x428] sm:$0xff]
      %v305 = vld [vmem:[%s165 + $0x430] sm:$0xff]
      %v306 = vld [vmem:[%s165 + $0x438] sm:$0xff]
      %v307 = vld [vmem:[%s165 + $0x440] sm:$0xff]
      %v308 = vld [vmem:[%s165 + $0x448] sm:$0xff]
      %v309 = vld [vmem:[%s165 + $0x450] sm:$0xff]
      %v310 = vld [vmem:[%s165 + $0x458] sm:$0xff]
      %v311 = vld [vmem:[%s165 + $0x460] sm:$0xff]
      %v312 = vld [vmem:[%s165 + $0x468] sm:$0xff]
      %v313 = vld [vmem:[%s165 + $0x470] sm:$0xff]
      %v314 = vld [vmem:[%s165 + $0x478] sm:$0xff]
      %v315 = vld [vmem:[%s165 + $0x480] sm:$0xff]
      %v316 = vld [vmem:[%s165 + $0x488] sm:$0xff]
      %v317 = vld [vmem:[%s165 + $0x490] sm:$0xff]
      %v318 = vld [vmem:[%s165 + $0x498] sm:$0xff]
      %v319 = vld [vmem:[%s165 + $0x4a0] sm:$0xff]
      %v320 = vld [vmem:[%s165 + $0x4a8] sm:$0xff]
      %v321 = vld [vmem:[%s165 + $0x4b0] sm:$0xff]
      %v322 = vld [vmem:[%s165 + $0x4b8] sm:$0xff]
      %v323 = vld [vmem:[%s165 + $0x4c0] sm:$0xff]
      %v324 = vld [vmem:[%s165 + $0x4c8] sm:$0xff]
      %v325 = vld [vmem:[%s165 + $0x4d0] sm:$0xff]
      %v326 = vld [vmem:[%s165 + $0x4d8] sm:$0xff]
      %v327 = vld [vmem:[%s165 + $0x4e0] sm:$0xff]
      %v328 = vld [vmem:[%s165 + $0x4e8] sm:$0xff]
      %v329 = vld [vmem:[%s165 + $0x4f0] sm:$0xff]
      %v330 = vld [vmem:[%s165 + $0x4f8] sm:$0xff]
      %v331 = vld [vmem:[%s165 + $0x500] sm:$0xff]
      %v332 = vld [vmem:[%s165 + $0x508] sm:$0xff]
      %v333 = vld [vmem:[%s165 + $0x510] sm:$0xff]
      %v334 = vld [vmem:[%s165 + $0x518] sm:$0xff]
      %v335 = vld [vmem:[%s165 + $0x520] sm:$0xff]
      %v336 = vld [vmem:[%s165 + $0x528] sm:$0xff]
      %v337 = vld [vmem:[%s165 + $0x530] sm:$0xff]
      %v338 = vld [vmem:[%s165 + $0x538] sm:$0xff]
      %v339 = vld [vmem:[%s165 + $0x540] sm:$0xff]
      %v340 = vld [vmem:[%s165 + $0x548] sm:$0xff]
      %v341 = vld [vmem:[%s165 + $0x550] sm:$0xff]
      %v342 = vld [vmem:[%s165 + $0x558] sm:$0xff]
      %v343 = vld [vmem:[%s165 + $0x560] sm:$0xff]
      %v344 = vld [vmem:[%s165 + $0x568] sm:$0xff]
      %v345 = vld [vmem:[%s165 + $0x570] sm:$0xff]
      %v346 = vld [vmem:[%s165 + $0x578] sm:$0xff]
      %v347 = vld [vmem:[%s165 + $0x580] sm:$0xff]
      %v348 = vld [vmem:[%s165 + $0x588] sm:$0xff]
      %v349 = vld [vmem:[%s165 + $0x590] sm:$0xff]
      %v350 = vld [vmem:[%s165 + $0x598] sm:$0xff]
      %v351 = vld [vmem:[%s165 + $0x5a0] sm:$0xff]
      %v352 = vld [vmem:[%s165 + $0x5a8] sm:$0xff]
      %v353 = vld [vmem:[%s165 + $0x5b0] sm:$0xff]
      %v354 = vld [vmem:[%s165 + $0x5b8] sm:$0xff]
      %v355 = vld [vmem:[%s165 + $0x5c0] sm:$0xff]
      %v356 = vld [vmem:[%s165 + $0x5c8] sm:$0xff]
      %v357 = vld [vmem:[%s165 + $0x5d0] sm:$0xff]
      %v358 = vld [vmem:[%s165 + $0x5d8] sm:$0xff]
      %v359 = vld [vmem:[%s165 + $0x5e0] sm:$0xff]
      %v360 = vld [vmem:[%s165 + $0x5e8] sm:$0xff]
      %v361 = vld [vmem:[%s165 + $0x5f0] sm:$0xff]
      %v362 = vld [vmem:[%s165 + $0x5f8] sm:$0xff]
      %v363 = vld [vmem:[%s165 + $0x600] sm:$0xff]
      %v364 = vld [vmem:[%s165 + $0x608] sm:$0xff]
      %v365 = vld [vmem:[%s165 + $0x610] sm:$0xff]
      %v366 = vld [vmem:[%s165 + $0x618] sm:$0xff]
      %v367 = vld [vmem:[%s165 + $0x620] sm:$0xff]
      %v368 = vld [vmem:[%s165 + $0x628] sm:$0xff]
      %v369 = vld [vmem:[%s165 + $0x630] sm:$0xff]
      %v370 = vld [vmem:[%s165 + $0x638] sm:$0xff]
      %v371 = vld [vmem:[%s165 + $0x640] sm:$0xff]
      %v372 = vld [vmem:[%s165 + $0x648] sm:$0xff]
      %v373 = vld [vmem:[%s165 + $0x650] sm:$0xff]
      %v374 = vld [vmem:[%s165 + $0x658] sm:$0xff]
      %v375 = vld [vmem:[%s165 + $0x660] sm:$0xff]
      %v376 = vld [vmem:[%s165 + $0x668] sm:$0xff]
      %v377 = vld [vmem:[%s165 + $0x670] sm:$0xff]
      %v378 = vld [vmem:[%s165 + $0x678] sm:$0xff]
      %v379 = vld [vmem:[%s165 + $0x680] sm:$0xff]
      %v380 = vld [vmem:[%s165 + $0x688] sm:$0xff]
      %v381 = vld [vmem:[%s165 + $0x690] sm:$0xff]
      %v382 = vld [vmem:[%s165 + $0x698] sm:$0xff]
      %v383 = vld [vmem:[%s165 + $0x6a0] sm:$0xff]
      %v384 = vld [vmem:[%s165 + $0x6a8] sm:$0xff]
      %v385 = vld [vmem:[%s165 + $0x6b0] sm:$0xff]
      %v386 = vld [vmem:[%s165 + $0x6b8] sm:$0xff]
      %v387 = vld [vmem:[%s165 + $0x6c0] sm:$0xff]
      %v388 = vld [vmem:[%s165 + $0x6c8] sm:$0xff]
      %v389 = vld [vmem:[%s165 + $0x6d0] sm:$0xff]
      %v390 = vld [vmem:[%s165 + $0x6d8] sm:$0xff]
      %v391 = vld [vmem:[%s165 + $0x6e0] sm:$0xff]
      %v392 = vld [vmem:[%s165 + $0x6e8] sm:$0xff]
      %v393 = vld [vmem:[%s165 + $0x6f0] sm:$0xff]
      %v394 = vld [vmem:[%s165 + $0x6f8] sm:$0xff]
      %v395 = vld [vmem:[%s165 + $0x700] sm:$0xff]
      %v396 = vld [vmem:[%s165 + $0x708] sm:$0xff]
      %v397 = vld [vmem:[%s165 + $0x710] sm:$0xff]
      %v398 = vld [vmem:[%s165 + $0x718] sm:$0xff]
      %v399 = vld [vmem:[%s165 + $0x720] sm:$0xff]
      %v400 = vld [vmem:[%s165 + $0x728] sm:$0xff]
      %v401 = vld [vmem:[%s165 + $0x730] sm:$0xff]
      %v402 = vld [vmem:[%s165 + $0x738] sm:$0xff]
      %v403 = vld [vmem:[%s165 + $0x740] sm:$0xff]
      %v404 = vld [vmem:[%s165 + $0x748] sm:$0xff]
      %v405 = vld [vmem:[%s165 + $0x750] sm:$0xff]
      %v406 = vld [vmem:[%s165 + $0x758] sm:$0xff]
      %v407 = vld [vmem:[%s165 + $0x760] sm:$0xff]
      %v408 = vld [vmem:[%s165 + $0x768] sm:$0xff]
      %v409 = vld [vmem:[%s165 + $0x770] sm:$0xff]
      %v410 = vld [vmem:[%s165 + $0x778] sm:$0xff]
      %v411 = vld [vmem:[%s165 + $0x780] sm:$0xff]
      %v412 = vld [vmem:[%s165 + $0x788] sm:$0xff]
      %v413 = vld [vmem:[%s165 + $0x790] sm:$0xff]
      %v414 = vld [vmem:[%s165 + $0x798] sm:$0xff]
      %v415 = vld [vmem:[%s165 + $0x7a0] sm:$0xff]
      %v416 = vld [vmem:[%s165 + $0x7a8] sm:$0xff]
      %v417 = vld [vmem:[%s165 + $0x7b0] sm:$0xff]
      %v418 = vld [vmem:[%s165 + $0x7b8] sm:$0xff]
      %v419 = vld [vmem:[%s165 + $0x7c0] sm:$0xff]
      %v420 = vld [vmem:[%s165 + $0x7c8] sm:$0xff]
      %v421 = vld [vmem:[%s165 + $0x7d0] sm:$0xff]
      %v422 = vld [vmem:[%s165 + $0x7d8] sm:$0xff]
      %v423 = vld [vmem:[%s165 + $0x7e0] sm:$0xff]
      %v424 = vld [vmem:[%s165 + $0x7e8] sm:$0xff]
      %v425 = vld [vmem:[%s165 + $0x7f0] sm:$0xff]
      %v426 = vld [vmem:[%s165 + $0x7f8] sm:$0xff]
      %v427 = vld [vmem:[%s165 + $0x800] sm:$0xff]
      %v428 = vld [vmem:[%s165 + $0x808] sm:$0xff]
      %v429 = vld [vmem:[%s165 + $0x810] sm:$0xff]
      %v430 = vld [vmem:[%s165 + $0x818] sm:$0xff]
      %v431 = vld [vmem:[%s165 + $0x820] sm:$0xff]
      %v432 = vld [vmem:[%s165 + $0x828] sm:$0xff]
      %v433 = vld [vmem:[%s165 + $0x830] sm:$0xff]
      %v434 = vld [vmem:[%s165 + $0x838] sm:$0xff]
      %v435 = vld [vmem:[%s165 + $0x840] sm:$0xff]
      %v436 = vld [vmem:[%s165 + $0x848] sm:$0xff]
      %v437 = vld [vmem:[%s165 + $0x850] sm:$0xff]
      %v438 = vld [vmem:[%s165 + $0x858] sm:$0xff]
      %v439 = vld [vmem:[%s165 + $0x860] sm:$0xff]
      %v440 = vld [vmem:[%s165 + $0x868] sm:$0xff]
      %v441 = vld [vmem:[%s165 + $0x870] sm:$0xff]
      %v442 = vld [vmem:[%s165 + $0x878] sm:$0xff]
      %v443 = vld [vmem:[%s165 + $0x880] sm:$0xff]
      %v444 = vld [vmem:[%s165 + $0x888] sm:$0xff]
      %v445 = vld [vmem:[%s165 + $0x890] sm:$0xff]
      %v446 = vld [vmem:[%s165 + $0x898] sm:$0xff]
      %v447 = vld [vmem:[%s165 + $0x8a0] sm:$0xff]
      %v448 = vld [vmem:[%s165 + $0x8a8] sm:$0xff]
      %v449 = vld [vmem:[%s165 + $0x8b0] sm:$0xff]
      %v450 = vld [vmem:[%s165 + $0x8b8] sm:$0xff]
      %v451 = vld [vmem:[%s165 + $0x8c0] sm:$0xff]
      %v452 = vld [vmem:[%s165 + $0x8c8] sm:$0xff]
      %v453 = vld [vmem:[%s165 + $0x8d0] sm:$0xff]
      %v454 = vld [vmem:[%s165 + $0x8d8] sm:$0xff]
      %v455 = vld [vmem:[%s165 + $0x8e0] sm:$0xff]
      %v456 = vld [vmem:[%s165 + $0x8e8] sm:$0xff]
      %v457 = vld [vmem:[%s165 + $0x8f0] sm:$0xff]
      %v458 = vld [vmem:[%s165 + $0x8f8] sm:$0xff]
      %v459 = vld [vmem:[%s165 + $0x900] sm:$0xff]
      %v460 = vld [vmem:[%s165 + $0x908] sm:$0xff]
      %v461 = vld [vmem:[%s165 + $0x910] sm:$0xff]
      %v462 = vld [vmem:[%s165 + $0x918] sm:$0xff]
      %v463 = vld [vmem:[%s165 + $0x920] sm:$0xff]
      %v464 = vld [vmem:[%s165 + $0x928] sm:$0xff]
      %v465 = vld [vmem:[%s165 + $0x930] sm:$0xff]
      %v466 = vld [vmem:[%s165 + $0x938] sm:$0xff]
      %v467 = vld [vmem:[%s165 + $0x940] sm:$0xff]
      %v468 = vld [vmem:[%s165 + $0x948] sm:$0xff]
      %v469 = vld [vmem:[%s165 + $0x950] sm:$0xff]
      %v470 = vld [vmem:[%s165 + $0x958] sm:$0xff]
      %v471 = vld [vmem:[%s165 + $0x960] sm:$0xff]
      %v472 = vld [vmem:[%s165 + $0x968] sm:$0xff]
      %v473 = vld [vmem:[%s165 + $0x970] sm:$0xff]
      %v474 = vld [vmem:[%s165 + $0x978] sm:$0xff]
      %v475 = vld [vmem:[%s165 + $0x980] sm:$0xff]
      %v476 = vld [vmem:[%s165 + $0x988] sm:$0xff]
      %v477 = vld [vmem:[%s165 + $0x990] sm:$0xff]
      %v478 = vld [vmem:[%s165 + $0x998] sm:$0xff]
      %v479 = vld [vmem:[%s165 + $0x9a0] sm:$0xff]
      %v480 = vld [vmem:[%s165 + $0x9a8] sm:$0xff]
      %v481 = vld [vmem:[%s165 + $0x9b0] sm:$0xff]
      %v482 = vld [vmem:[%s165 + $0x9b8] sm:$0xff]
      %v483 = vld [vmem:[%s165 + $0x9c0] sm:$0xff]
      %v484 = vld [vmem:[%s165 + $0x9c8] sm:$0xff]
      %v485 = vld [vmem:[%s165 + $0x9d0] sm:$0xff]
      %v486 = vld [vmem:[%s165 + $0x9d8] sm:$0xff]
      %v487 = vld [vmem:[%s165 + $0x9e0] sm:$0xff]
      %v488 = vld [vmem:[%s165 + $0x9e8] sm:$0xff]
      %v489 = vld [vmem:[%s165 + $0x9f0] sm:$0xff]
      %v490 = vld [vmem:[%s165 + $0x9f8] sm:$0xff]
      %v491 = vld [vmem:[%s165 + $0xa00] sm:$0xff]
      %v492 = vld [vmem:[%s165 + $0xa08] sm:$0xff]
      %v493 = vld [vmem:[%s165 + $0xa10] sm:$0xff]
      %v494 = vld [vmem:[%s165 + $0xa18] sm:$0xff]
      %v495 = vld [vmem:[%s165 + $0xa20] sm:$0xff]
      %v496 = vld [vmem:[%s165 + $0xa28] sm:$0xff]
      %v497 = vld [vmem:[%s165 + $0xa30] sm:$0xff]
      %v498 = vld [vmem:[%s165 + $0xa38] sm:$0xff]
      %v499 = vld [vmem:[%s165 + $0xa40] sm:$0xff]
      %v500 = vld [vmem:[%s165 + $0xa48] sm:$0xff]
      %v501 = vld [vmem:[%s165 + $0xa50] sm:$0xff]
      %v502 = vld [vmem:[%s165 + $0xa58] sm:$0xff]
      %v503 = vld [vmem:[%s165 + $0xa60] sm:$0xff]
      %v504 = vld [vmem:[%s165 + $0xa68] sm:$0xff]
      %v505 = vld [vmem:[%s165 + $0xa70] sm:$0xff]
      %v506 = vld [vmem:[%s165 + $0xa78] sm:$0xff]
      %v507 = vld [vmem:[%s165 + $0xa80] sm:$0xff]
      %v508 = vld [vmem:[%s165 + $0xa88] sm:$0xff]
      %v509 = vld [vmem:[%s165 + $0xa90] sm:$0xff]
      %v510 = vld [vmem:[%s165 + $0xa98] sm:$0xff]
      %v511 = vld [vmem:[%s165 + $0xaa0] sm:$0xff]
      %v512 = vld [vmem:[%s165 + $0xaa8] sm:$0xff]
      %v513 = vld [vmem:[%s165 + $0xab0] sm:$0xff]
      %v514 = vld [vmem:[%s165 + $0xab8] sm:$0xff]
      %v515 = vld [vmem:[%s165 + $0xac0] sm:$0xff]
      %v516 = vld [vmem:[%s165 + $0xac8] sm:$0xff]
      %v517 = vld [vmem:[%s165 + $0xad0] sm:$0xff]
      %v518 = vld [vmem:[%s165 + $0xad8] sm:$0xff]
      %v519 = vld [vmem:[%s165 + $0xae0] sm:$0xff]
      %v520 = vld [vmem:[%s165 + $0xae8] sm:$0xff]
      %v521 = vld [vmem:[%s165 + $0xaf0] sm:$0xff]
      %v522 = vld [vmem:[%s165 + $0xaf8] sm:$0xff]
      %v523 = vld [vmem:[%s165 + $0xb00] sm:$0xff]
      %v524 = vld [vmem:[%s165 + $0xb08] sm:$0xff]
      %v525 = vld [vmem:[%s165 + $0xb10] sm:$0xff]
      %v526 = vld [vmem:[%s165 + $0xb18] sm:$0xff]
      %v527 = vld [vmem:[%s165 + $0xb20] sm:$0xff]
      %v528 = vld [vmem:[%s165 + $0xb28] sm:$0xff]
      %v529 = vld [vmem:[%s165 + $0xb30] sm:$0xff]
      %v530 = vld [vmem:[%s165 + $0xb38] sm:$0xff]
      %v531 = vld [vmem:[%s165 + $0xb40] sm:$0xff]
      %v532 = vld [vmem:[%s165 + $0xb48] sm:$0xff]
      %v533 = vld [vmem:[%s165 + $0xb50] sm:$0xff]
      %v534 = vld [vmem:[%s165 + $0xb58] sm:$0xff]
      %v535 = vld [vmem:[%s165 + $0xb60] sm:$0xff]
      %v536 = vld [vmem:[%s165 + $0xb68] sm:$0xff]
      %v537 = vld [vmem:[%s165 + $0xb70] sm:$0xff]
      %v538 = vld [vmem:[%s165 + $0xb78] sm:$0xff]
      %v539 = vld [vmem:[%s165 + $0xb80] sm:$0xff]
      %v540 = vld [vmem:[%s165 + $0xb88] sm:$0xff]
      %v541 = vld [vmem:[%s165 + $0xb90] sm:$0xff]
      %v542 = vld [vmem:[%s165 + $0xb98] sm:$0xff]
      %v543 = vld [vmem:[%s165 + $0xba0] sm:$0xff]
      %v544 = vld [vmem:[%s165 + $0xba8] sm:$0xff]
      %v545 = vld [vmem:[%s165 + $0xbb0] sm:$0xff]
      %v546 = vld [vmem:[%s165 + $0xbb8] sm:$0xff]
      %v547 = vld [vmem:[%s165 + $0xbc0] sm:$0xff]
      %v548 = vld [vmem:[%s165 + $0xbc8] sm:$0xff]
      %v549 = vld [vmem:[%s165 + $0xbd0] sm:$0xff]
      %v550 = vld [vmem:[%s165 + $0xbd8] sm:$0xff]
      %v551 = vld [vmem:[%s165 + $0xbe0] sm:$0xff]
      %v552 = vld [vmem:[%s165 + $0xbe8] sm:$0xff]
      %v553 = vld [vmem:[%s165 + $0xbf0] sm:$0xff]
      %v554 = vld [vmem:[%s165 + $0xbf8] sm:$0xff]
      %v555 = vld [vmem:[%s165 + $0xc00] sm:$0xff]
      %v556 = vld [vmem:[%s165 + $0xc08] sm:$0xff]
      %v557 = vld [vmem:[%s165 + $0xc10] sm:$0xff]
      %v558 = vld [vmem:[%s165 + $0xc18] sm:$0xff]
      %v559 = vld [vmem:[%s165 + $0xc20] sm:$0xff]
      %v560 = vld [vmem:[%s165 + $0xc28] sm:$0xff]
      %v561 = vld [vmem:[%s165 + $0xc30] sm:$0xff]
      %v562 = vld [vmem:[%s165 + $0xc38] sm:$0xff]
      %v563 = vld [vmem:[%s1] sm:$0xff]
      %v564 = vld [vmem:[%s1 + $0x8] sm:$0xff]
      %v565 = vld [vmem:[%s1 + $0x10] sm:$0xff]
      %v566 = vld [vmem:[%s1 + $0x18] sm:$0x1]
      %v567 = vld [vmem:[%s2] sm:$0x1]
      %v569 = vlaneseq
      %v570 = vshrl.u32 %v569, 7
      %v571 = vsub.s32 0, %v570
      %v572 = vrot.slane %v567, %v571
      %vm574 = vcmask 203776
      %v576 = vsel %vm574, %v171, 0
      %v579 = vsel %vm574, %v172, 0
      %v582 = vsel %vm574, %v173, 0
      %v585 = vsel %vm574, %v174, 0
      %v588 = vsel %vm574, %v175, 0
      %v591 = vsel %vm574, %v176, 0
      %v594 = vsel %vm574, %v177, 0
      %v597 = vsel %vm574, %v178, 0
      %v600 = vsel %vm574, %v179, 0
      %v603 = vsel %vm574, %v180, 0
      %v606 = vsel %vm574, %v181, 0
      %v609 = vsel %vm574, %v182, 0
      %v612 = vsel %vm574, %v183, 0
      %v615 = vsel %vm574, %v184, 0
      %v618 = vsel %vm574, %v185, 0
      %v621 = vsel %vm574, %v186, 0
      %v624 = vsel %vm574, %v187, 0
      %v627 = vsel %vm574, %v188, 0
      %v630 = vsel %vm574, %v189, 0
      %v633 = vsel %vm574, %v190, 0
      %v636 = vsel %vm574, %v191, 0
      %v639 = vsel %vm574, %v192, 0
      %v642 = vsel %vm574, %v193, 0
      %v645 = vsel %vm574, %v194, 0
      %v648 = vsel %vm574, %v195, 0
      %v651 = vsel %vm574, %v196, 0
      %v654 = vsel %vm574, %v197, 0
      %v657 = vsel %vm574, %v198, 0
      %v660 = vsel %vm574, %v199, 0
      %v663 = vsel %vm574, %v200, 0
      %v666 = vsel %vm574, %v201, 0
      %v669 = vsel %vm574, %v202, 0
      %v672 = vsel %vm574, %v203, 0
      %v675 = vsel %vm574, %v204, 0
      %v678 = vsel %vm574, %v205, 0
      %v681 = vsel %vm574, %v206, 0
      %v684 = vsel %vm574, %v207, 0
      %v687 = vsel %vm574, %v208, 0
      %v690 = vsel %vm574, %v209, 0
      %v693 = vsel %vm574, %v210, 0
      %v696 = vsel %vm574, %v211, 0
      %v699 = vsel %vm574, %v212, 0
      %v702 = vsel %vm574, %v213, 0
      %v705 = vsel %vm574, %v214, 0
      %v708 = vsel %vm574, %v215, 0
      %v711 = vsel %vm574, %v216, 0
      %v714 = vsel %vm574, %v217, 0
      %v717 = vsel %vm574, %v218, 0
      %v720 = vsel %vm574, %v219, 0
      %v723 = vsel %vm574, %v220, 0
      %v726 = vsel %vm574, %v221, 0
      %v729 = vsel %vm574, %v222, 0
      %v732 = vsel %vm574, %v223, 0
      %v735 = vsel %vm574, %v224, 0
      %v738 = vsel %vm574, %v225, 0
      %v741 = vsel %vm574, %v226, 0
      %v744 = vsel %vm574, %v227, 0
      %v747 = vsel %vm574, %v228, 0
      %v750 = vsel %vm574, %v229, 0
      %v753 = vsel %vm574, %v230, 0
      %v756 = vsel %vm574, %v231, 0
      %v759 = vsel %vm574, %v232, 0
      %v762 = vsel %vm574, %v233, 0
      %v765 = vsel %vm574, %v234, 0
      %v768 = vsel %vm574, %v235, 0
      %v771 = vsel %vm574, %v236, 0
      %v774 = vsel %vm574, %v237, 0
      %v777 = vsel %vm574, %v238, 0
      %v780 = vsel %vm574, %v239, 0
      %v783 = vsel %vm574, %v240, 0
      %v786 = vsel %vm574, %v241, 0
      %v789 = vsel %vm574, %v242, 0
      %v792 = vsel %vm574, %v243, 0
      %v795 = vsel %vm574, %v244, 0
      %v798 = vsel %vm574, %v245, 0
      %v801 = vsel %vm574, %v246, 0
      %v804 = vsel %vm574, %v247, 0
      %v807 = vsel %vm574, %v248, 0
      %v810 = vsel %vm574, %v249, 0
      %v813 = vsel %vm574, %v250, 0
      %v816 = vsel %vm574, %v251, 0
      %v819 = vsel %vm574, %v252, 0
      %v822 = vsel %vm574, %v253, 0
      %v825 = vsel %vm574, %v254, 0
      %v828 = vsel %vm574, %v255, 0
      %v831 = vsel %vm574, %v256, 0
      %v834 = vsel %vm574, %v257, 0
      %v837 = vsel %vm574, %v258, 0
      %v840 = vsel %vm574, %v259, 0
      %v843 = vsel %vm574, %v260, 0
      %v846 = vsel %vm574, %v261, 0
      %v849 = vsel %vm574, %v262, 0
      %v852 = vsel %vm574, %v263, 0
      %v855 = vsel %vm574, %v264, 0
      %v858 = vsel %vm574, %v265, 0
      %v861 = vsel %vm574, %v266, 0
      %v864 = vsel %vm574, %v267, 0
      %v867 = vsel %vm574, %v268, 0
      %v870 = vsel %vm574, %v269, 0
      %v873 = vsel %vm574, %v270, 0
      %v876 = vsel %vm574, %v271, 0
      %v879 = vsel %vm574, %v272, 0
      %v882 = vsel %vm574, %v273, 0
      %v885 = vsel %vm574, %v274, 0
      %v888 = vsel %vm574, %v275, 0
      %v891 = vsel %vm574, %v276, 0
      %v894 = vsel %vm574, %v277, 0
      %v897 = vsel %vm574, %v278, 0
      %v900 = vsel %vm574, %v279, 0
      %v903 = vsel %vm574, %v280, 0
      %v906 = vsel %vm574, %v281, 0
      %v909 = vsel %vm574, %v282, 0
      %v912 = vsel %vm574, %v283, 0
      %v915 = vsel %vm574, %v284, 0
      %v918 = vsel %vm574, %v285, 0
      %v921 = vsel %vm574, %v286, 0
      %v924 = vsel %vm574, %v287, 0
      %v927 = vsel %vm574, %v288, 0
      %v930 = vsel %vm574, %v289, 0
      %v933 = vsel %vm574, %v290, 0
      %v936 = vsel %vm574, %v291, 0
      %v939 = vsel %vm574, %v292, 0
      %v942 = vsel %vm574, %v293, 0
      %v945 = vsel %vm574, %v294, 0
      %v948 = vsel %vm574, %v295, 0
      %v951 = vsel %vm574, %v296, 0
      %v954 = vsel %vm574, %v297, 0
      %v957 = vsel %vm574, %v298, 0
      %v960 = vsel %vm574, %v299, 0
      %v963 = vsel %vm574, %v300, 0
      %v966 = vsel %vm574, %v301, 0
      %v969 = vsel %vm574, %v302, 0
      %v972 = vsel %vm574, %v303, 0
      %v975 = vsel %vm574, %v304, 0
      %v978 = vsel %vm574, %v305, 0
      %v981 = vsel %vm574, %v306, 0
      %v984 = vsel %vm574, %v307, 0
      %v987 = vsel %vm574, %v308, 0
      %v990 = vsel %vm574, %v309, 0
      %v993 = vsel %vm574, %v310, 0
      %v996 = vsel %vm574, %v311, 0
      %v999 = vsel %vm574, %v312, 0
      %v1002 = vsel %vm574, %v313, 0
      %v1005 = vsel %vm574, %v314, 0
      %v1008 = vsel %vm574, %v315, 0
      %v1011 = vsel %vm574, %v316, 0
      %v1014 = vsel %vm574, %v317, 0
      %v1017 = vsel %vm574, %v318, 0
      %v1020 = vsel %vm574, %v319, 0
      %v1023 = vsel %vm574, %v320, 0
      %v1026 = vsel %vm574, %v321, 0
      %v1029 = vsel %vm574, %v322, 0
      %v1032 = vsel %vm574, %v323, 0
      %v1035 = vsel %vm574, %v324, 0
      %v1038 = vsel %vm574, %v325, 0
      %v1041 = vsel %vm574, %v326, 0
      %v1044 = vsel %vm574, %v327, 0
      %v1047 = vsel %vm574, %v328, 0
      %v1050 = vsel %vm574, %v329, 0
      %v1053 = vsel %vm574, %v330, 0
      %v1056 = vsel %vm574, %v331, 0
      %v1059 = vsel %vm574, %v332, 0
      %v1062 = vsel %vm574, %v333, 0
      %v1065 = vsel %vm574, %v334, 0
      %v1068 = vsel %vm574, %v335, 0
      %v1071 = vsel %vm574, %v336, 0
      %v1074 = vsel %vm574, %v337, 0
      %v1077 = vsel %vm574, %v338, 0
      %v1080 = vsel %vm574, %v339, 0
      %v1083 = vsel %vm574, %v340, 0
      %v1086 = vsel %vm574, %v341, 0
      %v1089 = vsel %vm574, %v342, 0
      %v1092 = vsel %vm574, %v343, 0
      %v1095 = vsel %vm574, %v344, 0
      %v1098 = vsel %vm574, %v345, 0
      %v1101 = vsel %vm574, %v346, 0
      %v1104 = vsel %vm574, %v347, 0
      %v1107 = vsel %vm574, %v348, 0
      %v1110 = vsel %vm574, %v349, 0
      %v1113 = vsel %vm574, %v350, 0
      %v1116 = vsel %vm574, %v351, 0
      %v1119 = vsel %vm574, %v352, 0
      %v1122 = vsel %vm574, %v353, 0
      %v1125 = vsel %vm574, %v354, 0
      %v1128 = vsel %vm574, %v355, 0
      %v1131 = vsel %vm574, %v356, 0
      %v1134 = vsel %vm574, %v357, 0
      %v1137 = vsel %vm574, %v358, 0
      %v1140 = vsel %vm574, %v359, 0
      %v1143 = vsel %vm574, %v360, 0
      %v1146 = vsel %vm574, %v361, 0
      %v1149 = vsel %vm574, %v362, 0
      %v1152 = vsel %vm574, %v363, 0
      %v1155 = vsel %vm574, %v364, 0
      %v1158 = vsel %vm574, %v365, 0
      %v1161 = vsel %vm574, %v366, 0
      %v1164 = vsel %vm574, %v367, 0
      %v1167 = vsel %vm574, %v368, 0
      %v1170 = vsel %vm574, %v369, 0
      %v1173 = vsel %vm574, %v370, 0
      %v1176 = vsel %vm574, %v371, 0
      %v1179 = vsel %vm574, %v372, 0
      %v1182 = vsel %vm574, %v373, 0
      %v1185 = vsel %vm574, %v374, 0
      %v1188 = vsel %vm574, %v375, 0
      %v1191 = vsel %vm574, %v376, 0
      %v1194 = vsel %vm574, %v377, 0
      %v1197 = vsel %vm574, %v378, 0
      %v1200 = vsel %vm574, %v379, 0
      %v1203 = vsel %vm574, %v380, 0
      %v1206 = vsel %vm574, %v381, 0
      %v1209 = vsel %vm574, %v382, 0
      %v1212 = vsel %vm574, %v383, 0
      %v1215 = vsel %vm574, %v384, 0
      %v1218 = vsel %vm574, %v385, 0
      %v1221 = vsel %vm574, %v386, 0
      %v1224 = vsel %vm574, %v387, 0
      %v1227 = vsel %vm574, %v388, 0
      %v1230 = vsel %vm574, %v389, 0
      %v1233 = vsel %vm574, %v390, 0
      %v1236 = vsel %vm574, %v391, 0
      %v1239 = vsel %vm574, %v392, 0
      %v1242 = vsel %vm574, %v393, 0
      %v1245 = vsel %vm574, %v394, 0
      %v1248 = vsel %vm574, %v395, 0
      %v1251 = vsel %vm574, %v396, 0
      %v1254 = vsel %vm574, %v397, 0
      %v1257 = vsel %vm574, %v398, 0
      %v1260 = vsel %vm574, %v399, 0
      %v1263 = vsel %vm574, %v400, 0
      %v1266 = vsel %vm574, %v401, 0
      %v1269 = vsel %vm574, %v402, 0
      %v1272 = vsel %vm574, %v403, 0
      %v1275 = vsel %vm574, %v404, 0
      %v1278 = vsel %vm574, %v405, 0
      %v1281 = vsel %vm574, %v406, 0
      %v1284 = vsel %vm574, %v407, 0
      %v1287 = vsel %vm574, %v408, 0
      %v1290 = vsel %vm574, %v409, 0
      %v1293 = vsel %vm574, %v410, 0
      %v1296 = vsel %vm574, %v411, 0
      %v1299 = vsel %vm574, %v412, 0
      %v1302 = vsel %vm574, %v413, 0
      %v1305 = vsel %vm574, %v414, 0
      %v1308 = vsel %vm574, %v415, 0
      %v1311 = vsel %vm574, %v416, 0
      %v1314 = vsel %vm574, %v417, 0
      %v1317 = vsel %vm574, %v418, 0
      %v1320 = vsel %vm574, %v419, 0
      %v1323 = vsel %vm574, %v420, 0
      %v1326 = vsel %vm574, %v421, 0
      %v1329 = vsel %vm574, %v422, 0
      %v1332 = vsel %vm574, %v423, 0
      %v1335 = vsel %vm574, %v424, 0
      %v1338 = vsel %vm574, %v425, 0
      %v1341 = vsel %vm574, %v426, 0
      %v1344 = vsel %vm574, %v427, 0
      %v1347 = vsel %vm574, %v428, 0
      %v1350 = vsel %vm574, %v429, 0
      %v1353 = vsel %vm574, %v430, 0
      %v1356 = vsel %vm574, %v431, 0
      %v1359 = vsel %vm574, %v432, 0
      %v1362 = vsel %vm574, %v433, 0
      %v1365 = vsel %vm574, %v434, 0
      %v1368 = vsel %vm574, %v435, 0
      %v1371 = vsel %vm574, %v436, 0
      %v1374 = vsel %vm574, %v437, 0
      %v1377 = vsel %vm574, %v438, 0
      %v1380 = vsel %vm574, %v439, 0
      %v1383 = vsel %vm574, %v440, 0
      %v1386 = vsel %vm574, %v441, 0
      %v1389 = vsel %vm574, %v442, 0
      %v1392 = vsel %vm574, %v443, 0
      %v1395 = vsel %vm574, %v444, 0
      %v1398 = vsel %vm574, %v445, 0
      %v1401 = vsel %vm574, %v446, 0
      %v1404 = vsel %vm574, %v447, 0
      %v1407 = vsel %vm574, %v448, 0
      %v1410 = vsel %vm574, %v449, 0
      %v1413 = vsel %vm574, %v450, 0
      %v1416 = vsel %vm574, %v451, 0
      %v1419 = vsel %vm574, %v452, 0
      %v1422 = vsel %vm574, %v453, 0
      %v1425 = vsel %vm574, %v454, 0
      %v1428 = vsel %vm574, %v455, 0
      %v1431 = vsel %vm574, %v456, 0
      %v1434 = vsel %vm574, %v457, 0
      %v1437 = vsel %vm574, %v458, 0
      %v1440 = vsel %vm574, %v459, 0
      %v1443 = vsel %vm574, %v460, 0
      %v1446 = vsel %vm574, %v461, 0
      %v1449 = vsel %vm574, %v462, 0
      %v1452 = vsel %vm574, %v463, 0
      %v1455 = vsel %vm574, %v464, 0
      %v1458 = vsel %vm574, %v465, 0
      %v1461 = vsel %vm574, %v466, 0
      %v1464 = vsel %vm574, %v467, 0
      %v1467 = vsel %vm574, %v468, 0
      %v1470 = vsel %vm574, %v469, 0
      %v1473 = vsel %vm574, %v470, 0
      %v1476 = vsel %vm574, %v471, 0
      %v1479 = vsel %vm574, %v472, 0
      %v1482 = vsel %vm574, %v473, 0
      %v1485 = vsel %vm574, %v474, 0
      %v1488 = vsel %vm574, %v475, 0
      %v1491 = vsel %vm574, %v476, 0
      %v1494 = vsel %vm574, %v477, 0
      %v1497 = vsel %vm574, %v478, 0
      %v1500 = vsel %vm574, %v479, 0
      %v1503 = vsel %vm574, %v480, 0
      %v1506 = vsel %vm574, %v481, 0
      %v1509 = vsel %vm574, %v482, 0
      %v1512 = vsel %vm574, %v483, 0
      %v1515 = vsel %vm574, %v484, 0
      %v1518 = vsel %vm574, %v485, 0
      %v1521 = vsel %vm574, %v486, 0
      %v1524 = vsel %vm574, %v487, 0
      %v1527 = vsel %vm574, %v488, 0
      %v1530 = vsel %vm574, %v489, 0
      %v1533 = vsel %vm574, %v490, 0
      %v1536 = vsel %vm574, %v491, 0
      %v1539 = vsel %vm574, %v492, 0
      %v1542 = vsel %vm574, %v493, 0
      %v1545 = vsel %vm574, %v494, 0
      %v1548 = vsel %vm574, %v495, 0
      %v1551 = vsel %vm574, %v496, 0
      %v1554 = vsel %vm574, %v497, 0
      %v1557 = vsel %vm574, %v498, 0
      %v1560 = vsel %vm574, %v499, 0
      %v1563 = vsel %vm574, %v500, 0
      %v1566 = vsel %vm574, %v501, 0
      %v1569 = vsel %vm574, %v502, 0
      %v1572 = vsel %vm574, %v503, 0
      %v1575 = vsel %vm574, %v504, 0
      %v1578 = vsel %vm574, %v505, 0
      %v1581 = vsel %vm574, %v506, 0
      %v1584 = vsel %vm574, %v507, 0
      %v1587 = vsel %vm574, %v508, 0
      %v1590 = vsel %vm574, %v509, 0
      %v1593 = vsel %vm574, %v510, 0
      %v1596 = vsel %vm574, %v511, 0
      %v1599 = vsel %vm574, %v512, 0
      %v1602 = vsel %vm574, %v513, 0
      %v1605 = vsel %vm574, %v514, 0
      %v1608 = vsel %vm574, %v515, 0
      %v1611 = vsel %vm574, %v516, 0
      %v1614 = vsel %vm574, %v517, 0
      %v1617 = vsel %vm574, %v518, 0
      %v1620 = vsel %vm574, %v519, 0
      %v1623 = vsel %vm574, %v520, 0
      %v1626 = vsel %vm574, %v521, 0
      %v1629 = vsel %vm574, %v522, 0
      %v1632 = vsel %vm574, %v523, 0
      %v1635 = vsel %vm574, %v524, 0
      %v1638 = vsel %vm574, %v525, 0
      %v1641 = vsel %vm574, %v526, 0
      %v1644 = vsel %vm574, %v527, 0
      %v1647 = vsel %vm574, %v528, 0
      %v1650 = vsel %vm574, %v529, 0
      %v1653 = vsel %vm574, %v530, 0
      %v1656 = vsel %vm574, %v531, 0
      %v1659 = vsel %vm574, %v532, 0
      %v1662 = vsel %vm574, %v533, 0
      %v1665 = vsel %vm574, %v534, 0
      %v1668 = vsel %vm574, %v535, 0
      %v1671 = vsel %vm574, %v536, 0
      %v1674 = vsel %vm574, %v537, 0
      %v1677 = vsel %vm574, %v538, 0
      %v1680 = vsel %vm574, %v539, 0
      %v1683 = vsel %vm574, %v540, 0
      %v1686 = vsel %vm574, %v541, 0
      %v1689 = vsel %vm574, %v542, 0
      %v1692 = vsel %vm574, %v543, 0
      %v1695 = vsel %vm574, %v544, 0
      %v1698 = vsel %vm574, %v545, 0
      %v1701 = vsel %vm574, %v546, 0
      %v1704 = vsel %vm574, %v547, 0
      %v1707 = vsel %vm574, %v548, 0
      %v1710 = vsel %vm574, %v549, 0
      %v1713 = vsel %vm574, %v550, 0
      %v1716 = vsel %vm574, %v551, 0
      %v1719 = vsel %vm574, %v552, 0
      %v1722 = vsel %vm574, %v553, 0
      %v1725 = vsel %vm574, %v554, 0
      %v1728 = vsel %vm574, %v555, 0
      %v1731 = vsel %vm574, %v556, 0
      %v1734 = vsel %vm574, %v557, 0
      %v1737 = vsel %vm574, %v558, 0
      %v1740 = vsel %vm574, %v559, 0
      %v1743 = vsel %vm574, %v560, 0
      %v1746 = vsel %vm574, %v561, 0
      %v1749 = vsel %vm574, %v562, 0
      %vm1751 = vcmask 1040384
      %v1753 = vsel %vm1751, %v566, 0
      %1755 = vmatprep.subr.mxu0 0.0
      %1756 = vmatpush1.msra.mxu0 0.0
      %1757 = vmatprep.subr.mxu0 0.0
      %1758 = vmatpush1.msra.mxu0 0.0
      %1759 = vmatprep.subr.mxu0 0.0
      %1760 = vmatpush1.msra.mxu0 0.0
      %1761 = vmatprep.subr.mxu0 0.0
      %1762 = vmatpush1.msra.mxu0 0.0
      %1763 = vmatprep.subr.mxu0 0.0
      %1764 = vmatpush1.msra.mxu0 0.0
      %1765 = vmatprep.subr.mxu0 0.0
      %1766 = vmatpush1.msra.mxu0 0.0
      %1767 = vmatprep.subr.mxu0 0.0
      %1768 = vmatpush1.msra.mxu0 0.0
      %1769 = vmatprep.subr.mxu0 0.0
      %1770 = vmatpush1.msra.mxu0 0.0
      %1771 = vmatprep.subr.mxu0 0.0
      %1772 = vmatpush1.msra.mxu0 0.0
      %1773 = vmatprep.subr.mxu0 0.0
      %1774 = vmatpush1.msra.mxu0 0.0
      %1775 = vmatprep.subr.mxu0 0.0
      %1776 = vmatpush1.msra.mxu0 0.0
      %1777 = vmatprep.subr.mxu0 0.0
      %1778 = vmatpush1.msra.mxu0 0.0
      %1779 = vmatprep.subr.mxu0 0.0
      %1780 = vmatpush1.msra.mxu0 %v1753
      %1781 = vmatprep.subr.mxu0 0.0
      %1782 = vmatpush1.msra.mxu0 %v565
      %1783 = vmatprep.subr.mxu0 0.0
      %1784 = vmatpush1.msra.mxu0 %v564
      %1785 = vmatprep.subr.mxu0 0.0
      %1786 = vmatpush1.msra.mxu0 %v563
      %1787 = vmatprep.subr.mxu0 0.0
      %1788 = vmatpush2.msra.mxu0 0.0
      %1789 = vmatprep.subr.mxu0 0.0
      %1790 = vmatpush2.msra.mxu0 0.0
      %1791 = vmatprep.subr.mxu0 0.0
      %1792 = vmatpush2.msra.mxu0 0.0
      %1793 = vmatprep.subr.mxu0 0.0
      %1794 = vmatpush2.msra.mxu0 0.0
      %1795 = vmatprep.subr.mxu0 0.0
      %1796 = vmatpush2.msra.mxu0 0.0
      %1797 = vmatprep.subr.mxu0 0.0
      %1798 = vmatpush2.msra.mxu0 0.0
      %1799 = vmatprep.subr.mxu0 0.0
      %1800 = vmatpush2.msra.mxu0 0.0
      %1801 = vmatprep.subr.mxu0 0.0
      %1802 = vmatpush2.msra.mxu0 0.0
      %1803 = vmatprep.subr.mxu0 0.0
      %1804 = vmatpush2.msra.mxu0 0.0
      %1805 = vmatprep.subr.mxu0 0.0
      %1806 = vmatpush2.msra.mxu0 0.0
      %1807 = vmatprep.subr.mxu0 0.0
      %1808 = vmatpush2.msra.mxu0 0.0
      %1809 = vmatprep.subr.mxu0 0.0
      %1810 = vmatpush2.msra.mxu0 0.0
      %1811 = vmatprep.subr.mxu0 0.0
      %1812 = vmatpush2.msra.mxu0 0.0
      %1813 = vmatprep.subr.mxu0 0.0
      %1814 = vmatpush2.msra.mxu0 0.0
      %1815 = vmatprep.subr.mxu0 0.0
      %1816 = vmatpush2.msra.mxu0 0.0
      %1817 = vmatprep.subr.mxu0 0.0
      %1818 = vmatpush2.msra.mxu0 0.0
      %1819 = vmatprep.mubr.f32.mxu0 0.0
      %1820 = vmatmul.mubr.f32.gmra.mxu0 %v576
      %v1821 = vpop.f32.mrf.mxu0
      %v1822 = vadd.f32 %v572, %v1821
      %v1823 = vpop.f32.mrf.mxu0
      %1824 = vmatprep.mubr.f32.mxu0 0.0
      %1825 = vmatmul.mubr.f32.gmra.mxu0 %v579
      %v1826 = vpop.f32.mrf.mxu0
      %v1827 = vadd.f32 %v572, %v1826
      %v1828 = vpop.f32.mrf.mxu0
      %1829 = vmatprep.mubr.f32.mxu0 0.0
      %1830 = vmatmul.mubr.f32.gmra.mxu0 %v582
      %v1831 = vpop.f32.mrf.mxu0
      %v1832 = vadd.f32 %v572, %v1831
      %v1833 = vpop.f32.mrf.mxu0
      %1834 = vmatprep.mubr.f32.mxu0 0.0
      %1835 = vmatmul.mubr.f32.gmra.mxu0 %v585
      %v1836 = vpop.f32.mrf.mxu0
      %v1837 = vadd.f32 %v572, %v1836
      %v1838 = vpop.f32.mrf.mxu0
      %1839 = vmatprep.mubr.f32.mxu0 0.0
      %1840 = vmatmul.mubr.f32.gmra.mxu0 %v588
      %v1841 = vpop.f32.mrf.mxu0
      %v1842 = vadd.f32 %v572, %v1841
      %v1843 = vpop.f32.mrf.mxu0
      %1844 = vmatprep.mubr.f32.mxu0 0.0
      %1845 = vmatmul.mubr.f32.gmra.mxu0 %v591
      %v1846 = vpop.f32.mrf.mxu0
      %v1847 = vadd.f32 %v572, %v1846
      %v1848 = vpop.f32.mrf.mxu0
      %1849 = vmatprep.mubr.f32.mxu0 0.0
      %1850 = vmatmul.mubr.f32.gmra.mxu0 %v594
      %v1851 = vpop.f32.mrf.mxu0
      %v1852 = vadd.f32 %v572, %v1851
      %v1853 = vpop.f32.mrf.mxu0
      %1854 = vmatprep.mubr.f32.mxu0 0.0
      %1855 = vmatmul.mubr.f32.gmra.mxu0 %v597
      %v1856 = vpop.f32.mrf.mxu0
      %v1857 = vadd.f32 %v572, %v1856
      %v1858 = vpop.f32.mrf.mxu0
      %1859 = vmatprep.mubr.f32.mxu0 0.0
      %1860 = vmatmul.mubr.f32.gmra.mxu0 %v600
      %v1861 = vpop.f32.mrf.mxu0
      %v1862 = vadd.f32 %v572, %v1861
      %v1863 = vpop.f32.mrf.mxu0
      %1864 = vmatprep.mubr.f32.mxu0 0.0
      %1865 = vmatmul.mubr.f32.gmra.mxu0 %v603
      %v1866 = vpop.f32.mrf.mxu0
      %v1867 = vadd.f32 %v572, %v1866
      %v1868 = vpop.f32.mrf.mxu0
      %1869 = vmatprep.mubr.f32.mxu0 0.0
      %1870 = vmatmul.mubr.f32.gmra.mxu0 %v606
      %v1871 = vpop.f32.mrf.mxu0
      %v1872 = vadd.f32 %v572, %v1871
      %v1873 = vpop.f32.mrf.mxu0
      %1874 = vmatprep.mubr.f32.mxu0 0.0
      %1875 = vmatmul.mubr.f32.gmra.mxu0 %v609
      %v1876 = vpop.f32.mrf.mxu0
      %v1877 = vadd.f32 %v572, %v1876
      %v1878 = vpop.f32.mrf.mxu0
      %1879 = vmatprep.mubr.f32.mxu0 0.0
      %1880 = vmatmul.mubr.f32.gmra.mxu0 %v612
      %v1881 = vpop.f32.mrf.mxu0
      %v1882 = vadd.f32 %v572, %v1881
      %v1883 = vpop.f32.mrf.mxu0
      %1884 = vmatprep.mubr.f32.mxu0 0.0
      %1885 = vmatmul.mubr.f32.gmra.mxu0 %v615
      %v1886 = vpop.f32.mrf.mxu0
      %v1887 = vadd.f32 %v572, %v1886
      %v1888 = vpop.f32.mrf.mxu0
      %1889 = vmatprep.mubr.f32.mxu0 0.0
      %1890 = vmatmul.mubr.f32.gmra.mxu0 %v618
      %v1891 = vpop.f32.mrf.mxu0
      %v1892 = vadd.f32 %v572, %v1891
      %v1893 = vpop.f32.mrf.mxu0
      %1894 = vmatprep.mubr.f32.mxu0 0.0
      %1895 = vmatmul.mubr.f32.gmra.mxu0 %v621
      %v1896 = vpop.f32.mrf.mxu0
      %v1897 = vadd.f32 %v572, %v1896
      %v1898 = vpop.f32.mrf.mxu0
      %1899 = vmatprep.mubr.f32.mxu0 0.0
      %1900 = vmatmul.mubr.f32.gmra.mxu0 %v624
      %v1901 = vpop.f32.mrf.mxu0
      %v1902 = vadd.f32 %v572, %v1901
      %v1903 = vpop.f32.mrf.mxu0
      %1904 = vmatprep.mubr.f32.mxu0 0.0
      %1905 = vmatmul.mubr.f32.gmra.mxu0 %v627
      %v1906 = vpop.f32.mrf.mxu0
      %v1907 = vadd.f32 %v572, %v1906
      %v1908 = vpop.f32.mrf.mxu0
      %1909 = vmatprep.mubr.f32.mxu0 0.0
      %1910 = vmatmul.mubr.f32.gmra.mxu0 %v630
      %v1911 = vpop.f32.mrf.mxu0
      %v1912 = vadd.f32 %v572, %v1911
      %v1913 = vpop.f32.mrf.mxu0
      %1914 = vmatprep.mubr.f32.mxu0 0.0
      %1915 = vmatmul.mubr.f32.gmra.mxu0 %v633
      %v1916 = vpop.f32.mrf.mxu0
      %v1917 = vadd.f32 %v572, %v1916
      %v1918 = vpop.f32.mrf.mxu0
      %1919 = vmatprep.mubr.f32.mxu0 0.0
      %1920 = vmatmul.mubr.f32.gmra.mxu0 %v636
      %v1921 = vpop.f32.mrf.mxu0
      %v1922 = vadd.f32 %v572, %v1921
      %v1923 = vpop.f32.mrf.mxu0
      %1924 = vmatprep.mubr.f32.mxu0 0.0
      %1925 = vmatmul.mubr.f32.gmra.mxu0 %v639
      %v1926 = vpop.f32.mrf.mxu0
      %v1927 = vadd.f32 %v572, %v1926
      %v1928 = vpop.f32.mrf.mxu0
      %1929 = vmatprep.mubr.f32.mxu0 0.0
      %1930 = vmatmul.mubr.f32.gmra.mxu0 %v642
      %v1931 = vpop.f32.mrf.mxu0
      %v1932 = vadd.f32 %v572, %v1931
      %v1933 = vpop.f32.mrf.mxu0
      %1934 = vmatprep.mubr.f32.mxu0 0.0
      %1935 = vmatmul.mubr.f32.gmra.mxu0 %v645
      %v1936 = vpop.f32.mrf.mxu0
      %v1937 = vadd.f32 %v572, %v1936
      %v1938 = vpop.f32.mrf.mxu0
      %1939 = vmatprep.mubr.f32.mxu0 0.0
      %1940 = vmatmul.mubr.f32.gmra.mxu0 %v648
      %v1941 = vpop.f32.mrf.mxu0
      %v1942 = vadd.f32 %v572, %v1941
      %v1943 = vpop.f32.mrf.mxu0
      %1944 = vmatprep.mubr.f32.mxu0 0.0
      %1945 = vmatmul.mubr.f32.gmra.mxu0 %v651
      %v1946 = vpop.f32.mrf.mxu0
      %v1947 = vadd.f32 %v572, %v1946
      %v1948 = vpop.f32.mrf.mxu0
      %1949 = vmatprep.mubr.f32.mxu0 0.0
      %1950 = vmatmul.mubr.f32.gmra.mxu0 %v654
      %v1951 = vpop.f32.mrf.mxu0
      %v1952 = vadd.f32 %v572, %v1951
      %v1953 = vpop.f32.mrf.mxu0
      %1954 = vmatprep.mubr.f32.mxu0 0.0
      %1955 = vmatmul.mubr.f32.gmra.mxu0 %v657
      %v1956 = vpop.f32.mrf.mxu0
      %v1957 = vadd.f32 %v572, %v1956
      %v1958 = vpop.f32.mrf.mxu0
      %1959 = vmatprep.mubr.f32.mxu0 0.0
      %1960 = vmatmul.mubr.f32.gmra.mxu0 %v660
      %v1961 = vpop.f32.mrf.mxu0
      %v1962 = vadd.f32 %v572, %v1961
      %v1963 = vpop.f32.mrf.mxu0
      %1964 = vmatprep.mubr.f32.mxu0 0.0
      %1965 = vmatmul.mubr.f32.gmra.mxu0 %v663
      %v1966 = vpop.f32.mrf.mxu0
      %v1967 = vadd.f32 %v572, %v1966
      %v1968 = vpop.f32.mrf.mxu0
      %1969 = vmatprep.mubr.f32.mxu0 0.0
      %1970 = vmatmul.mubr.f32.gmra.mxu0 %v666
      %v1971 = vpop.f32.mrf.mxu0
      %v1972 = vadd.f32 %v572, %v1971
      %v1973 = vpop.f32.mrf.mxu0
      %1974 = vmatprep.mubr.f32.mxu0 0.0
      %1975 = vmatmul.mubr.f32.gmra.mxu0 %v669
      %v1976 = vpop.f32.mrf.mxu0
      %v1977 = vadd.f32 %v572, %v1976
      %v1978 = vpop.f32.mrf.mxu0
      %1979 = vmatprep.mubr.f32.mxu0 0.0
      %1980 = vmatmul.mubr.f32.gmra.mxu0 %v672
      %v1981 = vpop.f32.mrf.mxu0
      %v1982 = vadd.f32 %v572, %v1981
      %v1983 = vpop.f32.mrf.mxu0
      %1984 = vmatprep.mubr.f32.mxu0 0.0
      %1985 = vmatmul.mubr.f32.gmra.mxu0 %v675
      %v1986 = vpop.f32.mrf.mxu0
      %v1987 = vadd.f32 %v572, %v1986
      %v1988 = vpop.f32.mrf.mxu0
      %1989 = vmatprep.mubr.f32.mxu0 0.0
      %1990 = vmatmul.mubr.f32.gmra.mxu0 %v678
      %v1991 = vpop.f32.mrf.mxu0
      %v1992 = vadd.f32 %v572, %v1991
      %v1993 = vpop.f32.mrf.mxu0
      %1994 = vmatprep.mubr.f32.mxu0 0.0
      %1995 = vmatmul.mubr.f32.gmra.mxu0 %v681
      %v1996 = vpop.f32.mrf.mxu0
      %v1997 = vadd.f32 %v572, %v1996
      %v1998 = vpop.f32.mrf.mxu0
      %1999 = vmatprep.mubr.f32.mxu0 0.0
      %2000 = vmatmul.mubr.f32.gmra.mxu0 %v684
      %v2001 = vpop.f32.mrf.mxu0
      %v2002 = vadd.f32 %v572, %v2001
      %v2003 = vpop.f32.mrf.mxu0
      %2004 = vmatprep.mubr.f32.mxu0 0.0
      %2005 = vmatmul.mubr.f32.gmra.mxu0 %v687
      %v2006 = vpop.f32.mrf.mxu0
      %v2007 = vadd.f32 %v572, %v2006
      %v2008 = vpop.f32.mrf.mxu0
      %2009 = vmatprep.mubr.f32.mxu0 0.0
      %2010 = vmatmul.mubr.f32.gmra.mxu0 %v690
      %v2011 = vpop.f32.mrf.mxu0
      %v2012 = vadd.f32 %v572, %v2011
      %v2013 = vpop.f32.mrf.mxu0
      %2014 = vmatprep.mubr.f32.mxu0 0.0
      %2015 = vmatmul.mubr.f32.gmra.mxu0 %v693
      %v2016 = vpop.f32.mrf.mxu0
      %v2017 = vadd.f32 %v572, %v2016
      %v2018 = vpop.f32.mrf.mxu0
      %2019 = vmatprep.mubr.f32.mxu0 0.0
      %2020 = vmatmul.mubr.f32.gmra.mxu0 %v696
      %v2021 = vpop.f32.mrf.mxu0
      %v2022 = vadd.f32 %v572, %v2021
      %v2023 = vpop.f32.mrf.mxu0
      %2024 = vmatprep.mubr.f32.mxu0 0.0
      %2025 = vmatmul.mubr.f32.gmra.mxu0 %v699
      %v2026 = vpop.f32.mrf.mxu0
      %v2027 = vadd.f32 %v572, %v2026
      %v2028 = vpop.f32.mrf.mxu0
      %2029 = vmatprep.mubr.f32.mxu0 0.0
      %2030 = vmatmul.mubr.f32.gmra.mxu0 %v702
      %v2031 = vpop.f32.mrf.mxu0
      %v2032 = vadd.f32 %v572, %v2031
      %v2033 = vpop.f32.mrf.mxu0
      %2034 = vmatprep.mubr.f32.mxu0 0.0
      %2035 = vmatmul.mubr.f32.gmra.mxu0 %v705
      %v2036 = vpop.f32.mrf.mxu0
      %v2037 = vadd.f32 %v572, %v2036
      %v2038 = vpop.f32.mrf.mxu0
      %2039 = vmatprep.mubr.f32.mxu0 0.0
      %2040 = vmatmul.mubr.f32.gmra.mxu0 %v708
      %v2041 = vpop.f32.mrf.mxu0
      %v2042 = vadd.f32 %v572, %v2041
      %v2043 = vpop.f32.mrf.mxu0
      %2044 = vmatprep.mubr.f32.mxu0 0.0
      %2045 = vmatmul.mubr.f32.gmra.mxu0 %v711
      %v2046 = vpop.f32.mrf.mxu0
      %v2047 = vadd.f32 %v572, %v2046
      %v2048 = vpop.f32.mrf.mxu0
      %2049 = vmatprep.mubr.f32.mxu0 0.0
      %2050 = vmatmul.mubr.f32.gmra.mxu0 %v714
      %v2051 = vpop.f32.mrf.mxu0
      %v2052 = vadd.f32 %v572, %v2051
      %v2053 = vpop.f32.mrf.mxu0
      %2054 = vmatprep.mubr.f32.mxu0 0.0
      %2055 = vmatmul.mubr.f32.gmra.mxu0 %v717
      %v2056 = vpop.f32.mrf.mxu0
      %v2057 = vadd.f32 %v572, %v2056
      %v2058 = vpop.f32.mrf.mxu0
      %2059 = vmatprep.mubr.f32.mxu0 0.0
      %2060 = vmatmul.mubr.f32.gmra.mxu0 %v720
      %v2061 = vpop.f32.mrf.mxu0
      %v2062 = vadd.f32 %v572, %v2061
      %v2063 = vpop.f32.mrf.mxu0
      %2064 = vmatprep.mubr.f32.mxu0 0.0
      %2065 = vmatmul.mubr.f32.gmra.mxu0 %v723
      %v2066 = vpop.f32.mrf.mxu0
      %v2067 = vadd.f32 %v572, %v2066
      %v2068 = vpop.f32.mrf.mxu0
      %2069 = vmatprep.mubr.f32.mxu0 0.0
      %2070 = vmatmul.mubr.f32.gmra.mxu0 %v726
      %v2071 = vpop.f32.mrf.mxu0
      %v2072 = vadd.f32 %v572, %v2071
      %v2073 = vpop.f32.mrf.mxu0
      %2074 = vmatprep.mubr.f32.mxu0 0.0
      %2075 = vmatmul.mubr.f32.gmra.mxu0 %v729
      %v2076 = vpop.f32.mrf.mxu0
      %v2077 = vadd.f32 %v572, %v2076
      %v2078 = vpop.f32.mrf.mxu0
      %2079 = vmatprep.mubr.f32.mxu0 0.0
      %2080 = vmatmul.mubr.f32.gmra.mxu0 %v732
      %v2081 = vpop.f32.mrf.mxu0
      %v2082 = vadd.f32 %v572, %v2081
      %v2083 = vpop.f32.mrf.mxu0
      %2084 = vmatprep.mubr.f32.mxu0 0.0
      %2085 = vmatmul.mubr.f32.gmra.mxu0 %v735
      %v2086 = vpop.f32.mrf.mxu0
      %v2087 = vadd.f32 %v572, %v2086
      %v2088 = vpop.f32.mrf.mxu0
      %2089 = vmatprep.mubr.f32.mxu0 0.0
      %2090 = vmatmul.mubr.f32.gmra.mxu0 %v738
      %v2091 = vpop.f32.mrf.mxu0
      %v2092 = vadd.f32 %v572, %v2091
      %v2093 = vpop.f32.mrf.mxu0
      %2094 = vmatprep.mubr.f32.mxu0 0.0
      %2095 = vmatmul.mubr.f32.gmra.mxu0 %v741
      %v2096 = vpop.f32.mrf.mxu0
      %v2097 = vadd.f32 %v572, %v2096
      %v2098 = vpop.f32.mrf.mxu0
      %2099 = vmatprep.mubr.f32.mxu0 0.0
      %2100 = vmatmul.mubr.f32.gmra.mxu0 %v744
      %v2101 = vpop.f32.mrf.mxu0
      %v2102 = vadd.f32 %v572, %v2101
      %v2103 = vpop.f32.mrf.mxu0
      %2104 = vmatprep.mubr.f32.mxu0 0.0
      %2105 = vmatmul.mubr.f32.gmra.mxu0 %v747
      %v2106 = vpop.f32.mrf.mxu0
      %v2107 = vadd.f32 %v572, %v2106
      %v2108 = vpop.f32.mrf.mxu0
      %2109 = vmatprep.mubr.f32.mxu0 0.0
      %2110 = vmatmul.mubr.f32.gmra.mxu0 %v750
      %v2111 = vpop.f32.mrf.mxu0
      %v2112 = vadd.f32 %v572, %v2111
      %v2113 = vpop.f32.mrf.mxu0
      %2114 = vmatprep.mubr.f32.mxu0 0.0
      %2115 = vmatmul.mubr.f32.gmra.mxu0 %v753
      %v2116 = vpop.f32.mrf.mxu0
      %v2117 = vadd.f32 %v572, %v2116
      %v2118 = vpop.f32.mrf.mxu0
      %2119 = vmatprep.mubr.f32.mxu0 0.0
      %2120 = vmatmul.mubr.f32.gmra.mxu0 %v756
      %v2121 = vpop.f32.mrf.mxu0
      %v2122 = vadd.f32 %v572, %v2121
      %v2123 = vpop.f32.mrf.mxu0
      %2124 = vmatprep.mubr.f32.mxu0 0.0
      %2125 = vmatmul.mubr.f32.gmra.mxu0 %v759
      %v2126 = vpop.f32.mrf.mxu0
      %v2127 = vadd.f32 %v572, %v2126
      %v2128 = vpop.f32.mrf.mxu0
      %2129 = vmatprep.mubr.f32.mxu0 0.0
      %2130 = vmatmul.mubr.f32.gmra.mxu0 %v762
      %v2131 = vpop.f32.mrf.mxu0
      %v2132 = vadd.f32 %v572, %v2131
      %v2133 = vpop.f32.mrf.mxu0
      %2134 = vmatprep.mubr.f32.mxu0 0.0
      %2135 = vmatmul.mubr.f32.gmra.mxu0 %v765
      %v2136 = vpop.f32.mrf.mxu0
      %v2137 = vadd.f32 %v572, %v2136
      %v2138 = vpop.f32.mrf.mxu0
      %2139 = vmatprep.mubr.f32.mxu0 0.0
      %2140 = vmatmul.mubr.f32.gmra.mxu0 %v768
      %v2141 = vpop.f32.mrf.mxu0
      %v2142 = vadd.f32 %v572, %v2141
      %v2143 = vpop.f32.mrf.mxu0
      %2144 = vmatprep.mubr.f32.mxu0 0.0
      %2145 = vmatmul.mubr.f32.gmra.mxu0 %v771
      %v2146 = vpop.f32.mrf.mxu0
      %v2147 = vadd.f32 %v572, %v2146
      %v2148 = vpop.f32.mrf.mxu0
      %2149 = vmatprep.mubr.f32.mxu0 0.0
      %2150 = vmatmul.mubr.f32.gmra.mxu0 %v774
      %v2151 = vpop.f32.mrf.mxu0
      %v2152 = vadd.f32 %v572, %v2151
      %v2153 = vpop.f32.mrf.mxu0
      %2154 = vmatprep.mubr.f32.mxu0 0.0
      %2155 = vmatmul.mubr.f32.gmra.mxu0 %v777
      %v2156 = vpop.f32.mrf.mxu0
      %v2157 = vadd.f32 %v572, %v2156
      %v2158 = vpop.f32.mrf.mxu0
      %2159 = vmatprep.mubr.f32.mxu0 0.0
      %2160 = vmatmul.mubr.f32.gmra.mxu0 %v780
      %v2161 = vpop.f32.mrf.mxu0
      %v2162 = vadd.f32 %v572, %v2161
      %v2163 = vpop.f32.mrf.mxu0
      %2164 = vmatprep.mubr.f32.mxu0 0.0
      %2165 = vmatmul.mubr.f32.gmra.mxu0 %v783
      %v2166 = vpop.f32.mrf.mxu0
      %v2167 = vadd.f32 %v572, %v2166
      %v2168 = vpop.f32.mrf.mxu0
      %2169 = vmatprep.mubr.f32.mxu0 0.0
      %2170 = vmatmul.mubr.f32.gmra.mxu0 %v786
      %v2171 = vpop.f32.mrf.mxu0
      %v2172 = vadd.f32 %v572, %v2171
      %v2173 = vpop.f32.mrf.mxu0
      %2174 = vmatprep.mubr.f32.mxu0 0.0
      %2175 = vmatmul.mubr.f32.gmra.mxu0 %v789
      %v2176 = vpop.f32.mrf.mxu0
      %v2177 = vadd.f32 %v572, %v2176
      %v2178 = vpop.f32.mrf.mxu0
      %2179 = vmatprep.mubr.f32.mxu0 0.0
      %2180 = vmatmul.mubr.f32.gmra.mxu0 %v792
      %v2181 = vpop.f32.mrf.mxu0
      %v2182 = vadd.f32 %v572, %v2181
      %v2183 = vpop.f32.mrf.mxu0
      %2184 = vmatprep.mubr.f32.mxu0 0.0
      %2185 = vmatmul.mubr.f32.gmra.mxu0 %v795
      %v2186 = vpop.f32.mrf.mxu0
      %v2187 = vadd.f32 %v572, %v2186
      %v2188 = vpop.f32.mrf.mxu0
      %2189 = vmatprep.mubr.f32.mxu0 0.0
      %2190 = vmatmul.mubr.f32.gmra.mxu0 %v798
      %v2191 = vpop.f32.mrf.mxu0
      %v2192 = vadd.f32 %v572, %v2191
      %v2193 = vpop.f32.mrf.mxu0
      %2194 = vmatprep.mubr.f32.mxu0 0.0
      %2195 = vmatmul.mubr.f32.gmra.mxu0 %v801
      %v2196 = vpop.f32.mrf.mxu0
      %v2197 = vadd.f32 %v572, %v2196
      %v2198 = vpop.f32.mrf.mxu0
      %2199 = vmatprep.mubr.f32.mxu0 0.0
      %2200 = vmatmul.mubr.f32.gmra.mxu0 %v804
      %v2201 = vpop.f32.mrf.mxu0
      %v2202 = vadd.f32 %v572, %v2201
      %v2203 = vpop.f32.mrf.mxu0
      %2204 = vmatprep.mubr.f32.mxu0 0.0
      %2205 = vmatmul.mubr.f32.gmra.mxu0 %v807
      %v2206 = vpop.f32.mrf.mxu0
      %v2207 = vadd.f32 %v572, %v2206
      %v2208 = vpop.f32.mrf.mxu0
      %2209 = vmatprep.mubr.f32.mxu0 0.0
      %2210 = vmatmul.mubr.f32.gmra.mxu0 %v810
      %v2211 = vpop.f32.mrf.mxu0
      %v2212 = vadd.f32 %v572, %v2211
      %v2213 = vpop.f32.mrf.mxu0
      %2214 = vmatprep.mubr.f32.mxu0 0.0
      %2215 = vmatmul.mubr.f32.gmra.mxu0 %v813
      %v2216 = vpop.f32.mrf.mxu0
      %v2217 = vadd.f32 %v572, %v2216
      %v2218 = vpop.f32.mrf.mxu0
      %2219 = vmatprep.mubr.f32.mxu0 0.0
      %2220 = vmatmul.mubr.f32.gmra.mxu0 %v816
      %v2221 = vpop.f32.mrf.mxu0
      %v2222 = vadd.f32 %v572, %v2221
      %v2223 = vpop.f32.mrf.mxu0
      %2224 = vmatprep.mubr.f32.mxu0 0.0
      %2225 = vmatmul.mubr.f32.gmra.mxu0 %v819
      %v2226 = vpop.f32.mrf.mxu0
      %v2227 = vadd.f32 %v572, %v2226
      %v2228 = vpop.f32.mrf.mxu0
      %2229 = vmatprep.mubr.f32.mxu0 0.0
      %2230 = vmatmul.mubr.f32.gmra.mxu0 %v822
      %v2231 = vpop.f32.mrf.mxu0
      %v2232 = vadd.f32 %v572, %v2231
      %v2233 = vpop.f32.mrf.mxu0
      %2234 = vmatprep.mubr.f32.mxu0 0.0
      %2235 = vmatmul.mubr.f32.gmra.mxu0 %v825
      %v2236 = vpop.f32.mrf.mxu0
      %v2237 = vadd.f32 %v572, %v2236
      %v2238 = vpop.f32.mrf.mxu0
      %2239 = vmatprep.mubr.f32.mxu0 0.0
      %2240 = vmatmul.mubr.f32.gmra.mxu0 %v828
      %v2241 = vpop.f32.mrf.mxu0
      %v2242 = vadd.f32 %v572, %v2241
      %v2243 = vpop.f32.mrf.mxu0
      %2244 = vmatprep.mubr.f32.mxu0 0.0
      %2245 = vmatmul.mubr.f32.gmra.mxu0 %v831
      %v2246 = vpop.f32.mrf.mxu0
      %v2247 = vadd.f32 %v572, %v2246
      %v2248 = vpop.f32.mrf.mxu0
      %2249 = vmatprep.mubr.f32.mxu0 0.0
      %2250 = vmatmul.mubr.f32.gmra.mxu0 %v834
      %v2251 = vpop.f32.mrf.mxu0
      %v2252 = vadd.f32 %v572, %v2251
      %v2253 = vpop.f32.mrf.mxu0
      %2254 = vmatprep.mubr.f32.mxu0 0.0
      %2255 = vmatmul.mubr.f32.gmra.mxu0 %v837
      %v2256 = vpop.f32.mrf.mxu0
      %v2257 = vadd.f32 %v572, %v2256
      %v2258 = vpop.f32.mrf.mxu0
      %2259 = vmatprep.mubr.f32.mxu0 0.0
      %2260 = vmatmul.mubr.f32.gmra.mxu0 %v840
      %v2261 = vpop.f32.mrf.mxu0
      %v2262 = vadd.f32 %v572, %v2261
      %v2263 = vpop.f32.mrf.mxu0
      %2264 = vmatprep.mubr.f32.mxu0 0.0
      %2265 = vmatmul.mubr.f32.gmra.mxu0 %v843
      %v2266 = vpop.f32.mrf.mxu0
      %v2267 = vadd.f32 %v572, %v2266
      %v2268 = vpop.f32.mrf.mxu0
      %2269 = vmatprep.mubr.f32.mxu0 0.0
      %2270 = vmatmul.mubr.f32.gmra.mxu0 %v846
      %v2271 = vpop.f32.mrf.mxu0
      %v2272 = vadd.f32 %v572, %v2271
      %v2273 = vpop.f32.mrf.mxu0
      %2274 = vmatprep.mubr.f32.mxu0 0.0
      %2275 = vmatmul.mubr.f32.gmra.mxu0 %v849
      %v2276 = vpop.f32.mrf.mxu0
      %v2277 = vadd.f32 %v572, %v2276
      %v2278 = vpop.f32.mrf.mxu0
      %2279 = vmatprep.mubr.f32.mxu0 0.0
      %2280 = vmatmul.mubr.f32.gmra.mxu0 %v852
      %v2281 = vpop.f32.mrf.mxu0
      %v2282 = vadd.f32 %v572, %v2281
      %v2283 = vpop.f32.mrf.mxu0
      %2284 = vmatprep.mubr.f32.mxu0 0.0
      %2285 = vmatmul.mubr.f32.gmra.mxu0 %v855
      %v2286 = vpop.f32.mrf.mxu0
      %v2287 = vadd.f32 %v572, %v2286
      %v2288 = vpop.f32.mrf.mxu0
      %2289 = vmatprep.mubr.f32.mxu0 0.0
      %2290 = vmatmul.mubr.f32.gmra.mxu0 %v858
      %v2291 = vpop.f32.mrf.mxu0
      %v2292 = vadd.f32 %v572, %v2291
      %v2293 = vpop.f32.mrf.mxu0
      %2294 = vmatprep.mubr.f32.mxu0 0.0
      %2295 = vmatmul.mubr.f32.gmra.mxu0 %v861
      %v2296 = vpop.f32.mrf.mxu0
      %v2297 = vadd.f32 %v572, %v2296
      %v2298 = vpop.f32.mrf.mxu0
      %2299 = vmatprep.mubr.f32.mxu0 0.0
      %2300 = vmatmul.mubr.f32.gmra.mxu0 %v864
      %v2301 = vpop.f32.mrf.mxu0
      %v2302 = vadd.f32 %v572, %v2301
      %v2303 = vpop.f32.mrf.mxu0
      %2304 = vmatprep.mubr.f32.mxu0 0.0
      %2305 = vmatmul.mubr.f32.gmra.mxu0 %v867
      %v2306 = vpop.f32.mrf.mxu0
      %v2307 = vadd.f32 %v572, %v2306
      %v2308 = vpop.f32.mrf.mxu0
      %2309 = vmatprep.mubr.f32.mxu0 0.0
      %2310 = vmatmul.mubr.f32.gmra.mxu0 %v870
      %v2311 = vpop.f32.mrf.mxu0
      %v2312 = vadd.f32 %v572, %v2311
      %v2313 = vpop.f32.mrf.mxu0
      %2314 = vmatprep.mubr.f32.mxu0 0.0
      %2315 = vmatmul.mubr.f32.gmra.mxu0 %v873
      %v2316 = vpop.f32.mrf.mxu0
      %v2317 = vadd.f32 %v572, %v2316
      %v2318 = vpop.f32.mrf.mxu0
      %2319 = vmatprep.mubr.f32.mxu0 0.0
      %2320 = vmatmul.mubr.f32.gmra.mxu0 %v876
      %v2321 = vpop.f32.mrf.mxu0
      %v2322 = vadd.f32 %v572, %v2321
      %v2323 = vpop.f32.mrf.mxu0
      %2324 = vmatprep.mubr.f32.mxu0 0.0
      %2325 = vmatmul.mubr.f32.gmra.mxu0 %v879
      %v2326 = vpop.f32.mrf.mxu0
      %v2327 = vadd.f32 %v572, %v2326
      %v2328 = vpop.f32.mrf.mxu0
      %2329 = vmatprep.mubr.f32.mxu0 0.0
      %2330 = vmatmul.mubr.f32.gmra.mxu0 %v882
      %v2331 = vpop.f32.mrf.mxu0
      %v2332 = vadd.f32 %v572, %v2331
      %v2333 = vpop.f32.mrf.mxu0
      %2334 = vmatprep.mubr.f32.mxu0 0.0
      %2335 = vmatmul.mubr.f32.gmra.mxu0 %v885
      %v2336 = vpop.f32.mrf.mxu0
      %v2337 = vadd.f32 %v572, %v2336
      %v2338 = vpop.f32.mrf.mxu0
      %2339 = vmatprep.mubr.f32.mxu0 0.0
      %2340 = vmatmul.mubr.f32.gmra.mxu0 %v888
      %v2341 = vpop.f32.mrf.mxu0
      %v2342 = vadd.f32 %v572, %v2341
      %v2343 = vpop.f32.mrf.mxu0
      %2344 = vmatprep.mubr.f32.mxu0 0.0
      %2345 = vmatmul.mubr.f32.gmra.mxu0 %v891
      %v2346 = vpop.f32.mrf.mxu0
      %v2347 = vadd.f32 %v572, %v2346
      %v2348 = vpop.f32.mrf.mxu0
      %2349 = vmatprep.mubr.f32.mxu0 0.0
      %2350 = vmatmul.mubr.f32.gmra.mxu0 %v894
      %v2351 = vpop.f32.mrf.mxu0
      %v2352 = vadd.f32 %v572, %v2351
      %v2353 = vpop.f32.mrf.mxu0
      %2354 = vmatprep.mubr.f32.mxu0 0.0
      %2355 = vmatmul.mubr.f32.gmra.mxu0 %v897
      %v2356 = vpop.f32.mrf.mxu0
      %v2357 = vadd.f32 %v572, %v2356
      %v2358 = vpop.f32.mrf.mxu0
      %2359 = vmatprep.mubr.f32.mxu0 0.0
      %2360 = vmatmul.mubr.f32.gmra.mxu0 %v900
      %v2361 = vpop.f32.mrf.mxu0
      %v2362 = vadd.f32 %v572, %v2361
      %v2363 = vpop.f32.mrf.mxu0
      %2364 = vmatprep.mubr.f32.mxu0 0.0
      %2365 = vmatmul.mubr.f32.gmra.mxu0 %v903
      %v2366 = vpop.f32.mrf.mxu0
      %v2367 = vadd.f32 %v572, %v2366
      %v2368 = vpop.f32.mrf.mxu0
      %2369 = vmatprep.mubr.f32.mxu0 0.0
      %2370 = vmatmul.mubr.f32.gmra.mxu0 %v906
      %v2371 = vpop.f32.mrf.mxu0
      %v2372 = vadd.f32 %v572, %v2371
      %v2373 = vpop.f32.mrf.mxu0
      %2374 = vmatprep.mubr.f32.mxu0 0.0
      %2375 = vmatmul.mubr.f32.gmra.mxu0 %v909
      %v2376 = vpop.f32.mrf.mxu0
      %v2377 = vadd.f32 %v572, %v2376
      %v2378 = vpop.f32.mrf.mxu0
      %2379 = vmatprep.mubr.f32.mxu0 0.0
      %2380 = vmatmul.mubr.f32.gmra.mxu0 %v912
      %v2381 = vpop.f32.mrf.mxu0
      %v2382 = vadd.f32 %v572, %v2381
      %v2383 = vpop.f32.mrf.mxu0
      %2384 = vmatprep.mubr.f32.mxu0 0.0
      %2385 = vmatmul.mubr.f32.gmra.mxu0 %v915
      %v2386 = vpop.f32.mrf.mxu0
      %v2387 = vadd.f32 %v572, %v2386
      %v2388 = vpop.f32.mrf.mxu0
      %2389 = vmatprep.mubr.f32.mxu0 0.0
      %2390 = vmatmul.mubr.f32.gmra.mxu0 %v918
      %v2391 = vpop.f32.mrf.mxu0
      %v2392 = vadd.f32 %v572, %v2391
      %v2393 = vpop.f32.mrf.mxu0
      %2394 = vmatprep.mubr.f32.mxu0 0.0
      %2395 = vmatmul.mubr.f32.gmra.mxu0 %v921
      %v2396 = vpop.f32.mrf.mxu0
      %v2397 = vadd.f32 %v572, %v2396
      %v2398 = vpop.f32.mrf.mxu0
      %2399 = vmatprep.mubr.f32.mxu0 0.0
      %2400 = vmatmul.mubr.f32.gmra.mxu0 %v924
      %v2401 = vpop.f32.mrf.mxu0
      %v2402 = vadd.f32 %v572, %v2401
      %v2403 = vpop.f32.mrf.mxu0
      %2404 = vmatprep.mubr.f32.mxu0 0.0
      %2405 = vmatmul.mubr.f32.gmra.mxu0 %v927
      %v2406 = vpop.f32.mrf.mxu0
      %v2407 = vadd.f32 %v572, %v2406
      %v2408 = vpop.f32.mrf.mxu0
      %2409 = vmatprep.mubr.f32.mxu0 0.0
      %2410 = vmatmul.mubr.f32.gmra.mxu0 %v930
      %v2411 = vpop.f32.mrf.mxu0
      %v2412 = vadd.f32 %v572, %v2411
      %v2413 = vpop.f32.mrf.mxu0
      %2414 = vmatprep.mubr.f32.mxu0 0.0
      %2415 = vmatmul.mubr.f32.gmra.mxu0 %v933
      %v2416 = vpop.f32.mrf.mxu0
      %v2417 = vadd.f32 %v572, %v2416
      %v2418 = vpop.f32.mrf.mxu0
      %2419 = vmatprep.mubr.f32.mxu0 0.0
      %2420 = vmatmul.mubr.f32.gmra.mxu0 %v936
      %v2421 = vpop.f32.mrf.mxu0
      %v2422 = vadd.f32 %v572, %v2421
      %v2423 = vpop.f32.mrf.mxu0
      %2424 = vmatprep.mubr.f32.mxu0 0.0
      %2425 = vmatmul.mubr.f32.gmra.mxu0 %v939
      %v2426 = vpop.f32.mrf.mxu0
      %v2427 = vadd.f32 %v572, %v2426
      %v2428 = vpop.f32.mrf.mxu0
      %2429 = vmatprep.mubr.f32.mxu0 0.0
      %2430 = vmatmul.mubr.f32.gmra.mxu0 %v942
      %v2431 = vpop.f32.mrf.mxu0
      %v2432 = vadd.f32 %v572, %v2431
      %v2433 = vpop.f32.mrf.mxu0
      %2434 = vmatprep.mubr.f32.mxu0 0.0
      %2435 = vmatmul.mubr.f32.gmra.mxu0 %v945
      %v2436 = vpop.f32.mrf.mxu0
      %v2437 = vadd.f32 %v572, %v2436
      %v2438 = vpop.f32.mrf.mxu0
      %2439 = vmatprep.mubr.f32.mxu0 0.0
      %2440 = vmatmul.mubr.f32.gmra.mxu0 %v948
      %v2441 = vpop.f32.mrf.mxu0
      %v2442 = vadd.f32 %v572, %v2441
      %v2443 = vpop.f32.mrf.mxu0
      %2444 = vmatprep.mubr.f32.mxu0 0.0
      %2445 = vmatmul.mubr.f32.gmra.mxu0 %v951
      %v2446 = vpop.f32.mrf.mxu0
      %v2447 = vadd.f32 %v572, %v2446
      %v2448 = vpop.f32.mrf.mxu0
      %2449 = vmatprep.mubr.f32.mxu0 0.0
      %2450 = vmatmul.mubr.f32.gmra.mxu0 %v954
      %v2451 = vpop.f32.mrf.mxu0
      %v2452 = vadd.f32 %v572, %v2451
      %v2453 = vpop.f32.mrf.mxu0
      %2454 = vmatprep.mubr.f32.mxu0 0.0
      %2455 = vmatmul.mubr.f32.gmra.mxu0 %v957
      %v2456 = vpop.f32.mrf.mxu0
      %v2457 = vadd.f32 %v572, %v2456
      %v2458 = vpop.f32.mrf.mxu0
      %2459 = vmatprep.mubr.f32.mxu0 0.0
      %2460 = vmatmul.mubr.f32.gmra.mxu0 %v960
      %v2461 = vpop.f32.mrf.mxu0
      %v2462 = vadd.f32 %v572, %v2461
      %v2463 = vpop.f32.mrf.mxu0
      %2464 = vmatprep.mubr.f32.mxu0 0.0
      %2465 = vmatmul.mubr.f32.gmra.mxu0 %v963
      %v2466 = vpop.f32.mrf.mxu0
      %v2467 = vadd.f32 %v572, %v2466
      %v2468 = vpop.f32.mrf.mxu0
      %2469 = vmatprep.mubr.f32.mxu0 0.0
      %2470 = vmatmul.mubr.f32.gmra.mxu0 %v966
      %v2471 = vpop.f32.mrf.mxu0
      %v2472 = vadd.f32 %v572, %v2471
      %v2473 = vpop.f32.mrf.mxu0
      %2474 = vmatprep.mubr.f32.mxu0 0.0
      %2475 = vmatmul.mubr.f32.gmra.mxu0 %v969
      %v2476 = vpop.f32.mrf.mxu0
      %v2477 = vadd.f32 %v572, %v2476
      %v2478 = vpop.f32.mrf.mxu0
      %2479 = vmatprep.mubr.f32.mxu0 0.0
      %2480 = vmatmul.mubr.f32.gmra.mxu0 %v972
      %v2481 = vpop.f32.mrf.mxu0
      %v2482 = vadd.f32 %v572, %v2481
      %v2483 = vpop.f32.mrf.mxu0
      %2484 = vmatprep.mubr.f32.mxu0 0.0
      %2485 = vmatmul.mubr.f32.gmra.mxu0 %v975
      %v2486 = vpop.f32.mrf.mxu0
      %v2487 = vadd.f32 %v572, %v2486
      %v2488 = vpop.f32.mrf.mxu0
      %2489 = vmatprep.mubr.f32.mxu0 0.0
      %2490 = vmatmul.mubr.f32.gmra.mxu0 %v978
      %v2491 = vpop.f32.mrf.mxu0
      %v2492 = vadd.f32 %v572, %v2491
      %v2493 = vpop.f32.mrf.mxu0
      %2494 = vmatprep.mubr.f32.mxu0 0.0
      %2495 = vmatmul.mubr.f32.gmra.mxu0 %v981
      %v2496 = vpop.f32.mrf.mxu0
      %v2497 = vadd.f32 %v572, %v2496
      %v2498 = vpop.f32.mrf.mxu0
      %2499 = vmatprep.mubr.f32.mxu0 0.0
      %2500 = vmatmul.mubr.f32.gmra.mxu0 %v984
      %v2501 = vpop.f32.mrf.mxu0
      %v2502 = vadd.f32 %v572, %v2501
      %v2503 = vpop.f32.mrf.mxu0
      %2504 = vmatprep.mubr.f32.mxu0 0.0
      %2505 = vmatmul.mubr.f32.gmra.mxu0 %v987
      %v2506 = vpop.f32.mrf.mxu0
      %v2507 = vadd.f32 %v572, %v2506
      %v2508 = vpop.f32.mrf.mxu0
      %2509 = vmatprep.mubr.f32.mxu0 0.0
      %2510 = vmatmul.mubr.f32.gmra.mxu0 %v990
      %v2511 = vpop.f32.mrf.mxu0
      %v2512 = vadd.f32 %v572, %v2511
      %v2513 = vpop.f32.mrf.mxu0
      %2514 = vmatprep.mubr.f32.mxu0 0.0
      %2515 = vmatmul.mubr.f32.gmra.mxu0 %v993
      %v2516 = vpop.f32.mrf.mxu0
      %v2517 = vadd.f32 %v572, %v2516
      %v2518 = vpop.f32.mrf.mxu0
      %2519 = vmatprep.mubr.f32.mxu0 0.0
      %2520 = vmatmul.mubr.f32.gmra.mxu0 %v996
      %v2521 = vpop.f32.mrf.mxu0
      %v2522 = vadd.f32 %v572, %v2521
      %v2523 = vpop.f32.mrf.mxu0
      %2524 = vmatprep.mubr.f32.mxu0 0.0
      %2525 = vmatmul.mubr.f32.gmra.mxu0 %v999
      %v2526 = vpop.f32.mrf.mxu0
      %v2527 = vadd.f32 %v572, %v2526
      %v2528 = vpop.f32.mrf.mxu0
      %2529 = vmatprep.mubr.f32.mxu0 0.0
      %2530 = vmatmul.mubr.f32.gmra.mxu0 %v1002
      %v2531 = vpop.f32.mrf.mxu0
      %v2532 = vadd.f32 %v572, %v2531
      %v2533 = vpop.f32.mrf.mxu0
      %2534 = vmatprep.mubr.f32.mxu0 0.0
      %2535 = vmatmul.mubr.f32.gmra.mxu0 %v1005
      %v2536 = vpop.f32.mrf.mxu0
      %v2537 = vadd.f32 %v572, %v2536
      %v2538 = vpop.f32.mrf.mxu0
      %2539 = vmatprep.mubr.f32.mxu0 0.0
      %2540 = vmatmul.mubr.f32.gmra.mxu0 %v1008
      %v2541 = vpop.f32.mrf.mxu0
      %v2542 = vadd.f32 %v572, %v2541
      %v2543 = vpop.f32.mrf.mxu0
      %2544 = vmatprep.mubr.f32.mxu0 0.0
      %2545 = vmatmul.mubr.f32.gmra.mxu0 %v1011
      %v2546 = vpop.f32.mrf.mxu0
      %v2547 = vadd.f32 %v572, %v2546
      %v2548 = vpop.f32.mrf.mxu0
      %2549 = vmatprep.mubr.f32.mxu0 0.0
      %2550 = vmatmul.mubr.f32.gmra.mxu0 %v1014
      %v2551 = vpop.f32.mrf.mxu0
      %v2552 = vadd.f32 %v572, %v2551
      %v2553 = vpop.f32.mrf.mxu0
      %2554 = vmatprep.mubr.f32.mxu0 0.0
      %2555 = vmatmul.mubr.f32.gmra.mxu0 %v1017
      %v2556 = vpop.f32.mrf.mxu0
      %v2557 = vadd.f32 %v572, %v2556
      %v2558 = vpop.f32.mrf.mxu0
      %2559 = vmatprep.mubr.f32.mxu0 0.0
      %2560 = vmatmul.mubr.f32.gmra.mxu0 %v1020
      %v2561 = vpop.f32.mrf.mxu0
      %v2562 = vadd.f32 %v572, %v2561
      %v2563 = vpop.f32.mrf.mxu0
      %2564 = vmatprep.mubr.f32.mxu0 0.0
      %2565 = vmatmul.mubr.f32.gmra.mxu0 %v1023
      %v2566 = vpop.f32.mrf.mxu0
      %v2567 = vadd.f32 %v572, %v2566
      %v2568 = vpop.f32.mrf.mxu0
      %2569 = vmatprep.mubr.f32.mxu0 0.0
      %2570 = vmatmul.mubr.f32.gmra.mxu0 %v1026
      %v2571 = vpop.f32.mrf.mxu0
      %v2572 = vadd.f32 %v572, %v2571
      %v2573 = vpop.f32.mrf.mxu0
      %2574 = vmatprep.mubr.f32.mxu0 0.0
      %2575 = vmatmul.mubr.f32.gmra.mxu0 %v1029
      %v2576 = vpop.f32.mrf.mxu0
      %v2577 = vadd.f32 %v572, %v2576
      %v2578 = vpop.f32.mrf.mxu0
      %2579 = vmatprep.mubr.f32.mxu0 0.0
      %2580 = vmatmul.mubr.f32.gmra.mxu0 %v1032
      %v2581 = vpop.f32.mrf.mxu0
      %v2582 = vadd.f32 %v572, %v2581
      %v2583 = vpop.f32.mrf.mxu0
      %2584 = vmatprep.mubr.f32.mxu0 0.0
      %2585 = vmatmul.mubr.f32.gmra.mxu0 %v1035
      %v2586 = vpop.f32.mrf.mxu0
      %v2587 = vadd.f32 %v572, %v2586
      %v2588 = vpop.f32.mrf.mxu0
      %2589 = vmatprep.mubr.f32.mxu0 0.0
      %2590 = vmatmul.mubr.f32.gmra.mxu0 %v1038
      %v2591 = vpop.f32.mrf.mxu0
      %v2592 = vadd.f32 %v572, %v2591
      %v2593 = vpop.f32.mrf.mxu0
      %2594 = vmatprep.mubr.f32.mxu0 0.0
      %2595 = vmatmul.mubr.f32.gmra.mxu0 %v1041
      %v2596 = vpop.f32.mrf.mxu0
      %v2597 = vadd.f32 %v572, %v2596
      %v2598 = vpop.f32.mrf.mxu0
      %2599 = vmatprep.mubr.f32.mxu0 0.0
      %2600 = vmatmul.mubr.f32.gmra.mxu0 %v1044
      %v2601 = vpop.f32.mrf.mxu0
      %v2602 = vadd.f32 %v572, %v2601
      %v2603 = vpop.f32.mrf.mxu0
      %2604 = vmatprep.mubr.f32.mxu0 0.0
      %2605 = vmatmul.mubr.f32.gmra.mxu0 %v1047
      %v2606 = vpop.f32.mrf.mxu0
      %v2607 = vadd.f32 %v572, %v2606
      %v2608 = vpop.f32.mrf.mxu0
      %2609 = vmatprep.mubr.f32.mxu0 0.0
      %2610 = vmatmul.mubr.f32.gmra.mxu0 %v1050
      %v2611 = vpop.f32.mrf.mxu0
      %v2612 = vadd.f32 %v572, %v2611
      %v2613 = vpop.f32.mrf.mxu0
      %2614 = vmatprep.mubr.f32.mxu0 0.0
      %2615 = vmatmul.mubr.f32.gmra.mxu0 %v1053
      %v2616 = vpop.f32.mrf.mxu0
      %v2617 = vadd.f32 %v572, %v2616
      %v2618 = vpop.f32.mrf.mxu0
      %2619 = vmatprep.mubr.f32.mxu0 0.0
      %2620 = vmatmul.mubr.f32.gmra.mxu0 %v1056
      %v2621 = vpop.f32.mrf.mxu0
      %v2622 = vadd.f32 %v572, %v2621
      %v2623 = vpop.f32.mrf.mxu0
      %2624 = vmatprep.mubr.f32.mxu0 0.0
      %2625 = vmatmul.mubr.f32.gmra.mxu0 %v1059
      %v2626 = vpop.f32.mrf.mxu0
      %v2627 = vadd.f32 %v572, %v2626
      %v2628 = vpop.f32.mrf.mxu0
      %2629 = vmatprep.mubr.f32.mxu0 0.0
      %2630 = vmatmul.mubr.f32.gmra.mxu0 %v1062
      %v2631 = vpop.f32.mrf.mxu0
      %v2632 = vadd.f32 %v572, %v2631
      %v2633 = vpop.f32.mrf.mxu0
      %2634 = vmatprep.mubr.f32.mxu0 0.0
      %2635 = vmatmul.mubr.f32.gmra.mxu0 %v1065
      %v2636 = vpop.f32.mrf.mxu0
      %v2637 = vadd.f32 %v572, %v2636
      %v2638 = vpop.f32.mrf.mxu0
      %2639 = vmatprep.mubr.f32.mxu0 0.0
      %2640 = vmatmul.mubr.f32.gmra.mxu0 %v1068
      %v2641 = vpop.f32.mrf.mxu0
      %v2642 = vadd.f32 %v572, %v2641
      %v2643 = vpop.f32.mrf.mxu0
      %2644 = vmatprep.mubr.f32.mxu0 0.0
      %2645 = vmatmul.mubr.f32.gmra.mxu0 %v1071
      %v2646 = vpop.f32.mrf.mxu0
      %v2647 = vadd.f32 %v572, %v2646
      %v2648 = vpop.f32.mrf.mxu0
      %2649 = vmatprep.mubr.f32.mxu0 0.0
      %2650 = vmatmul.mubr.f32.gmra.mxu0 %v1074
      %v2651 = vpop.f32.mrf.mxu0
      %v2652 = vadd.f32 %v572, %v2651
      %v2653 = vpop.f32.mrf.mxu0
      %2654 = vmatprep.mubr.f32.mxu0 0.0
      %2655 = vmatmul.mubr.f32.gmra.mxu0 %v1077
      %v2656 = vpop.f32.mrf.mxu0
      %v2657 = vadd.f32 %v572, %v2656
      %v2658 = vpop.f32.mrf.mxu0
      %2659 = vmatprep.mubr.f32.mxu0 0.0
      %2660 = vmatmul.mubr.f32.gmra.mxu0 %v1080
      %v2661 = vpop.f32.mrf.mxu0
      %v2662 = vadd.f32 %v572, %v2661
      %v2663 = vpop.f32.mrf.mxu0
      %2664 = vmatprep.mubr.f32.mxu0 0.0
      %2665 = vmatmul.mubr.f32.gmra.mxu0 %v1083
      %v2666 = vpop.f32.mrf.mxu0
      %v2667 = vadd.f32 %v572, %v2666
      %v2668 = vpop.f32.mrf.mxu0
      %2669 = vmatprep.mubr.f32.mxu0 0.0
      %2670 = vmatmul.mubr.f32.gmra.mxu0 %v1086
      %v2671 = vpop.f32.mrf.mxu0
      %v2672 = vadd.f32 %v572, %v2671
      %v2673 = vpop.f32.mrf.mxu0
      %2674 = vmatprep.mubr.f32.mxu0 0.0
      %2675 = vmatmul.mubr.f32.gmra.mxu0 %v1089
      %v2676 = vpop.f32.mrf.mxu0
      %v2677 = vadd.f32 %v572, %v2676
      %v2678 = vpop.f32.mrf.mxu0
      %2679 = vmatprep.mubr.f32.mxu0 0.0
      %2680 = vmatmul.mubr.f32.gmra.mxu0 %v1092
      %v2681 = vpop.f32.mrf.mxu0
      %v2682 = vadd.f32 %v572, %v2681
      %v2683 = vpop.f32.mrf.mxu0
      %2684 = vmatprep.mubr.f32.mxu0 0.0
      %2685 = vmatmul.mubr.f32.gmra.mxu0 %v1095
      %v2686 = vpop.f32.mrf.mxu0
      %v2687 = vadd.f32 %v572, %v2686
      %v2688 = vpop.f32.mrf.mxu0
      %2689 = vmatprep.mubr.f32.mxu0 0.0
      %2690 = vmatmul.mubr.f32.gmra.mxu0 %v1098
      %v2691 = vpop.f32.mrf.mxu0
      %v2692 = vadd.f32 %v572, %v2691
      %v2693 = vpop.f32.mrf.mxu0
      %2694 = vmatprep.mubr.f32.mxu0 0.0
      %2695 = vmatmul.mubr.f32.gmra.mxu0 %v1101
      %v2696 = vpop.f32.mrf.mxu0
      %v2697 = vadd.f32 %v572, %v2696
      %v2698 = vpop.f32.mrf.mxu0
      %2699 = vmatprep.mubr.f32.mxu0 0.0
      %2700 = vmatmul.mubr.f32.gmra.mxu0 %v1104
      %v2701 = vpop.f32.mrf.mxu0
      %v2702 = vadd.f32 %v572, %v2701
      %v2703 = vpop.f32.mrf.mxu0
      %2704 = vmatprep.mubr.f32.mxu0 0.0
      %2705 = vmatmul.mubr.f32.gmra.mxu0 %v1107
      %v2706 = vpop.f32.mrf.mxu0
      %v2707 = vadd.f32 %v572, %v2706
      %v2708 = vpop.f32.mrf.mxu0
      %2709 = vmatprep.mubr.f32.mxu0 0.0
      %2710 = vmatmul.mubr.f32.gmra.mxu0 %v1110
      %v2711 = vpop.f32.mrf.mxu0
      %v2712 = vadd.f32 %v572, %v2711
      %v2713 = vpop.f32.mrf.mxu0
      %2714 = vmatprep.mubr.f32.mxu0 0.0
      %2715 = vmatmul.mubr.f32.gmra.mxu0 %v1113
      %v2716 = vpop.f32.mrf.mxu0
      %v2717 = vadd.f32 %v572, %v2716
      %v2718 = vpop.f32.mrf.mxu0
      %2719 = vmatprep.mubr.f32.mxu0 0.0
      %2720 = vmatmul.mubr.f32.gmra.mxu0 %v1116
      %v2721 = vpop.f32.mrf.mxu0
      %v2722 = vadd.f32 %v572, %v2721
      %v2723 = vpop.f32.mrf.mxu0
      %2724 = vmatprep.mubr.f32.mxu0 0.0
      %2725 = vmatmul.mubr.f32.gmra.mxu0 %v1119
      %v2726 = vpop.f32.mrf.mxu0
      %v2727 = vadd.f32 %v572, %v2726
      %v2728 = vpop.f32.mrf.mxu0
      %2729 = vmatprep.mubr.f32.mxu0 0.0
      %2730 = vmatmul.mubr.f32.gmra.mxu0 %v1122
      %v2731 = vpop.f32.mrf.mxu0
      %v2732 = vadd.f32 %v572, %v2731
      %v2733 = vpop.f32.mrf.mxu0
      %2734 = vmatprep.mubr.f32.mxu0 0.0
      %2735 = vmatmul.mubr.f32.gmra.mxu0 %v1125
      %v2736 = vpop.f32.mrf.mxu0
      %v2737 = vadd.f32 %v572, %v2736
      %v2738 = vpop.f32.mrf.mxu0
      %2739 = vmatprep.mubr.f32.mxu0 0.0
      %2740 = vmatmul.mubr.f32.gmra.mxu0 %v1128
      %v2741 = vpop.f32.mrf.mxu0
      %v2742 = vadd.f32 %v572, %v2741
      %v2743 = vpop.f32.mrf.mxu0
      %2744 = vmatprep.mubr.f32.mxu0 0.0
      %2745 = vmatmul.mubr.f32.gmra.mxu0 %v1131
      %v2746 = vpop.f32.mrf.mxu0
      %v2747 = vadd.f32 %v572, %v2746
      %v2748 = vpop.f32.mrf.mxu0
      %2749 = vmatprep.mubr.f32.mxu0 0.0
      %2750 = vmatmul.mubr.f32.gmra.mxu0 %v1134
      %v2751 = vpop.f32.mrf.mxu0
      %v2752 = vadd.f32 %v572, %v2751
      %v2753 = vpop.f32.mrf.mxu0
      %2754 = vmatprep.mubr.f32.mxu0 0.0
      %2755 = vmatmul.mubr.f32.gmra.mxu0 %v1137
      %v2756 = vpop.f32.mrf.mxu0
      %v2757 = vadd.f32 %v572, %v2756
      %v2758 = vpop.f32.mrf.mxu0
      %2759 = vmatprep.mubr.f32.mxu0 0.0
      %2760 = vmatmul.mubr.f32.gmra.mxu0 %v1140
      %v2761 = vpop.f32.mrf.mxu0
      %v2762 = vadd.f32 %v572, %v2761
      %v2763 = vpop.f32.mrf.mxu0
      %2764 = vmatprep.mubr.f32.mxu0 0.0
      %2765 = vmatmul.mubr.f32.gmra.mxu0 %v1143
      %v2766 = vpop.f32.mrf.mxu0
      %v2767 = vadd.f32 %v572, %v2766
      %v2768 = vpop.f32.mrf.mxu0
      %2769 = vmatprep.mubr.f32.mxu0 0.0
      %2770 = vmatmul.mubr.f32.gmra.mxu0 %v1146
      %v2771 = vpop.f32.mrf.mxu0
      %v2772 = vadd.f32 %v572, %v2771
      %v2773 = vpop.f32.mrf.mxu0
      %2774 = vmatprep.mubr.f32.mxu0 0.0
      %2775 = vmatmul.mubr.f32.gmra.mxu0 %v1149
      %v2776 = vpop.f32.mrf.mxu0
      %v2777 = vadd.f32 %v572, %v2776
      %v2778 = vpop.f32.mrf.mxu0
      %2779 = vmatprep.mubr.f32.mxu0 0.0
      %2780 = vmatmul.mubr.f32.gmra.mxu0 %v1152
      %v2781 = vpop.f32.mrf.mxu0
      %v2782 = vadd.f32 %v572, %v2781
      %v2783 = vpop.f32.mrf.mxu0
      %2784 = vmatprep.mubr.f32.mxu0 0.0
      %2785 = vmatmul.mubr.f32.gmra.mxu0 %v1155
      %v2786 = vpop.f32.mrf.mxu0
      %v2787 = vadd.f32 %v572, %v2786
      %v2788 = vpop.f32.mrf.mxu0
      %2789 = vmatprep.mubr.f32.mxu0 0.0
      %2790 = vmatmul.mubr.f32.gmra.mxu0 %v1158
      %v2791 = vpop.f32.mrf.mxu0
      %v2792 = vadd.f32 %v572, %v2791
      %v2793 = vpop.f32.mrf.mxu0
      %2794 = vmatprep.mubr.f32.mxu0 0.0
      %2795 = vmatmul.mubr.f32.gmra.mxu0 %v1161
      %v2796 = vpop.f32.mrf.mxu0
      %v2797 = vadd.f32 %v572, %v2796
      %v2798 = vpop.f32.mrf.mxu0
      %2799 = vmatprep.mubr.f32.mxu0 0.0
      %2800 = vmatmul.mubr.f32.gmra.mxu0 %v1164
      %v2801 = vpop.f32.mrf.mxu0
      %v2802 = vadd.f32 %v572, %v2801
      %v2803 = vpop.f32.mrf.mxu0
      %2804 = vmatprep.mubr.f32.mxu0 0.0
      %2805 = vmatmul.mubr.f32.gmra.mxu0 %v1167
      %v2806 = vpop.f32.mrf.mxu0
      %v2807 = vadd.f32 %v572, %v2806
      %v2808 = vpop.f32.mrf.mxu0
      %2809 = vmatprep.mubr.f32.mxu0 0.0
      %2810 = vmatmul.mubr.f32.gmra.mxu0 %v1170
      %v2811 = vpop.f32.mrf.mxu0
      %v2812 = vadd.f32 %v572, %v2811
      %v2813 = vpop.f32.mrf.mxu0
      %2814 = vmatprep.mubr.f32.mxu0 0.0
      %2815 = vmatmul.mubr.f32.gmra.mxu0 %v1173
      %v2816 = vpop.f32.mrf.mxu0
      %v2817 = vadd.f32 %v572, %v2816
      %v2818 = vpop.f32.mrf.mxu0
      %2819 = vmatprep.mubr.f32.mxu0 0.0
      %2820 = vmatmul.mubr.f32.gmra.mxu0 %v1176
      %v2821 = vpop.f32.mrf.mxu0
      %v2822 = vadd.f32 %v572, %v2821
      %v2823 = vpop.f32.mrf.mxu0
      %2824 = vmatprep.mubr.f32.mxu0 0.0
      %2825 = vmatmul.mubr.f32.gmra.mxu0 %v1179
      %v2826 = vpop.f32.mrf.mxu0
      %v2827 = vadd.f32 %v572, %v2826
      %v2828 = vpop.f32.mrf.mxu0
      %2829 = vmatprep.mubr.f32.mxu0 0.0
      %2830 = vmatmul.mubr.f32.gmra.mxu0 %v1182
      %v2831 = vpop.f32.mrf.mxu0
      %v2832 = vadd.f32 %v572, %v2831
      %v2833 = vpop.f32.mrf.mxu0
      %2834 = vmatprep.mubr.f32.mxu0 0.0
      %2835 = vmatmul.mubr.f32.gmra.mxu0 %v1185
      %v2836 = vpop.f32.mrf.mxu0
      %v2837 = vadd.f32 %v572, %v2836
      %v2838 = vpop.f32.mrf.mxu0
      %2839 = vmatprep.mubr.f32.mxu0 0.0
      %2840 = vmatmul.mubr.f32.gmra.mxu0 %v1188
      %v2841 = vpop.f32.mrf.mxu0
      %v2842 = vadd.f32 %v572, %v2841
      %v2843 = vpop.f32.mrf.mxu0
      %2844 = vmatprep.mubr.f32.mxu0 0.0
      %2845 = vmatmul.mubr.f32.gmra.mxu0 %v1191
      %v2846 = vpop.f32.mrf.mxu0
      %v2847 = vadd.f32 %v572, %v2846
      %v2848 = vpop.f32.mrf.mxu0
      %2849 = vmatprep.mubr.f32.mxu0 0.0
      %2850 = vmatmul.mubr.f32.gmra.mxu0 %v1194
      %v2851 = vpop.f32.mrf.mxu0
      %v2852 = vadd.f32 %v572, %v2851
      %v2853 = vpop.f32.mrf.mxu0
      %2854 = vmatprep.mubr.f32.mxu0 0.0
      %2855 = vmatmul.mubr.f32.gmra.mxu0 %v1197
      %v2856 = vpop.f32.mrf.mxu0
      %v2857 = vadd.f32 %v572, %v2856
      %v2858 = vpop.f32.mrf.mxu0
      %2859 = vmatprep.mubr.f32.mxu0 0.0
      %2860 = vmatmul.mubr.f32.gmra.mxu0 %v1200
      %v2861 = vpop.f32.mrf.mxu0
      %v2862 = vadd.f32 %v572, %v2861
      %v2863 = vpop.f32.mrf.mxu0
      %2864 = vmatprep.mubr.f32.mxu0 0.0
      %2865 = vmatmul.mubr.f32.gmra.mxu0 %v1203
      %v2866 = vpop.f32.mrf.mxu0
      %v2867 = vadd.f32 %v572, %v2866
      %v2868 = vpop.f32.mrf.mxu0
      %2869 = vmatprep.mubr.f32.mxu0 0.0
      %2870 = vmatmul.mubr.f32.gmra.mxu0 %v1206
      %v2871 = vpop.f32.mrf.mxu0
      %v2872 = vadd.f32 %v572, %v2871
      %v2873 = vpop.f32.mrf.mxu0
      %2874 = vmatprep.mubr.f32.mxu0 0.0
      %2875 = vmatmul.mubr.f32.gmra.mxu0 %v1209
      %v2876 = vpop.f32.mrf.mxu0
      %v2877 = vadd.f32 %v572, %v2876
      %v2878 = vpop.f32.mrf.mxu0
      %2879 = vmatprep.mubr.f32.mxu0 0.0
      %2880 = vmatmul.mubr.f32.gmra.mxu0 %v1212
      %v2881 = vpop.f32.mrf.mxu0
      %v2882 = vadd.f32 %v572, %v2881
      %v2883 = vpop.f32.mrf.mxu0
      %2884 = vmatprep.mubr.f32.mxu0 0.0
      %2885 = vmatmul.mubr.f32.gmra.mxu0 %v1215
      %v2886 = vpop.f32.mrf.mxu0
      %v2887 = vadd.f32 %v572, %v2886
      %v2888 = vpop.f32.mrf.mxu0
      %2889 = vmatprep.mubr.f32.mxu0 0.0
      %2890 = vmatmul.mubr.f32.gmra.mxu0 %v1218
      %v2891 = vpop.f32.mrf.mxu0
      %v2892 = vadd.f32 %v572, %v2891
      %v2893 = vpop.f32.mrf.mxu0
      %2894 = vmatprep.mubr.f32.mxu0 0.0
      %2895 = vmatmul.mubr.f32.gmra.mxu0 %v1221
      %v2896 = vpop.f32.mrf.mxu0
      %v2897 = vadd.f32 %v572, %v2896
      %v2898 = vpop.f32.mrf.mxu0
      %2899 = vmatprep.mubr.f32.mxu0 0.0
      %2900 = vmatmul.mubr.f32.gmra.mxu0 %v1224
      %v2901 = vpop.f32.mrf.mxu0
      %v2902 = vadd.f32 %v572, %v2901
      %v2903 = vpop.f32.mrf.mxu0
      %2904 = vmatprep.mubr.f32.mxu0 0.0
      %2905 = vmatmul.mubr.f32.gmra.mxu0 %v1227
      %v2906 = vpop.f32.mrf.mxu0
      %v2907 = vadd.f32 %v572, %v2906
      %v2908 = vpop.f32.mrf.mxu0
      %2909 = vmatprep.mubr.f32.mxu0 0.0
      %2910 = vmatmul.mubr.f32.gmra.mxu0 %v1230
      %v2911 = vpop.f32.mrf.mxu0
      %v2912 = vadd.f32 %v572, %v2911
      %v2913 = vpop.f32.mrf.mxu0
      %2914 = vmatprep.mubr.f32.mxu0 0.0
      %2915 = vmatmul.mubr.f32.gmra.mxu0 %v1233
      %v2916 = vpop.f32.mrf.mxu0
      %v2917 = vadd.f32 %v572, %v2916
      %v2918 = vpop.f32.mrf.mxu0
      %2919 = vmatprep.mubr.f32.mxu0 0.0
      %2920 = vmatmul.mubr.f32.gmra.mxu0 %v1236
      %v2921 = vpop.f32.mrf.mxu0
      %v2922 = vadd.f32 %v572, %v2921
      %v2923 = vpop.f32.mrf.mxu0
      %2924 = vmatprep.mubr.f32.mxu0 0.0
      %2925 = vmatmul.mubr.f32.gmra.mxu0 %v1239
      %v2926 = vpop.f32.mrf.mxu0
      %v2927 = vadd.f32 %v572, %v2926
      %v2928 = vpop.f32.mrf.mxu0
      %2929 = vmatprep.mubr.f32.mxu0 0.0
      %2930 = vmatmul.mubr.f32.gmra.mxu0 %v1242
      %v2931 = vpop.f32.mrf.mxu0
      %v2932 = vadd.f32 %v572, %v2931
      %v2933 = vpop.f32.mrf.mxu0
      %2934 = vmatprep.mubr.f32.mxu0 0.0
      %2935 = vmatmul.mubr.f32.gmra.mxu0 %v1245
      %v2936 = vpop.f32.mrf.mxu0
      %v2937 = vadd.f32 %v572, %v2936
      %v2938 = vpop.f32.mrf.mxu0
      %2939 = vmatprep.mubr.f32.mxu0 0.0
      %2940 = vmatmul.mubr.f32.gmra.mxu0 %v1248
      %v2941 = vpop.f32.mrf.mxu0
      %v2942 = vadd.f32 %v572, %v2941
      %v2943 = vpop.f32.mrf.mxu0
      %2944 = vmatprep.mubr.f32.mxu0 0.0
      %2945 = vmatmul.mubr.f32.gmra.mxu0 %v1251
      %v2946 = vpop.f32.mrf.mxu0
      %v2947 = vadd.f32 %v572, %v2946
      %v2948 = vpop.f32.mrf.mxu0
      %2949 = vmatprep.mubr.f32.mxu0 0.0
      %2950 = vmatmul.mubr.f32.gmra.mxu0 %v1254
      %v2951 = vpop.f32.mrf.mxu0
      %v2952 = vadd.f32 %v572, %v2951
      %v2953 = vpop.f32.mrf.mxu0
      %2954 = vmatprep.mubr.f32.mxu0 0.0
      %2955 = vmatmul.mubr.f32.gmra.mxu0 %v1257
      %v2956 = vpop.f32.mrf.mxu0
      %v2957 = vadd.f32 %v572, %v2956
      %v2958 = vpop.f32.mrf.mxu0
      %2959 = vmatprep.mubr.f32.mxu0 0.0
      %2960 = vmatmul.mubr.f32.gmra.mxu0 %v1260
      %v2961 = vpop.f32.mrf.mxu0
      %v2962 = vadd.f32 %v572, %v2961
      %v2963 = vpop.f32.mrf.mxu0
      %2964 = vmatprep.mubr.f32.mxu0 0.0
      %2965 = vmatmul.mubr.f32.gmra.mxu0 %v1263
      %v2966 = vpop.f32.mrf.mxu0
      %v2967 = vadd.f32 %v572, %v2966
      %v2968 = vpop.f32.mrf.mxu0
      %2969 = vmatprep.mubr.f32.mxu0 0.0
      %2970 = vmatmul.mubr.f32.gmra.mxu0 %v1266
      %v2971 = vpop.f32.mrf.mxu0
      %v2972 = vadd.f32 %v572, %v2971
      %v2973 = vpop.f32.mrf.mxu0
      %2974 = vmatprep.mubr.f32.mxu0 0.0
      %2975 = vmatmul.mubr.f32.gmra.mxu0 %v1269
      %v2976 = vpop.f32.mrf.mxu0
      %v2977 = vadd.f32 %v572, %v2976
      %v2978 = vpop.f32.mrf.mxu0
      %2979 = vmatprep.mubr.f32.mxu0 0.0
      %2980 = vmatmul.mubr.f32.gmra.mxu0 %v1272
      %v2981 = vpop.f32.mrf.mxu0
      %v2982 = vadd.f32 %v572, %v2981
      %v2983 = vpop.f32.mrf.mxu0
      %2984 = vmatprep.mubr.f32.mxu0 0.0
      %2985 = vmatmul.mubr.f32.gmra.mxu0 %v1275
      %v2986 = vpop.f32.mrf.mxu0
      %v2987 = vadd.f32 %v572, %v2986
      %v2988 = vpop.f32.mrf.mxu0
      %2989 = vmatprep.mubr.f32.mxu0 0.0
      %2990 = vmatmul.mubr.f32.gmra.mxu0 %v1278
      %v2991 = vpop.f32.mrf.mxu0
      %v2992 = vadd.f32 %v572, %v2991
      %v2993 = vpop.f32.mrf.mxu0
      %2994 = vmatprep.mubr.f32.mxu0 0.0
      %2995 = vmatmul.mubr.f32.gmra.mxu0 %v1281
      %v2996 = vpop.f32.mrf.mxu0
      %v2997 = vadd.f32 %v572, %v2996
      %v2998 = vpop.f32.mrf.mxu0
      %2999 = vmatprep.mubr.f32.mxu0 0.0
      %3000 = vmatmul.mubr.f32.gmra.mxu0 %v1284
      %v3001 = vpop.f32.mrf.mxu0
      %v3002 = vadd.f32 %v572, %v3001
      %v3003 = vpop.f32.mrf.mxu0
      %3004 = vmatprep.mubr.f32.mxu0 0.0
      %3005 = vmatmul.mubr.f32.gmra.mxu0 %v1287
      %v3006 = vpop.f32.mrf.mxu0
      %v3007 = vadd.f32 %v572, %v3006
      %v3008 = vpop.f32.mrf.mxu0
      %3009 = vmatprep.mubr.f32.mxu0 0.0
      %3010 = vmatmul.mubr.f32.gmra.mxu0 %v1290
      %v3011 = vpop.f32.mrf.mxu0
      %v3012 = vadd.f32 %v572, %v3011
      %v3013 = vpop.f32.mrf.mxu0
      %3014 = vmatprep.mubr.f32.mxu0 0.0
      %3015 = vmatmul.mubr.f32.gmra.mxu0 %v1293
      %v3016 = vpop.f32.mrf.mxu0
      %v3017 = vadd.f32 %v572, %v3016
      %v3018 = vpop.f32.mrf.mxu0
      %3019 = vmatprep.mubr.f32.mxu0 0.0
      %3020 = vmatmul.mubr.f32.gmra.mxu0 %v1296
      %v3021 = vpop.f32.mrf.mxu0
      %v3022 = vadd.f32 %v572, %v3021
      %v3023 = vpop.f32.mrf.mxu0
      %3024 = vmatprep.mubr.f32.mxu0 0.0
      %3025 = vmatmul.mubr.f32.gmra.mxu0 %v1299
      %v3026 = vpop.f32.mrf.mxu0
      %v3027 = vadd.f32 %v572, %v3026
      %v3028 = vpop.f32.mrf.mxu0
      %3029 = vmatprep.mubr.f32.mxu0 0.0
      %3030 = vmatmul.mubr.f32.gmra.mxu0 %v1302
      %v3031 = vpop.f32.mrf.mxu0
      %v3032 = vadd.f32 %v572, %v3031
      %v3033 = vpop.f32.mrf.mxu0
      %3034 = vmatprep.mubr.f32.mxu0 0.0
      %3035 = vmatmul.mubr.f32.gmra.mxu0 %v1305
      %v3036 = vpop.f32.mrf.mxu0
      %v3037 = vadd.f32 %v572, %v3036
      %v3038 = vpop.f32.mrf.mxu0
      %3039 = vmatprep.mubr.f32.mxu0 0.0
      %3040 = vmatmul.mubr.f32.gmra.mxu0 %v1308
      %v3041 = vpop.f32.mrf.mxu0
      %v3042 = vadd.f32 %v572, %v3041
      %v3043 = vpop.f32.mrf.mxu0
      %3044 = vmatprep.mubr.f32.mxu0 0.0
      %3045 = vmatmul.mubr.f32.gmra.mxu0 %v1311
      %v3046 = vpop.f32.mrf.mxu0
      %v3047 = vadd.f32 %v572, %v3046
      %v3048 = vpop.f32.mrf.mxu0
      %3049 = vmatprep.mubr.f32.mxu0 0.0
      %3050 = vmatmul.mubr.f32.gmra.mxu0 %v1314
      %v3051 = vpop.f32.mrf.mxu0
      %v3052 = vadd.f32 %v572, %v3051
      %v3053 = vpop.f32.mrf.mxu0
      %3054 = vmatprep.mubr.f32.mxu0 0.0
      %3055 = vmatmul.mubr.f32.gmra.mxu0 %v1317
      %v3056 = vpop.f32.mrf.mxu0
      %v3057 = vadd.f32 %v572, %v3056
      %v3058 = vpop.f32.mrf.mxu0
      %3059 = vmatprep.mubr.f32.mxu0 0.0
      %3060 = vmatmul.mubr.f32.gmra.mxu0 %v1320
      %v3061 = vpop.f32.mrf.mxu0
      %v3062 = vadd.f32 %v572, %v3061
      %v3063 = vpop.f32.mrf.mxu0
      %3064 = vmatprep.mubr.f32.mxu0 0.0
      %3065 = vmatmul.mubr.f32.gmra.mxu0 %v1323
      %v3066 = vpop.f32.mrf.mxu0
      %v3067 = vadd.f32 %v572, %v3066
      %v3068 = vpop.f32.mrf.mxu0
      %3069 = vmatprep.mubr.f32.mxu0 0.0
      %3070 = vmatmul.mubr.f32.gmra.mxu0 %v1326
      %v3071 = vpop.f32.mrf.mxu0
      %v3072 = vadd.f32 %v572, %v3071
      %v3073 = vpop.f32.mrf.mxu0
      %3074 = vmatprep.mubr.f32.mxu0 0.0
      %3075 = vmatmul.mubr.f32.gmra.mxu0 %v1329
      %v3076 = vpop.f32.mrf.mxu0
      %v3077 = vadd.f32 %v572, %v3076
      %v3078 = vpop.f32.mrf.mxu0
      %3079 = vmatprep.mubr.f32.mxu0 0.0
      %3080 = vmatmul.mubr.f32.gmra.mxu0 %v1332
      %v3081 = vpop.f32.mrf.mxu0
      %v3082 = vadd.f32 %v572, %v3081
      %v3083 = vpop.f32.mrf.mxu0
      %3084 = vmatprep.mubr.f32.mxu0 0.0
      %3085 = vmatmul.mubr.f32.gmra.mxu0 %v1335
      %v3086 = vpop.f32.mrf.mxu0
      %v3087 = vadd.f32 %v572, %v3086
      %v3088 = vpop.f32.mrf.mxu0
      %3089 = vmatprep.mubr.f32.mxu0 0.0
      %3090 = vmatmul.mubr.f32.gmra.mxu0 %v1338
      %v3091 = vpop.f32.mrf.mxu0
      %v3092 = vadd.f32 %v572, %v3091
      %v3093 = vpop.f32.mrf.mxu0
      %3094 = vmatprep.mubr.f32.mxu0 0.0
      %3095 = vmatmul.mubr.f32.gmra.mxu0 %v1341
      %v3096 = vpop.f32.mrf.mxu0
      %v3097 = vadd.f32 %v572, %v3096
      %v3098 = vpop.f32.mrf.mxu0
      %3099 = vmatprep.mubr.f32.mxu0 0.0
      %3100 = vmatmul.mubr.f32.gmra.mxu0 %v1344
      %v3101 = vpop.f32.mrf.mxu0
      %v3102 = vadd.f32 %v572, %v3101
      %v3103 = vpop.f32.mrf.mxu0
      %3104 = vmatprep.mubr.f32.mxu0 0.0
      %3105 = vmatmul.mubr.f32.gmra.mxu0 %v1347
      %v3106 = vpop.f32.mrf.mxu0
      %v3107 = vadd.f32 %v572, %v3106
      %v3108 = vpop.f32.mrf.mxu0
      %3109 = vmatprep.mubr.f32.mxu0 0.0
      %3110 = vmatmul.mubr.f32.gmra.mxu0 %v1350
      %v3111 = vpop.f32.mrf.mxu0
      %v3112 = vadd.f32 %v572, %v3111
      %v3113 = vpop.f32.mrf.mxu0
      %3114 = vmatprep.mubr.f32.mxu0 0.0
      %3115 = vmatmul.mubr.f32.gmra.mxu0 %v1353
      %v3116 = vpop.f32.mrf.mxu0
      %v3117 = vadd.f32 %v572, %v3116
      %v3118 = vpop.f32.mrf.mxu0
      %3119 = vmatprep.mubr.f32.mxu0 0.0
      %3120 = vmatmul.mubr.f32.gmra.mxu0 %v1356
      %v3121 = vpop.f32.mrf.mxu0
      %v3122 = vadd.f32 %v572, %v3121
      %v3123 = vpop.f32.mrf.mxu0
      %3124 = vmatprep.mubr.f32.mxu0 0.0
      %3125 = vmatmul.mubr.f32.gmra.mxu0 %v1359
      %v3126 = vpop.f32.mrf.mxu0
      %v3127 = vadd.f32 %v572, %v3126
      %v3128 = vpop.f32.mrf.mxu0
      %3129 = vmatprep.mubr.f32.mxu0 0.0
      %3130 = vmatmul.mubr.f32.gmra.mxu0 %v1362
      %v3131 = vpop.f32.mrf.mxu0
      %v3132 = vadd.f32 %v572, %v3131
      %v3133 = vpop.f32.mrf.mxu0
      %3134 = vmatprep.mubr.f32.mxu0 0.0
      %3135 = vmatmul.mubr.f32.gmra.mxu0 %v1365
      %v3136 = vpop.f32.mrf.mxu0
      %v3137 = vadd.f32 %v572, %v3136
      %v3138 = vpop.f32.mrf.mxu0
      %3139 = vmatprep.mubr.f32.mxu0 0.0
      %3140 = vmatmul.mubr.f32.gmra.mxu0 %v1368
      %v3141 = vpop.f32.mrf.mxu0
      %v3142 = vadd.f32 %v572, %v3141
      %v3143 = vpop.f32.mrf.mxu0
      %3144 = vmatprep.mubr.f32.mxu0 0.0
      %3145 = vmatmul.mubr.f32.gmra.mxu0 %v1371
      %v3146 = vpop.f32.mrf.mxu0
      %v3147 = vadd.f32 %v572, %v3146
      %v3148 = vpop.f32.mrf.mxu0
      %3149 = vmatprep.mubr.f32.mxu0 0.0
      %3150 = vmatmul.mubr.f32.gmra.mxu0 %v1374
      %v3151 = vpop.f32.mrf.mxu0
      %v3152 = vadd.f32 %v572, %v3151
      %v3153 = vpop.f32.mrf.mxu0
      %3154 = vmatprep.mubr.f32.mxu0 0.0
      %3155 = vmatmul.mubr.f32.gmra.mxu0 %v1377
      %v3156 = vpop.f32.mrf.mxu0
      %v3157 = vadd.f32 %v572, %v3156
      %v3158 = vpop.f32.mrf.mxu0
      %3159 = vmatprep.mubr.f32.mxu0 0.0
      %3160 = vmatmul.mubr.f32.gmra.mxu0 %v1380
      %v3161 = vpop.f32.mrf.mxu0
      %v3162 = vadd.f32 %v572, %v3161
      %v3163 = vpop.f32.mrf.mxu0
      %3164 = vmatprep.mubr.f32.mxu0 0.0
      %3165 = vmatmul.mubr.f32.gmra.mxu0 %v1383
      %v3166 = vpop.f32.mrf.mxu0
      %v3167 = vadd.f32 %v572, %v3166
      %v3168 = vpop.f32.mrf.mxu0
      %3169 = vmatprep.mubr.f32.mxu0 0.0
      %3170 = vmatmul.mubr.f32.gmra.mxu0 %v1386
      %v3171 = vpop.f32.mrf.mxu0
      %v3172 = vadd.f32 %v572, %v3171
      %v3173 = vpop.f32.mrf.mxu0
      %3174 = vmatprep.mubr.f32.mxu0 0.0
      %3175 = vmatmul.mubr.f32.gmra.mxu0 %v1389
      %v3176 = vpop.f32.mrf.mxu0
      %v3177 = vadd.f32 %v572, %v3176
      %v3178 = vpop.f32.mrf.mxu0
      %3179 = vmatprep.mubr.f32.mxu0 0.0
      %3180 = vmatmul.mubr.f32.gmra.mxu0 %v1392
      %v3181 = vpop.f32.mrf.mxu0
      %v3182 = vadd.f32 %v572, %v3181
      %v3183 = vpop.f32.mrf.mxu0
      %3184 = vmatprep.mubr.f32.mxu0 0.0
      %3185 = vmatmul.mubr.f32.gmra.mxu0 %v1395
      %v3186 = vpop.f32.mrf.mxu0
      %v3187 = vadd.f32 %v572, %v3186
      %v3188 = vpop.f32.mrf.mxu0
      %3189 = vmatprep.mubr.f32.mxu0 0.0
      %3190 = vmatmul.mubr.f32.gmra.mxu0 %v1398
      %v3191 = vpop.f32.mrf.mxu0
      %v3192 = vadd.f32 %v572, %v3191
      %v3193 = vpop.f32.mrf.mxu0
      %3194 = vmatprep.mubr.f32.mxu0 0.0
      %3195 = vmatmul.mubr.f32.gmra.mxu0 %v1401
      %v3196 = vpop.f32.mrf.mxu0
      %v3197 = vadd.f32 %v572, %v3196
      %v3198 = vpop.f32.mrf.mxu0
      %3199 = vmatprep.mubr.f32.mxu0 0.0
      %3200 = vmatmul.mubr.f32.gmra.mxu0 %v1404
      %v3201 = vpop.f32.mrf.mxu0
      %v3202 = vadd.f32 %v572, %v3201
      %v3203 = vpop.f32.mrf.mxu0
      %3204 = vmatprep.mubr.f32.mxu0 0.0
      %3205 = vmatmul.mubr.f32.gmra.mxu0 %v1407
      %v3206 = vpop.f32.mrf.mxu0
      %v3207 = vadd.f32 %v572, %v3206
      %v3208 = vpop.f32.mrf.mxu0
      %3209 = vmatprep.mubr.f32.mxu0 0.0
      %3210 = vmatmul.mubr.f32.gmra.mxu0 %v1410
      %v3211 = vpop.f32.mrf.mxu0
      %v3212 = vadd.f32 %v572, %v3211
      %v3213 = vpop.f32.mrf.mxu0
      %3214 = vmatprep.mubr.f32.mxu0 0.0
      %3215 = vmatmul.mubr.f32.gmra.mxu0 %v1413
      %v3216 = vpop.f32.mrf.mxu0
      %v3217 = vadd.f32 %v572, %v3216
      %v3218 = vpop.f32.mrf.mxu0
      %3219 = vmatprep.mubr.f32.mxu0 0.0
      %3220 = vmatmul.mubr.f32.gmra.mxu0 %v1416
      %v3221 = vpop.f32.mrf.mxu0
      %v3222 = vadd.f32 %v572, %v3221
      %v3223 = vpop.f32.mrf.mxu0
      %3224 = vmatprep.mubr.f32.mxu0 0.0
      %3225 = vmatmul.mubr.f32.gmra.mxu0 %v1419
      %v3226 = vpop.f32.mrf.mxu0
      %v3227 = vadd.f32 %v572, %v3226
      %v3228 = vpop.f32.mrf.mxu0
      %3229 = vmatprep.mubr.f32.mxu0 0.0
      %3230 = vmatmul.mubr.f32.gmra.mxu0 %v1422
      %v3231 = vpop.f32.mrf.mxu0
      %v3232 = vadd.f32 %v572, %v3231
      %v3233 = vpop.f32.mrf.mxu0
      %3234 = vmatprep.mubr.f32.mxu0 0.0
      %3235 = vmatmul.mubr.f32.gmra.mxu0 %v1425
      %v3236 = vpop.f32.mrf.mxu0
      %v3237 = vadd.f32 %v572, %v3236
      %v3238 = vpop.f32.mrf.mxu0
      %3239 = vmatprep.mubr.f32.mxu0 0.0
      %3240 = vmatmul.mubr.f32.gmra.mxu0 %v1428
      %v3241 = vpop.f32.mrf.mxu0
      %v3242 = vadd.f32 %v572, %v3241
      %v3243 = vpop.f32.mrf.mxu0
      %3244 = vmatprep.mubr.f32.mxu0 0.0
      %3245 = vmatmul.mubr.f32.gmra.mxu0 %v1431
      %v3246 = vpop.f32.mrf.mxu0
      %v3247 = vadd.f32 %v572, %v3246
      %v3248 = vpop.f32.mrf.mxu0
      %3249 = vmatprep.mubr.f32.mxu0 0.0
      %3250 = vmatmul.mubr.f32.gmra.mxu0 %v1434
      %v3251 = vpop.f32.mrf.mxu0
      %v3252 = vadd.f32 %v572, %v3251
      %v3253 = vpop.f32.mrf.mxu0
      %3254 = vmatprep.mubr.f32.mxu0 0.0
      %3255 = vmatmul.mubr.f32.gmra.mxu0 %v1437
      %v3256 = vpop.f32.mrf.mxu0
      %v3257 = vadd.f32 %v572, %v3256
      %v3258 = vpop.f32.mrf.mxu0
      %3259 = vmatprep.mubr.f32.mxu0 0.0
      %3260 = vmatmul.mubr.f32.gmra.mxu0 %v1440
      %v3261 = vpop.f32.mrf.mxu0
      %v3262 = vadd.f32 %v572, %v3261
      %v3263 = vpop.f32.mrf.mxu0
      %3264 = vmatprep.mubr.f32.mxu0 0.0
      %3265 = vmatmul.mubr.f32.gmra.mxu0 %v1443
      %v3266 = vpop.f32.mrf.mxu0
      %v3267 = vadd.f32 %v572, %v3266
      %v3268 = vpop.f32.mrf.mxu0
      %3269 = vmatprep.mubr.f32.mxu0 0.0
      %3270 = vmatmul.mubr.f32.gmra.mxu0 %v1446
      %v3271 = vpop.f32.mrf.mxu0
      %v3272 = vadd.f32 %v572, %v3271
      %v3273 = vpop.f32.mrf.mxu0
      %3274 = vmatprep.mubr.f32.mxu0 0.0
      %3275 = vmatmul.mubr.f32.gmra.mxu0 %v1449
      %v3276 = vpop.f32.mrf.mxu0
      %v3277 = vadd.f32 %v572, %v3276
      %v3278 = vpop.f32.mrf.mxu0
      %3279 = vmatprep.mubr.f32.mxu0 0.0
      %3280 = vmatmul.mubr.f32.gmra.mxu0 %v1452
      %v3281 = vpop.f32.mrf.mxu0
      %v3282 = vadd.f32 %v572, %v3281
      %v3283 = vpop.f32.mrf.mxu0
      %3284 = vmatprep.mubr.f32.mxu0 0.0
      %3285 = vmatmul.mubr.f32.gmra.mxu0 %v1455
      %v3286 = vpop.f32.mrf.mxu0
      %v3287 = vadd.f32 %v572, %v3286
      %v3288 = vpop.f32.mrf.mxu0
      %3289 = vmatprep.mubr.f32.mxu0 0.0
      %3290 = vmatmul.mubr.f32.gmra.mxu0 %v1458
      %v3291 = vpop.f32.mrf.mxu0
      %v3292 = vadd.f32 %v572, %v3291
      %v3293 = vpop.f32.mrf.mxu0
      %3294 = vmatprep.mubr.f32.mxu0 0.0
      %3295 = vmatmul.mubr.f32.gmra.mxu0 %v1461
      %v3296 = vpop.f32.mrf.mxu0
      %v3297 = vadd.f32 %v572, %v3296
      %v3298 = vpop.f32.mrf.mxu0
      %3299 = vmatprep.mubr.f32.mxu0 0.0
      %3300 = vmatmul.mubr.f32.gmra.mxu0 %v1464
      %v3301 = vpop.f32.mrf.mxu0
      %v3302 = vadd.f32 %v572, %v3301
      %v3303 = vpop.f32.mrf.mxu0
      %3304 = vmatprep.mubr.f32.mxu0 0.0
      %3305 = vmatmul.mubr.f32.gmra.mxu0 %v1467
      %v3306 = vpop.f32.mrf.mxu0
      %v3307 = vadd.f32 %v572, %v3306
      %v3308 = vpop.f32.mrf.mxu0
      %3309 = vmatprep.mubr.f32.mxu0 0.0
      %3310 = vmatmul.mubr.f32.gmra.mxu0 %v1470
      %v3311 = vpop.f32.mrf.mxu0
      %v3312 = vadd.f32 %v572, %v3311
      %v3313 = vpop.f32.mrf.mxu0
      %3314 = vmatprep.mubr.f32.mxu0 0.0
      %3315 = vmatmul.mubr.f32.gmra.mxu0 %v1473
      %v3316 = vpop.f32.mrf.mxu0
      %v3317 = vadd.f32 %v572, %v3316
      %v3318 = vpop.f32.mrf.mxu0
      %3319 = vmatprep.mubr.f32.mxu0 0.0
      %3320 = vmatmul.mubr.f32.gmra.mxu0 %v1476
      %v3321 = vpop.f32.mrf.mxu0
      %v3322 = vadd.f32 %v572, %v3321
      %v3323 = vpop.f32.mrf.mxu0
      %3324 = vmatprep.mubr.f32.mxu0 0.0
      %3325 = vmatmul.mubr.f32.gmra.mxu0 %v1479
      %v3326 = vpop.f32.mrf.mxu0
      %v3327 = vadd.f32 %v572, %v3326
      %v3328 = vpop.f32.mrf.mxu0
      %3329 = vmatprep.mubr.f32.mxu0 0.0
      %3330 = vmatmul.mubr.f32.gmra.mxu0 %v1482
      %v3331 = vpop.f32.mrf.mxu0
      %v3332 = vadd.f32 %v572, %v3331
      %v3333 = vpop.f32.mrf.mxu0
      %3334 = vmatprep.mubr.f32.mxu0 0.0
      %3335 = vmatmul.mubr.f32.gmra.mxu0 %v1485
      %v3336 = vpop.f32.mrf.mxu0
      %v3337 = vadd.f32 %v572, %v3336
      %v3338 = vpop.f32.mrf.mxu0
      %3339 = vmatprep.mubr.f32.mxu0 0.0
      %3340 = vmatmul.mubr.f32.gmra.mxu0 %v1488
      %v3341 = vpop.f32.mrf.mxu0
      %v3342 = vadd.f32 %v572, %v3341
      %v3343 = vpop.f32.mrf.mxu0
      %3344 = vmatprep.mubr.f32.mxu0 0.0
      %3345 = vmatmul.mubr.f32.gmra.mxu0 %v1491
      %v3346 = vpop.f32.mrf.mxu0
      %v3347 = vadd.f32 %v572, %v3346
      %v3348 = vpop.f32.mrf.mxu0
      %3349 = vmatprep.mubr.f32.mxu0 0.0
      %3350 = vmatmul.mubr.f32.gmra.mxu0 %v1494
      %v3351 = vpop.f32.mrf.mxu0
      %v3352 = vadd.f32 %v572, %v3351
      %v3353 = vpop.f32.mrf.mxu0
      %3354 = vmatprep.mubr.f32.mxu0 0.0
      %3355 = vmatmul.mubr.f32.gmra.mxu0 %v1497
      %v3356 = vpop.f32.mrf.mxu0
      %v3357 = vadd.f32 %v572, %v3356
      %v3358 = vpop.f32.mrf.mxu0
      %3359 = vmatprep.mubr.f32.mxu0 0.0
      %3360 = vmatmul.mubr.f32.gmra.mxu0 %v1500
      %v3361 = vpop.f32.mrf.mxu0
      %v3362 = vadd.f32 %v572, %v3361
      %v3363 = vpop.f32.mrf.mxu0
      %3364 = vmatprep.mubr.f32.mxu0 0.0
      %3365 = vmatmul.mubr.f32.gmra.mxu0 %v1503
      %v3366 = vpop.f32.mrf.mxu0
      %v3367 = vadd.f32 %v572, %v3366
      %v3368 = vpop.f32.mrf.mxu0
      %3369 = vmatprep.mubr.f32.mxu0 0.0
      %3370 = vmatmul.mubr.f32.gmra.mxu0 %v1506
      %v3371 = vpop.f32.mrf.mxu0
      %v3372 = vadd.f32 %v572, %v3371
      %v3373 = vpop.f32.mrf.mxu0
      %3374 = vmatprep.mubr.f32.mxu0 0.0
      %3375 = vmatmul.mubr.f32.gmra.mxu0 %v1509
      %v3376 = vpop.f32.mrf.mxu0
      %v3377 = vadd.f32 %v572, %v3376
      %v3378 = vpop.f32.mrf.mxu0
      %3379 = vmatprep.mubr.f32.mxu0 0.0
      %3380 = vmatmul.mubr.f32.gmra.mxu0 %v1512
      %v3381 = vpop.f32.mrf.mxu0
      %v3382 = vadd.f32 %v572, %v3381
      %v3383 = vpop.f32.mrf.mxu0
      %3384 = vmatprep.mubr.f32.mxu0 0.0
      %3385 = vmatmul.mubr.f32.gmra.mxu0 %v1515
      %v3386 = vpop.f32.mrf.mxu0
      %v3387 = vadd.f32 %v572, %v3386
      %v3388 = vpop.f32.mrf.mxu0
      %3389 = vmatprep.mubr.f32.mxu0 0.0
      %3390 = vmatmul.mubr.f32.gmra.mxu0 %v1518
      %v3391 = vpop.f32.mrf.mxu0
      %v3392 = vadd.f32 %v572, %v3391
      %v3393 = vpop.f32.mrf.mxu0
      %3394 = vmatprep.mubr.f32.mxu0 0.0
      %3395 = vmatmul.mubr.f32.gmra.mxu0 %v1521
      %v3396 = vpop.f32.mrf.mxu0
      %v3397 = vadd.f32 %v572, %v3396
      %v3398 = vpop.f32.mrf.mxu0
      %3399 = vmatprep.mubr.f32.mxu0 0.0
      %3400 = vmatmul.mubr.f32.gmra.mxu0 %v1524
      %v3401 = vpop.f32.mrf.mxu0
      %v3402 = vadd.f32 %v572, %v3401
      %v3403 = vpop.f32.mrf.mxu0
      %3404 = vmatprep.mubr.f32.mxu0 0.0
      %3405 = vmatmul.mubr.f32.gmra.mxu0 %v1527
      %v3406 = vpop.f32.mrf.mxu0
      %v3407 = vadd.f32 %v572, %v3406
      %v3408 = vpop.f32.mrf.mxu0
      %3409 = vmatprep.mubr.f32.mxu0 0.0
      %3410 = vmatmul.mubr.f32.gmra.mxu0 %v1530
      %v3411 = vpop.f32.mrf.mxu0
      %v3412 = vadd.f32 %v572, %v3411
      %v3413 = vpop.f32.mrf.mxu0
      %3414 = vmatprep.mubr.f32.mxu0 0.0
      %3415 = vmatmul.mubr.f32.gmra.mxu0 %v1533
      %v3416 = vpop.f32.mrf.mxu0
      %v3417 = vadd.f32 %v572, %v3416
      %v3418 = vpop.f32.mrf.mxu0
      %3419 = vmatprep.mubr.f32.mxu0 0.0
      %3420 = vmatmul.mubr.f32.gmra.mxu0 %v1536
      %v3421 = vpop.f32.mrf.mxu0
      %v3422 = vadd.f32 %v572, %v3421
      %v3423 = vpop.f32.mrf.mxu0
      %3424 = vmatprep.mubr.f32.mxu0 0.0
      %3425 = vmatmul.mubr.f32.gmra.mxu0 %v1539
      %v3426 = vpop.f32.mrf.mxu0
      %v3427 = vadd.f32 %v572, %v3426
      %v3428 = vpop.f32.mrf.mxu0
      %3429 = vmatprep.mubr.f32.mxu0 0.0
      %3430 = vmatmul.mubr.f32.gmra.mxu0 %v1542
      %v3431 = vpop.f32.mrf.mxu0
      %v3432 = vadd.f32 %v572, %v3431
      %v3433 = vpop.f32.mrf.mxu0
      %3434 = vmatprep.mubr.f32.mxu0 0.0
      %3435 = vmatmul.mubr.f32.gmra.mxu0 %v1545
      %v3436 = vpop.f32.mrf.mxu0
      %v3437 = vadd.f32 %v572, %v3436
      %v3438 = vpop.f32.mrf.mxu0
      %3439 = vmatprep.mubr.f32.mxu0 0.0
      %3440 = vmatmul.mubr.f32.gmra.mxu0 %v1548
      %v3441 = vpop.f32.mrf.mxu0
      %v3442 = vadd.f32 %v572, %v3441
      %v3443 = vpop.f32.mrf.mxu0
      %3444 = vmatprep.mubr.f32.mxu0 0.0
      %3445 = vmatmul.mubr.f32.gmra.mxu0 %v1551
      %v3446 = vpop.f32.mrf.mxu0
      %v3447 = vadd.f32 %v572, %v3446
      %v3448 = vpop.f32.mrf.mxu0
      %3449 = vmatprep.mubr.f32.mxu0 0.0
      %3450 = vmatmul.mubr.f32.gmra.mxu0 %v1554
      %v3451 = vpop.f32.mrf.mxu0
      %v3452 = vadd.f32 %v572, %v3451
      %v3453 = vpop.f32.mrf.mxu0
      %3454 = vmatprep.mubr.f32.mxu0 0.0
      %3455 = vmatmul.mubr.f32.gmra.mxu0 %v1557
      %v3456 = vpop.f32.mrf.mxu0
      %v3457 = vadd.f32 %v572, %v3456
      %v3458 = vpop.f32.mrf.mxu0
      %3459 = vmatprep.mubr.f32.mxu0 0.0
      %3460 = vmatmul.mubr.f32.gmra.mxu0 %v1560
      %v3461 = vpop.f32.mrf.mxu0
      %v3462 = vadd.f32 %v572, %v3461
      %v3463 = vpop.f32.mrf.mxu0
      %3464 = vmatprep.mubr.f32.mxu0 0.0
      %3465 = vmatmul.mubr.f32.gmra.mxu0 %v1563
      %v3466 = vpop.f32.mrf.mxu0
      %v3467 = vadd.f32 %v572, %v3466
      %v3468 = vpop.f32.mrf.mxu0
      %3469 = vmatprep.mubr.f32.mxu0 0.0
      %3470 = vmatmul.mubr.f32.gmra.mxu0 %v1566
      %v3471 = vpop.f32.mrf.mxu0
      %v3472 = vadd.f32 %v572, %v3471
      %v3473 = vpop.f32.mrf.mxu0
      %3474 = vmatprep.mubr.f32.mxu0 0.0
      %3475 = vmatmul.mubr.f32.gmra.mxu0 %v1569
      %v3476 = vpop.f32.mrf.mxu0
      %v3477 = vadd.f32 %v572, %v3476
      %v3478 = vpop.f32.mrf.mxu0
      %3479 = vmatprep.mubr.f32.mxu0 0.0
      %3480 = vmatmul.mubr.f32.gmra.mxu0 %v1572
      %v3481 = vpop.f32.mrf.mxu0
      %v3482 = vadd.f32 %v572, %v3481
      %v3483 = vpop.f32.mrf.mxu0
      %3484 = vmatprep.mubr.f32.mxu0 0.0
      %3485 = vmatmul.mubr.f32.gmra.mxu0 %v1575
      %v3486 = vpop.f32.mrf.mxu0
      %v3487 = vadd.f32 %v572, %v3486
      %v3488 = vpop.f32.mrf.mxu0
      %3489 = vmatprep.mubr.f32.mxu0 0.0
      %3490 = vmatmul.mubr.f32.gmra.mxu0 %v1578
      %v3491 = vpop.f32.mrf.mxu0
      %v3492 = vadd.f32 %v572, %v3491
      %v3493 = vpop.f32.mrf.mxu0
      %3494 = vmatprep.mubr.f32.mxu0 0.0
      %3495 = vmatmul.mubr.f32.gmra.mxu0 %v1581
      %v3496 = vpop.f32.mrf.mxu0
      %v3497 = vadd.f32 %v572, %v3496
      %v3498 = vpop.f32.mrf.mxu0
      %3499 = vmatprep.mubr.f32.mxu0 0.0
      %3500 = vmatmul.mubr.f32.gmra.mxu0 %v1584
      %v3501 = vpop.f32.mrf.mxu0
      %v3502 = vadd.f32 %v572, %v3501
      %v3503 = vpop.f32.mrf.mxu0
      %3504 = vmatprep.mubr.f32.mxu0 0.0
      %3505 = vmatmul.mubr.f32.gmra.mxu0 %v1587
      %v3506 = vpop.f32.mrf.mxu0
      %v3507 = vadd.f32 %v572, %v3506
      %v3508 = vpop.f32.mrf.mxu0
      %3509 = vmatprep.mubr.f32.mxu0 0.0
      %3510 = vmatmul.mubr.f32.gmra.mxu0 %v1590
      %v3511 = vpop.f32.mrf.mxu0
      %v3512 = vadd.f32 %v572, %v3511
      %v3513 = vpop.f32.mrf.mxu0
      %3514 = vmatprep.mubr.f32.mxu0 0.0
      %3515 = vmatmul.mubr.f32.gmra.mxu0 %v1593
      %v3516 = vpop.f32.mrf.mxu0
      %v3517 = vadd.f32 %v572, %v3516
      %v3518 = vpop.f32.mrf.mxu0
      %3519 = vmatprep.mubr.f32.mxu0 0.0
      %3520 = vmatmul.mubr.f32.gmra.mxu0 %v1596
      %v3521 = vpop.f32.mrf.mxu0
      %v3522 = vadd.f32 %v572, %v3521
      %v3523 = vpop.f32.mrf.mxu0
      %3524 = vmatprep.mubr.f32.mxu0 0.0
      %3525 = vmatmul.mubr.f32.gmra.mxu0 %v1599
      %v3526 = vpop.f32.mrf.mxu0
      %v3527 = vadd.f32 %v572, %v3526
      %v3528 = vpop.f32.mrf.mxu0
      %3529 = vmatprep.mubr.f32.mxu0 0.0
      %3530 = vmatmul.mubr.f32.gmra.mxu0 %v1602
      %v3531 = vpop.f32.mrf.mxu0
      %v3532 = vadd.f32 %v572, %v3531
      %v3533 = vpop.f32.mrf.mxu0
      %3534 = vmatprep.mubr.f32.mxu0 0.0
      %3535 = vmatmul.mubr.f32.gmra.mxu0 %v1605
      %v3536 = vpop.f32.mrf.mxu0
      %v3537 = vadd.f32 %v572, %v3536
      %v3538 = vpop.f32.mrf.mxu0
      %3539 = vmatprep.mubr.f32.mxu0 0.0
      %3540 = vmatmul.mubr.f32.gmra.mxu0 %v1608
      %v3541 = vpop.f32.mrf.mxu0
      %v3542 = vadd.f32 %v572, %v3541
      %v3543 = vpop.f32.mrf.mxu0
      %3544 = vmatprep.mubr.f32.mxu0 0.0
      %3545 = vmatmul.mubr.f32.gmra.mxu0 %v1611
      %v3546 = vpop.f32.mrf.mxu0
      %v3547 = vadd.f32 %v572, %v3546
      %v3548 = vpop.f32.mrf.mxu0
      %3549 = vmatprep.mubr.f32.mxu0 0.0
      %3550 = vmatmul.mubr.f32.gmra.mxu0 %v1614
      %v3551 = vpop.f32.mrf.mxu0
      %v3552 = vadd.f32 %v572, %v3551
      %v3553 = vpop.f32.mrf.mxu0
      %3554 = vmatprep.mubr.f32.mxu0 0.0
      %3555 = vmatmul.mubr.f32.gmra.mxu0 %v1617
      %v3556 = vpop.f32.mrf.mxu0
      %v3557 = vadd.f32 %v572, %v3556
      %v3558 = vpop.f32.mrf.mxu0
      %3559 = vmatprep.mubr.f32.mxu0 0.0
      %3560 = vmatmul.mubr.f32.gmra.mxu0 %v1620
      %v3561 = vpop.f32.mrf.mxu0
      %v3562 = vadd.f32 %v572, %v3561
      %v3563 = vpop.f32.mrf.mxu0
      %3564 = vmatprep.mubr.f32.mxu0 0.0
      %3565 = vmatmul.mubr.f32.gmra.mxu0 %v1623
      %v3566 = vpop.f32.mrf.mxu0
      %v3567 = vadd.f32 %v572, %v3566
      %v3568 = vpop.f32.mrf.mxu0
      %3569 = vmatprep.mubr.f32.mxu0 0.0
      %3570 = vmatmul.mubr.f32.gmra.mxu0 %v1626
      %v3571 = vpop.f32.mrf.mxu0
      %v3572 = vadd.f32 %v572, %v3571
      %v3573 = vpop.f32.mrf.mxu0
      %3574 = vmatprep.mubr.f32.mxu0 0.0
      %3575 = vmatmul.mubr.f32.gmra.mxu0 %v1629
      %v3576 = vpop.f32.mrf.mxu0
      %v3577 = vadd.f32 %v572, %v3576
      %v3578 = vpop.f32.mrf.mxu0
      %3579 = vmatprep.mubr.f32.mxu0 0.0
      %3580 = vmatmul.mubr.f32.gmra.mxu0 %v1632
      %v3581 = vpop.f32.mrf.mxu0
      %v3582 = vadd.f32 %v572, %v3581
      %v3583 = vpop.f32.mrf.mxu0
      %3584 = vmatprep.mubr.f32.mxu0 0.0
      %3585 = vmatmul.mubr.f32.gmra.mxu0 %v1635
      %v3586 = vpop.f32.mrf.mxu0
      %v3587 = vadd.f32 %v572, %v3586
      %v3588 = vpop.f32.mrf.mxu0
      %3589 = vmatprep.mubr.f32.mxu0 0.0
      %3590 = vmatmul.mubr.f32.gmra.mxu0 %v1638
      %v3591 = vpop.f32.mrf.mxu0
      %v3592 = vadd.f32 %v572, %v3591
      %v3593 = vpop.f32.mrf.mxu0
      %3594 = vmatprep.mubr.f32.mxu0 0.0
      %3595 = vmatmul.mubr.f32.gmra.mxu0 %v1641
      %v3596 = vpop.f32.mrf.mxu0
      %v3597 = vadd.f32 %v572, %v3596
      %v3598 = vpop.f32.mrf.mxu0
      %3599 = vmatprep.mubr.f32.mxu0 0.0
      %3600 = vmatmul.mubr.f32.gmra.mxu0 %v1644
      %v3601 = vpop.f32.mrf.mxu0
      %v3602 = vadd.f32 %v572, %v3601
      %v3603 = vpop.f32.mrf.mxu0
      %3604 = vmatprep.mubr.f32.mxu0 0.0
      %3605 = vmatmul.mubr.f32.gmra.mxu0 %v1647
      %v3606 = vpop.f32.mrf.mxu0
      %v3607 = vadd.f32 %v572, %v3606
      %v3608 = vpop.f32.mrf.mxu0
      %3609 = vmatprep.mubr.f32.mxu0 0.0
      %3610 = vmatmul.mubr.f32.gmra.mxu0 %v1650
      %v3611 = vpop.f32.mrf.mxu0
      %v3612 = vadd.f32 %v572, %v3611
      %v3613 = vpop.f32.mrf.mxu0
      %3614 = vmatprep.mubr.f32.mxu0 0.0
      %3615 = vmatmul.mubr.f32.gmra.mxu0 %v1653
      %v3616 = vpop.f32.mrf.mxu0
      %v3617 = vadd.f32 %v572, %v3616
      %v3618 = vpop.f32.mrf.mxu0
      %3619 = vmatprep.mubr.f32.mxu0 0.0
      %3620 = vmatmul.mubr.f32.gmra.mxu0 %v1656
      %v3621 = vpop.f32.mrf.mxu0
      %v3622 = vadd.f32 %v572, %v3621
      %v3623 = vpop.f32.mrf.mxu0
      %3624 = vmatprep.mubr.f32.mxu0 0.0
      %3625 = vmatmul.mubr.f32.gmra.mxu0 %v1659
      %v3626 = vpop.f32.mrf.mxu0
      %v3627 = vadd.f32 %v572, %v3626
      %v3628 = vpop.f32.mrf.mxu0
      %3629 = vmatprep.mubr.f32.mxu0 0.0
      %3630 = vmatmul.mubr.f32.gmra.mxu0 %v1662
      %v3631 = vpop.f32.mrf.mxu0
      %v3632 = vadd.f32 %v572, %v3631
      %v3633 = vpop.f32.mrf.mxu0
      %3634 = vmatprep.mubr.f32.mxu0 0.0
      %3635 = vmatmul.mubr.f32.gmra.mxu0 %v1665
      %v3636 = vpop.f32.mrf.mxu0
      %v3637 = vadd.f32 %v572, %v3636
      %v3638 = vpop.f32.mrf.mxu0
      %3639 = vmatprep.mubr.f32.mxu0 0.0
      %3640 = vmatmul.mubr.f32.gmra.mxu0 %v1668
      %v3641 = vpop.f32.mrf.mxu0
      %v3642 = vadd.f32 %v572, %v3641
      %v3643 = vpop.f32.mrf.mxu0
      %3644 = vmatprep.mubr.f32.mxu0 0.0
      %3645 = vmatmul.mubr.f32.gmra.mxu0 %v1671
      %v3646 = vpop.f32.mrf.mxu0
      %v3647 = vadd.f32 %v572, %v3646
      %v3648 = vpop.f32.mrf.mxu0
      %3649 = vmatprep.mubr.f32.mxu0 0.0
      %3650 = vmatmul.mubr.f32.gmra.mxu0 %v1674
      %v3651 = vpop.f32.mrf.mxu0
      %v3652 = vadd.f32 %v572, %v3651
      %v3653 = vpop.f32.mrf.mxu0
      %3654 = vmatprep.mubr.f32.mxu0 0.0
      %3655 = vmatmul.mubr.f32.gmra.mxu0 %v1677
      %v3656 = vpop.f32.mrf.mxu0
      %v3657 = vadd.f32 %v572, %v3656
      %v3658 = vpop.f32.mrf.mxu0
      %3659 = vmatprep.mubr.f32.mxu0 0.0
      %3660 = vmatmul.mubr.f32.gmra.mxu0 %v1680
      %v3661 = vpop.f32.mrf.mxu0
      %v3662 = vadd.f32 %v572, %v3661
      %v3663 = vpop.f32.mrf.mxu0
      %3664 = vmatprep.mubr.f32.mxu0 0.0
      %3665 = vmatmul.mubr.f32.gmra.mxu0 %v1683
      %v3666 = vpop.f32.mrf.mxu0
      %v3667 = vadd.f32 %v572, %v3666
      %v3668 = vpop.f32.mrf.mxu0
      %3669 = vmatprep.mubr.f32.mxu0 0.0
      %3670 = vmatmul.mubr.f32.gmra.mxu0 %v1686
      %v3671 = vpop.f32.mrf.mxu0
      %v3672 = vadd.f32 %v572, %v3671
      %v3673 = vpop.f32.mrf.mxu0
      %3674 = vmatprep.mubr.f32.mxu0 0.0
      %3675 = vmatmul.mubr.f32.gmra.mxu0 %v1689
      %v3676 = vpop.f32.mrf.mxu0
      %v3677 = vadd.f32 %v572, %v3676
      %v3678 = vpop.f32.mrf.mxu0
      %3679 = vmatprep.mubr.f32.mxu0 0.0
      %3680 = vmatmul.mubr.f32.gmra.mxu0 %v1692
      %v3681 = vpop.f32.mrf.mxu0
      %v3682 = vadd.f32 %v572, %v3681
      %v3683 = vpop.f32.mrf.mxu0
      %3684 = vmatprep.mubr.f32.mxu0 0.0
      %3685 = vmatmul.mubr.f32.gmra.mxu0 %v1695
      %v3686 = vpop.f32.mrf.mxu0
      %v3687 = vadd.f32 %v572, %v3686
      %v3688 = vpop.f32.mrf.mxu0
      %3689 = vmatprep.mubr.f32.mxu0 0.0
      %3690 = vmatmul.mubr.f32.gmra.mxu0 %v1698
      %v3691 = vpop.f32.mrf.mxu0
      %v3692 = vadd.f32 %v572, %v3691
      %v3693 = vpop.f32.mrf.mxu0
      %3694 = vmatprep.mubr.f32.mxu0 0.0
      %3695 = vmatmul.mubr.f32.gmra.mxu0 %v1701
      %v3696 = vpop.f32.mrf.mxu0
      %v3697 = vadd.f32 %v572, %v3696
      %v3698 = vpop.f32.mrf.mxu0
      %3699 = vmatprep.mubr.f32.mxu0 0.0
      %3700 = vmatmul.mubr.f32.gmra.mxu0 %v1704
      %v3701 = vpop.f32.mrf.mxu0
      %v3702 = vadd.f32 %v572, %v3701
      %v3703 = vpop.f32.mrf.mxu0
      %3704 = vmatprep.mubr.f32.mxu0 0.0
      %3705 = vmatmul.mubr.f32.gmra.mxu0 %v1707
      %v3706 = vpop.f32.mrf.mxu0
      %v3707 = vadd.f32 %v572, %v3706
      %v3708 = vpop.f32.mrf.mxu0
      %3709 = vmatprep.mubr.f32.mxu0 0.0
      %3710 = vmatmul.mubr.f32.gmra.mxu0 %v1710
      %v3711 = vpop.f32.mrf.mxu0
      %v3712 = vadd.f32 %v572, %v3711
      %v3713 = vpop.f32.mrf.mxu0
      %3714 = vmatprep.mubr.f32.mxu0 0.0
      %3715 = vmatmul.mubr.f32.gmra.mxu0 %v1713
      %v3716 = vpop.f32.mrf.mxu0
      %v3717 = vadd.f32 %v572, %v3716
      %v3718 = vpop.f32.mrf.mxu0
      %3719 = vmatprep.mubr.f32.mxu0 0.0
      %3720 = vmatmul.mubr.f32.gmra.mxu0 %v1716
      %v3721 = vpop.f32.mrf.mxu0
      %v3722 = vadd.f32 %v572, %v3721
      %v3723 = vpop.f32.mrf.mxu0
      %3724 = vmatprep.mubr.f32.mxu0 0.0
      %3725 = vmatmul.mubr.f32.gmra.mxu0 %v1719
      %v3726 = vpop.f32.mrf.mxu0
      %v3727 = vadd.f32 %v572, %v3726
      %v3728 = vpop.f32.mrf.mxu0
      %3729 = vmatprep.mubr.f32.mxu0 0.0
      %3730 = vmatmul.mubr.f32.gmra.mxu0 %v1722
      %v3731 = vpop.f32.mrf.mxu0
      %v3732 = vadd.f32 %v572, %v3731
      %v3733 = vpop.f32.mrf.mxu0
      %3734 = vmatprep.mubr.f32.mxu0 0.0
      %3735 = vmatmul.mubr.f32.gmra.mxu0 %v1725
      %v3736 = vpop.f32.mrf.mxu0
      %v3737 = vadd.f32 %v572, %v3736
      %v3738 = vpop.f32.mrf.mxu0
      %3739 = vmatprep.mubr.f32.mxu0 0.0
      %3740 = vmatmul.mubr.f32.gmra.mxu0 %v1728
      %v3741 = vpop.f32.mrf.mxu0
      %v3742 = vadd.f32 %v572, %v3741
      %v3743 = vpop.f32.mrf.mxu0
      %3744 = vmatprep.mubr.f32.mxu0 0.0
      %3745 = vmatmul.mubr.f32.gmra.mxu0 %v1731
      %v3746 = vpop.f32.mrf.mxu0
      %v3747 = vadd.f32 %v572, %v3746
      %v3748 = vpop.f32.mrf.mxu0
      %3749 = vmatprep.mubr.f32.mxu0 0.0
      %3750 = vmatmul.mubr.f32.gmra.mxu0 %v1734
      %v3751 = vpop.f32.mrf.mxu0
      %v3752 = vadd.f32 %v572, %v3751
      %v3753 = vpop.f32.mrf.mxu0
      %3754 = vmatprep.mubr.f32.mxu0 0.0
      %3755 = vmatmul.mubr.f32.gmra.mxu0 %v1737
      %v3756 = vpop.f32.mrf.mxu0
      %v3757 = vadd.f32 %v572, %v3756
      %v3758 = vpop.f32.mrf.mxu0
      %3759 = vmatprep.mubr.f32.mxu0 0.0
      %3760 = vmatmul.mubr.f32.gmra.mxu0 %v1740
      %v3761 = vpop.f32.mrf.mxu0
      %v3762 = vadd.f32 %v572, %v3761
      %v3763 = vpop.f32.mrf.mxu0
      %3764 = vmatprep.mubr.f32.mxu0 0.0
      %3765 = vmatmul.mubr.f32.gmra.mxu0 %v1743
      %v3766 = vpop.f32.mrf.mxu0
      %v3767 = vadd.f32 %v572, %v3766
      %v3768 = vpop.f32.mrf.mxu0
      %3769 = vmatprep.mubr.f32.mxu0 0.0
      %3770 = vmatmul.mubr.f32.gmra.mxu0 %v1746
      %v3771 = vpop.f32.mrf.mxu0
      %v3772 = vadd.f32 %v572, %v3771
      %v3773 = vpop.f32.mrf.mxu0
      %3774 = vmatprep.mubr.f32.mxu0 0.0
      %3775 = vmatmul.mubr.f32.gmra.mxu0 %v1749
      %v3776 = vpop.f32.mrf.mxu0
      %v3777 = vadd.f32 %v572, %v3776
      %v3778 = vpop.f32.mrf.mxu0
      %3779 = vdwg.mxu0
      %v3780 = vmax.f32 %v1822, 0.0
      %v3781 = vmax.f32 %v1827, 0.0
      %v3782 = vmax.f32 %v1832, 0.0
      %v3783 = vmax.f32 %v1837, 0.0
      %v3784 = vmax.f32 %v1842, 0.0
      %v3785 = vmax.f32 %v1847, 0.0
      %v3786 = vmax.f32 %v1852, 0.0
      %v3787 = vmax.f32 %v1857, 0.0
      %v3788 = vmax.f32 %v1862, 0.0
      %v3789 = vmax.f32 %v1867, 0.0
      %v3790 = vmax.f32 %v1872, 0.0
      %v3791 = vmax.f32 %v1877, 0.0
      %v3792 = vmax.f32 %v1882, 0.0
      %v3793 = vmax.f32 %v1887, 0.0
      %v3794 = vmax.f32 %v1892, 0.0
      %v3795 = vmax.f32 %v1897, 0.0
      %v3796 = vmax.f32 %v1902, 0.0
      %v3797 = vmax.f32 %v1907, 0.0
      %v3798 = vmax.f32 %v1912, 0.0
      %v3799 = vmax.f32 %v1917, 0.0
      %v3800 = vmax.f32 %v1922, 0.0
      %v3801 = vmax.f32 %v1927, 0.0
      %v3802 = vmax.f32 %v1932, 0.0
      %v3803 = vmax.f32 %v1937, 0.0
      %v3804 = vmax.f32 %v1942, 0.0
      %v3805 = vmax.f32 %v1947, 0.0
      %v3806 = vmax.f32 %v1952, 0.0
      %v3807 = vmax.f32 %v1957, 0.0
      %v3808 = vmax.f32 %v1962, 0.0
      %v3809 = vmax.f32 %v1967, 0.0
      %v3810 = vmax.f32 %v1972, 0.0
      %v3811 = vmax.f32 %v1977, 0.0
      %v3812 = vmax.f32 %v1982, 0.0
      %v3813 = vmax.f32 %v1987, 0.0
      %v3814 = vmax.f32 %v1992, 0.0
      %v3815 = vmax.f32 %v1997, 0.0
      %v3816 = vmax.f32 %v2002, 0.0
      %v3817 = vmax.f32 %v2007, 0.0
      %v3818 = vmax.f32 %v2012, 0.0
      %v3819 = vmax.f32 %v2017, 0.0
      %v3820 = vmax.f32 %v2022, 0.0
      %v3821 = vmax.f32 %v2027, 0.0
      %v3822 = vmax.f32 %v2032, 0.0
      %v3823 = vmax.f32 %v2037, 0.0
      %v3824 = vmax.f32 %v2042, 0.0
      %v3825 = vmax.f32 %v2047, 0.0
      %v3826 = vmax.f32 %v2052, 0.0
      %v3827 = vmax.f32 %v2057, 0.0
      %v3828 = vmax.f32 %v2062, 0.0
      %v3829 = vmax.f32 %v2067, 0.0
      %v3830 = vmax.f32 %v2072, 0.0
      %v3831 = vmax.f32 %v2077, 0.0
      %v3832 = vmax.f32 %v2082, 0.0
      %v3833 = vmax.f32 %v2087, 0.0
      %v3834 = vmax.f32 %v2092, 0.0
      %v3835 = vmax.f32 %v2097, 0.0
      %v3836 = vmax.f32 %v2102, 0.0
      %v3837 = vmax.f32 %v2107, 0.0
      %v3838 = vmax.f32 %v2112, 0.0
      %v3839 = vmax.f32 %v2117, 0.0
      %v3840 = vmax.f32 %v2122, 0.0
      %v3841 = vmax.f32 %v2127, 0.0
      %v3842 = vmax.f32 %v2132, 0.0
      %v3843 = vmax.f32 %v2137, 0.0
      %v3844 = vmax.f32 %v2142, 0.0
      %v3845 = vmax.f32 %v2147, 0.0
      %v3846 = vmax.f32 %v2152, 0.0
      %v3847 = vmax.f32 %v2157, 0.0
      %v3848 = vmax.f32 %v2162, 0.0
      %v3849 = vmax.f32 %v2167, 0.0
      %v3850 = vmax.f32 %v2172, 0.0
      %v3851 = vmax.f32 %v2177, 0.0
      %v3852 = vmax.f32 %v2182, 0.0
      %v3853 = vmax.f32 %v2187, 0.0
      %v3854 = vmax.f32 %v2192, 0.0
      %v3855 = vmax.f32 %v2197, 0.0
      %v3856 = vmax.f32 %v2202, 0.0
      %v3857 = vmax.f32 %v2207, 0.0
      %v3858 = vmax.f32 %v2212, 0.0
      %v3859 = vmax.f32 %v2217, 0.0
      %v3860 = vmax.f32 %v2222, 0.0
      %v3861 = vmax.f32 %v2227, 0.0
      %v3862 = vmax.f32 %v2232, 0.0
      %v3863 = vmax.f32 %v2237, 0.0
      %v3864 = vmax.f32 %v2242, 0.0
      %v3865 = vmax.f32 %v2247, 0.0
      %v3866 = vmax.f32 %v2252, 0.0
      %v3867 = vmax.f32 %v2257, 0.0
      %v3868 = vmax.f32 %v2262, 0.0
      %v3869 = vmax.f32 %v2267, 0.0
      %v3870 = vmax.f32 %v2272, 0.0
      %v3871 = vmax.f32 %v2277, 0.0
      %v3872 = vmax.f32 %v2282, 0.0
      %v3873 = vmax.f32 %v2287, 0.0
      %v3874 = vmax.f32 %v2292, 0.0
      %v3875 = vmax.f32 %v2297, 0.0
      %v3876 = vmax.f32 %v2302, 0.0
      %v3877 = vmax.f32 %v2307, 0.0
      %v3878 = vmax.f32 %v2312, 0.0
      %v3879 = vmax.f32 %v2317, 0.0
      %v3880 = vmax.f32 %v2322, 0.0
      %v3881 = vmax.f32 %v2327, 0.0
      %v3882 = vmax.f32 %v2332, 0.0
      %v3883 = vmax.f32 %v2337, 0.0
      %v3884 = vmax.f32 %v2342, 0.0
      %v3885 = vmax.f32 %v2347, 0.0
      %v3886 = vmax.f32 %v2352, 0.0
      %v3887 = vmax.f32 %v2357, 0.0
      %v3888 = vmax.f32 %v2362, 0.0
      %v3889 = vmax.f32 %v2367, 0.0
      %v3890 = vmax.f32 %v2372, 0.0
      %v3891 = vmax.f32 %v2377, 0.0
      %v3892 = vmax.f32 %v2382, 0.0
      %v3893 = vmax.f32 %v2387, 0.0
      %v3894 = vmax.f32 %v2392, 0.0
      %v3895 = vmax.f32 %v2397, 0.0
      %v3896 = vmax.f32 %v2402, 0.0
      %v3897 = vmax.f32 %v2407, 0.0
      %v3898 = vmax.f32 %v2412, 0.0
      %v3899 = vmax.f32 %v2417, 0.0
      %v3900 = vmax.f32 %v2422, 0.0
      %v3901 = vmax.f32 %v2427, 0.0
      %v3902 = vmax.f32 %v2432, 0.0
      %v3903 = vmax.f32 %v2437, 0.0
      %v3904 = vmax.f32 %v2442, 0.0
      %v3905 = vmax.f32 %v2447, 0.0
      %v3906 = vmax.f32 %v2452, 0.0
      %v3907 = vmax.f32 %v2457, 0.0
      %v3908 = vmax.f32 %v2462, 0.0
      %v3909 = vmax.f32 %v2467, 0.0
      %v3910 = vmax.f32 %v2472, 0.0
      %v3911 = vmax.f32 %v2477, 0.0
      %v3912 = vmax.f32 %v2482, 0.0
      %v3913 = vmax.f32 %v2487, 0.0
      %v3914 = vmax.f32 %v2492, 0.0
      %v3915 = vmax.f32 %v2497, 0.0
      %v3916 = vmax.f32 %v2502, 0.0
      %v3917 = vmax.f32 %v2507, 0.0
      %v3918 = vmax.f32 %v2512, 0.0
      %v3919 = vmax.f32 %v2517, 0.0
      %v3920 = vmax.f32 %v2522, 0.0
      %v3921 = vmax.f32 %v2527, 0.0
      %v3922 = vmax.f32 %v2532, 0.0
      %v3923 = vmax.f32 %v2537, 0.0
      %v3924 = vmax.f32 %v2542, 0.0
      %v3925 = vmax.f32 %v2547, 0.0
      %v3926 = vmax.f32 %v2552, 0.0
      %v3927 = vmax.f32 %v2557, 0.0
      %v3928 = vmax.f32 %v2562, 0.0
      %v3929 = vmax.f32 %v2567, 0.0
      %v3930 = vmax.f32 %v2572, 0.0
      %v3931 = vmax.f32 %v2577, 0.0
      %v3932 = vmax.f32 %v2582, 0.0
      %v3933 = vmax.f32 %v2587, 0.0
      %v3934 = vmax.f32 %v2592, 0.0
      %v3935 = vmax.f32 %v2597, 0.0
      %v3936 = vmax.f32 %v2602, 0.0
      %v3937 = vmax.f32 %v2607, 0.0
      %v3938 = vmax.f32 %v2612, 0.0
      %v3939 = vmax.f32 %v2617, 0.0
      %v3940 = vmax.f32 %v2622, 0.0
      %v3941 = vmax.f32 %v2627, 0.0
      %v3942 = vmax.f32 %v2632, 0.0
      %v3943 = vmax.f32 %v2637, 0.0
      %v3944 = vmax.f32 %v2642, 0.0
      %v3945 = vmax.f32 %v2647, 0.0
      %v3946 = vmax.f32 %v2652, 0.0
      %v3947 = vmax.f32 %v2657, 0.0
      %v3948 = vmax.f32 %v2662, 0.0
      %v3949 = vmax.f32 %v2667, 0.0
      %v3950 = vmax.f32 %v2672, 0.0
      %v3951 = vmax.f32 %v2677, 0.0
      %v3952 = vmax.f32 %v2682, 0.0
      %v3953 = vmax.f32 %v2687, 0.0
      %v3954 = vmax.f32 %v2692, 0.0
      %v3955 = vmax.f32 %v2697, 0.0
      %v3956 = vmax.f32 %v2702, 0.0
      %v3957 = vmax.f32 %v2707, 0.0
      %v3958 = vmax.f32 %v2712, 0.0
      %v3959 = vmax.f32 %v2717, 0.0
      %v3960 = vmax.f32 %v2722, 0.0
      %v3961 = vmax.f32 %v2727, 0.0
      %v3962 = vmax.f32 %v2732, 0.0
      %v3963 = vmax.f32 %v2737, 0.0
      %v3964 = vmax.f32 %v2742, 0.0
      %v3965 = vmax.f32 %v2747, 0.0
      %v3966 = vmax.f32 %v2752, 0.0
      %v3967 = vmax.f32 %v2757, 0.0
      %v3968 = vmax.f32 %v2762, 0.0
      %v3969 = vmax.f32 %v2767, 0.0
      %v3970 = vmax.f32 %v2772, 0.0
      %v3971 = vmax.f32 %v2777, 0.0
      %v3972 = vmax.f32 %v2782, 0.0
      %v3973 = vmax.f32 %v2787, 0.0
      %v3974 = vmax.f32 %v2792, 0.0
      %v3975 = vmax.f32 %v2797, 0.0
      %v3976 = vmax.f32 %v2802, 0.0
      %v3977 = vmax.f32 %v2807, 0.0
      %v3978 = vmax.f32 %v2812, 0.0
      %v3979 = vmax.f32 %v2817, 0.0
      %v3980 = vmax.f32 %v2822, 0.0
      %v3981 = vmax.f32 %v2827, 0.0
      %v3982 = vmax.f32 %v2832, 0.0
      %v3983 = vmax.f32 %v2837, 0.0
      %v3984 = vmax.f32 %v2842, 0.0
      %v3985 = vmax.f32 %v2847, 0.0
      %v3986 = vmax.f32 %v2852, 0.0
      %v3987 = vmax.f32 %v2857, 0.0
      %v3988 = vmax.f32 %v2862, 0.0
      %v3989 = vmax.f32 %v2867, 0.0
      %v3990 = vmax.f32 %v2872, 0.0
      %v3991 = vmax.f32 %v2877, 0.0
      %v3992 = vmax.f32 %v2882, 0.0
      %v3993 = vmax.f32 %v2887, 0.0
      %v3994 = vmax.f32 %v2892, 0.0
      %v3995 = vmax.f32 %v2897, 0.0
      %v3996 = vmax.f32 %v2902, 0.0
      %v3997 = vmax.f32 %v2907, 0.0
      %v3998 = vmax.f32 %v2912, 0.0
      %v3999 = vmax.f32 %v2917, 0.0
      %v4000 = vmax.f32 %v2922, 0.0
      %v4001 = vmax.f32 %v2927, 0.0
      %v4002 = vmax.f32 %v2932, 0.0
      %v4003 = vmax.f32 %v2937, 0.0
      %v4004 = vmax.f32 %v2942, 0.0
      %v4005 = vmax.f32 %v2947, 0.0
      %v4006 = vmax.f32 %v2952, 0.0
      %v4007 = vmax.f32 %v2957, 0.0
      %v4008 = vmax.f32 %v2962, 0.0
      %v4009 = vmax.f32 %v2967, 0.0
      %v4010 = vmax.f32 %v2972, 0.0
      %v4011 = vmax.f32 %v2977, 0.0
      %v4012 = vmax.f32 %v2982, 0.0
      %v4013 = vmax.f32 %v2987, 0.0
      %v4014 = vmax.f32 %v2992, 0.0
      %v4015 = vmax.f32 %v2997, 0.0
      %v4016 = vmax.f32 %v3002, 0.0
      %v4017 = vmax.f32 %v3007, 0.0
      %v4018 = vmax.f32 %v3012, 0.0
      %v4019 = vmax.f32 %v3017, 0.0
      %v4020 = vmax.f32 %v3022, 0.0
      %v4021 = vmax.f32 %v3027, 0.0
      %v4022 = vmax.f32 %v3032, 0.0
      %v4023 = vmax.f32 %v3037, 0.0
      %v4024 = vmax.f32 %v3042, 0.0
      %v4025 = vmax.f32 %v3047, 0.0
      %v4026 = vmax.f32 %v3052, 0.0
      %v4027 = vmax.f32 %v3057, 0.0
      %v4028 = vmax.f32 %v3062, 0.0
      %v4029 = vmax.f32 %v3067, 0.0
      %v4030 = vmax.f32 %v3072, 0.0
      %v4031 = vmax.f32 %v3077, 0.0
      %v4032 = vmax.f32 %v3082, 0.0
      %v4033 = vmax.f32 %v3087, 0.0
      %v4034 = vmax.f32 %v3092, 0.0
      %v4035 = vmax.f32 %v3097, 0.0
      %v4036 = vmax.f32 %v3102, 0.0
      %v4037 = vmax.f32 %v3107, 0.0
      %v4038 = vmax.f32 %v3112, 0.0
      %v4039 = vmax.f32 %v3117, 0.0
      %v4040 = vmax.f32 %v3122, 0.0
      %v4041 = vmax.f32 %v3127, 0.0
      %v4042 = vmax.f32 %v3132, 0.0
      %v4043 = vmax.f32 %v3137, 0.0
      %v4044 = vmax.f32 %v3142, 0.0
      %v4045 = vmax.f32 %v3147, 0.0
      %v4046 = vmax.f32 %v3152, 0.0
      %v4047 = vmax.f32 %v3157, 0.0
      %v4048 = vmax.f32 %v3162, 0.0
      %v4049 = vmax.f32 %v3167, 0.0
      %v4050 = vmax.f32 %v3172, 0.0
      %v4051 = vmax.f32 %v3177, 0.0
      %v4052 = vmax.f32 %v3182, 0.0
      %v4053 = vmax.f32 %v3187, 0.0
      %v4054 = vmax.f32 %v3192, 0.0
      %v4055 = vmax.f32 %v3197, 0.0
      %v4056 = vmax.f32 %v3202, 0.0
      %v4057 = vmax.f32 %v3207, 0.0
      %v4058 = vmax.f32 %v3212, 0.0
      %v4059 = vmax.f32 %v3217, 0.0
      %v4060 = vmax.f32 %v3222, 0.0
      %v4061 = vmax.f32 %v3227, 0.0
      %v4062 = vmax.f32 %v3232, 0.0
      %v4063 = vmax.f32 %v3237, 0.0
      %v4064 = vmax.f32 %v3242, 0.0
      %v4065 = vmax.f32 %v3247, 0.0
      %v4066 = vmax.f32 %v3252, 0.0
      %v4067 = vmax.f32 %v3257, 0.0
      %v4068 = vmax.f32 %v3262, 0.0
      %v4069 = vmax.f32 %v3267, 0.0
      %v4070 = vmax.f32 %v3272, 0.0
      %v4071 = vmax.f32 %v3277, 0.0
      %v4072 = vmax.f32 %v3282, 0.0
      %v4073 = vmax.f32 %v3287, 0.0
      %v4074 = vmax.f32 %v3292, 0.0
      %v4075 = vmax.f32 %v3297, 0.0
      %v4076 = vmax.f32 %v3302, 0.0
      %v4077 = vmax.f32 %v3307, 0.0
      %v4078 = vmax.f32 %v3312, 0.0
      %v4079 = vmax.f32 %v3317, 0.0
      %v4080 = vmax.f32 %v3322, 0.0
      %v4081 = vmax.f32 %v3327, 0.0
      %v4082 = vmax.f32 %v3332, 0.0
      %v4083 = vmax.f32 %v3337, 0.0
      %v4084 = vmax.f32 %v3342, 0.0
      %v4085 = vmax.f32 %v3347, 0.0
      %v4086 = vmax.f32 %v3352, 0.0
      %v4087 = vmax.f32 %v3357, 0.0
      %v4088 = vmax.f32 %v3362, 0.0
      %v4089 = vmax.f32 %v3367, 0.0
      %v4090 = vmax.f32 %v3372, 0.0
      %v4091 = vmax.f32 %v3377, 0.0
      %v4092 = vmax.f32 %v3382, 0.0
      %v4093 = vmax.f32 %v3387, 0.0
      %v4094 = vmax.f32 %v3392, 0.0
      %v4095 = vmax.f32 %v3397, 0.0
      %v4096 = vmax.f32 %v3402, 0.0
      %v4097 = vmax.f32 %v3407, 0.0
      %v4098 = vmax.f32 %v3412, 0.0
      %v4099 = vmax.f32 %v3417, 0.0
      %v4100 = vmax.f32 %v3422, 0.0
      %v4101 = vmax.f32 %v3427, 0.0
      %v4102 = vmax.f32 %v3432, 0.0
      %v4103 = vmax.f32 %v3437, 0.0
      %v4104 = vmax.f32 %v3442, 0.0
      %v4105 = vmax.f32 %v3447, 0.0
      %v4106 = vmax.f32 %v3452, 0.0
      %v4107 = vmax.f32 %v3457, 0.0
      %v4108 = vmax.f32 %v3462, 0.0
      %v4109 = vmax.f32 %v3467, 0.0
      %v4110 = vmax.f32 %v3472, 0.0
      %v4111 = vmax.f32 %v3477, 0.0
      %v4112 = vmax.f32 %v3482, 0.0
      %v4113 = vmax.f32 %v3487, 0.0
      %v4114 = vmax.f32 %v3492, 0.0
      %v4115 = vmax.f32 %v3497, 0.0
      %v4116 = vmax.f32 %v3502, 0.0
      %v4117 = vmax.f32 %v3507, 0.0
      %v4118 = vmax.f32 %v3512, 0.0
      %v4119 = vmax.f32 %v3517, 0.0
      %v4120 = vmax.f32 %v3522, 0.0
      %v4121 = vmax.f32 %v3527, 0.0
      %v4122 = vmax.f32 %v3532, 0.0
      %v4123 = vmax.f32 %v3537, 0.0
      %v4124 = vmax.f32 %v3542, 0.0
      %v4125 = vmax.f32 %v3547, 0.0
      %v4126 = vmax.f32 %v3552, 0.0
      %v4127 = vmax.f32 %v3557, 0.0
      %v4128 = vmax.f32 %v3562, 0.0
      %v4129 = vmax.f32 %v3567, 0.0
      %v4130 = vmax.f32 %v3572, 0.0
      %v4131 = vmax.f32 %v3577, 0.0
      %v4132 = vmax.f32 %v3582, 0.0
      %v4133 = vmax.f32 %v3587, 0.0
      %v4134 = vmax.f32 %v3592, 0.0
      %v4135 = vmax.f32 %v3597, 0.0
      %v4136 = vmax.f32 %v3602, 0.0
      %v4137 = vmax.f32 %v3607, 0.0
      %v4138 = vmax.f32 %v3612, 0.0
      %v4139 = vmax.f32 %v3617, 0.0
      %v4140 = vmax.f32 %v3622, 0.0
      %v4141 = vmax.f32 %v3627, 0.0
      %v4142 = vmax.f32 %v3632, 0.0
      %v4143 = vmax.f32 %v3637, 0.0
      %v4144 = vmax.f32 %v3642, 0.0
      %v4145 = vmax.f32 %v3647, 0.0
      %v4146 = vmax.f32 %v3652, 0.0
      %v4147 = vmax.f32 %v3657, 0.0
      %v4148 = vmax.f32 %v3662, 0.0
      %v4149 = vmax.f32 %v3667, 0.0
      %v4150 = vmax.f32 %v3672, 0.0
      %v4151 = vmax.f32 %v3677, 0.0
      %v4152 = vmax.f32 %v3682, 0.0
      %v4153 = vmax.f32 %v3687, 0.0
      %v4154 = vmax.f32 %v3692, 0.0
      %v4155 = vmax.f32 %v3697, 0.0
      %v4156 = vmax.f32 %v3702, 0.0
      %v4157 = vmax.f32 %v3707, 0.0
      %v4158 = vmax.f32 %v3712, 0.0
      %v4159 = vmax.f32 %v3717, 0.0
      %v4160 = vmax.f32 %v3722, 0.0
      %v4161 = vmax.f32 %v3727, 0.0
      %v4162 = vmax.f32 %v3732, 0.0
      %v4163 = vmax.f32 %v3737, 0.0
      %v4164 = vmax.f32 %v3742, 0.0
      %v4165 = vmax.f32 %v3747, 0.0
      %v4166 = vmax.f32 %v3752, 0.0
      %v4167 = vmax.f32 %v3757, 0.0
      %v4168 = vmax.f32 %v3762, 0.0
      %v4169 = vmax.f32 %v3767, 0.0
      %v4170 = vmax.f32 %v3772, 0.0
      %v4171 = vmax.f32 %v3777, 0.0
      %v4172 = vmax.f32 %v3780, %v3878
      %v4173 = vmax.f32 %v3781, %v3879
      %v4174 = vmax.f32 %v3782, %v3880
      %v4175 = vmax.f32 %v3783, %v3881
      %v4176 = vmax.f32 %v3784, %v3882
      %v4177 = vmax.f32 %v3785, %v3883
      %v4178 = vmax.f32 %v3786, %v3884
      %v4179 = vmax.f32 %v3787, %v3885
      %v4180 = vmax.f32 %v3788, %v3886
      %v4181 = vmax.f32 %v3789, %v3887
      %v4182 = vmax.f32 %v3790, %v3888
      %v4183 = vmax.f32 %v3791, %v3889
      %v4184 = vmax.f32 %v3792, %v3890
      %v4185 = vmax.f32 %v3793, %v3891
      %v4186 = vmax.f32 %v3794, %v3892
      %v4187 = vmax.f32 %v3795, %v3893
      %v4188 = vmax.f32 %v3796, %v3894
      %v4189 = vmax.f32 %v3797, %v3895
      %v4190 = vmax.f32 %v3798, %v3896
      %v4191 = vmax.f32 %v3799, %v3897
      %v4192 = vmax.f32 %v3800, %v3898
      %v4193 = vmax.f32 %v3801, %v3899
      %v4194 = vmax.f32 %v3802, %v3900
      %v4195 = vmax.f32 %v3803, %v3901
      %v4196 = vmax.f32 %v3804, %v3902
      %v4197 = vmax.f32 %v3805, %v3903
      %v4198 = vmax.f32 %v3806, %v3904
      %v4199 = vmax.f32 %v3807, %v3905
      %v4200 = vmax.f32 %v3808, %v3906
      %v4201 = vmax.f32 %v3809, %v3907
      %v4202 = vmax.f32 %v3810, %v3908
      %v4203 = vmax.f32 %v3811, %v3909
      %v4204 = vmax.f32 %v3812, %v3910
      %v4205 = vmax.f32 %v3813, %v3911
      %v4206 = vmax.f32 %v3814, %v3912
      %v4207 = vmax.f32 %v3815, %v3913
      %v4208 = vmax.f32 %v3816, %v3914
      %v4209 = vmax.f32 %v3817, %v3915
      %v4210 = vmax.f32 %v3818, %v3916
      %v4211 = vmax.f32 %v3819, %v3917
      %v4212 = vmax.f32 %v3820, %v3918
      %v4213 = vmax.f32 %v3821, %v3919
      %v4214 = vmax.f32 %v3822, %v3920
      %v4215 = vmax.f32 %v3823, %v3921
      %v4216 = vmax.f32 %v3824, %v3922
      %v4217 = vmax.f32 %v3825, %v3923
      %v4218 = vmax.f32 %v3826, %v3924
      %v4219 = vmax.f32 %v3827, %v3925
      %v4220 = vmax.f32 %v3828, %v3926
      %v4221 = vmax.f32 %v3829, %v3927
      %v4222 = vmax.f32 %v3830, %v3928
      %v4223 = vmax.f32 %v3831, %v3929
      %v4224 = vmax.f32 %v3832, %v3930
      %v4225 = vmax.f32 %v3833, %v3931
      %v4226 = vmax.f32 %v3834, %v3932
      %v4227 = vmax.f32 %v3835, %v3933
      %v4228 = vmax.f32 %v3836, %v3934
      %v4229 = vmax.f32 %v3837, %v3935
      %v4230 = vmax.f32 %v3838, %v3936
      %v4231 = vmax.f32 %v3839, %v3937
      %v4232 = vmax.f32 %v3840, %v3938
      %v4233 = vmax.f32 %v3841, %v3939
      %v4234 = vmax.f32 %v3842, %v3940
      %v4235 = vmax.f32 %v3843, %v3941
      %v4236 = vmax.f32 %v3844, %v3942
      %v4237 = vmax.f32 %v3845, %v3943
      %v4238 = vmax.f32 %v3846, %v3944
      %v4239 = vmax.f32 %v3847, %v3945
      %v4240 = vmax.f32 %v3848, %v3946
      %v4241 = vmax.f32 %v3849, %v3947
      %v4242 = vmax.f32 %v3850, %v3948
      %v4243 = vmax.f32 %v3851, %v3949
      %v4244 = vmax.f32 %v3852, %v3950
      %v4245 = vmax.f32 %v3853, %v3951
      %v4246 = vmax.f32 %v3854, %v3952
      %v4247 = vmax.f32 %v3855, %v3953
      %v4248 = vmax.f32 %v3856, %v3954
      %v4249 = vmax.f32 %v3857, %v3955
      %v4250 = vmax.f32 %v3858, %v3956
      %v4251 = vmax.f32 %v3859, %v3957
      %v4252 = vmax.f32 %v3860, %v3958
      %v4253 = vmax.f32 %v3861, %v3959
      %v4254 = vmax.f32 %v3862, %v3960
      %v4255 = vmax.f32 %v3863, %v3961
      %v4256 = vmax.f32 %v3864, %v3962
      %v4257 = vmax.f32 %v3865, %v3963
      %v4258 = vmax.f32 %v3866, %v3964
      %v4259 = vmax.f32 %v3867, %v3965
      %v4260 = vmax.f32 %v3868, %v3966
      %v4261 = vmax.f32 %v3869, %v3967
      %v4262 = vmax.f32 %v3870, %v3968
      %v4263 = vmax.f32 %v3871, %v3969
      %v4264 = vmax.f32 %v3872, %v3970
      %v4265 = vmax.f32 %v3873, %v3971
      %v4266 = vmax.f32 %v3874, %v3972
      %v4267 = vmax.f32 %v3875, %v3973
      %v4268 = vmax.f32 %v3876, %v3974
      %v4269 = vmax.f32 %v3877, %v3975
      %v4270 = vmax.f32 %v3976, %v4074
      %v4271 = vmax.f32 %v3977, %v4075
      %v4272 = vmax.f32 %v3978, %v4076
      %v4273 = vmax.f32 %v3979, %v4077
      %v4274 = vmax.f32 %v3980, %v4078
      %v4275 = vmax.f32 %v3981, %v4079
      %v4276 = vmax.f32 %v3982, %v4080
      %v4277 = vmax.f32 %v3983, %v4081
      %v4278 = vmax.f32 %v3984, %v4082
      %v4279 = vmax.f32 %v3985, %v4083
      %v4280 = vmax.f32 %v3986, %v4084
      %v4281 = vmax.f32 %v3987, %v4085
      %v4282 = vmax.f32 %v3988, %v4086
      %v4283 = vmax.f32 %v3989, %v4087
      %v4284 = vmax.f32 %v3990, %v4088
      %v4285 = vmax.f32 %v3991, %v4089
      %v4286 = vmax.f32 %v3992, %v4090
      %v4287 = vmax.f32 %v3993, %v4091
      %v4288 = vmax.f32 %v3994, %v4092
      %v4289 = vmax.f32 %v3995, %v4093
      %v4290 = vmax.f32 %v3996, %v4094
      %v4291 = vmax.f32 %v3997, %v4095
      %v4292 = vmax.f32 %v3998, %v4096
      %v4293 = vmax.f32 %v3999, %v4097
      %v4294 = vmax.f32 %v4000, %v4098
      %v4295 = vmax.f32 %v4001, %v4099
      %v4296 = vmax.f32 %v4002, %v4100
      %v4297 = vmax.f32 %v4003, %v4101
      %v4298 = vmax.f32 %v4004, %v4102
      %v4299 = vmax.f32 %v4005, %v4103
      %v4300 = vmax.f32 %v4006, %v4104
      %v4301 = vmax.f32 %v4007, %v4105
      %v4302 = vmax.f32 %v4008, %v4106
      %v4303 = vmax.f32 %v4009, %v4107
      %v4304 = vmax.f32 %v4010, %v4108
      %v4305 = vmax.f32 %v4011, %v4109
      %v4306 = vmax.f32 %v4012, %v4110
      %v4307 = vmax.f32 %v4013, %v4111
      %v4308 = vmax.f32 %v4014, %v4112
      %v4309 = vmax.f32 %v4015, %v4113
      %v4310 = vmax.f32 %v4016, %v4114
      %v4311 = vmax.f32 %v4017, %v4115
      %v4312 = vmax.f32 %v4018, %v4116
      %v4313 = vmax.f32 %v4019, %v4117
      %v4314 = vmax.f32 %v4020, %v4118
      %v4315 = vmax.f32 %v4021, %v4119
      %v4316 = vmax.f32 %v4022, %v4120
      %v4317 = vmax.f32 %v4023, %v4121
      %v4318 = vmax.f32 %v4024, %v4122
      %v4319 = vmax.f32 %v4025, %v4123
      %v4320 = vmax.f32 %v4026, %v4124
      %v4321 = vmax.f32 %v4027, %v4125
      %v4322 = vmax.f32 %v4028, %v4126
      %v4323 = vmax.f32 %v4029, %v4127
      %v4324 = vmax.f32 %v4030, %v4128
      %v4325 = vmax.f32 %v4031, %v4129
      %v4326 = vmax.f32 %v4032, %v4130
      %v4327 = vmax.f32 %v4033, %v4131
      %v4328 = vmax.f32 %v4034, %v4132
      %v4329 = vmax.f32 %v4035, %v4133
      %v4330 = vmax.f32 %v4036, %v4134
      %v4331 = vmax.f32 %v4037, %v4135
      %v4332 = vmax.f32 %v4038, %v4136
      %v4333 = vmax.f32 %v4039, %v4137
      %v4334 = vmax.f32 %v4040, %v4138
      %v4335 = vmax.f32 %v4041, %v4139
      %v4336 = vmax.f32 %v4042, %v4140
      %v4337 = vmax.f32 %v4043, %v4141
      %v4338 = vmax.f32 %v4044, %v4142
      %v4339 = vmax.f32 %v4045, %v4143
      %v4340 = vmax.f32 %v4046, %v4144
      %v4341 = vmax.f32 %v4047, %v4145
      %v4342 = vmax.f32 %v4048, %v4146
      %v4343 = vmax.f32 %v4049, %v4147
      %v4344 = vmax.f32 %v4050, %v4148
      %v4345 = vmax.f32 %v4051, %v4149
      %v4346 = vmax.f32 %v4052, %v4150
      %v4347 = vmax.f32 %v4053, %v4151
      %v4348 = vmax.f32 %v4054, %v4152
      %v4349 = vmax.f32 %v4055, %v4153
      %v4350 = vmax.f32 %v4056, %v4154
      %v4351 = vmax.f32 %v4057, %v4155
      %v4352 = vmax.f32 %v4058, %v4156
      %v4353 = vmax.f32 %v4059, %v4157
      %v4354 = vmax.f32 %v4060, %v4158
      %v4355 = vmax.f32 %v4061, %v4159
      %v4356 = vmax.f32 %v4062, %v4160
      %v4357 = vmax.f32 %v4063, %v4161
      %v4358 = vmax.f32 %v4064, %v4162
      %v4359 = vmax.f32 %v4065, %v4163
      %v4360 = vmax.f32 %v4066, %v4164
      %v4361 = vmax.f32 %v4067, %v4165
      %v4362 = vmax.f32 %v4068, %v4166
      %v4363 = vmax.f32 %v4069, %v4167
      %v4364 = vmax.f32 %v4070, %v4168
      %v4365 = vmax.f32 %v4071, %v4169
      %v4366 = vmax.f32 %v4072, %v4170
      %v4367 = vmax.f32 %v4073, %v4171
      %v4368 = vmax.f32 %v4172, %v4270
      %v4369 = vmax.f32 %v4173, %v4271
      %v4370 = vmax.f32 %v4174, %v4272
      %v4371 = vmax.f32 %v4175, %v4273
      %v4372 = vmax.f32 %v4176, %v4274
      %v4373 = vmax.f32 %v4177, %v4275
      %v4374 = vmax.f32 %v4178, %v4276
      %v4375 = vmax.f32 %v4179, %v4277
      %v4376 = vmax.f32 %v4180, %v4278
      %v4377 = vmax.f32 %v4181, %v4279
      %v4378 = vmax.f32 %v4182, %v4280
      %v4379 = vmax.f32 %v4183, %v4281
      %v4380 = vmax.f32 %v4184, %v4282
      %v4381 = vmax.f32 %v4185, %v4283
      %v4382 = vmax.f32 %v4186, %v4284
      %v4383 = vmax.f32 %v4187, %v4285
      %v4384 = vmax.f32 %v4188, %v4286
      %v4385 = vmax.f32 %v4189, %v4287
      %v4386 = vmax.f32 %v4190, %v4288
      %v4387 = vmax.f32 %v4191, %v4289
      %v4388 = vmax.f32 %v4192, %v4290
      %v4389 = vmax.f32 %v4193, %v4291
      %v4390 = vmax.f32 %v4194, %v4292
      %v4391 = vmax.f32 %v4195, %v4293
      %v4392 = vmax.f32 %v4196, %v4294
      %v4393 = vmax.f32 %v4197, %v4295
      %v4394 = vmax.f32 %v4198, %v4296
      %v4395 = vmax.f32 %v4199, %v4297
      %v4396 = vmax.f32 %v4200, %v4298
      %v4397 = vmax.f32 %v4201, %v4299
      %v4398 = vmax.f32 %v4202, %v4300
      %v4399 = vmax.f32 %v4203, %v4301
      %v4400 = vmax.f32 %v4204, %v4302
      %v4401 = vmax.f32 %v4205, %v4303
      %v4402 = vmax.f32 %v4206, %v4304
      %v4403 = vmax.f32 %v4207, %v4305
      %v4404 = vmax.f32 %v4208, %v4306
      %v4405 = vmax.f32 %v4209, %v4307
      %v4406 = vmax.f32 %v4210, %v4308
      %v4407 = vmax.f32 %v4211, %v4309
      %v4408 = vmax.f32 %v4212, %v4310
      %v4409 = vmax.f32 %v4213, %v4311
      %v4410 = vmax.f32 %v4214, %v4312
      %v4411 = vmax.f32 %v4215, %v4313
      %v4412 = vmax.f32 %v4216, %v4314
      %v4413 = vmax.f32 %v4217, %v4315
      %v4414 = vmax.f32 %v4218, %v4316
      %v4415 = vmax.f32 %v4219, %v4317
      %v4416 = vmax.f32 %v4220, %v4318
      %v4417 = vmax.f32 %v4221, %v4319
      %v4418 = vmax.f32 %v4222, %v4320
      %v4419 = vmax.f32 %v4223, %v4321
      %v4420 = vmax.f32 %v4224, %v4322
      %v4421 = vmax.f32 %v4225, %v4323
      %v4422 = vmax.f32 %v4226, %v4324
      %v4423 = vmax.f32 %v4227, %v4325
      %v4424 = vmax.f32 %v4228, %v4326
      %v4425 = vmax.f32 %v4229, %v4327
      %v4426 = vmax.f32 %v4230, %v4328
      %v4427 = vmax.f32 %v4231, %v4329
      %v4428 = vmax.f32 %v4232, %v4330
      %v4429 = vmax.f32 %v4233, %v4331
      %v4430 = vmax.f32 %v4234, %v4332
      %v4431 = vmax.f32 %v4235, %v4333
      %v4432 = vmax.f32 %v4236, %v4334
      %v4433 = vmax.f32 %v4237, %v4335
      %v4434 = vmax.f32 %v4238, %v4336
      %v4435 = vmax.f32 %v4239, %v4337
      %v4436 = vmax.f32 %v4240, %v4338
      %v4437 = vmax.f32 %v4241, %v4339
      %v4438 = vmax.f32 %v4242, %v4340
      %v4439 = vmax.f32 %v4243, %v4341
      %v4440 = vmax.f32 %v4244, %v4342
      %v4441 = vmax.f32 %v4245, %v4343
      %v4442 = vmax.f32 %v4246, %v4344
      %v4443 = vmax.f32 %v4247, %v4345
      %v4444 = vmax.f32 %v4248, %v4346
      %v4445 = vmax.f32 %v4249, %v4347
      %v4446 = vmax.f32 %v4250, %v4348
      %v4447 = vmax.f32 %v4251, %v4349
      %v4448 = vmax.f32 %v4252, %v4350
      %v4449 = vmax.f32 %v4253, %v4351
      %v4450 = vmax.f32 %v4254, %v4352
      %v4451 = vmax.f32 %v4255, %v4353
      %v4452 = vmax.f32 %v4256, %v4354
      %v4453 = vmax.f32 %v4257, %v4355
      %v4454 = vmax.f32 %v4258, %v4356
      %v4455 = vmax.f32 %v4259, %v4357
      %v4456 = vmax.f32 %v4260, %v4358
      %v4457 = vmax.f32 %v4261, %v4359
      %v4458 = vmax.f32 %v4262, %v4360
      %v4459 = vmax.f32 %v4263, %v4361
      %v4460 = vmax.f32 %v4264, %v4362
      %v4461 = vmax.f32 %v4265, %v4363
      %v4462 = vmax.f32 %v4266, %v4364
      %v4463 = vmax.f32 %v4267, %v4365
      %v4464 = vmax.f32 %v4268, %v4366
      %v4465 = vmax.f32 %v4269, %v4367
      %vm4466 = vcmask 130048
      %4467 = vst.msk [vmem:[%s170] sm:$0xff] %vm4466, %v4368
      %4468 = vst.msk [vmem:[%s170 + $0x8] sm:$0xff] %vm4466, %v4369
      %4469 = vst.msk [vmem:[%s170 + $0x10] sm:$0xff] %vm4466, %v4370
      %4470 = vst.msk [vmem:[%s170 + $0x18] sm:$0xff] %vm4466, %v4371
      %4471 = vst.msk [vmem:[%s170 + $0x20] sm:$0xff] %vm4466, %v4372
      %4472 = vst.msk [vmem:[%s170 + $0x28] sm:$0xff] %vm4466, %v4373
      %4473 = vst.msk [vmem:[%s170 + $0x30] sm:$0xff] %vm4466, %v4374
      %4474 = vst.msk [vmem:[%s170 + $0x38] sm:$0xff] %vm4466, %v4375
      %4475 = vst.msk [vmem:[%s170 + $0x40] sm:$0xff] %vm4466, %v4376
      %4476 = vst.msk [vmem:[%s170 + $0x48] sm:$0xff] %vm4466, %v4377
      %4477 = vst.msk [vmem:[%s170 + $0x50] sm:$0xff] %vm4466, %v4378
      %4478 = vst.msk [vmem:[%s170 + $0x58] sm:$0xff] %vm4466, %v4379
      %4479 = vst.msk [vmem:[%s170 + $0x60] sm:$0xff] %vm4466, %v4380
      %4480 = vst.msk [vmem:[%s170 + $0x68] sm:$0xff] %vm4466, %v4381
      %4481 = vst.msk [vmem:[%s170 + $0x70] sm:$0xff] %vm4466, %v4382
      %4482 = vst.msk [vmem:[%s170 + $0x78] sm:$0xff] %vm4466, %v4383
      %4483 = vst.msk [vmem:[%s170 + $0x80] sm:$0xff] %vm4466, %v4384
      %4484 = vst.msk [vmem:[%s170 + $0x88] sm:$0xff] %vm4466, %v4385
      %4485 = vst.msk [vmem:[%s170 + $0x90] sm:$0xff] %vm4466, %v4386
      %4486 = vst.msk [vmem:[%s170 + $0x98] sm:$0xff] %vm4466, %v4387
      %4487 = vst.msk [vmem:[%s170 + $0xa0] sm:$0xff] %vm4466, %v4388
      %4488 = vst.msk [vmem:[%s170 + $0xa8] sm:$0xff] %vm4466, %v4389
      %4489 = vst.msk [vmem:[%s170 + $0xb0] sm:$0xff] %vm4466, %v4390
      %4490 = vst.msk [vmem:[%s170 + $0xb8] sm:$0xff] %vm4466, %v4391
      %4491 = vst.msk [vmem:[%s170 + $0xc0] sm:$0xff] %vm4466, %v4392
      %4492 = vst.msk [vmem:[%s170 + $0xc8] sm:$0xff] %vm4466, %v4393
      %4493 = vst.msk [vmem:[%s170 + $0xd0] sm:$0xff] %vm4466, %v4394
      %4494 = vst.msk [vmem:[%s170 + $0xd8] sm:$0xff] %vm4466, %v4395
      %4495 = vst.msk [vmem:[%s170 + $0xe0] sm:$0xff] %vm4466, %v4396
      %4496 = vst.msk [vmem:[%s170 + $0xe8] sm:$0xff] %vm4466, %v4397
      %4497 = vst.msk [vmem:[%s170 + $0xf0] sm:$0xff] %vm4466, %v4398
      %4498 = vst.msk [vmem:[%s170 + $0xf8] sm:$0xff] %vm4466, %v4399
      %4499 = vst.msk [vmem:[%s170 + $0x100] sm:$0xff] %vm4466, %v4400
      %4500 = vst.msk [vmem:[%s170 + $0x108] sm:$0xff] %vm4466, %v4401
      %4501 = vst.msk [vmem:[%s170 + $0x110] sm:$0xff] %vm4466, %v4402
      %4502 = vst.msk [vmem:[%s170 + $0x118] sm:$0xff] %vm4466, %v4403
      %4503 = vst.msk [vmem:[%s170 + $0x120] sm:$0xff] %vm4466, %v4404
      %4504 = vst.msk [vmem:[%s170 + $0x128] sm:$0xff] %vm4466, %v4405
      %4505 = vst.msk [vmem:[%s170 + $0x130] sm:$0xff] %vm4466, %v4406
      %4506 = vst.msk [vmem:[%s170 + $0x138] sm:$0xff] %vm4466, %v4407
      %4507 = vst.msk [vmem:[%s170 + $0x140] sm:$0xff] %vm4466, %v4408
      %4508 = vst.msk [vmem:[%s170 + $0x148] sm:$0xff] %vm4466, %v4409
      %4509 = vst.msk [vmem:[%s170 + $0x150] sm:$0xff] %vm4466, %v4410
      %4510 = vst.msk [vmem:[%s170 + $0x158] sm:$0xff] %vm4466, %v4411
      %4511 = vst.msk [vmem:[%s170 + $0x160] sm:$0xff] %vm4466, %v4412
      %4512 = vst.msk [vmem:[%s170 + $0x168] sm:$0xff] %vm4466, %v4413
      %4513 = vst.msk [vmem:[%s170 + $0x170] sm:$0xff] %vm4466, %v4414
      %4514 = vst.msk [vmem:[%s170 + $0x178] sm:$0xff] %vm4466, %v4415
      %4515 = vst.msk [vmem:[%s170 + $0x180] sm:$0xff] %vm4466, %v4416
      %4516 = vst.msk [vmem:[%s170 + $0x188] sm:$0xff] %vm4466, %v4417
      %4517 = vst.msk [vmem:[%s170 + $0x190] sm:$0xff] %vm4466, %v4418
      %4518 = vst.msk [vmem:[%s170 + $0x198] sm:$0xff] %vm4466, %v4419
      %4519 = vst.msk [vmem:[%s170 + $0x1a0] sm:$0xff] %vm4466, %v4420
      %4520 = vst.msk [vmem:[%s170 + $0x1a8] sm:$0xff] %vm4466, %v4421
      %4521 = vst.msk [vmem:[%s170 + $0x1b0] sm:$0xff] %vm4466, %v4422
      %4522 = vst.msk [vmem:[%s170 + $0x1b8] sm:$0xff] %vm4466, %v4423
      %4523 = vst.msk [vmem:[%s170 + $0x1c0] sm:$0xff] %vm4466, %v4424
      %4524 = vst.msk [vmem:[%s170 + $0x1c8] sm:$0xff] %vm4466, %v4425
      %4525 = vst.msk [vmem:[%s170 + $0x1d0] sm:$0xff] %vm4466, %v4426
      %4526 = vst.msk [vmem:[%s170 + $0x1d8] sm:$0xff] %vm4466, %v4427
      %4527 = vst.msk [vmem:[%s170 + $0x1e0] sm:$0xff] %vm4466, %v4428
      %4528 = vst.msk [vmem:[%s170 + $0x1e8] sm:$0xff] %vm4466, %v4429
      %4529 = vst.msk [vmem:[%s170 + $0x1f0] sm:$0xff] %vm4466, %v4430
      %4530 = vst.msk [vmem:[%s170 + $0x1f8] sm:$0xff] %vm4466, %v4431
      %4531 = vst.msk [vmem:[%s170 + $0x200] sm:$0xff] %vm4466, %v4432
      %4532 = vst.msk [vmem:[%s170 + $0x208] sm:$0xff] %vm4466, %v4433
      %4533 = vst.msk [vmem:[%s170 + $0x210] sm:$0xff] %vm4466, %v4434
      %4534 = vst.msk [vmem:[%s170 + $0x218] sm:$0xff] %vm4466, %v4435
      %4535 = vst.msk [vmem:[%s170 + $0x220] sm:$0xff] %vm4466, %v4436
      %4536 = vst.msk [vmem:[%s170 + $0x228] sm:$0xff] %vm4466, %v4437
      %4537 = vst.msk [vmem:[%s170 + $0x230] sm:$0xff] %vm4466, %v4438
      %4538 = vst.msk [vmem:[%s170 + $0x238] sm:$0xff] %vm4466, %v4439
      %4539 = vst.msk [vmem:[%s170 + $0x240] sm:$0xff] %vm4466, %v4440
      %4540 = vst.msk [vmem:[%s170 + $0x248] sm:$0xff] %vm4466, %v4441
      %4541 = vst.msk [vmem:[%s170 + $0x250] sm:$0xff] %vm4466, %v4442
      %4542 = vst.msk [vmem:[%s170 + $0x258] sm:$0xff] %vm4466, %v4443
      %4543 = vst.msk [vmem:[%s170 + $0x260] sm:$0xff] %vm4466, %v4444
      %4544 = vst.msk [vmem:[%s170 + $0x268] sm:$0xff] %vm4466, %v4445
      %4545 = vst.msk [vmem:[%s170 + $0x270] sm:$0xff] %vm4466, %v4446
      %4546 = vst.msk [vmem:[%s170 + $0x278] sm:$0xff] %vm4466, %v4447
      %4547 = vst.msk [vmem:[%s170 + $0x280] sm:$0xff] %vm4466, %v4448
      %4548 = vst.msk [vmem:[%s170 + $0x288] sm:$0xff] %vm4466, %v4449
      %4549 = vst.msk [vmem:[%s170 + $0x290] sm:$0xff] %vm4466, %v4450
      %4550 = vst.msk [vmem:[%s170 + $0x298] sm:$0xff] %vm4466, %v4451
      %4551 = vst.msk [vmem:[%s170 + $0x2a0] sm:$0xff] %vm4466, %v4452
      %4552 = vst.msk [vmem:[%s170 + $0x2a8] sm:$0xff] %vm4466, %v4453
      %4553 = vst.msk [vmem:[%s170 + $0x2b0] sm:$0xff] %vm4466, %v4454
      %4554 = vst.msk [vmem:[%s170 + $0x2b8] sm:$0xff] %vm4466, %v4455
      %4555 = vst.msk [vmem:[%s170 + $0x2c0] sm:$0xff] %vm4466, %v4456
      %4556 = vst.msk [vmem:[%s170 + $0x2c8] sm:$0xff] %vm4466, %v4457
      %4557 = vst.msk [vmem:[%s170 + $0x2d0] sm:$0xff] %vm4466, %v4458
      %4558 = vst.msk [vmem:[%s170 + $0x2d8] sm:$0xff] %vm4466, %v4459
      %4559 = vst.msk [vmem:[%s170 + $0x2e0] sm:$0xff] %vm4466, %v4460
      %4560 = vst.msk [vmem:[%s170 + $0x2e8] sm:$0xff] %vm4466, %v4461
      %4561 = vst.msk [vmem:[%s170 + $0x2f0] sm:$0xff] %vm4466, %v4462
      %4562 = vst.msk [vmem:[%s170 + $0x2f8] sm:$0xff] %vm4466, %v4463
      %4563 = vst.msk [vmem:[%s170 + $0x300] sm:$0xff] %vm4466, %v4464
      %4564 = vst.msk [vmem:[%s170 + $0x308] sm:$0xff] %vm4466, %v4465
      %p4565 = scmp.lt.s32.totalorder %s14, 1
      %s4566 = scalar_select %p4565, %s14, 1
      %s4567 = smul.addr %s4566, 98
      %s4568 = smul.addr %s4567, 8
      %s4569 = scalar_lea.vmem %s3, %s4568
      // Predicated region
      $region33: #{cnn_forward.4} parent=31 // pred_check
        %p4570 = pneg %p100
      $region34: #{cnn_forward.4} parent=31 // pred_check_branch
        %4572 = sbr.rel (%p4570) target = $region36
      $region35: #{cnn_forward.4} parent=31 // pred_region
        _
      $region36: #{cnn_forward.4} parent=31 // pred_fallthru
        _
    $region32: #{cnn_forward.4} parent=5 // pred_fallthru
      _
    %p4573 = scmp.le.s32.totalorder 2, %s9
    // Predicated region
    $region37: #{cnn_forward.4} parent=5 // pred_check
      %p4574 = pneg %p4573
    $region38: #{cnn_forward.4} parent=5 // pred_check_branch
      %4576 = sbr.rel (%p4574) target = $region40
    $region39: #{cnn_forward.4} parent=5 // pred_region
      %s4577 = ssub.s32 %s9, 2
      // Predicated region
      $region41: #{cnn_forward.4} parent=39 // pred_check
        %p4578 = pneg %p106
      $region42: #{cnn_forward.4} parent=39 // pred_check_branch
        %4580 = sbr.rel (%p4578) target = $region44
      $region43: #{cnn_forward.4} parent=39 // pred_region
        %p4581 = scmp.lt.s32.totalorder %s15, 1
        %s4582 = scalar_select %p4581, %s15, 1
        %s4583 = smul.addr %s4582, 98
        %s4584 = smul.addr %s4583, 8
        %s4585 = scalar_lea.vmem %s3, %s4584
      $region44: #{cnn_forward.4} parent=39 // pred_fallthru
        _
    $region40: #{cnn_forward.4} parent=5 // pred_fallthru
      _
  $region6: #{cnn_forward.4} parent=0 // loop_footer
    %s13 = sadd.s32 1, %s9
  $region7: #{cnn_forward.4} parent=0 // loop_footer_branch
    %8 = sbr.rel target = $region3
  $region8: #{cnn_forward.4} parent=0 // loop_exit
    _

// kernel: cnn_forward.5
$region0: #{cnn_forward.5}
  #allocation0 [shape = 'u32[]', space=smem, size = 0x4, offset = 0x4, fixed_abs, tag = 'smem constant byte address 0x4 - core index']
  #allocation1 [shape = 'u32[144,128]{1,0:T(1,128)}', space=vmem, size = 0x12000, scoped, tag = 'internal scratch']
  %s0 = inlined_call_operand.vmem [shape: f32[2,800,400], index: 0, kind: input, shape index: {}]
  %s1 = inlined_call_operand.vmem [shape: f32[400,32], index: 1, kind: input, shape index: {}]
  %s2 = inlined_call_operand.vmem [shape: f32[1,32], index: 2, kind: input, shape index: {}]
  %s3 = inlined_call_operand.vmem [shape: f32[2,200,32], index: 3, kind: output, shape index: {}]
  %s4 = sld [smem:[#allocation0]]
  $region45: #{cnn_forward.5} parent=0
    _
  %s6 = ssub.s32 1, %s4
  %s7 = scalar_select 0, %s6, %s4
  loop: start=0, step=1, limit=4
  $region2: #{cnn_forward.5} parent=0 // loop_pre_header
    _
  $region3: #{cnn_forward.5} parent=0 // loop_header
    %s9 = sphi 0, %s13
    %p10 = scmp.ge.s32.totalorder %s9, 4
    %s19 = sphi 0, %s21
    %s22 = sphi 0, %s19
    %s23 = sphi 0, %s22
    %s39 = sphi 0, %s23
    %s43 = sphi 0, %s43
    %s45 = sphi 0, %s43
    %s46 = sphi 0, %s45
    %s60 = sphi 0, %s46
    %s64 = sphi 0, %s64
    %s66 = sphi 0, %s64
    %s67 = sphi 0, %s66
    %s81 = sphi 0, %s67
    %s87 = sphi 0, %s89
    %s90 = sphi 0, %s87
    %s91 = sphi 0, %s90
    %s107 = sphi 0, %s91
  $region4: #{cnn_forward.5} parent=0 // loop_header_branch
    %12 = sbr.rel (%p10) target = $region8
  $region5: #{cnn_forward.5} parent=0 // loop_body
    %s14 = ssub.s32 %s9, 1
    %s15 = ssub.s32 %s9, 2
    %s16 = sadd.s32 %s9, 1
    %s17 = ssub.s32 %s9, %s16
    %p18 = scmp.eq.s32.totalorder %s17, 0
    %s20 = sadd.s32 %s19, 1
    %s21 = scalar_select %p18, %s19, %s20
    %p24 = pneg %p18
    %p25 = scmp.eq.s32.totalorder %s9, 1
    %p26 = por %p24, %p25
    %p27 = scmp.ne.s32.totalorder %s19, %s22
    %p28 = scmp.eq.s32.totalorder %s9, 0
    %p29 = por %p27, %p28
    %p30 = scmp.ne.s32.totalorder %s19, %s22
    %p31 = scmp.eq.s32.totalorder %s14, 1
    %p32 = por %p30, %p31
    %p33 = scmp.ne.s32.totalorder %s22, %s23
    %p34 = scmp.eq.s32.totalorder %s14, 0
    %p35 = por %p33, %p34
    %p36 = scmp.ne.s32.totalorder %s22, %s23
    %p37 = scmp.eq.s32.totalorder %s15, 1
    %p38 = por %p36, %p37
    %p40 = scmp.ne.s32.totalorder %s23, %s39
    %p41 = scmp.eq.s32.totalorder %s15, 0
    %p42 = por %p40, %p41
    %s44 = sadd.s32 %s43, 1
    %p47 = scmp.eq.s32.totalorder %s9, 1
    %p48 = scmp.ne.s32.totalorder %s43, %s45
    %p49 = scmp.eq.s32.totalorder %s9, 0
    %p50 = por %p48, %p49
    %p51 = scmp.ne.s32.totalorder %s43, %s45
    %p52 = scmp.eq.s32.totalorder %s14, 1
    %p53 = por %p51, %p52
    %p54 = scmp.ne.s32.totalorder %s45, %s46
    %p55 = scmp.eq.s32.totalorder %s14, 0
    %p56 = por %p54, %p55
    %p57 = scmp.ne.s32.totalorder %s45, %s46
    %p58 = scmp.eq.s32.totalorder %s15, 1
    %p59 = por %p57, %p58
    %p61 = scmp.ne.s32.totalorder %s46, %s60
    %p62 = scmp.eq.s32.totalorder %s15, 0
    %p63 = por %p61, %p62
    %s65 = sadd.s32 %s64, 1
    %p68 = scmp.eq.s32.totalorder %s9, 1
    %p69 = scmp.ne.s32.totalorder %s64, %s66
    %p70 = scmp.eq.s32.totalorder %s9, 0
    %p71 = por %p69, %p70
    %p72 = scmp.ne.s32.totalorder %s64, %s66
    %p73 = scmp.eq.s32.totalorder %s14, 1
    %p74 = por %p72, %p73
    %p75 = scmp.ne.s32.totalorder %s66, %s67
    %p76 = scmp.eq.s32.totalorder %s14, 0
    %p77 = por %p75, %p76
    %p78 = scmp.ne.s32.totalorder %s66, %s67
    %p79 = scmp.eq.s32.totalorder %s15, 1
    %p80 = por %p78, %p79
    %p82 = scmp.ne.s32.totalorder %s67, %s81
    %p83 = scmp.eq.s32.totalorder %s15, 0
    %p84 = por %p82, %p83
    %s85 = ssub.s32 %s9, %s16
    %p86 = scmp.eq.s32.totalorder %s85, 0
    %s88 = sadd.s32 %s87, 1
    %s89 = scalar_select %p86, %s87, %s88
    %p92 = pneg %p86
    %p93 = scmp.eq.s32.totalorder %s9, 1
    %p94 = por %p92, %p93
    %p95 = scmp.ne.s32.totalorder %s87, %s90
    %p96 = scmp.eq.s32.totalorder %s9, 0
    %p97 = por %p95, %p96
    %p98 = scmp.ne.s32.totalorder %s87, %s90
    %p99 = scmp.eq.s32.totalorder %s14, 1
    %p100 = por %p98, %p99
    %p101 = scmp.ne.s32.totalorder %s90, %s91
    %p102 = scmp.eq.s32.totalorder %s14, 0
    %p103 = por %p101, %p102
    %p104 = scmp.ne.s32.totalorder %s90, %s91
    %p105 = scmp.eq.s32.totalorder %s15, 1
    %p106 = por %p104, %p105
    %p108 = scmp.ne.s32.totalorder %s91, %s107
    %p109 = scmp.eq.s32.totalorder %s15, 0
    %p110 = por %p108, %p109
    %p111 = scmp.le.s32.totalorder 1, %s9
    %p112 = scmp.lt.s32.totalorder %s9, 3
    %p113 = pnand %p111, %p112
    %p114 = pneg %p113
    // Predicated region
    $region9: #{cnn_forward.5} parent=5 // pred_check
      _
    $region10: #{cnn_forward.5} parent=5 // pred_check_branch
      %116 = sbr.rel (%p113) target = $region12
    $region11: #{cnn_forward.5} parent=5 // pred_region
      %s117 = ssub.s32 %s9, 1
      // Predicated region
      $region13: #{cnn_forward.5} parent=11 // pred_check
        %p118 = pneg %p56
      $region14: #{cnn_forward.5} parent=11 // pred_check_branch
        %120 = sbr.rel (%p118) target = $region16
      $region15: #{cnn_forward.5} parent=11 // pred_region
        _
      $region16: #{cnn_forward.5} parent=11 // pred_fallthru
        _
      // Predicated region
      $region17: #{cnn_forward.5} parent=11 // pred_check
        %p121 = pneg %p77
      $region18: #{cnn_forward.5} parent=11 // pred_check_branch
        %123 = sbr.rel (%p121) target = $region20
      $region19: #{cnn_forward.5} parent=11 // pred_region
        _
      $region20: #{cnn_forward.5} parent=11 // pred_fallthru
        _
    $region12: #{cnn_forward.5} parent=5 // pred_fallthru
      _
    %p124 = scmp.lt.s32.totalorder %s9, 2
    // Predicated region
    $region21: #{cnn_forward.5} parent=5 // pred_check
      %p125 = pneg %p124
    $region22: #{cnn_forward.5} parent=5 // pred_check_branch
      %127 = sbr.rel (%p125) target = $region24
    $region23: #{cnn_forward.5} parent=5 // pred_region
      // Predicated region
      $region25: #{cnn_forward.5} parent=23 // pred_check
        %p128 = pneg %p29
      $region26: #{cnn_forward.5} parent=23 // pred_check_branch
        %130 = sbr.rel (%p128) target = $region28
      $region27: #{cnn_forward.5} parent=23 // pred_region
        %p131 = scmp.lt.s32.totalorder %s9, 1
        %s132 = scalar_select %p131, %s9, 1
        %s133 = smul.addr %s132, 400
        %s134 = smul.addr %s133, 8
        %s135 = scalar_lea.vmem %s0, %s134
      $region28: #{cnn_forward.5} parent=23 // pred_fallthru
        _
    $region24: #{cnn_forward.5} parent=5 // pred_fallthru
      _
    %p136 = scmp.le.s32.totalorder 1, %s9
    %p137 = scmp.lt.s32.totalorder %s9, 3
    %p138 = pnand %p136, %p137
    %p139 = pneg %p138
    // Predicated region
    $region29: #{cnn_forward.5} parent=5 // pred_check
      _
    $region30: #{cnn_forward.5} parent=5 // pred_check_branch
      %141 = sbr.rel (%p138) target = $region32
    $region31: #{cnn_forward.5} parent=5 // pred_region
      %s142 = ssub.s32 %s9, 1
      %p143 = scmp.lt.s32.totalorder %s14, 1
      %s144 = scalar_select %p143, %s14, 1
      %s145 = smul.addr %s144, 400
      %s146 = smul.addr %s145, 8
      %s147 = scalar_lea.vmem %s0, %s146
      %p148 = pneg %p35
      %p149 = pneg %p32
      %p150 = pneg %p56
      %p151 = pneg %p53
      %p152 = pneg %p77
      %p153 = pneg %p74
      %p154 = pneg %p103
      %p155 = pneg %p100
      %p156 = scmp.lt.s32.totalorder %s14, 1
      %s157 = scalar_select %p156, %s14, 1
      %s158 = smul.addr %s157, 25
      %s159 = smul.addr %s158, 8
      %s160 = scalar_lea.vmem %s3, %s159
      %p161 = scmp.lt.s32.totalorder %s14, 1
      %s162 = scalar_select %p161, %s14, 1
      %s163 = smul.addr %s162, 400
      %s164 = smul.addr %s163, 8
      %s165 = scalar_lea.vmem %s0, %s164
      %p166 = scmp.lt.s32.totalorder %s14, 1
      %s167 = scalar_select %p166, %s14, 1
      %s168 = smul.addr %s167, 25
      %s169 = smul.addr %s168, 8
      %s170 = scalar_lea.vmem %s3, %s169
      %v171 = vld [vmem:[%s165] sm:$0xff]
      %v172 = vld [vmem:[%s165 + $0x8] sm:$0xff]
      %v173 = vld [vmem:[%s165 + $0x10] sm:$0xff]
      %v174 = vld [vmem:[%s165 + $0x18] sm:$0xff]
      %v175 = vld [vmem:[%s165 + $0x20] sm:$0xff]
      %v176 = vld [vmem:[%s165 + $0x28] sm:$0xff]
      %v177 = vld [vmem:[%s165 + $0x30] sm:$0xff]
      %v178 = vld [vmem:[%s165 + $0x38] sm:$0xff]
      %v179 = vld [vmem:[%s165 + $0x40] sm:$0xff]
      %v180 = vld [vmem:[%s165 + $0x48] sm:$0xff]
      %v181 = vld [vmem:[%s165 + $0x50] sm:$0xff]
      %v182 = vld [vmem:[%s165 + $0x58] sm:$0xff]
      %v183 = vld [vmem:[%s165 + $0x60] sm:$0xff]
      %v184 = vld [vmem:[%s165 + $0x68] sm:$0xff]
      %v185 = vld [vmem:[%s165 + $0x70] sm:$0xff]
      %v186 = vld [vmem:[%s165 + $0x78] sm:$0xff]
      %v187 = vld [vmem:[%s165 + $0x80] sm:$0xff]
      %v188 = vld [vmem:[%s165 + $0x88] sm:$0xff]
      %v189 = vld [vmem:[%s165 + $0x90] sm:$0xff]
      %v190 = vld [vmem:[%s165 + $0x98] sm:$0xff]
      %v191 = vld [vmem:[%s165 + $0xa0] sm:$0xff]
      %v192 = vld [vmem:[%s165 + $0xa8] sm:$0xff]
      %v193 = vld [vmem:[%s165 + $0xb0] sm:$0xff]
      %v194 = vld [vmem:[%s165 + $0xb8] sm:$0xff]
      %v195 = vld [vmem:[%s165 + $0xc0] sm:$0xff]
      %v196 = vld [vmem:[%s165 + $0xc8] sm:$0xff]
      %v197 = vld [vmem:[%s165 + $0xd0] sm:$0xff]
      %v198 = vld [vmem:[%s165 + $0xd8] sm:$0xff]
      %v199 = vld [vmem:[%s165 + $0xe0] sm:$0xff]
      %v200 = vld [vmem:[%s165 + $0xe8] sm:$0xff]
      %v201 = vld [vmem:[%s165 + $0xf0] sm:$0xff]
      %v202 = vld [vmem:[%s165 + $0xf8] sm:$0xff]
      %v203 = vld [vmem:[%s165 + $0x100] sm:$0xff]
      %v204 = vld [vmem:[%s165 + $0x108] sm:$0xff]
      %v205 = vld [vmem:[%s165 + $0x110] sm:$0xff]
      %v206 = vld [vmem:[%s165 + $0x118] sm:$0xff]
      %v207 = vld [vmem:[%s165 + $0x120] sm:$0xff]
      %v208 = vld [vmem:[%s165 + $0x128] sm:$0xff]
      %v209 = vld [vmem:[%s165 + $0x130] sm:$0xff]
      %v210 = vld [vmem:[%s165 + $0x138] sm:$0xff]
      %v211 = vld [vmem:[%s165 + $0x140] sm:$0xff]
      %v212 = vld [vmem:[%s165 + $0x148] sm:$0xff]
      %v213 = vld [vmem:[%s165 + $0x150] sm:$0xff]
      %v214 = vld [vmem:[%s165 + $0x158] sm:$0xff]
      %v215 = vld [vmem:[%s165 + $0x160] sm:$0xff]
      %v216 = vld [vmem:[%s165 + $0x168] sm:$0xff]
      %v217 = vld [vmem:[%s165 + $0x170] sm:$0xff]
      %v218 = vld [vmem:[%s165 + $0x178] sm:$0xff]
      %v219 = vld [vmem:[%s165 + $0x180] sm:$0xff]
      %v220 = vld [vmem:[%s165 + $0x188] sm:$0xff]
      %v221 = vld [vmem:[%s165 + $0x190] sm:$0xff]
      %v222 = vld [vmem:[%s165 + $0x198] sm:$0xff]
      %v223 = vld [vmem:[%s165 + $0x1a0] sm:$0xff]
      %v224 = vld [vmem:[%s165 + $0x1a8] sm:$0xff]
      %v225 = vld [vmem:[%s165 + $0x1b0] sm:$0xff]
      %v226 = vld [vmem:[%s165 + $0x1b8] sm:$0xff]
      %v227 = vld [vmem:[%s165 + $0x1c0] sm:$0xff]
      %v228 = vld [vmem:[%s165 + $0x1c8] sm:$0xff]
      %v229 = vld [vmem:[%s165 + $0x1d0] sm:$0xff]
      %v230 = vld [vmem:[%s165 + $0x1d8] sm:$0xff]
      %v231 = vld [vmem:[%s165 + $0x1e0] sm:$0xff]
      %v232 = vld [vmem:[%s165 + $0x1e8] sm:$0xff]
      %v233 = vld [vmem:[%s165 + $0x1f0] sm:$0xff]
      %v234 = vld [vmem:[%s165 + $0x1f8] sm:$0xff]
      %v235 = vld [vmem:[%s165 + $0x200] sm:$0xff]
      %v236 = vld [vmem:[%s165 + $0x208] sm:$0xff]
      %v237 = vld [vmem:[%s165 + $0x210] sm:$0xff]
      %v238 = vld [vmem:[%s165 + $0x218] sm:$0xff]
      %v239 = vld [vmem:[%s165 + $0x220] sm:$0xff]
      %v240 = vld [vmem:[%s165 + $0x228] sm:$0xff]
      %v241 = vld [vmem:[%s165 + $0x230] sm:$0xff]
      %v242 = vld [vmem:[%s165 + $0x238] sm:$0xff]
      %v243 = vld [vmem:[%s165 + $0x240] sm:$0xff]
      %v244 = vld [vmem:[%s165 + $0x248] sm:$0xff]
      %v245 = vld [vmem:[%s165 + $0x250] sm:$0xff]
      %v246 = vld [vmem:[%s165 + $0x258] sm:$0xff]
      %v247 = vld [vmem:[%s165 + $0x260] sm:$0xff]
      %v248 = vld [vmem:[%s165 + $0x268] sm:$0xff]
      %v249 = vld [vmem:[%s165 + $0x270] sm:$0xff]
      %v250 = vld [vmem:[%s165 + $0x278] sm:$0xff]
      %v251 = vld [vmem:[%s165 + $0x280] sm:$0xff]
      %v252 = vld [vmem:[%s165 + $0x288] sm:$0xff]
      %v253 = vld [vmem:[%s165 + $0x290] sm:$0xff]
      %v254 = vld [vmem:[%s165 + $0x298] sm:$0xff]
      %v255 = vld [vmem:[%s165 + $0x2a0] sm:$0xff]
      %v256 = vld [vmem:[%s165 + $0x2a8] sm:$0xff]
      %v257 = vld [vmem:[%s165 + $0x2b0] sm:$0xff]
      %v258 = vld [vmem:[%s165 + $0x2b8] sm:$0xff]
      %v259 = vld [vmem:[%s165 + $0x2c0] sm:$0xff]
      %v260 = vld [vmem:[%s165 + $0x2c8] sm:$0xff]
      %v261 = vld [vmem:[%s165 + $0x2d0] sm:$0xff]
      %v262 = vld [vmem:[%s165 + $0x2d8] sm:$0xff]
      %v263 = vld [vmem:[%s165 + $0x2e0] sm:$0xff]
      %v264 = vld [vmem:[%s165 + $0x2e8] sm:$0xff]
      %v265 = vld [vmem:[%s165 + $0x2f0] sm:$0xff]
      %v266 = vld [vmem:[%s165 + $0x2f8] sm:$0xff]
      %v267 = vld [vmem:[%s165 + $0x300] sm:$0xff]
      %v268 = vld [vmem:[%s165 + $0x308] sm:$0xff]
      %v269 = vld [vmem:[%s165 + $0x310] sm:$0xff]
      %v270 = vld [vmem:[%s165 + $0x318] sm:$0xff]
      %v271 = vld [vmem:[%s165 + $0x320] sm:$0xff]
      %v272 = vld [vmem:[%s165 + $0x328] sm:$0xff]
      %v273 = vld [vmem:[%s165 + $0x330] sm:$0xff]
      %v274 = vld [vmem:[%s165 + $0x338] sm:$0xff]
      %v275 = vld [vmem:[%s165 + $0x340] sm:$0xff]
      %v276 = vld [vmem:[%s165 + $0x348] sm:$0xff]
      %v277 = vld [vmem:[%s165 + $0x350] sm:$0xff]
      %v278 = vld [vmem:[%s165 + $0x358] sm:$0xff]
      %v279 = vld [vmem:[%s165 + $0x360] sm:$0xff]
      %v280 = vld [vmem:[%s165 + $0x368] sm:$0xff]
      %v281 = vld [vmem:[%s165 + $0x370] sm:$0xff]
      %v282 = vld [vmem:[%s165 + $0x378] sm:$0xff]
      %v283 = vld [vmem:[%s165 + $0x380] sm:$0xff]
      %v284 = vld [vmem:[%s165 + $0x388] sm:$0xff]
      %v285 = vld [vmem:[%s165 + $0x390] sm:$0xff]
      %v286 = vld [vmem:[%s165 + $0x398] sm:$0xff]
      %v287 = vld [vmem:[%s165 + $0x3a0] sm:$0xff]
      %v288 = vld [vmem:[%s165 + $0x3a8] sm:$0xff]
      %v289 = vld [vmem:[%s165 + $0x3b0] sm:$0xff]
      %v290 = vld [vmem:[%s165 + $0x3b8] sm:$0xff]
      %v291 = vld [vmem:[%s165 + $0x3c0] sm:$0xff]
      %v292 = vld [vmem:[%s165 + $0x3c8] sm:$0xff]
      %v293 = vld [vmem:[%s165 + $0x3d0] sm:$0xff]
      %v294 = vld [vmem:[%s165 + $0x3d8] sm:$0xff]
      %v295 = vld [vmem:[%s165 + $0x3e0] sm:$0xff]
      %v296 = vld [vmem:[%s165 + $0x3e8] sm:$0xff]
      %v297 = vld [vmem:[%s165 + $0x3f0] sm:$0xff]
      %v298 = vld [vmem:[%s165 + $0x3f8] sm:$0xff]
      %v299 = vld [vmem:[%s165 + $0x400] sm:$0xff]
      %v300 = vld [vmem:[%s165 + $0x408] sm:$0xff]
      %v301 = vld [vmem:[%s165 + $0x410] sm:$0xff]
      %v302 = vld [vmem:[%s165 + $0x418] sm:$0xff]
      %v303 = vld [vmem:[%s165 + $0x420] sm:$0xff]
      %v304 = vld [vmem:[%s165 + $0x428] sm:$0xff]
      %v305 = vld [vmem:[%s165 + $0x430] sm:$0xff]
      %v306 = vld [vmem:[%s165 + $0x438] sm:$0xff]
      %v307 = vld [vmem:[%s165 + $0x440] sm:$0xff]
      %v308 = vld [vmem:[%s165 + $0x448] sm:$0xff]
      %v309 = vld [vmem:[%s165 + $0x450] sm:$0xff]
      %v310 = vld [vmem:[%s165 + $0x458] sm:$0xff]
      %v311 = vld [vmem:[%s165 + $0x460] sm:$0xff]
      %v312 = vld [vmem:[%s165 + $0x468] sm:$0xff]
      %v313 = vld [vmem:[%s165 + $0x470] sm:$0xff]
      %v314 = vld [vmem:[%s165 + $0x478] sm:$0xff]
      %v315 = vld [vmem:[%s165 + $0x480] sm:$0xff]
      %v316 = vld [vmem:[%s165 + $0x488] sm:$0xff]
      %v317 = vld [vmem:[%s165 + $0x490] sm:$0xff]
      %v318 = vld [vmem:[%s165 + $0x498] sm:$0xff]
      %v319 = vld [vmem:[%s165 + $0x4a0] sm:$0xff]
      %v320 = vld [vmem:[%s165 + $0x4a8] sm:$0xff]
      %v321 = vld [vmem:[%s165 + $0x4b0] sm:$0xff]
      %v322 = vld [vmem:[%s165 + $0x4b8] sm:$0xff]
      %v323 = vld [vmem:[%s165 + $0x4c0] sm:$0xff]
      %v324 = vld [vmem:[%s165 + $0x4c8] sm:$0xff]
      %v325 = vld [vmem:[%s165 + $0x4d0] sm:$0xff]
      %v326 = vld [vmem:[%s165 + $0x4d8] sm:$0xff]
      %v327 = vld [vmem:[%s165 + $0x4e0] sm:$0xff]
      %v328 = vld [vmem:[%s165 + $0x4e8] sm:$0xff]
      %v329 = vld [vmem:[%s165 + $0x4f0] sm:$0xff]
      %v330 = vld [vmem:[%s165 + $0x4f8] sm:$0xff]
      %v331 = vld [vmem:[%s165 + $0x500] sm:$0xff]
      %v332 = vld [vmem:[%s165 + $0x508] sm:$0xff]
      %v333 = vld [vmem:[%s165 + $0x510] sm:$0xff]
      %v334 = vld [vmem:[%s165 + $0x518] sm:$0xff]
      %v335 = vld [vmem:[%s165 + $0x520] sm:$0xff]
      %v336 = vld [vmem:[%s165 + $0x528] sm:$0xff]
      %v337 = vld [vmem:[%s165 + $0x530] sm:$0xff]
      %v338 = vld [vmem:[%s165 + $0x538] sm:$0xff]
      %v339 = vld [vmem:[%s165 + $0x540] sm:$0xff]
      %v340 = vld [vmem:[%s165 + $0x548] sm:$0xff]
      %v341 = vld [vmem:[%s165 + $0x550] sm:$0xff]
      %v342 = vld [vmem:[%s165 + $0x558] sm:$0xff]
      %v343 = vld [vmem:[%s165 + $0x560] sm:$0xff]
      %v344 = vld [vmem:[%s165 + $0x568] sm:$0xff]
      %v345 = vld [vmem:[%s165 + $0x570] sm:$0xff]
      %v346 = vld [vmem:[%s165 + $0x578] sm:$0xff]
      %v347 = vld [vmem:[%s165 + $0x580] sm:$0xff]
      %v348 = vld [vmem:[%s165 + $0x588] sm:$0xff]
      %v349 = vld [vmem:[%s165 + $0x590] sm:$0xff]
      %v350 = vld [vmem:[%s165 + $0x598] sm:$0xff]
      %v351 = vld [vmem:[%s165 + $0x5a0] sm:$0xff]
      %v352 = vld [vmem:[%s165 + $0x5a8] sm:$0xff]
      %v353 = vld [vmem:[%s165 + $0x5b0] sm:$0xff]
      %v354 = vld [vmem:[%s165 + $0x5b8] sm:$0xff]
      %v355 = vld [vmem:[%s165 + $0x5c0] sm:$0xff]
      %v356 = vld [vmem:[%s165 + $0x5c8] sm:$0xff]
      %v357 = vld [vmem:[%s165 + $0x5d0] sm:$0xff]
      %v358 = vld [vmem:[%s165 + $0x5d8] sm:$0xff]
      %v359 = vld [vmem:[%s165 + $0x5e0] sm:$0xff]
      %v360 = vld [vmem:[%s165 + $0x5e8] sm:$0xff]
      %v361 = vld [vmem:[%s165 + $0x5f0] sm:$0xff]
      %v362 = vld [vmem:[%s165 + $0x5f8] sm:$0xff]
      %v363 = vld [vmem:[%s165 + $0x600] sm:$0xff]
      %v364 = vld [vmem:[%s165 + $0x608] sm:$0xff]
      %v365 = vld [vmem:[%s165 + $0x610] sm:$0xff]
      %v366 = vld [vmem:[%s165 + $0x618] sm:$0xff]
      %v367 = vld [vmem:[%s165 + $0x620] sm:$0xff]
      %v368 = vld [vmem:[%s165 + $0x628] sm:$0xff]
      %v369 = vld [vmem:[%s165 + $0x630] sm:$0xff]
      %v370 = vld [vmem:[%s165 + $0x638] sm:$0xff]
      %v371 = vld [vmem:[%s165 + $0x640] sm:$0xff]
      %v372 = vld [vmem:[%s165 + $0x648] sm:$0xff]
      %v373 = vld [vmem:[%s165 + $0x650] sm:$0xff]
      %v374 = vld [vmem:[%s165 + $0x658] sm:$0xff]
      %v375 = vld [vmem:[%s165 + $0x660] sm:$0xff]
      %v376 = vld [vmem:[%s165 + $0x668] sm:$0xff]
      %v377 = vld [vmem:[%s165 + $0x670] sm:$0xff]
      %v378 = vld [vmem:[%s165 + $0x678] sm:$0xff]
      %v379 = vld [vmem:[%s165 + $0x680] sm:$0xff]
      %v380 = vld [vmem:[%s165 + $0x688] sm:$0xff]
      %v381 = vld [vmem:[%s165 + $0x690] sm:$0xff]
      %v382 = vld [vmem:[%s165 + $0x698] sm:$0xff]
      %v383 = vld [vmem:[%s165 + $0x6a0] sm:$0xff]
      %v384 = vld [vmem:[%s165 + $0x6a8] sm:$0xff]
      %v385 = vld [vmem:[%s165 + $0x6b0] sm:$0xff]
      %v386 = vld [vmem:[%s165 + $0x6b8] sm:$0xff]
      %v387 = vld [vmem:[%s165 + $0x6c0] sm:$0xff]
      %v388 = vld [vmem:[%s165 + $0x6c8] sm:$0xff]
      %v389 = vld [vmem:[%s165 + $0x6d0] sm:$0xff]
      %v390 = vld [vmem:[%s165 + $0x6d8] sm:$0xff]
      %v391 = vld [vmem:[%s165 + $0x6e0] sm:$0xff]
      %v392 = vld [vmem:[%s165 + $0x6e8] sm:$0xff]
      %v393 = vld [vmem:[%s165 + $0x6f0] sm:$0xff]
      %v394 = vld [vmem:[%s165 + $0x6f8] sm:$0xff]
      %v395 = vld [vmem:[%s165 + $0x700] sm:$0xff]
      %v396 = vld [vmem:[%s165 + $0x708] sm:$0xff]
      %v397 = vld [vmem:[%s165 + $0x710] sm:$0xff]
      %v398 = vld [vmem:[%s165 + $0x718] sm:$0xff]
      %v399 = vld [vmem:[%s165 + $0x720] sm:$0xff]
      %v400 = vld [vmem:[%s165 + $0x728] sm:$0xff]
      %v401 = vld [vmem:[%s165 + $0x730] sm:$0xff]
      %v402 = vld [vmem:[%s165 + $0x738] sm:$0xff]
      %v403 = vld [vmem:[%s165 + $0x740] sm:$0xff]
      %v404 = vld [vmem:[%s165 + $0x748] sm:$0xff]
      %v405 = vld [vmem:[%s165 + $0x750] sm:$0xff]
      %v406 = vld [vmem:[%s165 + $0x758] sm:$0xff]
      %v407 = vld [vmem:[%s165 + $0x760] sm:$0xff]
      %v408 = vld [vmem:[%s165 + $0x768] sm:$0xff]
      %v409 = vld [vmem:[%s165 + $0x770] sm:$0xff]
      %v410 = vld [vmem:[%s165 + $0x778] sm:$0xff]
      %v411 = vld [vmem:[%s165 + $0x780] sm:$0xff]
      %v412 = vld [vmem:[%s165 + $0x788] sm:$0xff]
      %v413 = vld [vmem:[%s165 + $0x790] sm:$0xff]
      %v414 = vld [vmem:[%s165 + $0x798] sm:$0xff]
      %v415 = vld [vmem:[%s165 + $0x7a0] sm:$0xff]
      %v416 = vld [vmem:[%s165 + $0x7a8] sm:$0xff]
      %v417 = vld [vmem:[%s165 + $0x7b0] sm:$0xff]
      %v418 = vld [vmem:[%s165 + $0x7b8] sm:$0xff]
      %v419 = vld [vmem:[%s165 + $0x7c0] sm:$0xff]
      %v420 = vld [vmem:[%s165 + $0x7c8] sm:$0xff]
      %v421 = vld [vmem:[%s165 + $0x7d0] sm:$0xff]
      %v422 = vld [vmem:[%s165 + $0x7d8] sm:$0xff]
      %v423 = vld [vmem:[%s165 + $0x7e0] sm:$0xff]
      %v424 = vld [vmem:[%s165 + $0x7e8] sm:$0xff]
      %v425 = vld [vmem:[%s165 + $0x7f0] sm:$0xff]
      %v426 = vld [vmem:[%s165 + $0x7f8] sm:$0xff]
      %v427 = vld [vmem:[%s165 + $0x800] sm:$0xff]
      %v428 = vld [vmem:[%s165 + $0x808] sm:$0xff]
      %v429 = vld [vmem:[%s165 + $0x810] sm:$0xff]
      %v430 = vld [vmem:[%s165 + $0x818] sm:$0xff]
      %v431 = vld [vmem:[%s165 + $0x820] sm:$0xff]
      %v432 = vld [vmem:[%s165 + $0x828] sm:$0xff]
      %v433 = vld [vmem:[%s165 + $0x830] sm:$0xff]
      %v434 = vld [vmem:[%s165 + $0x838] sm:$0xff]
      %v435 = vld [vmem:[%s165 + $0x840] sm:$0xff]
      %v436 = vld [vmem:[%s165 + $0x848] sm:$0xff]
      %v437 = vld [vmem:[%s165 + $0x850] sm:$0xff]
      %v438 = vld [vmem:[%s165 + $0x858] sm:$0xff]
      %v439 = vld [vmem:[%s165 + $0x860] sm:$0xff]
      %v440 = vld [vmem:[%s165 + $0x868] sm:$0xff]
      %v441 = vld [vmem:[%s165 + $0x870] sm:$0xff]
      %v442 = vld [vmem:[%s165 + $0x878] sm:$0xff]
      %v443 = vld [vmem:[%s165 + $0x880] sm:$0xff]
      %v444 = vld [vmem:[%s165 + $0x888] sm:$0xff]
      %v445 = vld [vmem:[%s165 + $0x890] sm:$0xff]
      %v446 = vld [vmem:[%s165 + $0x898] sm:$0xff]
      %v447 = vld [vmem:[%s165 + $0x8a0] sm:$0xff]
      %v448 = vld [vmem:[%s165 + $0x8a8] sm:$0xff]
      %v449 = vld [vmem:[%s165 + $0x8b0] sm:$0xff]
      %v450 = vld [vmem:[%s165 + $0x8b8] sm:$0xff]
      %v451 = vld [vmem:[%s165 + $0x8c0] sm:$0xff]
      %v452 = vld [vmem:[%s165 + $0x8c8] sm:$0xff]
      %v453 = vld [vmem:[%s165 + $0x8d0] sm:$0xff]
      %v454 = vld [vmem:[%s165 + $0x8d8] sm:$0xff]
      %v455 = vld [vmem:[%s165 + $0x8e0] sm:$0xff]
      %v456 = vld [vmem:[%s165 + $0x8e8] sm:$0xff]
      %v457 = vld [vmem:[%s165 + $0x8f0] sm:$0xff]
      %v458 = vld [vmem:[%s165 + $0x8f8] sm:$0xff]
      %v459 = vld [vmem:[%s165 + $0x900] sm:$0xff]
      %v460 = vld [vmem:[%s165 + $0x908] sm:$0xff]
      %v461 = vld [vmem:[%s165 + $0x910] sm:$0xff]
      %v462 = vld [vmem:[%s165 + $0x918] sm:$0xff]
      %v463 = vld [vmem:[%s165 + $0x920] sm:$0xff]
      %v464 = vld [vmem:[%s165 + $0x928] sm:$0xff]
      %v465 = vld [vmem:[%s165 + $0x930] sm:$0xff]
      %v466 = vld [vmem:[%s165 + $0x938] sm:$0xff]
      %v467 = vld [vmem:[%s165 + $0x940] sm:$0xff]
      %v468 = vld [vmem:[%s165 + $0x948] sm:$0xff]
      %v469 = vld [vmem:[%s165 + $0x950] sm:$0xff]
      %v470 = vld [vmem:[%s165 + $0x958] sm:$0xff]
      %v471 = vld [vmem:[%s165 + $0x960] sm:$0xff]
      %v472 = vld [vmem:[%s165 + $0x968] sm:$0xff]
      %v473 = vld [vmem:[%s165 + $0x970] sm:$0xff]
      %v474 = vld [vmem:[%s165 + $0x978] sm:$0xff]
      %v475 = vld [vmem:[%s165 + $0x980] sm:$0xff]
      %v476 = vld [vmem:[%s165 + $0x988] sm:$0xff]
      %v477 = vld [vmem:[%s165 + $0x990] sm:$0xff]
      %v478 = vld [vmem:[%s165 + $0x998] sm:$0xff]
      %v479 = vld [vmem:[%s165 + $0x9a0] sm:$0xff]
      %v480 = vld [vmem:[%s165 + $0x9a8] sm:$0xff]
      %v481 = vld [vmem:[%s165 + $0x9b0] sm:$0xff]
      %v482 = vld [vmem:[%s165 + $0x9b8] sm:$0xff]
      %v483 = vld [vmem:[%s165 + $0x9c0] sm:$0xff]
      %v484 = vld [vmem:[%s165 + $0x9c8] sm:$0xff]
      %v485 = vld [vmem:[%s165 + $0x9d0] sm:$0xff]
      %v486 = vld [vmem:[%s165 + $0x9d8] sm:$0xff]
      %v487 = vld [vmem:[%s165 + $0x9e0] sm:$0xff]
      %v488 = vld [vmem:[%s165 + $0x9e8] sm:$0xff]
      %v489 = vld [vmem:[%s165 + $0x9f0] sm:$0xff]
      %v490 = vld [vmem:[%s165 + $0x9f8] sm:$0xff]
      %v491 = vld [vmem:[%s165 + $0xa00] sm:$0xff]
      %v492 = vld [vmem:[%s165 + $0xa08] sm:$0xff]
      %v493 = vld [vmem:[%s165 + $0xa10] sm:$0xff]
      %v494 = vld [vmem:[%s165 + $0xa18] sm:$0xff]
      %v495 = vld [vmem:[%s165 + $0xa20] sm:$0xff]
      %v496 = vld [vmem:[%s165 + $0xa28] sm:$0xff]
      %v497 = vld [vmem:[%s165 + $0xa30] sm:$0xff]
      %v498 = vld [vmem:[%s165 + $0xa38] sm:$0xff]
      %v499 = vld [vmem:[%s165 + $0xa40] sm:$0xff]
      %v500 = vld [vmem:[%s165 + $0xa48] sm:$0xff]
      %v501 = vld [vmem:[%s165 + $0xa50] sm:$0xff]
      %v502 = vld [vmem:[%s165 + $0xa58] sm:$0xff]
      %v503 = vld [vmem:[%s165 + $0xa60] sm:$0xff]
      %v504 = vld [vmem:[%s165 + $0xa68] sm:$0xff]
      %v505 = vld [vmem:[%s165 + $0xa70] sm:$0xff]
      %v506 = vld [vmem:[%s165 + $0xa78] sm:$0xff]
      %v507 = vld [vmem:[%s165 + $0xa80] sm:$0xff]
      %v508 = vld [vmem:[%s165 + $0xa88] sm:$0xff]
      %v509 = vld [vmem:[%s165 + $0xa90] sm:$0xff]
      %v510 = vld [vmem:[%s165 + $0xa98] sm:$0xff]
      %v511 = vld [vmem:[%s165 + $0xaa0] sm:$0xff]
      %v512 = vld [vmem:[%s165 + $0xaa8] sm:$0xff]
      %v513 = vld [vmem:[%s165 + $0xab0] sm:$0xff]
      %v514 = vld [vmem:[%s165 + $0xab8] sm:$0xff]
      %v515 = vld [vmem:[%s165 + $0xac0] sm:$0xff]
      %v516 = vld [vmem:[%s165 + $0xac8] sm:$0xff]
      %v517 = vld [vmem:[%s165 + $0xad0] sm:$0xff]
      %v518 = vld [vmem:[%s165 + $0xad8] sm:$0xff]
      %v519 = vld [vmem:[%s165 + $0xae0] sm:$0xff]
      %v520 = vld [vmem:[%s165 + $0xae8] sm:$0xff]
      %v521 = vld [vmem:[%s165 + $0xaf0] sm:$0xff]
      %v522 = vld [vmem:[%s165 + $0xaf8] sm:$0xff]
      %v523 = vld [vmem:[%s165 + $0xb00] sm:$0xff]
      %v524 = vld [vmem:[%s165 + $0xb08] sm:$0xff]
      %v525 = vld [vmem:[%s165 + $0xb10] sm:$0xff]
      %v526 = vld [vmem:[%s165 + $0xb18] sm:$0xff]
      %v527 = vld [vmem:[%s165 + $0xb20] sm:$0xff]
      %v528 = vld [vmem:[%s165 + $0xb28] sm:$0xff]
      %v529 = vld [vmem:[%s165 + $0xb30] sm:$0xff]
      %v530 = vld [vmem:[%s165 + $0xb38] sm:$0xff]
      %v531 = vld [vmem:[%s165 + $0xb40] sm:$0xff]
      %v532 = vld [vmem:[%s165 + $0xb48] sm:$0xff]
      %v533 = vld [vmem:[%s165 + $0xb50] sm:$0xff]
      %v534 = vld [vmem:[%s165 + $0xb58] sm:$0xff]
      %v535 = vld [vmem:[%s165 + $0xb60] sm:$0xff]
      %v536 = vld [vmem:[%s165 + $0xb68] sm:$0xff]
      %v537 = vld [vmem:[%s165 + $0xb70] sm:$0xff]
      %v538 = vld [vmem:[%s165 + $0xb78] sm:$0xff]
      %v539 = vld [vmem:[%s165 + $0xb80] sm:$0xff]
      %v540 = vld [vmem:[%s165 + $0xb88] sm:$0xff]
      %v541 = vld [vmem:[%s165 + $0xb90] sm:$0xff]
      %v542 = vld [vmem:[%s165 + $0xb98] sm:$0xff]
      %v543 = vld [vmem:[%s165 + $0xba0] sm:$0xff]
      %v544 = vld [vmem:[%s165 + $0xba8] sm:$0xff]
      %v545 = vld [vmem:[%s165 + $0xbb0] sm:$0xff]
      %v546 = vld [vmem:[%s165 + $0xbb8] sm:$0xff]
      %v547 = vld [vmem:[%s165 + $0xbc0] sm:$0xff]
      %v548 = vld [vmem:[%s165 + $0xbc8] sm:$0xff]
      %v549 = vld [vmem:[%s165 + $0xbd0] sm:$0xff]
      %v550 = vld [vmem:[%s165 + $0xbd8] sm:$0xff]
      %v551 = vld [vmem:[%s165 + $0xbe0] sm:$0xff]
      %v552 = vld [vmem:[%s165 + $0xbe8] sm:$0xff]
      %v553 = vld [vmem:[%s165 + $0xbf0] sm:$0xff]
      %v554 = vld [vmem:[%s165 + $0xbf8] sm:$0xff]
      %v555 = vld [vmem:[%s165 + $0xc00] sm:$0xff]
      %v556 = vld [vmem:[%s165 + $0xc08] sm:$0xff]
      %v557 = vld [vmem:[%s165 + $0xc10] sm:$0xff]
      %v558 = vld [vmem:[%s165 + $0xc18] sm:$0xff]
      %v559 = vld [vmem:[%s165 + $0xc20] sm:$0xff]
      %v560 = vld [vmem:[%s165 + $0xc28] sm:$0xff]
      %v561 = vld [vmem:[%s165 + $0xc30] sm:$0xff]
      %v562 = vld [vmem:[%s165 + $0xc38] sm:$0xff]
      %v563 = vld [vmem:[%s165 + $0xc40] sm:$0xff]
      %v564 = vld [vmem:[%s165 + $0xc48] sm:$0xff]
      %v565 = vld [vmem:[%s165 + $0xc50] sm:$0xff]
      %v566 = vld [vmem:[%s165 + $0xc58] sm:$0xff]
      %v567 = vld [vmem:[%s165 + $0xc60] sm:$0xff]
      %v568 = vld [vmem:[%s165 + $0xc68] sm:$0xff]
      %v569 = vld [vmem:[%s165 + $0xc70] sm:$0xff]
      %v570 = vld [vmem:[%s165 + $0xc78] sm:$0xff]
      %v571 = vld [vmem:[%s1] sm:$0xff]
      %v572 = vld [vmem:[%s1 + $0x8] sm:$0xff]
      %v573 = vld [vmem:[%s1 + $0x10] sm:$0xff]
      %v574 = vld [vmem:[%s1 + $0x18] sm:$0xff]
      %v575 = vld [vmem:[%s1 + $0x20] sm:$0xff]
      %v576 = vld [vmem:[%s1 + $0x28] sm:$0xff]
      %v577 = vld [vmem:[%s1 + $0x30] sm:$0xff]
      %v578 = vld [vmem:[%s1 + $0x38] sm:$0xff]
      %v579 = vld [vmem:[%s1 + $0x40] sm:$0xff]
      %v580 = vld [vmem:[%s1 + $0x48] sm:$0xff]
      %v581 = vld [vmem:[%s1 + $0x50] sm:$0xff]
      %v582 = vld [vmem:[%s1 + $0x58] sm:$0xff]
      %v583 = vld [vmem:[%s1 + $0x60] sm:$0xff]
      %v584 = vld [vmem:[%s1 + $0x68] sm:$0xff]
      %v585 = vld [vmem:[%s1 + $0x70] sm:$0xff]
      %v586 = vld [vmem:[%s1 + $0x78] sm:$0xff]
      %v587 = vld [vmem:[%s1 + $0x80] sm:$0xff]
      %v588 = vld [vmem:[%s1 + $0x88] sm:$0xff]
      %v589 = vld [vmem:[%s1 + $0x90] sm:$0xff]
      %v590 = vld [vmem:[%s1 + $0x98] sm:$0xff]
      %v591 = vld [vmem:[%s1 + $0xa0] sm:$0xff]
      %v592 = vld [vmem:[%s1 + $0xa8] sm:$0xff]
      %v593 = vld [vmem:[%s1 + $0xb0] sm:$0xff]
      %v594 = vld [vmem:[%s1 + $0xb8] sm:$0xff]
      %v595 = vld [vmem:[%s1 + $0xc0] sm:$0xff]
      %v596 = vld [vmem:[%s1 + $0xc8] sm:$0xff]
      %v597 = vld [vmem:[%s1 + $0xd0] sm:$0xff]
      %v598 = vld [vmem:[%s1 + $0xd8] sm:$0xff]
      %v599 = vld [vmem:[%s1 + $0xe0] sm:$0xff]
      %v600 = vld [vmem:[%s1 + $0xe8] sm:$0xff]
      %v601 = vld [vmem:[%s1 + $0xf0] sm:$0xff]
      %v602 = vld [vmem:[%s1 + $0xf8] sm:$0xff]
      %v603 = vld [vmem:[%s1 + $0x100] sm:$0xff]
      %v604 = vld [vmem:[%s1 + $0x108] sm:$0xff]
      %v605 = vld [vmem:[%s1 + $0x110] sm:$0xff]
      %v606 = vld [vmem:[%s1 + $0x118] sm:$0xff]
      %v607 = vld [vmem:[%s1 + $0x120] sm:$0xff]
      %v608 = vld [vmem:[%s1 + $0x128] sm:$0xff]
      %v609 = vld [vmem:[%s1 + $0x130] sm:$0xff]
      %v610 = vld [vmem:[%s1 + $0x138] sm:$0xff]
      %v611 = vld [vmem:[%s1 + $0x140] sm:$0xff]
      %v612 = vld [vmem:[%s1 + $0x148] sm:$0xff]
      %v613 = vld [vmem:[%s1 + $0x150] sm:$0xff]
      %v614 = vld [vmem:[%s1 + $0x158] sm:$0xff]
      %v615 = vld [vmem:[%s1 + $0x160] sm:$0xff]
      %v616 = vld [vmem:[%s1 + $0x168] sm:$0xff]
      %v617 = vld [vmem:[%s1 + $0x170] sm:$0xff]
      %v618 = vld [vmem:[%s1 + $0x178] sm:$0xff]
      %v619 = vld [vmem:[%s1 + $0x180] sm:$0xff]
      %v620 = vld [vmem:[%s1 + $0x188] sm:$0xff]
      %v621 = vld [vmem:[%s2] sm:$0x1]
      %v623 = vlaneseq
      %v624 = vshrl.u32 %v623, 7
      %v625 = vsub.s32 0, %v624
      %v626 = vrot.slane %v621, %v625
      %vm628 = vcmask 130048
      %v630 = vsel %vm628, %v174, 0
      %v633 = vsel %vm628, %v178, 0
      %v636 = vsel %vm628, %v182, 0
      %v639 = vsel %vm628, %v186, 0
      %v642 = vsel %vm628, %v190, 0
      %v645 = vsel %vm628, %v194, 0
      %v648 = vsel %vm628, %v198, 0
      %v651 = vsel %vm628, %v202, 0
      %v654 = vsel %vm628, %v206, 0
      %v657 = vsel %vm628, %v210, 0
      %v660 = vsel %vm628, %v214, 0
      %v663 = vsel %vm628, %v218, 0
      %v666 = vsel %vm628, %v222, 0
      %v669 = vsel %vm628, %v226, 0
      %v672 = vsel %vm628, %v230, 0
      %v675 = vsel %vm628, %v234, 0
      %v678 = vsel %vm628, %v238, 0
      %v681 = vsel %vm628, %v242, 0
      %v684 = vsel %vm628, %v246, 0
      %v687 = vsel %vm628, %v250, 0
      %v690 = vsel %vm628, %v254, 0
      %v693 = vsel %vm628, %v258, 0
      %v696 = vsel %vm628, %v262, 0
      %v699 = vsel %vm628, %v266, 0
      %v702 = vsel %vm628, %v270, 0
      %v705 = vsel %vm628, %v274, 0
      %v708 = vsel %vm628, %v278, 0
      %v711 = vsel %vm628, %v282, 0
      %v714 = vsel %vm628, %v286, 0
      %v717 = vsel %vm628, %v290, 0
      %v720 = vsel %vm628, %v294, 0
      %v723 = vsel %vm628, %v298, 0
      %v726 = vsel %vm628, %v302, 0
      %v729 = vsel %vm628, %v306, 0
      %v732 = vsel %vm628, %v310, 0
      %v735 = vsel %vm628, %v314, 0
      %v738 = vsel %vm628, %v318, 0
      %v741 = vsel %vm628, %v322, 0
      %v744 = vsel %vm628, %v326, 0
      %v747 = vsel %vm628, %v330, 0
      %v750 = vsel %vm628, %v334, 0
      %v753 = vsel %vm628, %v338, 0
      %v756 = vsel %vm628, %v342, 0
      %v759 = vsel %vm628, %v346, 0
      %v762 = vsel %vm628, %v350, 0
      %v765 = vsel %vm628, %v354, 0
      %v768 = vsel %vm628, %v358, 0
      %v771 = vsel %vm628, %v362, 0
      %v774 = vsel %vm628, %v366, 0
      %v777 = vsel %vm628, %v370, 0
      %v780 = vsel %vm628, %v374, 0
      %v783 = vsel %vm628, %v378, 0
      %v786 = vsel %vm628, %v382, 0
      %v789 = vsel %vm628, %v386, 0
      %v792 = vsel %vm628, %v390, 0
      %v795 = vsel %vm628, %v394, 0
      %v798 = vsel %vm628, %v398, 0
      %v801 = vsel %vm628, %v402, 0
      %v804 = vsel %vm628, %v406, 0
      %v807 = vsel %vm628, %v410, 0
      %v810 = vsel %vm628, %v414, 0
      %v813 = vsel %vm628, %v418, 0
      %v816 = vsel %vm628, %v422, 0
      %v819 = vsel %vm628, %v426, 0
      %v822 = vsel %vm628, %v430, 0
      %v825 = vsel %vm628, %v434, 0
      %v828 = vsel %vm628, %v438, 0
      %v831 = vsel %vm628, %v442, 0
      %v834 = vsel %vm628, %v446, 0
      %v837 = vsel %vm628, %v450, 0
      %v840 = vsel %vm628, %v454, 0
      %v843 = vsel %vm628, %v458, 0
      %v846 = vsel %vm628, %v462, 0
      %v849 = vsel %vm628, %v466, 0
      %v852 = vsel %vm628, %v470, 0
      %v855 = vsel %vm628, %v474, 0
      %v858 = vsel %vm628, %v478, 0
      %v861 = vsel %vm628, %v482, 0
      %v864 = vsel %vm628, %v486, 0
      %v867 = vsel %vm628, %v490, 0
      %v870 = vsel %vm628, %v494, 0
      %v873 = vsel %vm628, %v498, 0
      %v876 = vsel %vm628, %v502, 0
      %v879 = vsel %vm628, %v506, 0
      %v882 = vsel %vm628, %v510, 0
      %v885 = vsel %vm628, %v514, 0
      %v888 = vsel %vm628, %v518, 0
      %v891 = vsel %vm628, %v522, 0
      %v894 = vsel %vm628, %v526, 0
      %v897 = vsel %vm628, %v530, 0
      %v900 = vsel %vm628, %v534, 0
      %v903 = vsel %vm628, %v538, 0
      %v906 = vsel %vm628, %v542, 0
      %v909 = vsel %vm628, %v546, 0
      %v912 = vsel %vm628, %v550, 0
      %v915 = vsel %vm628, %v554, 0
      %v918 = vsel %vm628, %v558, 0
      %v921 = vsel %vm628, %v562, 0
      %v924 = vsel %vm628, %v566, 0
      %v927 = vsel %vm628, %v570, 0
      %929 = vmatprep.subr.mxu0 0.0
      %930 = vmatpush1.msra.mxu0 %v586
      %931 = vmatprep.subr.mxu0 0.0
      %932 = vmatpush1.msra.mxu0 %v585
      %933 = vmatprep.subr.mxu0 0.0
      %934 = vmatpush1.msra.mxu0 %v584
      %935 = vmatprep.subr.mxu0 0.0
      %936 = vmatpush1.msra.mxu0 %v583
      %937 = vmatprep.subr.mxu0 0.0
      %938 = vmatpush1.msra.mxu0 %v582
      %939 = vmatprep.subr.mxu0 0.0
      %940 = vmatpush1.msra.mxu0 %v581
      %941 = vmatprep.subr.mxu0 0.0
      %942 = vmatpush1.msra.mxu0 %v580
      %943 = vmatprep.subr.mxu0 0.0
      %944 = vmatpush1.msra.mxu0 %v579
      %945 = vmatprep.subr.mxu0 0.0
      %946 = vmatpush1.msra.mxu0 %v578
      %947 = vmatprep.subr.mxu0 0.0
      %948 = vmatpush1.msra.mxu0 %v577
      %949 = vmatprep.subr.mxu0 0.0
      %950 = vmatpush1.msra.mxu0 %v576
      %951 = vmatprep.subr.mxu0 0.0
      %952 = vmatpush1.msra.mxu0 %v575
      %953 = vmatprep.subr.mxu0 0.0
      %954 = vmatpush1.msra.mxu0 %v574
      %955 = vmatprep.subr.mxu0 0.0
      %956 = vmatpush1.msra.mxu0 %v573
      %957 = vmatprep.subr.mxu0 0.0
      %958 = vmatpush1.msra.mxu0 %v572
      %959 = vmatprep.subr.mxu0 0.0
      %960 = vmatpush1.msra.mxu0 %v571
      %961 = vmatprep.subr.mxu0 0.0
      %962 = vmatpush2.msra.mxu0 %v602
      %963 = vmatprep.subr.mxu0 0.0
      %964 = vmatpush2.msra.mxu0 %v601
      %965 = vmatprep.subr.mxu0 0.0
      %966 = vmatpush2.msra.mxu0 %v600
      %967 = vmatprep.subr.mxu0 0.0
      %968 = vmatpush2.msra.mxu0 %v599
      %969 = vmatprep.subr.mxu0 0.0
      %970 = vmatpush2.msra.mxu0 %v598
      %971 = vmatprep.subr.mxu0 0.0
      %972 = vmatpush2.msra.mxu0 %v597
      %973 = vmatprep.subr.mxu0 0.0
      %974 = vmatpush2.msra.mxu0 %v596
      %975 = vmatprep.subr.mxu0 0.0
      %976 = vmatpush2.msra.mxu0 %v595
      %977 = vmatprep.subr.mxu0 0.0
      %978 = vmatpush2.msra.mxu0 %v594
      %979 = vmatprep.subr.mxu0 0.0
      %980 = vmatpush2.msra.mxu0 %v593
      %981 = vmatprep.subr.mxu0 0.0
      %982 = vmatpush2.msra.mxu0 %v592
      %983 = vmatprep.subr.mxu0 0.0
      %984 = vmatpush2.msra.mxu0 %v591
      %985 = vmatprep.subr.mxu0 0.0
      %986 = vmatpush2.msra.mxu0 %v590
      %987 = vmatprep.subr.mxu0 0.0
      %988 = vmatpush2.msra.mxu0 %v589
      %989 = vmatprep.subr.mxu0 0.0
      %990 = vmatpush2.msra.mxu0 %v588
      %991 = vmatprep.subr.mxu0 0.0
      %992 = vmatpush2.msra.mxu0 %v587
      %993 = vmatprep.mubr.f32.mxu0 %v172
      %994 = vmatmul.mubr.f32.gmra.mxu0 %v171
      %v995 = vpop.f32.mrf.mxu0
      %v996 = vadd.f32 %v626, %v995
      %v997 = vpop.f32.mrf.mxu0
      %998 = vmatprep.mubr.f32.mxu0 %v176
      %999 = vmatmul.mubr.f32.gmra.mxu0 %v175
      %v1000 = vpop.f32.mrf.mxu0
      %v1001 = vadd.f32 %v626, %v1000
      %v1002 = vpop.f32.mrf.mxu0
      %1003 = vmatprep.mubr.f32.mxu0 %v180
      %1004 = vmatmul.mubr.f32.gmra.mxu0 %v179
      %v1005 = vpop.f32.mrf.mxu0
      %v1006 = vadd.f32 %v626, %v1005
      %v1007 = vpop.f32.mrf.mxu0
      %1008 = vmatprep.mubr.f32.mxu0 %v184
      %1009 = vmatmul.mubr.f32.gmra.mxu0 %v183
      %v1010 = vpop.f32.mrf.mxu0
      %v1011 = vadd.f32 %v626, %v1010
      %v1012 = vpop.f32.mrf.mxu0
      %1013 = vmatprep.mubr.f32.mxu0 %v188
      %1014 = vmatmul.mubr.f32.gmra.mxu0 %v187
      %v1015 = vpop.f32.mrf.mxu0
      %v1016 = vadd.f32 %v626, %v1015
      %v1017 = vpop.f32.mrf.mxu0
      %1018 = vmatprep.mubr.f32.mxu0 %v192
      %1019 = vmatmul.mubr.f32.gmra.mxu0 %v191
      %v1020 = vpop.f32.mrf.mxu0
      %v1021 = vadd.f32 %v626, %v1020
      %v1022 = vpop.f32.mrf.mxu0
      %1023 = vmatprep.mubr.f32.mxu0 %v196
      %1024 = vmatmul.mubr.f32.gmra.mxu0 %v195
      %v1025 = vpop.f32.mrf.mxu0
      %v1026 = vadd.f32 %v626, %v1025
      %v1027 = vpop.f32.mrf.mxu0
      %1028 = vmatprep.mubr.f32.mxu0 %v200
      %1029 = vmatmul.mubr.f32.gmra.mxu0 %v199
      %v1030 = vpop.f32.mrf.mxu0
      %v1031 = vadd.f32 %v626, %v1030
      %v1032 = vpop.f32.mrf.mxu0
      %1033 = vmatprep.mubr.f32.mxu0 %v204
      %1034 = vmatmul.mubr.f32.gmra.mxu0 %v203
      %v1035 = vpop.f32.mrf.mxu0
      %v1036 = vadd.f32 %v626, %v1035
      %v1037 = vpop.f32.mrf.mxu0
      %1038 = vmatprep.mubr.f32.mxu0 %v208
      %1039 = vmatmul.mubr.f32.gmra.mxu0 %v207
      %v1040 = vpop.f32.mrf.mxu0
      %v1041 = vadd.f32 %v626, %v1040
      %v1042 = vpop.f32.mrf.mxu0
      %1043 = vmatprep.mubr.f32.mxu0 %v212
      %1044 = vmatmul.mubr.f32.gmra.mxu0 %v211
      %v1045 = vpop.f32.mrf.mxu0
      %v1046 = vadd.f32 %v626, %v1045
      %v1047 = vpop.f32.mrf.mxu0
      %1048 = vmatprep.mubr.f32.mxu0 %v216
      %1049 = vmatmul.mubr.f32.gmra.mxu0 %v215
      %v1050 = vpop.f32.mrf.mxu0
      %v1051 = vadd.f32 %v626, %v1050
      %v1052 = vpop.f32.mrf.mxu0
      %1053 = vmatprep.mubr.f32.mxu0 %v220
      %1054 = vmatmul.mubr.f32.gmra.mxu0 %v219
      %v1055 = vpop.f32.mrf.mxu0
      %v1056 = vadd.f32 %v626, %v1055
      %v1057 = vpop.f32.mrf.mxu0
      %1058 = vmatprep.mubr.f32.mxu0 %v224
      %1059 = vmatmul.mubr.f32.gmra.mxu0 %v223
      %v1060 = vpop.f32.mrf.mxu0
      %v1061 = vadd.f32 %v626, %v1060
      %v1062 = vpop.f32.mrf.mxu0
      %1063 = vmatprep.mubr.f32.mxu0 %v228
      %1064 = vmatmul.mubr.f32.gmra.mxu0 %v227
      %v1065 = vpop.f32.mrf.mxu0
      %v1066 = vadd.f32 %v626, %v1065
      %v1067 = vpop.f32.mrf.mxu0
      %1068 = vmatprep.mubr.f32.mxu0 %v232
      %1069 = vmatmul.mubr.f32.gmra.mxu0 %v231
      %v1070 = vpop.f32.mrf.mxu0
      %v1071 = vadd.f32 %v626, %v1070
      %v1072 = vpop.f32.mrf.mxu0
      %1073 = vmatprep.mubr.f32.mxu0 %v236
      %1074 = vmatmul.mubr.f32.gmra.mxu0 %v235
      %v1075 = vpop.f32.mrf.mxu0
      %v1076 = vadd.f32 %v626, %v1075
      %v1077 = vpop.f32.mrf.mxu0
      %1078 = vmatprep.mubr.f32.mxu0 %v240
      %1079 = vmatmul.mubr.f32.gmra.mxu0 %v239
      %v1080 = vpop.f32.mrf.mxu0
      %v1081 = vadd.f32 %v626, %v1080
      %v1082 = vpop.f32.mrf.mxu0
      %1083 = vmatprep.mubr.f32.mxu0 %v244
      %1084 = vmatmul.mubr.f32.gmra.mxu0 %v243
      %v1085 = vpop.f32.mrf.mxu0
      %v1086 = vadd.f32 %v626, %v1085
      %v1087 = vpop.f32.mrf.mxu0
      %1088 = vmatprep.mubr.f32.mxu0 %v248
      %1089 = vmatmul.mubr.f32.gmra.mxu0 %v247
      %v1090 = vpop.f32.mrf.mxu0
      %v1091 = vadd.f32 %v626, %v1090
      %v1092 = vpop.f32.mrf.mxu0
      %1093 = vmatprep.mubr.f32.mxu0 %v252
      %1094 = vmatmul.mubr.f32.gmra.mxu0 %v251
      %v1095 = vpop.f32.mrf.mxu0
      %v1096 = vadd.f32 %v626, %v1095
      %v1097 = vpop.f32.mrf.mxu0
      %1098 = vmatprep.mubr.f32.mxu0 %v256
      %1099 = vmatmul.mubr.f32.gmra.mxu0 %v255
      %v1100 = vpop.f32.mrf.mxu0
      %v1101 = vadd.f32 %v626, %v1100
      %v1102 = vpop.f32.mrf.mxu0
      %1103 = vmatprep.mubr.f32.mxu0 %v260
      %1104 = vmatmul.mubr.f32.gmra.mxu0 %v259
      %v1105 = vpop.f32.mrf.mxu0
      %v1106 = vadd.f32 %v626, %v1105
      %v1107 = vpop.f32.mrf.mxu0
      %1108 = vmatprep.mubr.f32.mxu0 %v264
      %1109 = vmatmul.mubr.f32.gmra.mxu0 %v263
      %v1110 = vpop.f32.mrf.mxu0
      %v1111 = vadd.f32 %v626, %v1110
      %v1112 = vpop.f32.mrf.mxu0
      %1113 = vmatprep.mubr.f32.mxu0 %v268
      %1114 = vmatmul.mubr.f32.gmra.mxu0 %v267
      %v1115 = vpop.f32.mrf.mxu0
      %v1116 = vadd.f32 %v626, %v1115
      %v1117 = vpop.f32.mrf.mxu0
      %1118 = vmatprep.mubr.f32.mxu0 %v272
      %1119 = vmatmul.mubr.f32.gmra.mxu0 %v271
      %v1120 = vpop.f32.mrf.mxu0
      %v1121 = vadd.f32 %v626, %v1120
      %v1122 = vpop.f32.mrf.mxu0
      %1123 = vmatprep.mubr.f32.mxu0 %v276
      %1124 = vmatmul.mubr.f32.gmra.mxu0 %v275
      %v1125 = vpop.f32.mrf.mxu0
      %v1126 = vadd.f32 %v626, %v1125
      %v1127 = vpop.f32.mrf.mxu0
      %1128 = vmatprep.mubr.f32.mxu0 %v280
      %1129 = vmatmul.mubr.f32.gmra.mxu0 %v279
      %v1130 = vpop.f32.mrf.mxu0
      %v1131 = vadd.f32 %v626, %v1130
      %v1132 = vpop.f32.mrf.mxu0
      %1133 = vmatprep.mubr.f32.mxu0 %v284
      %1134 = vmatmul.mubr.f32.gmra.mxu0 %v283
      %v1135 = vpop.f32.mrf.mxu0
      %v1136 = vadd.f32 %v626, %v1135
      %v1137 = vpop.f32.mrf.mxu0
      %1138 = vmatprep.mubr.f32.mxu0 %v288
      %1139 = vmatmul.mubr.f32.gmra.mxu0 %v287
      %v1140 = vpop.f32.mrf.mxu0
      %v1141 = vadd.f32 %v626, %v1140
      %v1142 = vpop.f32.mrf.mxu0
      %1143 = vmatprep.mubr.f32.mxu0 %v292
      %1144 = vmatmul.mubr.f32.gmra.mxu0 %v291
      %v1145 = vpop.f32.mrf.mxu0
      %v1146 = vadd.f32 %v626, %v1145
      %v1147 = vpop.f32.mrf.mxu0
      %1148 = vmatprep.mubr.f32.mxu0 %v296
      %1149 = vmatmul.mubr.f32.gmra.mxu0 %v295
      %v1150 = vpop.f32.mrf.mxu0
      %v1151 = vadd.f32 %v626, %v1150
      %v1152 = vpop.f32.mrf.mxu0
      %1153 = vmatprep.mubr.f32.mxu0 %v300
      %1154 = vmatmul.mubr.f32.gmra.mxu0 %v299
      %v1155 = vpop.f32.mrf.mxu0
      %v1156 = vadd.f32 %v626, %v1155
      %v1157 = vpop.f32.mrf.mxu0
      %1158 = vmatprep.mubr.f32.mxu0 %v304
      %1159 = vmatmul.mubr.f32.gmra.mxu0 %v303
      %v1160 = vpop.f32.mrf.mxu0
      %v1161 = vadd.f32 %v626, %v1160
      %v1162 = vpop.f32.mrf.mxu0
      %1163 = vmatprep.mubr.f32.mxu0 %v308
      %1164 = vmatmul.mubr.f32.gmra.mxu0 %v307
      %v1165 = vpop.f32.mrf.mxu0
      %v1166 = vadd.f32 %v626, %v1165
      %v1167 = vpop.f32.mrf.mxu0
      %1168 = vmatprep.mubr.f32.mxu0 %v312
      %1169 = vmatmul.mubr.f32.gmra.mxu0 %v311
      %v1170 = vpop.f32.mrf.mxu0
      %v1171 = vadd.f32 %v626, %v1170
      %v1172 = vpop.f32.mrf.mxu0
      %1173 = vmatprep.mubr.f32.mxu0 %v316
      %1174 = vmatmul.mubr.f32.gmra.mxu0 %v315
      %v1175 = vpop.f32.mrf.mxu0
      %v1176 = vadd.f32 %v626, %v1175
      %v1177 = vpop.f32.mrf.mxu0
      %1178 = vmatprep.mubr.f32.mxu0 %v320
      %1179 = vmatmul.mubr.f32.gmra.mxu0 %v319
      %v1180 = vpop.f32.mrf.mxu0
      %v1181 = vadd.f32 %v626, %v1180
      %v1182 = vpop.f32.mrf.mxu0
      %1183 = vmatprep.mubr.f32.mxu0 %v324
      %1184 = vmatmul.mubr.f32.gmra.mxu0 %v323
      %v1185 = vpop.f32.mrf.mxu0
      %v1186 = vadd.f32 %v626, %v1185
      %v1187 = vpop.f32.mrf.mxu0
      %1188 = vmatprep.mubr.f32.mxu0 %v328
      %1189 = vmatmul.mubr.f32.gmra.mxu0 %v327
      %v1190 = vpop.f32.mrf.mxu0
      %v1191 = vadd.f32 %v626, %v1190
      %v1192 = vpop.f32.mrf.mxu0
      %1193 = vmatprep.mubr.f32.mxu0 %v332
      %1194 = vmatmul.mubr.f32.gmra.mxu0 %v331
      %v1195 = vpop.f32.mrf.mxu0
      %v1196 = vadd.f32 %v626, %v1195
      %v1197 = vpop.f32.mrf.mxu0
      %1198 = vmatprep.mubr.f32.mxu0 %v336
      %1199 = vmatmul.mubr.f32.gmra.mxu0 %v335
      %v1200 = vpop.f32.mrf.mxu0
      %v1201 = vadd.f32 %v626, %v1200
      %v1202 = vpop.f32.mrf.mxu0
      %1203 = vmatprep.mubr.f32.mxu0 %v340
      %1204 = vmatmul.mubr.f32.gmra.mxu0 %v339
      %v1205 = vpop.f32.mrf.mxu0
      %v1206 = vadd.f32 %v626, %v1205
      %v1207 = vpop.f32.mrf.mxu0
      %1208 = vmatprep.mubr.f32.mxu0 %v344
      %1209 = vmatmul.mubr.f32.gmra.mxu0 %v343
      %v1210 = vpop.f32.mrf.mxu0
      %v1211 = vadd.f32 %v626, %v1210
      %v1212 = vpop.f32.mrf.mxu0
      %1213 = vmatprep.mubr.f32.mxu0 %v348
      %1214 = vmatmul.mubr.f32.gmra.mxu0 %v347
      %v1215 = vpop.f32.mrf.mxu0
      %v1216 = vadd.f32 %v626, %v1215
      %v1217 = vpop.f32.mrf.mxu0
      %1218 = vmatprep.mubr.f32.mxu0 %v352
      %1219 = vmatmul.mubr.f32.gmra.mxu0 %v351
      %v1220 = vpop.f32.mrf.mxu0
      %v1221 = vadd.f32 %v626, %v1220
      %v1222 = vpop.f32.mrf.mxu0
      %1223 = vmatprep.mubr.f32.mxu0 %v356
      %1224 = vmatmul.mubr.f32.gmra.mxu0 %v355
      %v1225 = vpop.f32.mrf.mxu0
      %v1226 = vadd.f32 %v626, %v1225
      %v1227 = vpop.f32.mrf.mxu0
      %1228 = vmatprep.mubr.f32.mxu0 %v360
      %1229 = vmatmul.mubr.f32.gmra.mxu0 %v359
      %v1230 = vpop.f32.mrf.mxu0
      %v1231 = vadd.f32 %v626, %v1230
      %v1232 = vpop.f32.mrf.mxu0
      %1233 = vmatprep.mubr.f32.mxu0 %v364
      %1234 = vmatmul.mubr.f32.gmra.mxu0 %v363
      %v1235 = vpop.f32.mrf.mxu0
      %v1236 = vadd.f32 %v626, %v1235
      %v1237 = vpop.f32.mrf.mxu0
      %1238 = vmatprep.mubr.f32.mxu0 %v368
      %1239 = vmatmul.mubr.f32.gmra.mxu0 %v367
      %v1240 = vpop.f32.mrf.mxu0
      %v1241 = vadd.f32 %v626, %v1240
      %v1242 = vpop.f32.mrf.mxu0
      %1243 = vmatprep.mubr.f32.mxu0 %v372
      %1244 = vmatmul.mubr.f32.gmra.mxu0 %v371
      %v1245 = vpop.f32.mrf.mxu0
      %v1246 = vadd.f32 %v626, %v1245
      %v1247 = vpop.f32.mrf.mxu0
      %1248 = vmatprep.mubr.f32.mxu0 %v376
      %1249 = vmatmul.mubr.f32.gmra.mxu0 %v375
      %v1250 = vpop.f32.mrf.mxu0
      %v1251 = vadd.f32 %v626, %v1250
      %v1252 = vpop.f32.mrf.mxu0
      %1253 = vmatprep.mubr.f32.mxu0 %v380
      %1254 = vmatmul.mubr.f32.gmra.mxu0 %v379
      %v1255 = vpop.f32.mrf.mxu0
      %v1256 = vadd.f32 %v626, %v1255
      %v1257 = vpop.f32.mrf.mxu0
      %1258 = vmatprep.mubr.f32.mxu0 %v384
      %1259 = vmatmul.mubr.f32.gmra.mxu0 %v383
      %v1260 = vpop.f32.mrf.mxu0
      %v1261 = vadd.f32 %v626, %v1260
      %v1262 = vpop.f32.mrf.mxu0
      %1263 = vmatprep.mubr.f32.mxu0 %v388
      %1264 = vmatmul.mubr.f32.gmra.mxu0 %v387
      %v1265 = vpop.f32.mrf.mxu0
      %v1266 = vadd.f32 %v626, %v1265
      %v1267 = vpop.f32.mrf.mxu0
      %1268 = vmatprep.mubr.f32.mxu0 %v392
      %1269 = vmatmul.mubr.f32.gmra.mxu0 %v391
      %v1270 = vpop.f32.mrf.mxu0
      %v1271 = vadd.f32 %v626, %v1270
      %v1272 = vpop.f32.mrf.mxu0
      %1273 = vmatprep.mubr.f32.mxu0 %v396
      %1274 = vmatmul.mubr.f32.gmra.mxu0 %v395
      %v1275 = vpop.f32.mrf.mxu0
      %v1276 = vadd.f32 %v626, %v1275
      %v1277 = vpop.f32.mrf.mxu0
      %1278 = vmatprep.mubr.f32.mxu0 %v400
      %1279 = vmatmul.mubr.f32.gmra.mxu0 %v399
      %v1280 = vpop.f32.mrf.mxu0
      %v1281 = vadd.f32 %v626, %v1280
      %v1282 = vpop.f32.mrf.mxu0
      %1283 = vmatprep.mubr.f32.mxu0 %v404
      %1284 = vmatmul.mubr.f32.gmra.mxu0 %v403
      %v1285 = vpop.f32.mrf.mxu0
      %v1286 = vadd.f32 %v626, %v1285
      %v1287 = vpop.f32.mrf.mxu0
      %1288 = vmatprep.mubr.f32.mxu0 %v408
      %1289 = vmatmul.mubr.f32.gmra.mxu0 %v407
      %v1290 = vpop.f32.mrf.mxu0
      %v1291 = vadd.f32 %v626, %v1290
      %v1292 = vpop.f32.mrf.mxu0
      %1293 = vmatprep.mubr.f32.mxu0 %v412
      %1294 = vmatmul.mubr.f32.gmra.mxu0 %v411
      %v1295 = vpop.f32.mrf.mxu0
      %v1296 = vadd.f32 %v626, %v1295
      %v1297 = vpop.f32.mrf.mxu0
      %1298 = vmatprep.mubr.f32.mxu0 %v416
      %1299 = vmatmul.mubr.f32.gmra.mxu0 %v415
      %v1300 = vpop.f32.mrf.mxu0
      %v1301 = vadd.f32 %v626, %v1300
      %v1302 = vpop.f32.mrf.mxu0
      %1303 = vmatprep.mubr.f32.mxu0 %v420
      %1304 = vmatmul.mubr.f32.gmra.mxu0 %v419
      %v1305 = vpop.f32.mrf.mxu0
      %v1306 = vadd.f32 %v626, %v1305
      %v1307 = vpop.f32.mrf.mxu0
      %1308 = vmatprep.mubr.f32.mxu0 %v424
      %1309 = vmatmul.mubr.f32.gmra.mxu0 %v423
      %v1310 = vpop.f32.mrf.mxu0
      %v1311 = vadd.f32 %v626, %v1310
      %v1312 = vpop.f32.mrf.mxu0
      %1313 = vmatprep.mubr.f32.mxu0 %v428
      %1314 = vmatmul.mubr.f32.gmra.mxu0 %v427
      %v1315 = vpop.f32.mrf.mxu0
      %v1316 = vadd.f32 %v626, %v1315
      %v1317 = vpop.f32.mrf.mxu0
      %1318 = vmatprep.mubr.f32.mxu0 %v432
      %1319 = vmatmul.mubr.f32.gmra.mxu0 %v431
      %v1320 = vpop.f32.mrf.mxu0
      %v1321 = vadd.f32 %v626, %v1320
      %v1322 = vpop.f32.mrf.mxu0
      %1323 = vmatprep.mubr.f32.mxu0 %v436
      %1324 = vmatmul.mubr.f32.gmra.mxu0 %v435
      %v1325 = vpop.f32.mrf.mxu0
      %v1326 = vadd.f32 %v626, %v1325
      %v1327 = vpop.f32.mrf.mxu0
      %1328 = vmatprep.mubr.f32.mxu0 %v440
      %1329 = vmatmul.mubr.f32.gmra.mxu0 %v439
      %v1330 = vpop.f32.mrf.mxu0
      %v1331 = vadd.f32 %v626, %v1330
      %v1332 = vpop.f32.mrf.mxu0
      %1333 = vmatprep.mubr.f32.mxu0 %v444
      %1334 = vmatmul.mubr.f32.gmra.mxu0 %v443
      %v1335 = vpop.f32.mrf.mxu0
      %v1336 = vadd.f32 %v626, %v1335
      %v1337 = vpop.f32.mrf.mxu0
      %1338 = vmatprep.mubr.f32.mxu0 %v448
      %1339 = vmatmul.mubr.f32.gmra.mxu0 %v447
      %v1340 = vpop.f32.mrf.mxu0
      %v1341 = vadd.f32 %v626, %v1340
      %v1342 = vpop.f32.mrf.mxu0
      %1343 = vmatprep.mubr.f32.mxu0 %v452
      %1344 = vmatmul.mubr.f32.gmra.mxu0 %v451
      %v1345 = vpop.f32.mrf.mxu0
      %v1346 = vadd.f32 %v626, %v1345
      %v1347 = vpop.f32.mrf.mxu0
      %1348 = vmatprep.mubr.f32.mxu0 %v456
      %1349 = vmatmul.mubr.f32.gmra.mxu0 %v455
      %v1350 = vpop.f32.mrf.mxu0
      %v1351 = vadd.f32 %v626, %v1350
      %v1352 = vpop.f32.mrf.mxu0
      %1353 = vmatprep.mubr.f32.mxu0 %v460
      %1354 = vmatmul.mubr.f32.gmra.mxu0 %v459
      %v1355 = vpop.f32.mrf.mxu0
      %v1356 = vadd.f32 %v626, %v1355
      %v1357 = vpop.f32.mrf.mxu0
      %1358 = vmatprep.mubr.f32.mxu0 %v464
      %1359 = vmatmul.mubr.f32.gmra.mxu0 %v463
      %v1360 = vpop.f32.mrf.mxu0
      %v1361 = vadd.f32 %v626, %v1360
      %v1362 = vpop.f32.mrf.mxu0
      %1363 = vmatprep.mubr.f32.mxu0 %v468
      %1364 = vmatmul.mubr.f32.gmra.mxu0 %v467
      %v1365 = vpop.f32.mrf.mxu0
      %v1366 = vadd.f32 %v626, %v1365
      %v1367 = vpop.f32.mrf.mxu0
      %1368 = vmatprep.mubr.f32.mxu0 %v472
      %1369 = vmatmul.mubr.f32.gmra.mxu0 %v471
      %v1370 = vpop.f32.mrf.mxu0
      %v1371 = vadd.f32 %v626, %v1370
      %v1372 = vpop.f32.mrf.mxu0
      %1373 = vmatprep.mubr.f32.mxu0 %v476
      %1374 = vmatmul.mubr.f32.gmra.mxu0 %v475
      %v1375 = vpop.f32.mrf.mxu0
      %v1376 = vadd.f32 %v626, %v1375
      %v1377 = vpop.f32.mrf.mxu0
      %1378 = vmatprep.mubr.f32.mxu0 %v480
      %1379 = vmatmul.mubr.f32.gmra.mxu0 %v479
      %v1380 = vpop.f32.mrf.mxu0
      %v1381 = vadd.f32 %v626, %v1380
      %v1382 = vpop.f32.mrf.mxu0
      %1383 = vmatprep.mubr.f32.mxu0 %v484
      %1384 = vmatmul.mubr.f32.gmra.mxu0 %v483
      %v1385 = vpop.f32.mrf.mxu0
      %v1386 = vadd.f32 %v626, %v1385
      %v1387 = vpop.f32.mrf.mxu0
      %1388 = vmatprep.mubr.f32.mxu0 %v488
      %1389 = vmatmul.mubr.f32.gmra.mxu0 %v487
      %v1390 = vpop.f32.mrf.mxu0
      %v1391 = vadd.f32 %v626, %v1390
      %v1392 = vpop.f32.mrf.mxu0
      %1393 = vmatprep.mubr.f32.mxu0 %v492
      %1394 = vmatmul.mubr.f32.gmra.mxu0 %v491
      %v1395 = vpop.f32.mrf.mxu0
      %v1396 = vadd.f32 %v626, %v1395
      %v1397 = vpop.f32.mrf.mxu0
      %1398 = vmatprep.mubr.f32.mxu0 %v496
      %1399 = vmatmul.mubr.f32.gmra.mxu0 %v495
      %v1400 = vpop.f32.mrf.mxu0
      %v1401 = vadd.f32 %v626, %v1400
      %v1402 = vpop.f32.mrf.mxu0
      %1403 = vmatprep.mubr.f32.mxu0 %v500
      %1404 = vmatmul.mubr.f32.gmra.mxu0 %v499
      %v1405 = vpop.f32.mrf.mxu0
      %v1406 = vadd.f32 %v626, %v1405
      %v1407 = vpop.f32.mrf.mxu0
      %1408 = vmatprep.mubr.f32.mxu0 %v504
      %1409 = vmatmul.mubr.f32.gmra.mxu0 %v503
      %v1410 = vpop.f32.mrf.mxu0
      %v1411 = vadd.f32 %v626, %v1410
      %v1412 = vpop.f32.mrf.mxu0
      %1413 = vmatprep.mubr.f32.mxu0 %v508
      %1414 = vmatmul.mubr.f32.gmra.mxu0 %v507
      %v1415 = vpop.f32.mrf.mxu0
      %v1416 = vadd.f32 %v626, %v1415
      %v1417 = vpop.f32.mrf.mxu0
      %1418 = vmatprep.mubr.f32.mxu0 %v512
      %1419 = vmatmul.mubr.f32.gmra.mxu0 %v511
      %v1420 = vpop.f32.mrf.mxu0
      %v1421 = vadd.f32 %v626, %v1420
      %v1422 = vpop.f32.mrf.mxu0
      %1423 = vmatprep.mubr.f32.mxu0 %v516
      %1424 = vmatmul.mubr.f32.gmra.mxu0 %v515
      %v1425 = vpop.f32.mrf.mxu0
      %v1426 = vadd.f32 %v626, %v1425
      %v1427 = vpop.f32.mrf.mxu0
      %1428 = vmatprep.mubr.f32.mxu0 %v520
      %1429 = vmatmul.mubr.f32.gmra.mxu0 %v519
      %v1430 = vpop.f32.mrf.mxu0
      %v1431 = vadd.f32 %v626, %v1430
      %v1432 = vpop.f32.mrf.mxu0
      %1433 = vmatprep.mubr.f32.mxu0 %v524
      %1434 = vmatmul.mubr.f32.gmra.mxu0 %v523
      %v1435 = vpop.f32.mrf.mxu0
      %v1436 = vadd.f32 %v626, %v1435
      %v1437 = vpop.f32.mrf.mxu0
      %1438 = vmatprep.mubr.f32.mxu0 %v528
      %1439 = vmatmul.mubr.f32.gmra.mxu0 %v527
      %v1440 = vpop.f32.mrf.mxu0
      %v1441 = vadd.f32 %v626, %v1440
      %v1442 = vpop.f32.mrf.mxu0
      %1443 = vmatprep.mubr.f32.mxu0 %v532
      %1444 = vmatmul.mubr.f32.gmra.mxu0 %v531
      %v1445 = vpop.f32.mrf.mxu0
      %v1446 = vadd.f32 %v626, %v1445
      %v1447 = vpop.f32.mrf.mxu0
      %1448 = vmatprep.mubr.f32.mxu0 %v536
      %1449 = vmatmul.mubr.f32.gmra.mxu0 %v535
      %v1450 = vpop.f32.mrf.mxu0
      %v1451 = vadd.f32 %v626, %v1450
      %v1452 = vpop.f32.mrf.mxu0
      %1453 = vmatprep.mubr.f32.mxu0 %v540
      %1454 = vmatmul.mubr.f32.gmra.mxu0 %v539
      %v1455 = vpop.f32.mrf.mxu0
      %v1456 = vadd.f32 %v626, %v1455
      %v1457 = vpop.f32.mrf.mxu0
      %1458 = vmatprep.mubr.f32.mxu0 %v544
      %1459 = vmatmul.mubr.f32.gmra.mxu0 %v543
      %v1460 = vpop.f32.mrf.mxu0
      %v1461 = vadd.f32 %v626, %v1460
      %v1462 = vpop.f32.mrf.mxu0
      %1463 = vmatprep.mubr.f32.mxu0 %v548
      %1464 = vmatmul.mubr.f32.gmra.mxu0 %v547
      %v1465 = vpop.f32.mrf.mxu0
      %v1466 = vadd.f32 %v626, %v1465
      %v1467 = vpop.f32.mrf.mxu0
      %1468 = vmatprep.mubr.f32.mxu0 %v552
      %1469 = vmatmul.mubr.f32.gmra.mxu0 %v551
      %v1470 = vpop.f32.mrf.mxu0
      %v1471 = vadd.f32 %v626, %v1470
      %v1472 = vpop.f32.mrf.mxu0
      %1473 = vmatprep.mubr.f32.mxu0 %v556
      %1474 = vmatmul.mubr.f32.gmra.mxu0 %v555
      %v1475 = vpop.f32.mrf.mxu0
      %v1476 = vadd.f32 %v626, %v1475
      %v1477 = vpop.f32.mrf.mxu0
      %1478 = vmatprep.mubr.f32.mxu0 %v560
      %1479 = vmatmul.mubr.f32.gmra.mxu0 %v559
      %v1480 = vpop.f32.mrf.mxu0
      %v1481 = vadd.f32 %v626, %v1480
      %v1482 = vpop.f32.mrf.mxu0
      %1483 = vmatprep.mubr.f32.mxu0 %v564
      %1484 = vmatmul.mubr.f32.gmra.mxu0 %v563
      %v1485 = vpop.f32.mrf.mxu0
      %v1486 = vadd.f32 %v626, %v1485
      %v1487 = vpop.f32.mrf.mxu0
      %1488 = vmatprep.mubr.f32.mxu0 %v568
      %1489 = vmatmul.mubr.f32.gmra.mxu0 %v567
      %v1490 = vpop.f32.mrf.mxu0
      %v1491 = vadd.f32 %v626, %v1490
      %v1492 = vpop.f32.mrf.mxu0
      %1493 = vdwg.mxu0
      %1494 = vmatprep.subr.mxu0 0.0
      %1495 = vmatpush1.msra.mxu0 %v618
      %1496 = vmatprep.subr.mxu0 0.0
      %1497 = vmatpush1.msra.mxu0 %v617
      %1498 = vmatprep.subr.mxu0 0.0
      %1499 = vmatpush1.msra.mxu0 %v616
      %1500 = vmatprep.subr.mxu0 0.0
      %1501 = vmatpush1.msra.mxu0 %v615
      %1502 = vmatprep.subr.mxu0 0.0
      %1503 = vmatpush1.msra.mxu0 %v614
      %1504 = vmatprep.subr.mxu0 0.0
      %1505 = vmatpush1.msra.mxu0 %v613
      %1506 = vmatprep.subr.mxu0 0.0
      %1507 = vmatpush1.msra.mxu0 %v612
      %1508 = vmatprep.subr.mxu0 0.0
      %1509 = vmatpush1.msra.mxu0 %v611
      %1510 = vmatprep.subr.mxu0 0.0
      %1511 = vmatpush1.msra.mxu0 %v610
      %1512 = vmatprep.subr.mxu0 0.0
      %1513 = vmatpush1.msra.mxu0 %v609
      %1514 = vmatprep.subr.mxu0 0.0
      %1515 = vmatpush1.msra.mxu0 %v608
      %1516 = vmatprep.subr.mxu0 0.0
      %1517 = vmatpush1.msra.mxu0 %v607
      %1518 = vmatprep.subr.mxu0 0.0
      %1519 = vmatpush1.msra.mxu0 %v606
      %1520 = vmatprep.subr.mxu0 0.0
      %1521 = vmatpush1.msra.mxu0 %v605
      %1522 = vmatprep.subr.mxu0 0.0
      %1523 = vmatpush1.msra.mxu0 %v604
      %1524 = vmatprep.subr.mxu0 0.0
      %1525 = vmatpush1.msra.mxu0 %v603
      %1526 = vmatprep.subr.mxu0 0.0
      %1527 = vmatpush2.msra.mxu0 0.0
      %1528 = vmatprep.subr.mxu0 0.0
      %1529 = vmatpush2.msra.mxu0 0.0
      %1530 = vmatprep.subr.mxu0 0.0
      %1531 = vmatpush2.msra.mxu0 0.0
      %1532 = vmatprep.subr.mxu0 0.0
      %1533 = vmatpush2.msra.mxu0 0.0
      %1534 = vmatprep.subr.mxu0 0.0
      %1535 = vmatpush2.msra.mxu0 0.0
      %1536 = vmatprep.subr.mxu0 0.0
      %1537 = vmatpush2.msra.mxu0 0.0
      %1538 = vmatprep.subr.mxu0 0.0
      %1539 = vmatpush2.msra.mxu0 0.0
      %1540 = vmatprep.subr.mxu0 0.0
      %1541 = vmatpush2.msra.mxu0 0.0
      %1542 = vmatprep.subr.mxu0 0.0
      %1543 = vmatpush2.msra.mxu0 0.0
      %1544 = vmatprep.subr.mxu0 0.0
      %1545 = vmatpush2.msra.mxu0 0.0
      %1546 = vmatprep.subr.mxu0 0.0
      %1547 = vmatpush2.msra.mxu0 0.0
      %1548 = vmatprep.subr.mxu0 0.0
      %1549 = vmatpush2.msra.mxu0 0.0
      %1550 = vmatprep.subr.mxu0 0.0
      %1551 = vmatpush2.msra.mxu0 0.0
      %1552 = vmatprep.subr.mxu0 0.0
      %1553 = vmatpush2.msra.mxu0 0.0
      %1554 = vmatprep.subr.mxu0 0.0
      %1555 = vmatpush2.msra.mxu0 %v620
      %1556 = vmatprep.subr.mxu0 0.0
      %1557 = vmatpush2.msra.mxu0 %v619
      %1558 = vmatprep.mubr.f32.mxu0 %v630
      %1559 = vmatmul.mubr.f32.gmra.mxu0 %v173
      %v1560 = vpop.f32.mrf.mxu0
      %v1561 = vadd.f32 %v996, %v1560
      %v1562 = vpop.f32.mrf.mxu0
      %1563 = vmatprep.mubr.f32.mxu0 %v633
      %1564 = vmatmul.mubr.f32.gmra.mxu0 %v177
      %v1565 = vpop.f32.mrf.mxu0
      %v1566 = vadd.f32 %v1001, %v1565
      %v1567 = vpop.f32.mrf.mxu0
      %1568 = vmatprep.mubr.f32.mxu0 %v636
      %1569 = vmatmul.mubr.f32.gmra.mxu0 %v181
      %v1570 = vpop.f32.mrf.mxu0
      %v1571 = vadd.f32 %v1006, %v1570
      %v1572 = vpop.f32.mrf.mxu0
      %1573 = vmatprep.mubr.f32.mxu0 %v639
      %1574 = vmatmul.mubr.f32.gmra.mxu0 %v185
      %v1575 = vpop.f32.mrf.mxu0
      %v1576 = vadd.f32 %v1011, %v1575
      %v1577 = vpop.f32.mrf.mxu0
      %1578 = vmatprep.mubr.f32.mxu0 %v642
      %1579 = vmatmul.mubr.f32.gmra.mxu0 %v189
      %v1580 = vpop.f32.mrf.mxu0
      %v1581 = vadd.f32 %v1016, %v1580
      %v1582 = vpop.f32.mrf.mxu0
      %1583 = vmatprep.mubr.f32.mxu0 %v645
      %1584 = vmatmul.mubr.f32.gmra.mxu0 %v193
      %v1585 = vpop.f32.mrf.mxu0
      %v1586 = vadd.f32 %v1021, %v1585
      %v1587 = vpop.f32.mrf.mxu0
      %1588 = vmatprep.mubr.f32.mxu0 %v648
      %1589 = vmatmul.mubr.f32.gmra.mxu0 %v197
      %v1590 = vpop.f32.mrf.mxu0
      %v1591 = vadd.f32 %v1026, %v1590
      %v1592 = vpop.f32.mrf.mxu0
      %1593 = vmatprep.mubr.f32.mxu0 %v651
      %1594 = vmatmul.mubr.f32.gmra.mxu0 %v201
      %v1595 = vpop.f32.mrf.mxu0
      %v1596 = vadd.f32 %v1031, %v1595
      %v1597 = vpop.f32.mrf.mxu0
      %1598 = vmatprep.mubr.f32.mxu0 %v654
      %1599 = vmatmul.mubr.f32.gmra.mxu0 %v205
      %v1600 = vpop.f32.mrf.mxu0
      %v1601 = vadd.f32 %v1036, %v1600
      %v1602 = vpop.f32.mrf.mxu0
      %1603 = vmatprep.mubr.f32.mxu0 %v657
      %1604 = vmatmul.mubr.f32.gmra.mxu0 %v209
      %v1605 = vpop.f32.mrf.mxu0
      %v1606 = vadd.f32 %v1041, %v1605
      %v1607 = vpop.f32.mrf.mxu0
      %1608 = vmatprep.mubr.f32.mxu0 %v660
      %1609 = vmatmul.mubr.f32.gmra.mxu0 %v213
      %v1610 = vpop.f32.mrf.mxu0
      %v1611 = vadd.f32 %v1046, %v1610
      %v1612 = vpop.f32.mrf.mxu0
      %1613 = vmatprep.mubr.f32.mxu0 %v663
      %1614 = vmatmul.mubr.f32.gmra.mxu0 %v217
      %v1615 = vpop.f32.mrf.mxu0
      %v1616 = vadd.f32 %v1051, %v1615
      %v1617 = vpop.f32.mrf.mxu0
      %1618 = vmatprep.mubr.f32.mxu0 %v666
      %1619 = vmatmul.mubr.f32.gmra.mxu0 %v221
      %v1620 = vpop.f32.mrf.mxu0
      %v1621 = vadd.f32 %v1056, %v1620
      %v1622 = vpop.f32.mrf.mxu0
      %1623 = vmatprep.mubr.f32.mxu0 %v669
      %1624 = vmatmul.mubr.f32.gmra.mxu0 %v225
      %v1625 = vpop.f32.mrf.mxu0
      %v1626 = vadd.f32 %v1061, %v1625
      %v1627 = vpop.f32.mrf.mxu0
      %1628 = vmatprep.mubr.f32.mxu0 %v672
      %1629 = vmatmul.mubr.f32.gmra.mxu0 %v229
      %v1630 = vpop.f32.mrf.mxu0
      %v1631 = vadd.f32 %v1066, %v1630
      %v1632 = vpop.f32.mrf.mxu0
      %1633 = vmatprep.mubr.f32.mxu0 %v675
      %1634 = vmatmul.mubr.f32.gmra.mxu0 %v233
      %v1635 = vpop.f32.mrf.mxu0
      %v1636 = vadd.f32 %v1071, %v1635
      %v1637 = vpop.f32.mrf.mxu0
      %1638 = vmatprep.mubr.f32.mxu0 %v678
      %1639 = vmatmul.mubr.f32.gmra.mxu0 %v237
      %v1640 = vpop.f32.mrf.mxu0
      %v1641 = vadd.f32 %v1076, %v1640
      %v1642 = vpop.f32.mrf.mxu0
      %1643 = vmatprep.mubr.f32.mxu0 %v681
      %1644 = vmatmul.mubr.f32.gmra.mxu0 %v241
      %v1645 = vpop.f32.mrf.mxu0
      %v1646 = vadd.f32 %v1081, %v1645
      %v1647 = vpop.f32.mrf.mxu0
      %1648 = vmatprep.mubr.f32.mxu0 %v684
      %1649 = vmatmul.mubr.f32.gmra.mxu0 %v245
      %v1650 = vpop.f32.mrf.mxu0
      %v1651 = vadd.f32 %v1086, %v1650
      %v1652 = vpop.f32.mrf.mxu0
      %1653 = vmatprep.mubr.f32.mxu0 %v687
      %1654 = vmatmul.mubr.f32.gmra.mxu0 %v249
      %v1655 = vpop.f32.mrf.mxu0
      %v1656 = vadd.f32 %v1091, %v1655
      %v1657 = vpop.f32.mrf.mxu0
      %1658 = vmatprep.mubr.f32.mxu0 %v690
      %1659 = vmatmul.mubr.f32.gmra.mxu0 %v253
      %v1660 = vpop.f32.mrf.mxu0
      %v1661 = vadd.f32 %v1096, %v1660
      %v1662 = vpop.f32.mrf.mxu0
      %1663 = vmatprep.mubr.f32.mxu0 %v693
      %1664 = vmatmul.mubr.f32.gmra.mxu0 %v257
      %v1665 = vpop.f32.mrf.mxu0
      %v1666 = vadd.f32 %v1101, %v1665
      %v1667 = vpop.f32.mrf.mxu0
      %1668 = vmatprep.mubr.f32.mxu0 %v696
      %1669 = vmatmul.mubr.f32.gmra.mxu0 %v261
      %v1670 = vpop.f32.mrf.mxu0
      %v1671 = vadd.f32 %v1106, %v1670
      %v1672 = vpop.f32.mrf.mxu0
      %1673 = vmatprep.mubr.f32.mxu0 %v699
      %1674 = vmatmul.mubr.f32.gmra.mxu0 %v265
      %v1675 = vpop.f32.mrf.mxu0
      %v1676 = vadd.f32 %v1111, %v1675
      %v1677 = vpop.f32.mrf.mxu0
      %1678 = vmatprep.mubr.f32.mxu0 %v702
      %1679 = vmatmul.mubr.f32.gmra.mxu0 %v269
      %v1680 = vpop.f32.mrf.mxu0
      %v1681 = vadd.f32 %v1116, %v1680
      %v1682 = vpop.f32.mrf.mxu0
      %1683 = vmatprep.mubr.f32.mxu0 %v705
      %1684 = vmatmul.mubr.f32.gmra.mxu0 %v273
      %v1685 = vpop.f32.mrf.mxu0
      %v1686 = vadd.f32 %v1121, %v1685
      %v1687 = vpop.f32.mrf.mxu0
      %1688 = vmatprep.mubr.f32.mxu0 %v708
      %1689 = vmatmul.mubr.f32.gmra.mxu0 %v277
      %v1690 = vpop.f32.mrf.mxu0
      %v1691 = vadd.f32 %v1126, %v1690
      %v1692 = vpop.f32.mrf.mxu0
      %1693 = vmatprep.mubr.f32.mxu0 %v711
      %1694 = vmatmul.mubr.f32.gmra.mxu0 %v281
      %v1695 = vpop.f32.mrf.mxu0
      %v1696 = vadd.f32 %v1131, %v1695
      %v1697 = vpop.f32.mrf.mxu0
      %1698 = vmatprep.mubr.f32.mxu0 %v714
      %1699 = vmatmul.mubr.f32.gmra.mxu0 %v285
      %v1700 = vpop.f32.mrf.mxu0
      %v1701 = vadd.f32 %v1136, %v1700
      %v1702 = vpop.f32.mrf.mxu0
      %1703 = vmatprep.mubr.f32.mxu0 %v717
      %1704 = vmatmul.mubr.f32.gmra.mxu0 %v289
      %v1705 = vpop.f32.mrf.mxu0
      %v1706 = vadd.f32 %v1141, %v1705
      %v1707 = vpop.f32.mrf.mxu0
      %1708 = vmatprep.mubr.f32.mxu0 %v720
      %1709 = vmatmul.mubr.f32.gmra.mxu0 %v293
      %v1710 = vpop.f32.mrf.mxu0
      %v1711 = vadd.f32 %v1146, %v1710
      %v1712 = vpop.f32.mrf.mxu0
      %1713 = vmatprep.mubr.f32.mxu0 %v723
      %1714 = vmatmul.mubr.f32.gmra.mxu0 %v297
      %v1715 = vpop.f32.mrf.mxu0
      %v1716 = vadd.f32 %v1151, %v1715
      %v1717 = vpop.f32.mrf.mxu0
      %1718 = vmatprep.mubr.f32.mxu0 %v726
      %1719 = vmatmul.mubr.f32.gmra.mxu0 %v301
      %v1720 = vpop.f32.mrf.mxu0
      %v1721 = vadd.f32 %v1156, %v1720
      %v1722 = vpop.f32.mrf.mxu0
      %1723 = vmatprep.mubr.f32.mxu0 %v729
      %1724 = vmatmul.mubr.f32.gmra.mxu0 %v305
      %v1725 = vpop.f32.mrf.mxu0
      %v1726 = vadd.f32 %v1161, %v1725
      %v1727 = vpop.f32.mrf.mxu0
      %1728 = vmatprep.mubr.f32.mxu0 %v732
      %1729 = vmatmul.mubr.f32.gmra.mxu0 %v309
      %v1730 = vpop.f32.mrf.mxu0
      %v1731 = vadd.f32 %v1166, %v1730
      %v1732 = vpop.f32.mrf.mxu0
      %1733 = vmatprep.mubr.f32.mxu0 %v735
      %1734 = vmatmul.mubr.f32.gmra.mxu0 %v313
      %v1735 = vpop.f32.mrf.mxu0
      %v1736 = vadd.f32 %v1171, %v1735
      %v1737 = vpop.f32.mrf.mxu0
      %1738 = vmatprep.mubr.f32.mxu0 %v738
      %1739 = vmatmul.mubr.f32.gmra.mxu0 %v317
      %v1740 = vpop.f32.mrf.mxu0
      %v1741 = vadd.f32 %v1176, %v1740
      %v1742 = vpop.f32.mrf.mxu0
      %1743 = vmatprep.mubr.f32.mxu0 %v741
      %1744 = vmatmul.mubr.f32.gmra.mxu0 %v321
      %v1745 = vpop.f32.mrf.mxu0
      %v1746 = vadd.f32 %v1181, %v1745
      %v1747 = vpop.f32.mrf.mxu0
      %1748 = vmatprep.mubr.f32.mxu0 %v744
      %1749 = vmatmul.mubr.f32.gmra.mxu0 %v325
      %v1750 = vpop.f32.mrf.mxu0
      %v1751 = vadd.f32 %v1186, %v1750
      %v1752 = vpop.f32.mrf.mxu0
      %1753 = vmatprep.mubr.f32.mxu0 %v747
      %1754 = vmatmul.mubr.f32.gmra.mxu0 %v329
      %v1755 = vpop.f32.mrf.mxu0
      %v1756 = vadd.f32 %v1191, %v1755
      %v1757 = vpop.f32.mrf.mxu0
      %1758 = vmatprep.mubr.f32.mxu0 %v750
      %1759 = vmatmul.mubr.f32.gmra.mxu0 %v333
      %v1760 = vpop.f32.mrf.mxu0
      %v1761 = vadd.f32 %v1196, %v1760
      %v1762 = vpop.f32.mrf.mxu0
      %1763 = vmatprep.mubr.f32.mxu0 %v753
      %1764 = vmatmul.mubr.f32.gmra.mxu0 %v337
      %v1765 = vpop.f32.mrf.mxu0
      %v1766 = vadd.f32 %v1201, %v1765
      %v1767 = vpop.f32.mrf.mxu0
      %1768 = vmatprep.mubr.f32.mxu0 %v756
      %1769 = vmatmul.mubr.f32.gmra.mxu0 %v341
      %v1770 = vpop.f32.mrf.mxu0
      %v1771 = vadd.f32 %v1206, %v1770
      %v1772 = vpop.f32.mrf.mxu0
      %1773 = vmatprep.mubr.f32.mxu0 %v759
      %1774 = vmatmul.mubr.f32.gmra.mxu0 %v345
      %v1775 = vpop.f32.mrf.mxu0
      %v1776 = vadd.f32 %v1211, %v1775
      %v1777 = vpop.f32.mrf.mxu0
      %1778 = vmatprep.mubr.f32.mxu0 %v762
      %1779 = vmatmul.mubr.f32.gmra.mxu0 %v349
      %v1780 = vpop.f32.mrf.mxu0
      %v1781 = vadd.f32 %v1216, %v1780
      %v1782 = vpop.f32.mrf.mxu0
      %1783 = vmatprep.mubr.f32.mxu0 %v765
      %1784 = vmatmul.mubr.f32.gmra.mxu0 %v353
      %v1785 = vpop.f32.mrf.mxu0
      %v1786 = vadd.f32 %v1221, %v1785
      %v1787 = vpop.f32.mrf.mxu0
      %1788 = vmatprep.mubr.f32.mxu0 %v768
      %1789 = vmatmul.mubr.f32.gmra.mxu0 %v357
      %v1790 = vpop.f32.mrf.mxu0
      %v1791 = vadd.f32 %v1226, %v1790
      %v1792 = vpop.f32.mrf.mxu0
      %1793 = vmatprep.mubr.f32.mxu0 %v771
      %1794 = vmatmul.mubr.f32.gmra.mxu0 %v361
      %v1795 = vpop.f32.mrf.mxu0
      %v1796 = vadd.f32 %v1231, %v1795
      %v1797 = vpop.f32.mrf.mxu0
      %1798 = vmatprep.mubr.f32.mxu0 %v774
      %1799 = vmatmul.mubr.f32.gmra.mxu0 %v365
      %v1800 = vpop.f32.mrf.mxu0
      %v1801 = vadd.f32 %v1236, %v1800
      %v1802 = vpop.f32.mrf.mxu0
      %1803 = vmatprep.mubr.f32.mxu0 %v777
      %1804 = vmatmul.mubr.f32.gmra.mxu0 %v369
      %v1805 = vpop.f32.mrf.mxu0
      %v1806 = vadd.f32 %v1241, %v1805
      %v1807 = vpop.f32.mrf.mxu0
      %1808 = vmatprep.mubr.f32.mxu0 %v780
      %1809 = vmatmul.mubr.f32.gmra.mxu0 %v373
      %v1810 = vpop.f32.mrf.mxu0
      %v1811 = vadd.f32 %v1246, %v1810
      %v1812 = vpop.f32.mrf.mxu0
      %1813 = vmatprep.mubr.f32.mxu0 %v783
      %1814 = vmatmul.mubr.f32.gmra.mxu0 %v377
      %v1815 = vpop.f32.mrf.mxu0
      %v1816 = vadd.f32 %v1251, %v1815
      %v1817 = vpop.f32.mrf.mxu0
      %1818 = vmatprep.mubr.f32.mxu0 %v786
      %1819 = vmatmul.mubr.f32.gmra.mxu0 %v381
      %v1820 = vpop.f32.mrf.mxu0
      %v1821 = vadd.f32 %v1256, %v1820
      %v1822 = vpop.f32.mrf.mxu0
      %1823 = vmatprep.mubr.f32.mxu0 %v789
      %1824 = vmatmul.mubr.f32.gmra.mxu0 %v385
      %v1825 = vpop.f32.mrf.mxu0
      %v1826 = vadd.f32 %v1261, %v1825
      %v1827 = vpop.f32.mrf.mxu0
      %1828 = vmatprep.mubr.f32.mxu0 %v792
      %1829 = vmatmul.mubr.f32.gmra.mxu0 %v389
      %v1830 = vpop.f32.mrf.mxu0
      %v1831 = vadd.f32 %v1266, %v1830
      %v1832 = vpop.f32.mrf.mxu0
      %1833 = vmatprep.mubr.f32.mxu0 %v795
      %1834 = vmatmul.mubr.f32.gmra.mxu0 %v393
      %v1835 = vpop.f32.mrf.mxu0
      %v1836 = vadd.f32 %v1271, %v1835
      %v1837 = vpop.f32.mrf.mxu0
      %1838 = vmatprep.mubr.f32.mxu0 %v798
      %1839 = vmatmul.mubr.f32.gmra.mxu0 %v397
      %v1840 = vpop.f32.mrf.mxu0
      %v1841 = vadd.f32 %v1276, %v1840
      %v1842 = vpop.f32.mrf.mxu0
      %1843 = vmatprep.mubr.f32.mxu0 %v801
      %1844 = vmatmul.mubr.f32.gmra.mxu0 %v401
      %v1845 = vpop.f32.mrf.mxu0
      %v1846 = vadd.f32 %v1281, %v1845
      %v1847 = vpop.f32.mrf.mxu0
      %1848 = vmatprep.mubr.f32.mxu0 %v804
      %1849 = vmatmul.mubr.f32.gmra.mxu0 %v405
      %v1850 = vpop.f32.mrf.mxu0
      %v1851 = vadd.f32 %v1286, %v1850
      %v1852 = vpop.f32.mrf.mxu0
      %1853 = vmatprep.mubr.f32.mxu0 %v807
      %1854 = vmatmul.mubr.f32.gmra.mxu0 %v409
      %v1855 = vpop.f32.mrf.mxu0
      %v1856 = vadd.f32 %v1291, %v1855
      %v1857 = vpop.f32.mrf.mxu0
      %1858 = vmatprep.mubr.f32.mxu0 %v810
      %1859 = vmatmul.mubr.f32.gmra.mxu0 %v413
      %v1860 = vpop.f32.mrf.mxu0
      %v1861 = vadd.f32 %v1296, %v1860
      %v1862 = vpop.f32.mrf.mxu0
      %1863 = vmatprep.mubr.f32.mxu0 %v813
      %1864 = vmatmul.mubr.f32.gmra.mxu0 %v417
      %v1865 = vpop.f32.mrf.mxu0
      %v1866 = vadd.f32 %v1301, %v1865
      %v1867 = vpop.f32.mrf.mxu0
      %1868 = vmatprep.mubr.f32.mxu0 %v816
      %1869 = vmatmul.mubr.f32.gmra.mxu0 %v421
      %v1870 = vpop.f32.mrf.mxu0
      %v1871 = vadd.f32 %v1306, %v1870
      %v1872 = vpop.f32.mrf.mxu0
      %1873 = vmatprep.mubr.f32.mxu0 %v819
      %1874 = vmatmul.mubr.f32.gmra.mxu0 %v425
      %v1875 = vpop.f32.mrf.mxu0
      %v1876 = vadd.f32 %v1311, %v1875
      %v1877 = vpop.f32.mrf.mxu0
      %1878 = vmatprep.mubr.f32.mxu0 %v822
      %1879 = vmatmul.mubr.f32.gmra.mxu0 %v429
      %v1880 = vpop.f32.mrf.mxu0
      %v1881 = vadd.f32 %v1316, %v1880
      %v1882 = vpop.f32.mrf.mxu0
      %1883 = vmatprep.mubr.f32.mxu0 %v825
      %1884 = vmatmul.mubr.f32.gmra.mxu0 %v433
      %v1885 = vpop.f32.mrf.mxu0
      %v1886 = vadd.f32 %v1321, %v1885
      %v1887 = vpop.f32.mrf.mxu0
      %1888 = vmatprep.mubr.f32.mxu0 %v828
      %1889 = vmatmul.mubr.f32.gmra.mxu0 %v437
      %v1890 = vpop.f32.mrf.mxu0
      %v1891 = vadd.f32 %v1326, %v1890
      %v1892 = vpop.f32.mrf.mxu0
      %1893 = vmatprep.mubr.f32.mxu0 %v831
      %1894 = vmatmul.mubr.f32.gmra.mxu0 %v441
      %v1895 = vpop.f32.mrf.mxu0
      %v1896 = vadd.f32 %v1331, %v1895
      %v1897 = vpop.f32.mrf.mxu0
      %1898 = vmatprep.mubr.f32.mxu0 %v834
      %1899 = vmatmul.mubr.f32.gmra.mxu0 %v445
      %v1900 = vpop.f32.mrf.mxu0
      %v1901 = vadd.f32 %v1336, %v1900
      %v1902 = vpop.f32.mrf.mxu0
      %1903 = vmatprep.mubr.f32.mxu0 %v837
      %1904 = vmatmul.mubr.f32.gmra.mxu0 %v449
      %v1905 = vpop.f32.mrf.mxu0
      %v1906 = vadd.f32 %v1341, %v1905
      %v1907 = vpop.f32.mrf.mxu0
      %1908 = vmatprep.mubr.f32.mxu0 %v840
      %1909 = vmatmul.mubr.f32.gmra.mxu0 %v453
      %v1910 = vpop.f32.mrf.mxu0
      %v1911 = vadd.f32 %v1346, %v1910
      %v1912 = vpop.f32.mrf.mxu0
      %1913 = vmatprep.mubr.f32.mxu0 %v843
      %1914 = vmatmul.mubr.f32.gmra.mxu0 %v457
      %v1915 = vpop.f32.mrf.mxu0
      %v1916 = vadd.f32 %v1351, %v1915
      %v1917 = vpop.f32.mrf.mxu0
      %1918 = vmatprep.mubr.f32.mxu0 %v846
      %1919 = vmatmul.mubr.f32.gmra.mxu0 %v461
      %v1920 = vpop.f32.mrf.mxu0
      %v1921 = vadd.f32 %v1356, %v1920
      %v1922 = vpop.f32.mrf.mxu0
      %1923 = vmatprep.mubr.f32.mxu0 %v849
      %1924 = vmatmul.mubr.f32.gmra.mxu0 %v465
      %v1925 = vpop.f32.mrf.mxu0
      %v1926 = vadd.f32 %v1361, %v1925
      %v1927 = vpop.f32.mrf.mxu0
      %1928 = vmatprep.mubr.f32.mxu0 %v852
      %1929 = vmatmul.mubr.f32.gmra.mxu0 %v469
      %v1930 = vpop.f32.mrf.mxu0
      %v1931 = vadd.f32 %v1366, %v1930
      %v1932 = vpop.f32.mrf.mxu0
      %1933 = vmatprep.mubr.f32.mxu0 %v855
      %1934 = vmatmul.mubr.f32.gmra.mxu0 %v473
      %v1935 = vpop.f32.mrf.mxu0
      %v1936 = vadd.f32 %v1371, %v1935
      %v1937 = vpop.f32.mrf.mxu0
      %1938 = vmatprep.mubr.f32.mxu0 %v858
      %1939 = vmatmul.mubr.f32.gmra.mxu0 %v477
      %v1940 = vpop.f32.mrf.mxu0
      %v1941 = vadd.f32 %v1376, %v1940
      %v1942 = vpop.f32.mrf.mxu0
      %1943 = vmatprep.mubr.f32.mxu0 %v861
      %1944 = vmatmul.mubr.f32.gmra.mxu0 %v481
      %v1945 = vpop.f32.mrf.mxu0
      %v1946 = vadd.f32 %v1381, %v1945
      %v1947 = vpop.f32.mrf.mxu0
      %1948 = vmatprep.mubr.f32.mxu0 %v864
      %1949 = vmatmul.mubr.f32.gmra.mxu0 %v485
      %v1950 = vpop.f32.mrf.mxu0
      %v1951 = vadd.f32 %v1386, %v1950
      %v1952 = vpop.f32.mrf.mxu0
      %1953 = vmatprep.mubr.f32.mxu0 %v867
      %1954 = vmatmul.mubr.f32.gmra.mxu0 %v489
      %v1955 = vpop.f32.mrf.mxu0
      %v1956 = vadd.f32 %v1391, %v1955
      %v1957 = vpop.f32.mrf.mxu0
      %1958 = vmatprep.mubr.f32.mxu0 %v870
      %1959 = vmatmul.mubr.f32.gmra.mxu0 %v493
      %v1960 = vpop.f32.mrf.mxu0
      %v1961 = vadd.f32 %v1396, %v1960
      %v1962 = vpop.f32.mrf.mxu0
      %1963 = vmatprep.mubr.f32.mxu0 %v873
      %1964 = vmatmul.mubr.f32.gmra.mxu0 %v497
      %v1965 = vpop.f32.mrf.mxu0
      %v1966 = vadd.f32 %v1401, %v1965
      %v1967 = vpop.f32.mrf.mxu0
      %1968 = vmatprep.mubr.f32.mxu0 %v876
      %1969 = vmatmul.mubr.f32.gmra.mxu0 %v501
      %v1970 = vpop.f32.mrf.mxu0
      %v1971 = vadd.f32 %v1406, %v1970
      %v1972 = vpop.f32.mrf.mxu0
      %1973 = vmatprep.mubr.f32.mxu0 %v879
      %1974 = vmatmul.mubr.f32.gmra.mxu0 %v505
      %v1975 = vpop.f32.mrf.mxu0
      %v1976 = vadd.f32 %v1411, %v1975
      %v1977 = vpop.f32.mrf.mxu0
      %1978 = vmatprep.mubr.f32.mxu0 %v882
      %1979 = vmatmul.mubr.f32.gmra.mxu0 %v509
      %v1980 = vpop.f32.mrf.mxu0
      %v1981 = vadd.f32 %v1416, %v1980
      %v1982 = vpop.f32.mrf.mxu0
      %1983 = vmatprep.mubr.f32.mxu0 %v885
      %1984 = vmatmul.mubr.f32.gmra.mxu0 %v513
      %v1985 = vpop.f32.mrf.mxu0
      %v1986 = vadd.f32 %v1421, %v1985
      %v1987 = vpop.f32.mrf.mxu0
      %1988 = vmatprep.mubr.f32.mxu0 %v888
      %1989 = vmatmul.mubr.f32.gmra.mxu0 %v517
      %v1990 = vpop.f32.mrf.mxu0
      %v1991 = vadd.f32 %v1426, %v1990
      %v1992 = vpop.f32.mrf.mxu0
      %1993 = vmatprep.mubr.f32.mxu0 %v891
      %1994 = vmatmul.mubr.f32.gmra.mxu0 %v521
      %v1995 = vpop.f32.mrf.mxu0
      %v1996 = vadd.f32 %v1431, %v1995
      %v1997 = vpop.f32.mrf.mxu0
      %1998 = vmatprep.mubr.f32.mxu0 %v894
      %1999 = vmatmul.mubr.f32.gmra.mxu0 %v525
      %v2000 = vpop.f32.mrf.mxu0
      %v2001 = vadd.f32 %v1436, %v2000
      %v2002 = vpop.f32.mrf.mxu0
      %2003 = vmatprep.mubr.f32.mxu0 %v897
      %2004 = vmatmul.mubr.f32.gmra.mxu0 %v529
      %v2005 = vpop.f32.mrf.mxu0
      %v2006 = vadd.f32 %v1441, %v2005
      %v2007 = vpop.f32.mrf.mxu0
      %2008 = vmatprep.mubr.f32.mxu0 %v900
      %2009 = vmatmul.mubr.f32.gmra.mxu0 %v533
      %v2010 = vpop.f32.mrf.mxu0
      %v2011 = vadd.f32 %v1446, %v2010
      %v2012 = vpop.f32.mrf.mxu0
      %2013 = vmatprep.mubr.f32.mxu0 %v903
      %2014 = vmatmul.mubr.f32.gmra.mxu0 %v537
      %v2015 = vpop.f32.mrf.mxu0
      %v2016 = vadd.f32 %v1451, %v2015
      %v2017 = vpop.f32.mrf.mxu0
      %2018 = vmatprep.mubr.f32.mxu0 %v906
      %2019 = vmatmul.mubr.f32.gmra.mxu0 %v541
      %v2020 = vpop.f32.mrf.mxu0
      %v2021 = vadd.f32 %v1456, %v2020
      %v2022 = vpop.f32.mrf.mxu0
      %2023 = vmatprep.mubr.f32.mxu0 %v909
      %2024 = vmatmul.mubr.f32.gmra.mxu0 %v545
      %v2025 = vpop.f32.mrf.mxu0
      %v2026 = vadd.f32 %v1461, %v2025
      %v2027 = vpop.f32.mrf.mxu0
      %2028 = vmatprep.mubr.f32.mxu0 %v912
      %2029 = vmatmul.mubr.f32.gmra.mxu0 %v549
      %v2030 = vpop.f32.mrf.mxu0
      %v2031 = vadd.f32 %v1466, %v2030
      %v2032 = vpop.f32.mrf.mxu0
      %2033 = vmatprep.mubr.f32.mxu0 %v915
      %2034 = vmatmul.mubr.f32.gmra.mxu0 %v553
      %v2035 = vpop.f32.mrf.mxu0
      %v2036 = vadd.f32 %v1471, %v2035
      %v2037 = vpop.f32.mrf.mxu0
      %2038 = vmatprep.mubr.f32.mxu0 %v918
      %2039 = vmatmul.mubr.f32.gmra.mxu0 %v557
      %v2040 = vpop.f32.mrf.mxu0
      %v2041 = vadd.f32 %v1476, %v2040
      %v2042 = vpop.f32.mrf.mxu0
      %2043 = vmatprep.mubr.f32.mxu0 %v921
      %2044 = vmatmul.mubr.f32.gmra.mxu0 %v561
      %v2045 = vpop.f32.mrf.mxu0
      %v2046 = vadd.f32 %v1481, %v2045
      %v2047 = vpop.f32.mrf.mxu0
      %2048 = vmatprep.mubr.f32.mxu0 %v924
      %2049 = vmatmul.mubr.f32.gmra.mxu0 %v565
      %v2050 = vpop.f32.mrf.mxu0
      %v2051 = vadd.f32 %v1486, %v2050
      %v2052 = vpop.f32.mrf.mxu0
      %2053 = vmatprep.mubr.f32.mxu0 %v927
      %2054 = vmatmul.mubr.f32.gmra.mxu0 %v569
      %v2055 = vpop.f32.mrf.mxu0
      %v2056 = vadd.f32 %v1491, %v2055
      %v2057 = vpop.f32.mrf.mxu0
      %2058 = vdwg.mxu0
      %v2059 = vmax.f32 %v1561, 0.0
      %v2060 = vmax.f32 %v1566, 0.0
      %v2061 = vmax.f32 %v1571, 0.0
      %v2062 = vmax.f32 %v1576, 0.0
      %v2063 = vmax.f32 %v1581, 0.0
      %v2064 = vmax.f32 %v1586, 0.0
      %v2065 = vmax.f32 %v1591, 0.0
      %v2066 = vmax.f32 %v1596, 0.0
      %v2067 = vmax.f32 %v1601, 0.0
      %v2068 = vmax.f32 %v1606, 0.0
      %v2069 = vmax.f32 %v1611, 0.0
      %v2070 = vmax.f32 %v1616, 0.0
      %v2071 = vmax.f32 %v1621, 0.0
      %v2072 = vmax.f32 %v1626, 0.0
      %v2073 = vmax.f32 %v1631, 0.0
      %v2074 = vmax.f32 %v1636, 0.0
      %v2075 = vmax.f32 %v1641, 0.0
      %v2076 = vmax.f32 %v1646, 0.0
      %v2077 = vmax.f32 %v1651, 0.0
      %v2078 = vmax.f32 %v1656, 0.0
      %v2079 = vmax.f32 %v1661, 0.0
      %v2080 = vmax.f32 %v1666, 0.0
      %v2081 = vmax.f32 %v1671, 0.0
      %v2082 = vmax.f32 %v1676, 0.0
      %v2083 = vmax.f32 %v1681, 0.0
      %v2084 = vmax.f32 %v1686, 0.0
      %v2085 = vmax.f32 %v1691, 0.0
      %v2086 = vmax.f32 %v1696, 0.0
      %v2087 = vmax.f32 %v1701, 0.0
      %v2088 = vmax.f32 %v1706, 0.0
      %v2089 = vmax.f32 %v1711, 0.0
      %v2090 = vmax.f32 %v1716, 0.0
      %v2091 = vmax.f32 %v1721, 0.0
      %v2092 = vmax.f32 %v1726, 0.0
      %v2093 = vmax.f32 %v1731, 0.0
      %v2094 = vmax.f32 %v1736, 0.0
      %v2095 = vmax.f32 %v1741, 0.0
      %v2096 = vmax.f32 %v1746, 0.0
      %v2097 = vmax.f32 %v1751, 0.0
      %v2098 = vmax.f32 %v1756, 0.0
      %v2099 = vmax.f32 %v1761, 0.0
      %v2100 = vmax.f32 %v1766, 0.0
      %v2101 = vmax.f32 %v1771, 0.0
      %v2102 = vmax.f32 %v1776, 0.0
      %v2103 = vmax.f32 %v1781, 0.0
      %v2104 = vmax.f32 %v1786, 0.0
      %v2105 = vmax.f32 %v1791, 0.0
      %v2106 = vmax.f32 %v1796, 0.0
      %v2107 = vmax.f32 %v1801, 0.0
      %v2108 = vmax.f32 %v1806, 0.0
      %v2109 = vmax.f32 %v1811, 0.0
      %v2110 = vmax.f32 %v1816, 0.0
      %v2111 = vmax.f32 %v1821, 0.0
      %v2112 = vmax.f32 %v1826, 0.0
      %v2113 = vmax.f32 %v1831, 0.0
      %v2114 = vmax.f32 %v1836, 0.0
      %v2115 = vmax.f32 %v1841, 0.0
      %v2116 = vmax.f32 %v1846, 0.0
      %v2117 = vmax.f32 %v1851, 0.0
      %v2118 = vmax.f32 %v1856, 0.0
      %v2119 = vmax.f32 %v1861, 0.0
      %v2120 = vmax.f32 %v1866, 0.0
      %v2121 = vmax.f32 %v1871, 0.0
      %v2122 = vmax.f32 %v1876, 0.0
      %v2123 = vmax.f32 %v1881, 0.0
      %v2124 = vmax.f32 %v1886, 0.0
      %v2125 = vmax.f32 %v1891, 0.0
      %v2126 = vmax.f32 %v1896, 0.0
      %v2127 = vmax.f32 %v1901, 0.0
      %v2128 = vmax.f32 %v1906, 0.0
      %v2129 = vmax.f32 %v1911, 0.0
      %v2130 = vmax.f32 %v1916, 0.0
      %v2131 = vmax.f32 %v1921, 0.0
      %v2132 = vmax.f32 %v1926, 0.0
      %v2133 = vmax.f32 %v1931, 0.0
      %v2134 = vmax.f32 %v1936, 0.0
      %v2135 = vmax.f32 %v1941, 0.0
      %v2136 = vmax.f32 %v1946, 0.0
      %v2137 = vmax.f32 %v1951, 0.0
      %v2138 = vmax.f32 %v1956, 0.0
      %v2139 = vmax.f32 %v1961, 0.0
      %v2140 = vmax.f32 %v1966, 0.0
      %v2141 = vmax.f32 %v1971, 0.0
      %v2142 = vmax.f32 %v1976, 0.0
      %v2143 = vmax.f32 %v1981, 0.0
      %v2144 = vmax.f32 %v1986, 0.0
      %v2145 = vmax.f32 %v1991, 0.0
      %v2146 = vmax.f32 %v1996, 0.0
      %v2147 = vmax.f32 %v2001, 0.0
      %v2148 = vmax.f32 %v2006, 0.0
      %v2149 = vmax.f32 %v2011, 0.0
      %v2150 = vmax.f32 %v2016, 0.0
      %v2151 = vmax.f32 %v2021, 0.0
      %v2152 = vmax.f32 %v2026, 0.0
      %v2153 = vmax.f32 %v2031, 0.0
      %v2154 = vmax.f32 %v2036, 0.0
      %v2155 = vmax.f32 %v2041, 0.0
      %v2156 = vmax.f32 %v2046, 0.0
      %v2157 = vmax.f32 %v2051, 0.0
      %v2158 = vmax.f32 %v2056, 0.0
      %v2159 = vmax.f32 %v2059, %v2084
      %v2160 = vmax.f32 %v2060, %v2085
      %v2161 = vmax.f32 %v2061, %v2086
      %v2162 = vmax.f32 %v2062, %v2087
      %v2163 = vmax.f32 %v2063, %v2088
      %v2164 = vmax.f32 %v2064, %v2089
      %v2165 = vmax.f32 %v2065, %v2090
      %v2166 = vmax.f32 %v2066, %v2091
      %v2167 = vmax.f32 %v2067, %v2092
      %v2168 = vmax.f32 %v2068, %v2093
      %v2169 = vmax.f32 %v2069, %v2094
      %v2170 = vmax.f32 %v2070, %v2095
      %v2171 = vmax.f32 %v2071, %v2096
      %v2172 = vmax.f32 %v2072, %v2097
      %v2173 = vmax.f32 %v2073, %v2098
      %v2174 = vmax.f32 %v2074, %v2099
      %v2175 = vmax.f32 %v2075, %v2100
      %v2176 = vmax.f32 %v2076, %v2101
      %v2177 = vmax.f32 %v2077, %v2102
      %v2178 = vmax.f32 %v2078, %v2103
      %v2179 = vmax.f32 %v2079, %v2104
      %v2180 = vmax.f32 %v2080, %v2105
      %v2181 = vmax.f32 %v2081, %v2106
      %v2182 = vmax.f32 %v2082, %v2107
      %v2183 = vmax.f32 %v2083, %v2108
      %v2184 = vmax.f32 %v2109, %v2134
      %v2185 = vmax.f32 %v2110, %v2135
      %v2186 = vmax.f32 %v2111, %v2136
      %v2187 = vmax.f32 %v2112, %v2137
      %v2188 = vmax.f32 %v2113, %v2138
      %v2189 = vmax.f32 %v2114, %v2139
      %v2190 = vmax.f32 %v2115, %v2140
      %v2191 = vmax.f32 %v2116, %v2141
      %v2192 = vmax.f32 %v2117, %v2142
      %v2193 = vmax.f32 %v2118, %v2143
      %v2194 = vmax.f32 %v2119, %v2144
      %v2195 = vmax.f32 %v2120, %v2145
      %v2196 = vmax.f32 %v2121, %v2146
      %v2197 = vmax.f32 %v2122, %v2147
      %v2198 = vmax.f32 %v2123, %v2148
      %v2199 = vmax.f32 %v2124, %v2149
      %v2200 = vmax.f32 %v2125, %v2150
      %v2201 = vmax.f32 %v2126, %v2151
      %v2202 = vmax.f32 %v2127, %v2152
      %v2203 = vmax.f32 %v2128, %v2153
      %v2204 = vmax.f32 %v2129, %v2154
      %v2205 = vmax.f32 %v2130, %v2155
      %v2206 = vmax.f32 %v2131, %v2156
      %v2207 = vmax.f32 %v2132, %v2157
      %v2208 = vmax.f32 %v2133, %v2158
      %v2209 = vmax.f32 %v2159, %v2184
      %v2210 = vmax.f32 %v2160, %v2185
      %v2211 = vmax.f32 %v2161, %v2186
      %v2212 = vmax.f32 %v2162, %v2187
      %v2213 = vmax.f32 %v2163, %v2188
      %v2214 = vmax.f32 %v2164, %v2189
      %v2215 = vmax.f32 %v2165, %v2190
      %v2216 = vmax.f32 %v2166, %v2191
      %v2217 = vmax.f32 %v2167, %v2192
      %v2218 = vmax.f32 %v2168, %v2193
      %v2219 = vmax.f32 %v2169, %v2194
      %v2220 = vmax.f32 %v2170, %v2195
      %v2221 = vmax.f32 %v2171, %v2196
      %v2222 = vmax.f32 %v2172, %v2197
      %v2223 = vmax.f32 %v2173, %v2198
      %v2224 = vmax.f32 %v2174, %v2199
      %v2225 = vmax.f32 %v2175, %v2200
      %v2226 = vmax.f32 %v2176, %v2201
      %v2227 = vmax.f32 %v2177, %v2202
      %v2228 = vmax.f32 %v2178, %v2203
      %v2229 = vmax.f32 %v2179, %v2204
      %v2230 = vmax.f32 %v2180, %v2205
      %v2231 = vmax.f32 %v2181, %v2206
      %v2232 = vmax.f32 %v2182, %v2207
      %v2233 = vmax.f32 %v2183, %v2208
      %vm2234 = vcmask 261120
      %2235 = vst.msk [vmem:[%s170] sm:$0xff] %vm2234, %v2209
      %2236 = vst.msk [vmem:[%s170 + $0x8] sm:$0xff] %vm2234, %v2210
      %2237 = vst.msk [vmem:[%s170 + $0x10] sm:$0xff] %vm2234, %v2211
      %2238 = vst.msk [vmem:[%s170 + $0x18] sm:$0xff] %vm2234, %v2212
      %2239 = vst.msk [vmem:[%s170 + $0x20] sm:$0xff] %vm2234, %v2213
      %2240 = vst.msk [vmem:[%s170 + $0x28] sm:$0xff] %vm2234, %v2214
      %2241 = vst.msk [vmem:[%s170 + $0x30] sm:$0xff] %vm2234, %v2215
      %2242 = vst.msk [vmem:[%s170 + $0x38] sm:$0xff] %vm2234, %v2216
      %2243 = vst.msk [vmem:[%s170 + $0x40] sm:$0xff] %vm2234, %v2217
      %2244 = vst.msk [vmem:[%s170 + $0x48] sm:$0xff] %vm2234, %v2218
      %2245 = vst.msk [vmem:[%s170 + $0x50] sm:$0xff] %vm2234, %v2219
      %2246 = vst.msk [vmem:[%s170 + $0x58] sm:$0xff] %vm2234, %v2220
      %2247 = vst.msk [vmem:[%s170 + $0x60] sm:$0xff] %vm2234, %v2221
      %2248 = vst.msk [vmem:[%s170 + $0x68] sm:$0xff] %vm2234, %v2222
      %2249 = vst.msk [vmem:[%s170 + $0x70] sm:$0xff] %vm2234, %v2223
      %2250 = vst.msk [vmem:[%s170 + $0x78] sm:$0xff] %vm2234, %v2224
      %2251 = vst.msk [vmem:[%s170 + $0x80] sm:$0xff] %vm2234, %v2225
      %2252 = vst.msk [vmem:[%s170 + $0x88] sm:$0xff] %vm2234, %v2226
      %2253 = vst.msk [vmem:[%s170 + $0x90] sm:$0xff] %vm2234, %v2227
      %2254 = vst.msk [vmem:[%s170 + $0x98] sm:$0xff] %vm2234, %v2228
      %2255 = vst.msk [vmem:[%s170 + $0xa0] sm:$0xff] %vm2234, %v2229
      %2256 = vst.msk [vmem:[%s170 + $0xa8] sm:$0xff] %vm2234, %v2230
      %2257 = vst.msk [vmem:[%s170 + $0xb0] sm:$0xff] %vm2234, %v2231
      %2258 = vst.msk [vmem:[%s170 + $0xb8] sm:$0xff] %vm2234, %v2232
      %2259 = vst.msk [vmem:[%s170 + $0xc0] sm:$0xff] %vm2234, %v2233
      %p2260 = scmp.lt.s32.totalorder %s14, 1
      %s2261 = scalar_select %p2260, %s14, 1
      %s2262 = smul.addr %s2261, 25
      %s2263 = smul.addr %s2262, 8
      %s2264 = scalar_lea.vmem %s3, %s2263
      // Predicated region
      $region33: #{cnn_forward.5} parent=31 // pred_check
        %p2265 = pneg %p100
      $region34: #{cnn_forward.5} parent=31 // pred_check_branch
        %2267 = sbr.rel (%p2265) target = $region36
      $region35: #{cnn_forward.5} parent=31 // pred_region
        _
      $region36: #{cnn_forward.5} parent=31 // pred_fallthru
        _
    $region32: #{cnn_forward.5} parent=5 // pred_fallthru
      _
    %p2268 = scmp.le.s32.totalorder 2, %s9
    // Predicated region
    $region37: #{cnn_forward.5} parent=5 // pred_check
      %p2269 = pneg %p2268
    $region38: #{cnn_forward.5} parent=5 // pred_check_branch
      %2271 = sbr.rel (%p2269) target = $region40
    $region39: #{cnn_forward.5} parent=5 // pred_region
      %s2272 = ssub.s32 %s9, 2
      // Predicated region
      $region41: #{cnn_forward.5} parent=39 // pred_check
        %p2273 = pneg %p106
      $region42: #{cnn_forward.5} parent=39 // pred_check_branch
        %2275 = sbr.rel (%p2273) target = $region44
      $region43: #{cnn_forward.5} parent=39 // pred_region
        %p2276 = scmp.lt.s32.totalorder %s15, 1
        %s2277 = scalar_select %p2276, %s15, 1
        %s2278 = smul.addr %s2277, 25
        %s2279 = smul.addr %s2278, 8
        %s2280 = scalar_lea.vmem %s3, %s2279
      $region44: #{cnn_forward.5} parent=39 // pred_fallthru
        _
    $region40: #{cnn_forward.5} parent=5 // pred_fallthru
      _
  $region6: #{cnn_forward.5} parent=0 // loop_footer
    %s13 = sadd.s32 1, %s9
  $region7: #{cnn_forward.5} parent=0 // loop_footer_branch
    %8 = sbr.rel target = $region3
  $region8: #{cnn_forward.5} parent=0 // loop_exit
    _

// kernel: cnn_forward.6
$region0: #{cnn_forward.6}
  #allocation0 [shape = 'u32[]', space=smem, size = 0x4, offset = 0x4, fixed_abs, tag = 'smem constant byte address 0x4 - core index']
  #allocation1 [shape = 'u32[144,128]{1,0:T(1,128)}', space=vmem, size = 0x12000, scoped, tag = 'internal scratch']
  %s0 = inlined_call_operand.vmem [shape: f32[2,224,800], index: 0, kind: input, shape index: {}]
  %s1 = inlined_call_operand.vmem [shape: f32[800,32], index: 1, kind: input, shape index: {}]
  %s2 = inlined_call_operand.vmem [shape: f32[1,32], index: 2, kind: input, shape index: {}]
  %s3 = inlined_call_operand.vmem [shape: f32[2,56,32], index: 3, kind: output, shape index: {}]
  %s4 = sld [smem:[#allocation0]]
  $region45: #{cnn_forward.6} parent=0
    _
  %s6 = ssub.s32 1, %s4
  %s7 = scalar_select 0, %s6, %s4
  loop: start=0, step=1, limit=4
  $region2: #{cnn_forward.6} parent=0 // loop_pre_header
    _
  $region3: #{cnn_forward.6} parent=0 // loop_header
    %s9 = sphi 0, %s13
    %p10 = scmp.ge.s32.totalorder %s9, 4
    %s19 = sphi 0, %s21
    %s22 = sphi 0, %s19
    %s23 = sphi 0, %s22
    %s39 = sphi 0, %s23
    %s43 = sphi 0, %s43
    %s45 = sphi 0, %s43
    %s46 = sphi 0, %s45
    %s60 = sphi 0, %s46
    %s64 = sphi 0, %s64
    %s66 = sphi 0, %s64
    %s67 = sphi 0, %s66
    %s81 = sphi 0, %s67
    %s87 = sphi 0, %s89
    %s90 = sphi 0, %s87
    %s91 = sphi 0, %s90
    %s107 = sphi 0, %s91
  $region4: #{cnn_forward.6} parent=0 // loop_header_branch
    %12 = sbr.rel (%p10) target = $region8
  $region5: #{cnn_forward.6} parent=0 // loop_body
    %s14 = ssub.s32 %s9, 1
    %s15 = ssub.s32 %s9, 2
    %s16 = sadd.s32 %s9, 1
    %s17 = ssub.s32 %s9, %s16
    %p18 = scmp.eq.s32.totalorder %s17, 0
    %s20 = sadd.s32 %s19, 1
    %s21 = scalar_select %p18, %s19, %s20
    %p24 = pneg %p18
    %p25 = scmp.eq.s32.totalorder %s9, 1
    %p26 = por %p24, %p25
    %p27 = scmp.ne.s32.totalorder %s19, %s22
    %p28 = scmp.eq.s32.totalorder %s9, 0
    %p29 = por %p27, %p28
    %p30 = scmp.ne.s32.totalorder %s19, %s22
    %p31 = scmp.eq.s32.totalorder %s14, 1
    %p32 = por %p30, %p31
    %p33 = scmp.ne.s32.totalorder %s22, %s23
    %p34 = scmp.eq.s32.totalorder %s14, 0
    %p35 = por %p33, %p34
    %p36 = scmp.ne.s32.totalorder %s22, %s23
    %p37 = scmp.eq.s32.totalorder %s15, 1
    %p38 = por %p36, %p37
    %p40 = scmp.ne.s32.totalorder %s23, %s39
    %p41 = scmp.eq.s32.totalorder %s15, 0
    %p42 = por %p40, %p41
    %s44 = sadd.s32 %s43, 1
    %p47 = scmp.eq.s32.totalorder %s9, 1
    %p48 = scmp.ne.s32.totalorder %s43, %s45
    %p49 = scmp.eq.s32.totalorder %s9, 0
    %p50 = por %p48, %p49
    %p51 = scmp.ne.s32.totalorder %s43, %s45
    %p52 = scmp.eq.s32.totalorder %s14, 1
    %p53 = por %p51, %p52
    %p54 = scmp.ne.s32.totalorder %s45, %s46
    %p55 = scmp.eq.s32.totalorder %s14, 0
    %p56 = por %p54, %p55
    %p57 = scmp.ne.s32.totalorder %s45, %s46
    %p58 = scmp.eq.s32.totalorder %s15, 1
    %p59 = por %p57, %p58
    %p61 = scmp.ne.s32.totalorder %s46, %s60
    %p62 = scmp.eq.s32.totalorder %s15, 0
    %p63 = por %p61, %p62
    %s65 = sadd.s32 %s64, 1
    %p68 = scmp.eq.s32.totalorder %s9, 1
    %p69 = scmp.ne.s32.totalorder %s64, %s66
    %p70 = scmp.eq.s32.totalorder %s9, 0
    %p71 = por %p69, %p70
    %p72 = scmp.ne.s32.totalorder %s64, %s66
    %p73 = scmp.eq.s32.totalorder %s14, 1
    %p74 = por %p72, %p73
    %p75 = scmp.ne.s32.totalorder %s66, %s67
    %p76 = scmp.eq.s32.totalorder %s14, 0
    %p77 = por %p75, %p76
    %p78 = scmp.ne.s32.totalorder %s66, %s67
    %p79 = scmp.eq.s32.totalorder %s15, 1
    %p80 = por %p78, %p79
    %p82 = scmp.ne.s32.totalorder %s67, %s81
    %p83 = scmp.eq.s32.totalorder %s15, 0
    %p84 = por %p82, %p83
    %s85 = ssub.s32 %s9, %s16
    %p86 = scmp.eq.s32.totalorder %s85, 0
    %s88 = sadd.s32 %s87, 1
    %s89 = scalar_select %p86, %s87, %s88
    %p92 = pneg %p86
    %p93 = scmp.eq.s32.totalorder %s9, 1
    %p94 = por %p92, %p93
    %p95 = scmp.ne.s32.totalorder %s87, %s90
    %p96 = scmp.eq.s32.totalorder %s9, 0
    %p97 = por %p95, %p96
    %p98 = scmp.ne.s32.totalorder %s87, %s90
    %p99 = scmp.eq.s32.totalorder %s14, 1
    %p100 = por %p98, %p99
    %p101 = scmp.ne.s32.totalorder %s90, %s91
    %p102 = scmp.eq.s32.totalorder %s14, 0
    %p103 = por %p101, %p102
    %p104 = scmp.ne.s32.totalorder %s90, %s91
    %p105 = scmp.eq.s32.totalorder %s15, 1
    %p106 = por %p104, %p105
    %p108 = scmp.ne.s32.totalorder %s91, %s107
    %p109 = scmp.eq.s32.totalorder %s15, 0
    %p110 = por %p108, %p109
    %p111 = scmp.le.s32.totalorder 1, %s9
    %p112 = scmp.lt.s32.totalorder %s9, 3
    %p113 = pnand %p111, %p112
    %p114 = pneg %p113
    // Predicated region
    $region9: #{cnn_forward.6} parent=5 // pred_check
      _
    $region10: #{cnn_forward.6} parent=5 // pred_check_branch
      %116 = sbr.rel (%p113) target = $region12
    $region11: #{cnn_forward.6} parent=5 // pred_region
      %s117 = ssub.s32 %s9, 1
      // Predicated region
      $region13: #{cnn_forward.6} parent=11 // pred_check
        %p118 = pneg %p56
      $region14: #{cnn_forward.6} parent=11 // pred_check_branch
        %120 = sbr.rel (%p118) target = $region16
      $region15: #{cnn_forward.6} parent=11 // pred_region
        _
      $region16: #{cnn_forward.6} parent=11 // pred_fallthru
        _
      // Predicated region
      $region17: #{cnn_forward.6} parent=11 // pred_check
        %p121 = pneg %p77
      $region18: #{cnn_forward.6} parent=11 // pred_check_branch
        %123 = sbr.rel (%p121) target = $region20
      $region19: #{cnn_forward.6} parent=11 // pred_region
        _
      $region20: #{cnn_forward.6} parent=11 // pred_fallthru
        _
    $region12: #{cnn_forward.6} parent=5 // pred_fallthru
      _
    %p124 = scmp.lt.s32.totalorder %s9, 2
    // Predicated region
    $region21: #{cnn_forward.6} parent=5 // pred_check
      %p125 = pneg %p124
    $region22: #{cnn_forward.6} parent=5 // pred_check_branch
      %127 = sbr.rel (%p125) target = $region24
    $region23: #{cnn_forward.6} parent=5 // pred_region
      // Predicated region
      $region25: #{cnn_forward.6} parent=23 // pred_check
        %p128 = pneg %p29
      $region26: #{cnn_forward.6} parent=23 // pred_check_branch
        %130 = sbr.rel (%p128) target = $region28
      $region27: #{cnn_forward.6} parent=23 // pred_region
        %p131 = scmp.lt.s32.totalorder %s9, 1
        %s132 = scalar_select %p131, %s9, 1
        %s133 = smul.addr %s132, 196
        %s134 = smul.addr %s133, 8
        %s135 = scalar_lea.vmem %s0, %s134
      $region28: #{cnn_forward.6} parent=23 // pred_fallthru
        _
    $region24: #{cnn_forward.6} parent=5 // pred_fallthru
      _
    %p136 = scmp.le.s32.totalorder 1, %s9
    %p137 = scmp.lt.s32.totalorder %s9, 3
    %p138 = pnand %p136, %p137
    %p139 = pneg %p138
    // Predicated region
    $region29: #{cnn_forward.6} parent=5 // pred_check
      _
    $region30: #{cnn_forward.6} parent=5 // pred_check_branch
      %141 = sbr.rel (%p138) target = $region32
    $region31: #{cnn_forward.6} parent=5 // pred_region
      %s142 = ssub.s32 %s9, 1
      %p143 = scmp.lt.s32.totalorder %s14, 1
      %s144 = scalar_select %p143, %s14, 1
      %s145 = smul.addr %s144, 196
      %s146 = smul.addr %s145, 8
      %s147 = scalar_lea.vmem %s0, %s146
      %p148 = pneg %p35
      %p149 = pneg %p32
      %p150 = pneg %p56
      %p151 = pneg %p53
      %p152 = pneg %p77
      %p153 = pneg %p74
      %p154 = pneg %p103
      %p155 = pneg %p100
      %p156 = scmp.lt.s32.totalorder %s14, 1
      %s157 = scalar_select %p156, %s14, 1
      %s158 = smul.addr %s157, 7
      %s159 = smul.addr %s158, 8
      %s160 = scalar_lea.vmem %s3, %s159
      %p161 = scmp.lt.s32.totalorder %s14, 1
      %s162 = scalar_select %p161, %s14, 1
      %s163 = smul.addr %s162, 196
      %s164 = smul.addr %s163, 8
      %s165 = scalar_lea.vmem %s0, %s164
      %p166 = scmp.lt.s32.totalorder %s14, 1
      %s167 = scalar_select %p166, %s14, 1
      %s168 = smul.addr %s167, 7
      %s169 = smul.addr %s168, 8
      %s170 = scalar_lea.vmem %s3, %s169
      %v171 = vld [vmem:[%s165] sm:$0xff]
      %v172 = vld [vmem:[%s165 + $0x8] sm:$0xff]
      %v173 = vld [vmem:[%s165 + $0x10] sm:$0xff]
      %v174 = vld [vmem:[%s165 + $0x18] sm:$0xff]
      %v175 = vld [vmem:[%s165 + $0x20] sm:$0xff]
      %v176 = vld [vmem:[%s165 + $0x28] sm:$0xff]
      %v177 = vld [vmem:[%s165 + $0x30] sm:$0xff]
      %v178 = vld [vmem:[%s165 + $0x38] sm:$0xff]
      %v179 = vld [vmem:[%s165 + $0x40] sm:$0xff]
      %v180 = vld [vmem:[%s165 + $0x48] sm:$0xff]
      %v181 = vld [vmem:[%s165 + $0x50] sm:$0xff]
      %v182 = vld [vmem:[%s165 + $0x58] sm:$0xff]
      %v183 = vld [vmem:[%s165 + $0x60] sm:$0xff]
      %v184 = vld [vmem:[%s165 + $0x68] sm:$0xff]
      %v185 = vld [vmem:[%s165 + $0x70] sm:$0xff]
      %v186 = vld [vmem:[%s165 + $0x78] sm:$0xff]
      %v187 = vld [vmem:[%s165 + $0x80] sm:$0xff]
      %v188 = vld [vmem:[%s165 + $0x88] sm:$0xff]
      %v189 = vld [vmem:[%s165 + $0x90] sm:$0xff]
      %v190 = vld [vmem:[%s165 + $0x98] sm:$0xff]
      %v191 = vld [vmem:[%s165 + $0xa0] sm:$0xff]
      %v192 = vld [vmem:[%s165 + $0xa8] sm:$0xff]
      %v193 = vld [vmem:[%s165 + $0xb0] sm:$0xff]
      %v194 = vld [vmem:[%s165 + $0xb8] sm:$0xff]
      %v195 = vld [vmem:[%s165 + $0xc0] sm:$0xff]
      %v196 = vld [vmem:[%s165 + $0xc8] sm:$0xff]
      %v197 = vld [vmem:[%s165 + $0xd0] sm:$0xff]
      %v198 = vld [vmem:[%s165 + $0xd8] sm:$0xff]
      %v199 = vld [vmem:[%s165 + $0xe0] sm:$0xff]
      %v200 = vld [vmem:[%s165 + $0xe8] sm:$0xff]
      %v201 = vld [vmem:[%s165 + $0xf0] sm:$0xff]
      %v202 = vld [vmem:[%s165 + $0xf8] sm:$0xff]
      %v203 = vld [vmem:[%s165 + $0x100] sm:$0xff]
      %v204 = vld [vmem:[%s165 + $0x108] sm:$0xff]
      %v205 = vld [vmem:[%s165 + $0x110] sm:$0xff]
      %v206 = vld [vmem:[%s165 + $0x118] sm:$0xff]
      %v207 = vld [vmem:[%s165 + $0x120] sm:$0xff]
      %v208 = vld [vmem:[%s165 + $0x128] sm:$0xff]
      %v209 = vld [vmem:[%s165 + $0x130] sm:$0xff]
      %v210 = vld [vmem:[%s165 + $0x138] sm:$0xff]
      %v211 = vld [vmem:[%s165 + $0x140] sm:$0xff]
      %v212 = vld [vmem:[%s165 + $0x148] sm:$0xff]
      %v213 = vld [vmem:[%s165 + $0x150] sm:$0xff]
      %v214 = vld [vmem:[%s165 + $0x158] sm:$0xff]
      %v215 = vld [vmem:[%s165 + $0x160] sm:$0xff]
      %v216 = vld [vmem:[%s165 + $0x168] sm:$0xff]
      %v217 = vld [vmem:[%s165 + $0x170] sm:$0xff]
      %v218 = vld [vmem:[%s165 + $0x178] sm:$0xff]
      %v219 = vld [vmem:[%s165 + $0x180] sm:$0xff]
      %v220 = vld [vmem:[%s165 + $0x188] sm:$0xff]
      %v221 = vld [vmem:[%s165 + $0x190] sm:$0xff]
      %v222 = vld [vmem:[%s165 + $0x198] sm:$0xff]
      %v223 = vld [vmem:[%s165 + $0x1a0] sm:$0xff]
      %v224 = vld [vmem:[%s165 + $0x1a8] sm:$0xff]
      %v225 = vld [vmem:[%s165 + $0x1b0] sm:$0xff]
      %v226 = vld [vmem:[%s165 + $0x1b8] sm:$0xff]
      %v227 = vld [vmem:[%s165 + $0x1c0] sm:$0xff]
      %v228 = vld [vmem:[%s165 + $0x1c8] sm:$0xff]
      %v229 = vld [vmem:[%s165 + $0x1d0] sm:$0xff]
      %v230 = vld [vmem:[%s165 + $0x1d8] sm:$0xff]
      %v231 = vld [vmem:[%s165 + $0x1e0] sm:$0xff]
      %v232 = vld [vmem:[%s165 + $0x1e8] sm:$0xff]
      %v233 = vld [vmem:[%s165 + $0x1f0] sm:$0xff]
      %v234 = vld [vmem:[%s165 + $0x1f8] sm:$0xff]
      %v235 = vld [vmem:[%s165 + $0x200] sm:$0xff]
      %v236 = vld [vmem:[%s165 + $0x208] sm:$0xff]
      %v237 = vld [vmem:[%s165 + $0x210] sm:$0xff]
      %v238 = vld [vmem:[%s165 + $0x218] sm:$0xff]
      %v239 = vld [vmem:[%s165 + $0x220] sm:$0xff]
      %v240 = vld [vmem:[%s165 + $0x228] sm:$0xff]
      %v241 = vld [vmem:[%s165 + $0x230] sm:$0xff]
      %v242 = vld [vmem:[%s165 + $0x238] sm:$0xff]
      %v243 = vld [vmem:[%s165 + $0x240] sm:$0xff]
      %v244 = vld [vmem:[%s165 + $0x248] sm:$0xff]
      %v245 = vld [vmem:[%s165 + $0x250] sm:$0xff]
      %v246 = vld [vmem:[%s165 + $0x258] sm:$0xff]
      %v247 = vld [vmem:[%s165 + $0x260] sm:$0xff]
      %v248 = vld [vmem:[%s165 + $0x268] sm:$0xff]
      %v249 = vld [vmem:[%s165 + $0x270] sm:$0xff]
      %v250 = vld [vmem:[%s165 + $0x278] sm:$0xff]
      %v251 = vld [vmem:[%s165 + $0x280] sm:$0xff]
      %v252 = vld [vmem:[%s165 + $0x288] sm:$0xff]
      %v253 = vld [vmem:[%s165 + $0x290] sm:$0xff]
      %v254 = vld [vmem:[%s165 + $0x298] sm:$0xff]
      %v255 = vld [vmem:[%s165 + $0x2a0] sm:$0xff]
      %v256 = vld [vmem:[%s165 + $0x2a8] sm:$0xff]
      %v257 = vld [vmem:[%s165 + $0x2b0] sm:$0xff]
      %v258 = vld [vmem:[%s165 + $0x2b8] sm:$0xff]
      %v259 = vld [vmem:[%s165 + $0x2c0] sm:$0xff]
      %v260 = vld [vmem:[%s165 + $0x2c8] sm:$0xff]
      %v261 = vld [vmem:[%s165 + $0x2d0] sm:$0xff]
      %v262 = vld [vmem:[%s165 + $0x2d8] sm:$0xff]
      %v263 = vld [vmem:[%s165 + $0x2e0] sm:$0xff]
      %v264 = vld [vmem:[%s165 + $0x2e8] sm:$0xff]
      %v265 = vld [vmem:[%s165 + $0x2f0] sm:$0xff]
      %v266 = vld [vmem:[%s165 + $0x2f8] sm:$0xff]
      %v267 = vld [vmem:[%s165 + $0x300] sm:$0xff]
      %v268 = vld [vmem:[%s165 + $0x308] sm:$0xff]
      %v269 = vld [vmem:[%s165 + $0x310] sm:$0xff]
      %v270 = vld [vmem:[%s165 + $0x318] sm:$0xff]
      %v271 = vld [vmem:[%s165 + $0x320] sm:$0xff]
      %v272 = vld [vmem:[%s165 + $0x328] sm:$0xff]
      %v273 = vld [vmem:[%s165 + $0x330] sm:$0xff]
      %v274 = vld [vmem:[%s165 + $0x338] sm:$0xff]
      %v275 = vld [vmem:[%s165 + $0x340] sm:$0xff]
      %v276 = vld [vmem:[%s165 + $0x348] sm:$0xff]
      %v277 = vld [vmem:[%s165 + $0x350] sm:$0xff]
      %v278 = vld [vmem:[%s165 + $0x358] sm:$0xff]
      %v279 = vld [vmem:[%s165 + $0x360] sm:$0xff]
      %v280 = vld [vmem:[%s165 + $0x368] sm:$0xff]
      %v281 = vld [vmem:[%s165 + $0x370] sm:$0xff]
      %v282 = vld [vmem:[%s165 + $0x378] sm:$0xff]
      %v283 = vld [vmem:[%s165 + $0x380] sm:$0xff]
      %v284 = vld [vmem:[%s165 + $0x388] sm:$0xff]
      %v285 = vld [vmem:[%s165 + $0x390] sm:$0xff]
      %v286 = vld [vmem:[%s165 + $0x398] sm:$0xff]
      %v287 = vld [vmem:[%s165 + $0x3a0] sm:$0xff]
      %v288 = vld [vmem:[%s165 + $0x3a8] sm:$0xff]
      %v289 = vld [vmem:[%s165 + $0x3b0] sm:$0xff]
      %v290 = vld [vmem:[%s165 + $0x3b8] sm:$0xff]
      %v291 = vld [vmem:[%s165 + $0x3c0] sm:$0xff]
      %v292 = vld [vmem:[%s165 + $0x3c8] sm:$0xff]
      %v293 = vld [vmem:[%s165 + $0x3d0] sm:$0xff]
      %v294 = vld [vmem:[%s165 + $0x3d8] sm:$0xff]
      %v295 = vld [vmem:[%s165 + $0x3e0] sm:$0xff]
      %v296 = vld [vmem:[%s165 + $0x3e8] sm:$0xff]
      %v297 = vld [vmem:[%s165 + $0x3f0] sm:$0xff]
      %v298 = vld [vmem:[%s165 + $0x3f8] sm:$0xff]
      %v299 = vld [vmem:[%s165 + $0x400] sm:$0xff]
      %v300 = vld [vmem:[%s165 + $0x408] sm:$0xff]
      %v301 = vld [vmem:[%s165 + $0x410] sm:$0xff]
      %v302 = vld [vmem:[%s165 + $0x418] sm:$0xff]
      %v303 = vld [vmem:[%s165 + $0x420] sm:$0xff]
      %v304 = vld [vmem:[%s165 + $0x428] sm:$0xff]
      %v305 = vld [vmem:[%s165 + $0x430] sm:$0xff]
      %v306 = vld [vmem:[%s165 + $0x438] sm:$0xff]
      %v307 = vld [vmem:[%s165 + $0x440] sm:$0xff]
      %v308 = vld [vmem:[%s165 + $0x448] sm:$0xff]
      %v309 = vld [vmem:[%s165 + $0x450] sm:$0xff]
      %v310 = vld [vmem:[%s165 + $0x458] sm:$0xff]
      %v311 = vld [vmem:[%s165 + $0x460] sm:$0xff]
      %v312 = vld [vmem:[%s165 + $0x468] sm:$0xff]
      %v313 = vld [vmem:[%s165 + $0x470] sm:$0xff]
      %v314 = vld [vmem:[%s165 + $0x478] sm:$0xff]
      %v315 = vld [vmem:[%s165 + $0x480] sm:$0xff]
      %v316 = vld [vmem:[%s165 + $0x488] sm:$0xff]
      %v317 = vld [vmem:[%s165 + $0x490] sm:$0xff]
      %v318 = vld [vmem:[%s165 + $0x498] sm:$0xff]
      %v319 = vld [vmem:[%s165 + $0x4a0] sm:$0xff]
      %v320 = vld [vmem:[%s165 + $0x4a8] sm:$0xff]
      %v321 = vld [vmem:[%s165 + $0x4b0] sm:$0xff]
      %v322 = vld [vmem:[%s165 + $0x4b8] sm:$0xff]
      %v323 = vld [vmem:[%s165 + $0x4c0] sm:$0xff]
      %v324 = vld [vmem:[%s165 + $0x4c8] sm:$0xff]
      %v325 = vld [vmem:[%s165 + $0x4d0] sm:$0xff]
      %v326 = vld [vmem:[%s165 + $0x4d8] sm:$0xff]
      %v327 = vld [vmem:[%s165 + $0x4e0] sm:$0xff]
      %v328 = vld [vmem:[%s165 + $0x4e8] sm:$0xff]
      %v329 = vld [vmem:[%s165 + $0x4f0] sm:$0xff]
      %v330 = vld [vmem:[%s165 + $0x4f8] sm:$0xff]
      %v331 = vld [vmem:[%s165 + $0x500] sm:$0xff]
      %v332 = vld [vmem:[%s165 + $0x508] sm:$0xff]
      %v333 = vld [vmem:[%s165 + $0x510] sm:$0xff]
      %v334 = vld [vmem:[%s165 + $0x518] sm:$0xff]
      %v335 = vld [vmem:[%s165 + $0x520] sm:$0xff]
      %v336 = vld [vmem:[%s165 + $0x528] sm:$0xff]
      %v337 = vld [vmem:[%s165 + $0x530] sm:$0xff]
      %v338 = vld [vmem:[%s165 + $0x538] sm:$0xff]
      %v339 = vld [vmem:[%s165 + $0x540] sm:$0xff]
      %v340 = vld [vmem:[%s165 + $0x548] sm:$0xff]
      %v341 = vld [vmem:[%s165 + $0x550] sm:$0xff]
      %v342 = vld [vmem:[%s165 + $0x558] sm:$0xff]
      %v343 = vld [vmem:[%s165 + $0x560] sm:$0xff]
      %v344 = vld [vmem:[%s165 + $0x568] sm:$0xff]
      %v345 = vld [vmem:[%s165 + $0x570] sm:$0xff]
      %v346 = vld [vmem:[%s165 + $0x578] sm:$0xff]
      %v347 = vld [vmem:[%s165 + $0x580] sm:$0xff]
      %v348 = vld [vmem:[%s165 + $0x588] sm:$0xff]
      %v349 = vld [vmem:[%s165 + $0x590] sm:$0xff]
      %v350 = vld [vmem:[%s165 + $0x598] sm:$0xff]
      %v351 = vld [vmem:[%s165 + $0x5a0] sm:$0xff]
      %v352 = vld [vmem:[%s165 + $0x5a8] sm:$0xff]
      %v353 = vld [vmem:[%s165 + $0x5b0] sm:$0xff]
      %v354 = vld [vmem:[%s165 + $0x5b8] sm:$0xff]
      %v355 = vld [vmem:[%s165 + $0x5c0] sm:$0xff]
      %v356 = vld [vmem:[%s165 + $0x5c8] sm:$0xff]
      %v357 = vld [vmem:[%s165 + $0x5d0] sm:$0xff]
      %v358 = vld [vmem:[%s165 + $0x5d8] sm:$0xff]
      %v359 = vld [vmem:[%s165 + $0x5e0] sm:$0xff]
      %v360 = vld [vmem:[%s165 + $0x5e8] sm:$0xff]
      %v361 = vld [vmem:[%s165 + $0x5f0] sm:$0xff]
      %v362 = vld [vmem:[%s165 + $0x5f8] sm:$0xff]
      %v363 = vld [vmem:[%s165 + $0x600] sm:$0xff]
      %v364 = vld [vmem:[%s165 + $0x608] sm:$0xff]
      %v365 = vld [vmem:[%s165 + $0x610] sm:$0xff]
      %v366 = vld [vmem:[%s165 + $0x618] sm:$0xff]
      %v367 = vld [vmem:[%s1] sm:$0xff]
      %v368 = vld [vmem:[%s1 + $0x8] sm:$0xff]
      %v369 = vld [vmem:[%s1 + $0x10] sm:$0xff]
      %v370 = vld [vmem:[%s1 + $0x18] sm:$0xff]
      %v371 = vld [vmem:[%s1 + $0x20] sm:$0xff]
      %v372 = vld [vmem:[%s1 + $0x28] sm:$0xff]
      %v373 = vld [vmem:[%s1 + $0x30] sm:$0xff]
      %v374 = vld [vmem:[%s1 + $0x38] sm:$0xff]
      %v375 = vld [vmem:[%s1 + $0x40] sm:$0xff]
      %v376 = vld [vmem:[%s1 + $0x48] sm:$0xff]
      %v377 = vld [vmem:[%s1 + $0x50] sm:$0xff]
      %v378 = vld [vmem:[%s1 + $0x58] sm:$0xff]
      %v379 = vld [vmem:[%s1 + $0x60] sm:$0xff]
      %v380 = vld [vmem:[%s1 + $0x68] sm:$0xff]
      %v381 = vld [vmem:[%s1 + $0x70] sm:$0xff]
      %v382 = vld [vmem:[%s1 + $0x78] sm:$0xff]
      %v383 = vld [vmem:[%s1 + $0x80] sm:$0xff]
      %v384 = vld [vmem:[%s1 + $0x88] sm:$0xff]
      %v385 = vld [vmem:[%s1 + $0x90] sm:$0xff]
      %v386 = vld [vmem:[%s1 + $0x98] sm:$0xff]
      %v387 = vld [vmem:[%s1 + $0xa0] sm:$0xff]
      %v388 = vld [vmem:[%s1 + $0xa8] sm:$0xff]
      %v389 = vld [vmem:[%s1 + $0xb0] sm:$0xff]
      %v390 = vld [vmem:[%s1 + $0xb8] sm:$0xff]
      %v391 = vld [vmem:[%s1 + $0xc0] sm:$0xff]
      %v392 = vld [vmem:[%s1 + $0xc8] sm:$0xff]
      %v393 = vld [vmem:[%s1 + $0xd0] sm:$0xff]
      %v394 = vld [vmem:[%s1 + $0xd8] sm:$0xff]
      %v395 = vld [vmem:[%s1 + $0xe0] sm:$0xff]
      %v396 = vld [vmem:[%s1 + $0xe8] sm:$0xff]
      %v397 = vld [vmem:[%s1 + $0xf0] sm:$0xff]
      %v398 = vld [vmem:[%s1 + $0xf8] sm:$0xff]
      %v399 = vld [vmem:[%s1 + $0x100] sm:$0xff]
      %v400 = vld [vmem:[%s1 + $0x108] sm:$0xff]
      %v401 = vld [vmem:[%s1 + $0x110] sm:$0xff]
      %v402 = vld [vmem:[%s1 + $0x118] sm:$0xff]
      %v403 = vld [vmem:[%s1 + $0x120] sm:$0xff]
      %v404 = vld [vmem:[%s1 + $0x128] sm:$0xff]
      %v405 = vld [vmem:[%s1 + $0x130] sm:$0xff]
      %v406 = vld [vmem:[%s1 + $0x138] sm:$0xff]
      %v407 = vld [vmem:[%s1 + $0x140] sm:$0xff]
      %v408 = vld [vmem:[%s1 + $0x148] sm:$0xff]
      %v409 = vld [vmem:[%s1 + $0x150] sm:$0xff]
      %v410 = vld [vmem:[%s1 + $0x158] sm:$0xff]
      %v411 = vld [vmem:[%s1 + $0x160] sm:$0xff]
      %v412 = vld [vmem:[%s1 + $0x168] sm:$0xff]
      %v413 = vld [vmem:[%s1 + $0x170] sm:$0xff]
      %v414 = vld [vmem:[%s1 + $0x178] sm:$0xff]
      %v415 = vld [vmem:[%s1 + $0x180] sm:$0xff]
      %v416 = vld [vmem:[%s1 + $0x188] sm:$0xff]
      %v417 = vld [vmem:[%s1 + $0x190] sm:$0xff]
      %v418 = vld [vmem:[%s1 + $0x198] sm:$0xff]
      %v419 = vld [vmem:[%s1 + $0x1a0] sm:$0xff]
      %v420 = vld [vmem:[%s1 + $0x1a8] sm:$0xff]
      %v421 = vld [vmem:[%s1 + $0x1b0] sm:$0xff]
      %v422 = vld [vmem:[%s1 + $0x1b8] sm:$0xff]
      %v423 = vld [vmem:[%s1 + $0x1c0] sm:$0xff]
      %v424 = vld [vmem:[%s1 + $0x1c8] sm:$0xff]
      %v425 = vld [vmem:[%s1 + $0x1d0] sm:$0xff]
      %v426 = vld [vmem:[%s1 + $0x1d8] sm:$0xff]
      %v427 = vld [vmem:[%s1 + $0x1e0] sm:$0xff]
      %v428 = vld [vmem:[%s1 + $0x1e8] sm:$0xff]
      %v429 = vld [vmem:[%s1 + $0x1f0] sm:$0xff]
      %v430 = vld [vmem:[%s1 + $0x1f8] sm:$0xff]
      %v431 = vld [vmem:[%s1 + $0x200] sm:$0xff]
      %v432 = vld [vmem:[%s1 + $0x208] sm:$0xff]
      %v433 = vld [vmem:[%s1 + $0x210] sm:$0xff]
      %v434 = vld [vmem:[%s1 + $0x218] sm:$0xff]
      %v435 = vld [vmem:[%s1 + $0x220] sm:$0xff]
      %v436 = vld [vmem:[%s1 + $0x228] sm:$0xff]
      %v437 = vld [vmem:[%s1 + $0x230] sm:$0xff]
      %v438 = vld [vmem:[%s1 + $0x238] sm:$0xff]
      %v439 = vld [vmem:[%s1 + $0x240] sm:$0xff]
      %v440 = vld [vmem:[%s1 + $0x248] sm:$0xff]
      %v441 = vld [vmem:[%s1 + $0x250] sm:$0xff]
      %v442 = vld [vmem:[%s1 + $0x258] sm:$0xff]
      %v443 = vld [vmem:[%s1 + $0x260] sm:$0xff]
      %v444 = vld [vmem:[%s1 + $0x268] sm:$0xff]
      %v445 = vld [vmem:[%s1 + $0x270] sm:$0xff]
      %v446 = vld [vmem:[%s1 + $0x278] sm:$0xff]
      %v447 = vld [vmem:[%s1 + $0x280] sm:$0xff]
      %v448 = vld [vmem:[%s1 + $0x288] sm:$0xff]
      %v449 = vld [vmem:[%s1 + $0x290] sm:$0xff]
      %v450 = vld [vmem:[%s1 + $0x298] sm:$0xff]
      %v451 = vld [vmem:[%s1 + $0x2a0] sm:$0xff]
      %v452 = vld [vmem:[%s1 + $0x2a8] sm:$0xff]
      %v453 = vld [vmem:[%s1 + $0x2b0] sm:$0xff]
      %v454 = vld [vmem:[%s1 + $0x2b8] sm:$0xff]
      %v455 = vld [vmem:[%s1 + $0x2c0] sm:$0xff]
      %v456 = vld [vmem:[%s1 + $0x2c8] sm:$0xff]
      %v457 = vld [vmem:[%s1 + $0x2d0] sm:$0xff]
      %v458 = vld [vmem:[%s1 + $0x2d8] sm:$0xff]
      %v459 = vld [vmem:[%s1 + $0x2e0] sm:$0xff]
      %v460 = vld [vmem:[%s1 + $0x2e8] sm:$0xff]
      %v461 = vld [vmem:[%s1 + $0x2f0] sm:$0xff]
      %v462 = vld [vmem:[%s1 + $0x2f8] sm:$0xff]
      %v463 = vld [vmem:[%s1 + $0x300] sm:$0xff]
      %v464 = vld [vmem:[%s1 + $0x308] sm:$0xff]
      %v465 = vld [vmem:[%s1 + $0x310] sm:$0xff]
      %v466 = vld [vmem:[%s1 + $0x318] sm:$0xff]
      %v467 = vld [vmem:[%s2] sm:$0x1]
      %v469 = vlaneseq
      %v470 = vshrl.u32 %v469, 7
      %v471 = vsub.s32 0, %v470
      %v472 = vrot.slane %v467, %v471
      %vm474 = vcmask 261120
      %v476 = vsel %vm474, %v177, 0
      %v479 = vsel %vm474, %v184, 0
      %v482 = vsel %vm474, %v191, 0
      %v485 = vsel %vm474, %v198, 0
      %v488 = vsel %vm474, %v205, 0
      %v491 = vsel %vm474, %v212, 0
      %v494 = vsel %vm474, %v219, 0
      %v497 = vsel %vm474, %v226, 0
      %v500 = vsel %vm474, %v233, 0
      %v503 = vsel %vm474, %v240, 0
      %v506 = vsel %vm474, %v247, 0
      %v509 = vsel %vm474, %v254, 0
      %v512 = vsel %vm474, %v261, 0
      %v515 = vsel %vm474, %v268, 0
      %v518 = vsel %vm474, %v275, 0
      %v521 = vsel %vm474, %v282, 0
      %v524 = vsel %vm474, %v289, 0
      %v527 = vsel %vm474, %v296, 0
      %v530 = vsel %vm474, %v303, 0
      %v533 = vsel %vm474, %v310, 0
      %v536 = vsel %vm474, %v317, 0
      %v539 = vsel %vm474, %v324, 0
      %v542 = vsel %vm474, %v331, 0
      %v545 = vsel %vm474, %v338, 0
      %v548 = vsel %vm474, %v345, 0
      %v551 = vsel %vm474, %v352, 0
      %v554 = vsel %vm474, %v359, 0
      %v557 = vsel %vm474, %v366, 0
      %559 = vmatprep.subr.mxu0 0.0
      %560 = vmatpush1.msra.mxu0 %v382
      %561 = vmatprep.subr.mxu0 0.0
      %562 = vmatpush1.msra.mxu0 %v381
      %563 = vmatprep.subr.mxu0 0.0
      %564 = vmatpush1.msra.mxu0 %v380
      %565 = vmatprep.subr.mxu0 0.0
      %566 = vmatpush1.msra.mxu0 %v379
      %567 = vmatprep.subr.mxu0 0.0
      %568 = vmatpush1.msra.mxu0 %v378
      %569 = vmatprep.subr.mxu0 0.0
      %570 = vmatpush1.msra.mxu0 %v377
      %571 = vmatprep.subr.mxu0 0.0
      %572 = vmatpush1.msra.mxu0 %v376
      %573 = vmatprep.subr.mxu0 0.0
      %574 = vmatpush1.msra.mxu0 %v375
      %575 = vmatprep.subr.mxu0 0.0
      %576 = vmatpush1.msra.mxu0 %v374
      %577 = vmatprep.subr.mxu0 0.0
      %578 = vmatpush1.msra.mxu0 %v373
      %579 = vmatprep.subr.mxu0 0.0
      %580 = vmatpush1.msra.mxu0 %v372
      %581 = vmatprep.subr.mxu0 0.0
      %582 = vmatpush1.msra.mxu0 %v371
      %583 = vmatprep.subr.mxu0 0.0
      %584 = vmatpush1.msra.mxu0 %v370
      %585 = vmatprep.subr.mxu0 0.0
      %586 = vmatpush1.msra.mxu0 %v369
      %587 = vmatprep.subr.mxu0 0.0
      %588 = vmatpush1.msra.mxu0 %v368
      %589 = vmatprep.subr.mxu0 0.0
      %590 = vmatpush1.msra.mxu0 %v367
      %591 = vmatprep.subr.mxu0 0.0
      %592 = vmatpush2.msra.mxu0 %v398
      %593 = vmatprep.subr.mxu0 0.0
      %594 = vmatpush2.msra.mxu0 %v397
      %595 = vmatprep.subr.mxu0 0.0
      %596 = vmatpush2.msra.mxu0 %v396
      %597 = vmatprep.subr.mxu0 0.0
      %598 = vmatpush2.msra.mxu0 %v395
      %599 = vmatprep.subr.mxu0 0.0
      %600 = vmatpush2.msra.mxu0 %v394
      %601 = vmatprep.subr.mxu0 0.0
      %602 = vmatpush2.msra.mxu0 %v393
      %603 = vmatprep.subr.mxu0 0.0
      %604 = vmatpush2.msra.mxu0 %v392
      %605 = vmatprep.subr.mxu0 0.0
      %606 = vmatpush2.msra.mxu0 %v391
      %607 = vmatprep.subr.mxu0 0.0
      %608 = vmatpush2.msra.mxu0 %v390
      %609 = vmatprep.subr.mxu0 0.0
      %610 = vmatpush2.msra.mxu0 %v389
      %611 = vmatprep.subr.mxu0 0.0
      %612 = vmatpush2.msra.mxu0 %v388
      %613 = vmatprep.subr.mxu0 0.0
      %614 = vmatpush2.msra.mxu0 %v387
      %615 = vmatprep.subr.mxu0 0.0
      %616 = vmatpush2.msra.mxu0 %v386
      %617 = vmatprep.subr.mxu0 0.0
      %618 = vmatpush2.msra.mxu0 %v385
      %619 = vmatprep.subr.mxu0 0.0
      %620 = vmatpush2.msra.mxu0 %v384
      %621 = vmatprep.subr.mxu0 0.0
      %622 = vmatpush2.msra.mxu0 %v383
      %623 = vmatprep.mubr.f32.mxu0 %v172
      %624 = vmatmul.mubr.f32.gmra.mxu0 %v171
      %v625 = vpop.f32.mrf.mxu0
      %v626 = vadd.f32 %v472, %v625
      %v627 = vpop.f32.mrf.mxu0
      %628 = vmatprep.mubr.f32.mxu0 %v179
      %629 = vmatmul.mubr.f32.gmra.mxu0 %v178
      %v630 = vpop.f32.mrf.mxu0
      %v631 = vadd.f32 %v472, %v630
      %v632 = vpop.f32.mrf.mxu0
      %633 = vmatprep.mubr.f32.mxu0 %v186
      %634 = vmatmul.mubr.f32.gmra.mxu0 %v185
      %v635 = vpop.f32.mrf.mxu0
      %v636 = vadd.f32 %v472, %v635
      %v637 = vpop.f32.mrf.mxu0
      %638 = vmatprep.mubr.f32.mxu0 %v193
      %639 = vmatmul.mubr.f32.gmra.mxu0 %v192
      %v640 = vpop.f32.mrf.mxu0
      %v641 = vadd.f32 %v472, %v640
      %v642 = vpop.f32.mrf.mxu0
      %643 = vmatprep.mubr.f32.mxu0 %v200
      %644 = vmatmul.mubr.f32.gmra.mxu0 %v199
      %v645 = vpop.f32.mrf.mxu0
      %v646 = vadd.f32 %v472, %v645
      %v647 = vpop.f32.mrf.mxu0
      %648 = vmatprep.mubr.f32.mxu0 %v207
      %649 = vmatmul.mubr.f32.gmra.mxu0 %v206
      %v650 = vpop.f32.mrf.mxu0
      %v651 = vadd.f32 %v472, %v650
      %v652 = vpop.f32.mrf.mxu0
      %653 = vmatprep.mubr.f32.mxu0 %v214
      %654 = vmatmul.mubr.f32.gmra.mxu0 %v213
      %v655 = vpop.f32.mrf.mxu0
      %v656 = vadd.f32 %v472, %v655
      %v657 = vpop.f32.mrf.mxu0
      %658 = vmatprep.mubr.f32.mxu0 %v221
      %659 = vmatmul.mubr.f32.gmra.mxu0 %v220
      %v660 = vpop.f32.mrf.mxu0
      %v661 = vadd.f32 %v472, %v660
      %v662 = vpop.f32.mrf.mxu0
      %663 = vmatprep.mubr.f32.mxu0 %v228
      %664 = vmatmul.mubr.f32.gmra.mxu0 %v227
      %v665 = vpop.f32.mrf.mxu0
      %v666 = vadd.f32 %v472, %v665
      %v667 = vpop.f32.mrf.mxu0
      %668 = vmatprep.mubr.f32.mxu0 %v235
      %669 = vmatmul.mubr.f32.gmra.mxu0 %v234
      %v670 = vpop.f32.mrf.mxu0
      %v671 = vadd.f32 %v472, %v670
      %v672 = vpop.f32.mrf.mxu0
      %673 = vmatprep.mubr.f32.mxu0 %v242
      %674 = vmatmul.mubr.f32.gmra.mxu0 %v241
      %v675 = vpop.f32.mrf.mxu0
      %v676 = vadd.f32 %v472, %v675
      %v677 = vpop.f32.mrf.mxu0
      %678 = vmatprep.mubr.f32.mxu0 %v249
      %679 = vmatmul.mubr.f32.gmra.mxu0 %v248
      %v680 = vpop.f32.mrf.mxu0
      %v681 = vadd.f32 %v472, %v680
      %v682 = vpop.f32.mrf.mxu0
      %683 = vmatprep.mubr.f32.mxu0 %v256
      %684 = vmatmul.mubr.f32.gmra.mxu0 %v255
      %v685 = vpop.f32.mrf.mxu0
      %v686 = vadd.f32 %v472, %v685
      %v687 = vpop.f32.mrf.mxu0
      %688 = vmatprep.mubr.f32.mxu0 %v263
      %689 = vmatmul.mubr.f32.gmra.mxu0 %v262
      %v690 = vpop.f32.mrf.mxu0
      %v691 = vadd.f32 %v472, %v690
      %v692 = vpop.f32.mrf.mxu0
      %693 = vmatprep.mubr.f32.mxu0 %v270
      %694 = vmatmul.mubr.f32.gmra.mxu0 %v269
      %v695 = vpop.f32.mrf.mxu0
      %v696 = vadd.f32 %v472, %v695
      %v697 = vpop.f32.mrf.mxu0
      %698 = vmatprep.mubr.f32.mxu0 %v277
      %699 = vmatmul.mubr.f32.gmra.mxu0 %v276
      %v700 = vpop.f32.mrf.mxu0
      %v701 = vadd.f32 %v472, %v700
      %v702 = vpop.f32.mrf.mxu0
      %703 = vmatprep.mubr.f32.mxu0 %v284
      %704 = vmatmul.mubr.f32.gmra.mxu0 %v283
      %v705 = vpop.f32.mrf.mxu0
      %v706 = vadd.f32 %v472, %v705
      %v707 = vpop.f32.mrf.mxu0
      %708 = vmatprep.mubr.f32.mxu0 %v291
      %709 = vmatmul.mubr.f32.gmra.mxu0 %v290
      %v710 = vpop.f32.mrf.mxu0
      %v711 = vadd.f32 %v472, %v710
      %v712 = vpop.f32.mrf.mxu0
      %713 = vmatprep.mubr.f32.mxu0 %v298
      %714 = vmatmul.mubr.f32.gmra.mxu0 %v297
      %v715 = vpop.f32.mrf.mxu0
      %v716 = vadd.f32 %v472, %v715
      %v717 = vpop.f32.mrf.mxu0
      %718 = vmatprep.mubr.f32.mxu0 %v305
      %719 = vmatmul.mubr.f32.gmra.mxu0 %v304
      %v720 = vpop.f32.mrf.mxu0
      %v721 = vadd.f32 %v472, %v720
      %v722 = vpop.f32.mrf.mxu0
      %723 = vmatprep.mubr.f32.mxu0 %v312
      %724 = vmatmul.mubr.f32.gmra.mxu0 %v311
      %v725 = vpop.f32.mrf.mxu0
      %v726 = vadd.f32 %v472, %v725
      %v727 = vpop.f32.mrf.mxu0
      %728 = vmatprep.mubr.f32.mxu0 %v319
      %729 = vmatmul.mubr.f32.gmra.mxu0 %v318
      %v730 = vpop.f32.mrf.mxu0
      %v731 = vadd.f32 %v472, %v730
      %v732 = vpop.f32.mrf.mxu0
      %733 = vmatprep.mubr.f32.mxu0 %v326
      %734 = vmatmul.mubr.f32.gmra.mxu0 %v325
      %v735 = vpop.f32.mrf.mxu0
      %v736 = vadd.f32 %v472, %v735
      %v737 = vpop.f32.mrf.mxu0
      %738 = vmatprep.mubr.f32.mxu0 %v333
      %739 = vmatmul.mubr.f32.gmra.mxu0 %v332
      %v740 = vpop.f32.mrf.mxu0
      %v741 = vadd.f32 %v472, %v740
      %v742 = vpop.f32.mrf.mxu0
      %743 = vmatprep.mubr.f32.mxu0 %v340
      %744 = vmatmul.mubr.f32.gmra.mxu0 %v339
      %v745 = vpop.f32.mrf.mxu0
      %v746 = vadd.f32 %v472, %v745
      %v747 = vpop.f32.mrf.mxu0
      %748 = vmatprep.mubr.f32.mxu0 %v347
      %749 = vmatmul.mubr.f32.gmra.mxu0 %v346
      %v750 = vpop.f32.mrf.mxu0
      %v751 = vadd.f32 %v472, %v750
      %v752 = vpop.f32.mrf.mxu0
      %753 = vmatprep.mubr.f32.mxu0 %v354
      %754 = vmatmul.mubr.f32.gmra.mxu0 %v353
      %v755 = vpop.f32.mrf.mxu0
      %v756 = vadd.f32 %v472, %v755
      %v757 = vpop.f32.mrf.mxu0
      %758 = vmatprep.mubr.f32.mxu0 %v361
      %759 = vmatmul.mubr.f32.gmra.mxu0 %v360
      %v760 = vpop.f32.mrf.mxu0
      %v761 = vadd.f32 %v472, %v760
      %v762 = vpop.f32.mrf.mxu0
      %763 = vdwg.mxu0
      %764 = vmatprep.subr.mxu0 0.0
      %765 = vmatpush1.msra.mxu0 %v414
      %766 = vmatprep.subr.mxu0 0.0
      %767 = vmatpush1.msra.mxu0 %v413
      %768 = vmatprep.subr.mxu0 0.0
      %769 = vmatpush1.msra.mxu0 %v412
      %770 = vmatprep.subr.mxu0 0.0
      %771 = vmatpush1.msra.mxu0 %v411
      %772 = vmatprep.subr.mxu0 0.0
      %773 = vmatpush1.msra.mxu0 %v410
      %774 = vmatprep.subr.mxu0 0.0
      %775 = vmatpush1.msra.mxu0 %v409
      %776 = vmatprep.subr.mxu0 0.0
      %777 = vmatpush1.msra.mxu0 %v408
      %778 = vmatprep.subr.mxu0 0.0
      %779 = vmatpush1.msra.mxu0 %v407
      %780 = vmatprep.subr.mxu0 0.0
      %781 = vmatpush1.msra.mxu0 %v406
      %782 = vmatprep.subr.mxu0 0.0
      %783 = vmatpush1.msra.mxu0 %v405
      %784 = vmatprep.subr.mxu0 0.0
      %785 = vmatpush1.msra.mxu0 %v404
      %786 = vmatprep.subr.mxu0 0.0
      %787 = vmatpush1.msra.mxu0 %v403
      %788 = vmatprep.subr.mxu0 0.0
      %789 = vmatpush1.msra.mxu0 %v402
      %790 = vmatprep.subr.mxu0 0.0
      %791 = vmatpush1.msra.mxu0 %v401
      %792 = vmatprep.subr.mxu0 0.0
      %793 = vmatpush1.msra.mxu0 %v400
      %794 = vmatprep.subr.mxu0 0.0
      %795 = vmatpush1.msra.mxu0 %v399
      %796 = vmatprep.subr.mxu0 0.0
      %797 = vmatpush2.msra.mxu0 %v430
      %798 = vmatprep.subr.mxu0 0.0
      %799 = vmatpush2.msra.mxu0 %v429
      %800 = vmatprep.subr.mxu0 0.0
      %801 = vmatpush2.msra.mxu0 %v428
      %802 = vmatprep.subr.mxu0 0.0
      %803 = vmatpush2.msra.mxu0 %v427
      %804 = vmatprep.subr.mxu0 0.0
      %805 = vmatpush2.msra.mxu0 %v426
      %806 = vmatprep.subr.mxu0 0.0
      %807 = vmatpush2.msra.mxu0 %v425
      %808 = vmatprep.subr.mxu0 0.0
      %809 = vmatpush2.msra.mxu0 %v424
      %810 = vmatprep.subr.mxu0 0.0
      %811 = vmatpush2.msra.mxu0 %v423
      %812 = vmatprep.subr.mxu0 0.0
      %813 = vmatpush2.msra.mxu0 %v422
      %814 = vmatprep.subr.mxu0 0.0
      %815 = vmatpush2.msra.mxu0 %v421
      %816 = vmatprep.subr.mxu0 0.0
      %817 = vmatpush2.msra.mxu0 %v420
      %818 = vmatprep.subr.mxu0 0.0
      %819 = vmatpush2.msra.mxu0 %v419
      %820 = vmatprep.subr.mxu0 0.0
      %821 = vmatpush2.msra.mxu0 %v418
      %822 = vmatprep.subr.mxu0 0.0
      %823 = vmatpush2.msra.mxu0 %v417
      %824 = vmatprep.subr.mxu0 0.0
      %825 = vmatpush2.msra.mxu0 %v416
      %826 = vmatprep.subr.mxu0 0.0
      %827 = vmatpush2.msra.mxu0 %v415
      %828 = vmatprep.mubr.f32.mxu0 %v174
      %829 = vmatmul.mubr.f32.gmra.mxu0 %v173
      %v830 = vpop.f32.mrf.mxu0
      %v831 = vadd.f32 %v626, %v830
      %v832 = vpop.f32.mrf.mxu0
      %833 = vmatprep.mubr.f32.mxu0 %v181
      %834 = vmatmul.mubr.f32.gmra.mxu0 %v180
      %v835 = vpop.f32.mrf.mxu0
      %v836 = vadd.f32 %v631, %v835
      %v837 = vpop.f32.mrf.mxu0
      %838 = vmatprep.mubr.f32.mxu0 %v188
      %839 = vmatmul.mubr.f32.gmra.mxu0 %v187
      %v840 = vpop.f32.mrf.mxu0
      %v841 = vadd.f32 %v636, %v840
      %v842 = vpop.f32.mrf.mxu0
      %843 = vmatprep.mubr.f32.mxu0 %v195
      %844 = vmatmul.mubr.f32.gmra.mxu0 %v194
      %v845 = vpop.f32.mrf.mxu0
      %v846 = vadd.f32 %v641, %v845
      %v847 = vpop.f32.mrf.mxu0
      %848 = vmatprep.mubr.f32.mxu0 %v202
      %849 = vmatmul.mubr.f32.gmra.mxu0 %v201
      %v850 = vpop.f32.mrf.mxu0
      %v851 = vadd.f32 %v646, %v850
      %v852 = vpop.f32.mrf.mxu0
      %853 = vmatprep.mubr.f32.mxu0 %v209
      %854 = vmatmul.mubr.f32.gmra.mxu0 %v208
      %v855 = vpop.f32.mrf.mxu0
      %v856 = vadd.f32 %v651, %v855
      %v857 = vpop.f32.mrf.mxu0
      %858 = vmatprep.mubr.f32.mxu0 %v216
      %859 = vmatmul.mubr.f32.gmra.mxu0 %v215
      %v860 = vpop.f32.mrf.mxu0
      %v861 = vadd.f32 %v656, %v860
      %v862 = vpop.f32.mrf.mxu0
      %863 = vmatprep.mubr.f32.mxu0 %v223
      %864 = vmatmul.mubr.f32.gmra.mxu0 %v222
      %v865 = vpop.f32.mrf.mxu0
      %v866 = vadd.f32 %v661, %v865
      %v867 = vpop.f32.mrf.mxu0
      %868 = vmatprep.mubr.f32.mxu0 %v230
      %869 = vmatmul.mubr.f32.gmra.mxu0 %v229
      %v870 = vpop.f32.mrf.mxu0
      %v871 = vadd.f32 %v666, %v870
      %v872 = vpop.f32.mrf.mxu0
      %873 = vmatprep.mubr.f32.mxu0 %v237
      %874 = vmatmul.mubr.f32.gmra.mxu0 %v236
      %v875 = vpop.f32.mrf.mxu0
      %v876 = vadd.f32 %v671, %v875
      %v877 = vpop.f32.mrf.mxu0
      %878 = vmatprep.mubr.f32.mxu0 %v244
      %879 = vmatmul.mubr.f32.gmra.mxu0 %v243
      %v880 = vpop.f32.mrf.mxu0
      %v881 = vadd.f32 %v676, %v880
      %v882 = vpop.f32.mrf.mxu0
      %883 = vmatprep.mubr.f32.mxu0 %v251
      %884 = vmatmul.mubr.f32.gmra.mxu0 %v250
      %v885 = vpop.f32.mrf.mxu0
      %v886 = vadd.f32 %v681, %v885
      %v887 = vpop.f32.mrf.mxu0
      %888 = vmatprep.mubr.f32.mxu0 %v258
      %889 = vmatmul.mubr.f32.gmra.mxu0 %v257
      %v890 = vpop.f32.mrf.mxu0
      %v891 = vadd.f32 %v686, %v890
      %v892 = vpop.f32.mrf.mxu0
      %893 = vmatprep.mubr.f32.mxu0 %v265
      %894 = vmatmul.mubr.f32.gmra.mxu0 %v264
      %v895 = vpop.f32.mrf.mxu0
      %v896 = vadd.f32 %v691, %v895
      %v897 = vpop.f32.mrf.mxu0
      %898 = vmatprep.mubr.f32.mxu0 %v272
      %899 = vmatmul.mubr.f32.gmra.mxu0 %v271
      %v900 = vpop.f32.mrf.mxu0
      %v901 = vadd.f32 %v696, %v900
      %v902 = vpop.f32.mrf.mxu0
      %903 = vmatprep.mubr.f32.mxu0 %v279
      %904 = vmatmul.mubr.f32.gmra.mxu0 %v278
      %v905 = vpop.f32.mrf.mxu0
      %v906 = vadd.f32 %v701, %v905
      %v907 = vpop.f32.mrf.mxu0
      %908 = vmatprep.mubr.f32.mxu0 %v286
      %909 = vmatmul.mubr.f32.gmra.mxu0 %v285
      %v910 = vpop.f32.mrf.mxu0
      %v911 = vadd.f32 %v706, %v910
      %v912 = vpop.f32.mrf.mxu0
      %913 = vmatprep.mubr.f32.mxu0 %v293
      %914 = vmatmul.mubr.f32.gmra.mxu0 %v292
      %v915 = vpop.f32.mrf.mxu0
      %v916 = vadd.f32 %v711, %v915
      %v917 = vpop.f32.mrf.mxu0
      %918 = vmatprep.mubr.f32.mxu0 %v300
      %919 = vmatmul.mubr.f32.gmra.mxu0 %v299
      %v920 = vpop.f32.mrf.mxu0
      %v921 = vadd.f32 %v716, %v920
      %v922 = vpop.f32.mrf.mxu0
      %923 = vmatprep.mubr.f32.mxu0 %v307
      %924 = vmatmul.mubr.f32.gmra.mxu0 %v306
      %v925 = vpop.f32.mrf.mxu0
      %v926 = vadd.f32 %v721, %v925
      %v927 = vpop.f32.mrf.mxu0
      %928 = vmatprep.mubr.f32.mxu0 %v314
      %929 = vmatmul.mubr.f32.gmra.mxu0 %v313
      %v930 = vpop.f32.mrf.mxu0
      %v931 = vadd.f32 %v726, %v930
      %v932 = vpop.f32.mrf.mxu0
      %933 = vmatprep.mubr.f32.mxu0 %v321
      %934 = vmatmul.mubr.f32.gmra.mxu0 %v320
      %v935 = vpop.f32.mrf.mxu0
      %v936 = vadd.f32 %v731, %v935
      %v937 = vpop.f32.mrf.mxu0
      %938 = vmatprep.mubr.f32.mxu0 %v328
      %939 = vmatmul.mubr.f32.gmra.mxu0 %v327
      %v940 = vpop.f32.mrf.mxu0
      %v941 = vadd.f32 %v736, %v940
      %v942 = vpop.f32.mrf.mxu0
      %943 = vmatprep.mubr.f32.mxu0 %v335
      %944 = vmatmul.mubr.f32.gmra.mxu0 %v334
      %v945 = vpop.f32.mrf.mxu0
      %v946 = vadd.f32 %v741, %v945
      %v947 = vpop.f32.mrf.mxu0
      %948 = vmatprep.mubr.f32.mxu0 %v342
      %949 = vmatmul.mubr.f32.gmra.mxu0 %v341
      %v950 = vpop.f32.mrf.mxu0
      %v951 = vadd.f32 %v746, %v950
      %v952 = vpop.f32.mrf.mxu0
      %953 = vmatprep.mubr.f32.mxu0 %v349
      %954 = vmatmul.mubr.f32.gmra.mxu0 %v348
      %v955 = vpop.f32.mrf.mxu0
      %v956 = vadd.f32 %v751, %v955
      %v957 = vpop.f32.mrf.mxu0
      %958 = vmatprep.mubr.f32.mxu0 %v356
      %959 = vmatmul.mubr.f32.gmra.mxu0 %v355
      %v960 = vpop.f32.mrf.mxu0
      %v961 = vadd.f32 %v756, %v960
      %v962 = vpop.f32.mrf.mxu0
      %963 = vmatprep.mubr.f32.mxu0 %v363
      %964 = vmatmul.mubr.f32.gmra.mxu0 %v362
      %v965 = vpop.f32.mrf.mxu0
      %v966 = vadd.f32 %v761, %v965
      %v967 = vpop.f32.mrf.mxu0
      %968 = vdwg.mxu0
      %969 = vmatprep.subr.mxu0 0.0
      %970 = vmatpush1.msra.mxu0 %v446
      %971 = vmatprep.subr.mxu0 0.0
      %972 = vmatpush1.msra.mxu0 %v445
      %973 = vmatprep.subr.mxu0 0.0
      %974 = vmatpush1.msra.mxu0 %v444
      %975 = vmatprep.subr.mxu0 0.0
      %976 = vmatpush1.msra.mxu0 %v443
      %977 = vmatprep.subr.mxu0 0.0
      %978 = vmatpush1.msra.mxu0 %v442
      %979 = vmatprep.subr.mxu0 0.0
      %980 = vmatpush1.msra.mxu0 %v441
      %981 = vmatprep.subr.mxu0 0.0
      %982 = vmatpush1.msra.mxu0 %v440
      %983 = vmatprep.subr.mxu0 0.0
      %984 = vmatpush1.msra.mxu0 %v439
      %985 = vmatprep.subr.mxu0 0.0
      %986 = vmatpush1.msra.mxu0 %v438
      %987 = vmatprep.subr.mxu0 0.0
      %988 = vmatpush1.msra.mxu0 %v437
      %989 = vmatprep.subr.mxu0 0.0
      %990 = vmatpush1.msra.mxu0 %v436
      %991 = vmatprep.subr.mxu0 0.0
      %992 = vmatpush1.msra.mxu0 %v435
      %993 = vmatprep.subr.mxu0 0.0
      %994 = vmatpush1.msra.mxu0 %v434
      %995 = vmatprep.subr.mxu0 0.0
      %996 = vmatpush1.msra.mxu0 %v433
      %997 = vmatprep.subr.mxu0 0.0
      %998 = vmatpush1.msra.mxu0 %v432
      %999 = vmatprep.subr.mxu0 0.0
      %1000 = vmatpush1.msra.mxu0 %v431
      %1001 = vmatprep.subr.mxu0 0.0
      %1002 = vmatpush2.msra.mxu0 %v462
      %1003 = vmatprep.subr.mxu0 0.0
      %1004 = vmatpush2.msra.mxu0 %v461
      %1005 = vmatprep.subr.mxu0 0.0
      %1006 = vmatpush2.msra.mxu0 %v460
      %1007 = vmatprep.subr.mxu0 0.0
      %1008 = vmatpush2.msra.mxu0 %v459
      %1009 = vmatprep.subr.mxu0 0.0
      %1010 = vmatpush2.msra.mxu0 %v458
      %1011 = vmatprep.subr.mxu0 0.0
      %1012 = vmatpush2.msra.mxu0 %v457
      %1013 = vmatprep.subr.mxu0 0.0
      %1014 = vmatpush2.msra.mxu0 %v456
      %1015 = vmatprep.subr.mxu0 0.0
      %1016 = vmatpush2.msra.mxu0 %v455
      %1017 = vmatprep.subr.mxu0 0.0
      %1018 = vmatpush2.msra.mxu0 %v454
      %1019 = vmatprep.subr.mxu0 0.0
      %1020 = vmatpush2.msra.mxu0 %v453
      %1021 = vmatprep.subr.mxu0 0.0
      %1022 = vmatpush2.msra.mxu0 %v452
      %1023 = vmatprep.subr.mxu0 0.0
      %1024 = vmatpush2.msra.mxu0 %v451
      %1025 = vmatprep.subr.mxu0 0.0
      %1026 = vmatpush2.msra.mxu0 %v450
      %1027 = vmatprep.subr.mxu0 0.0
      %1028 = vmatpush2.msra.mxu0 %v449
      %1029 = vmatprep.subr.mxu0 0.0
      %1030 = vmatpush2.msra.mxu0 %v448
      %1031 = vmatprep.subr.mxu0 0.0
      %1032 = vmatpush2.msra.mxu0 %v447
      %1033 = vmatprep.mubr.f32.mxu0 %v176
      %1034 = vmatmul.mubr.f32.gmra.mxu0 %v175
      %v1035 = vpop.f32.mrf.mxu0
      %v1036 = vadd.f32 %v831, %v1035
      %v1037 = vpop.f32.mrf.mxu0
      %1038 = vmatprep.mubr.f32.mxu0 %v183
      %1039 = vmatmul.mubr.f32.gmra.mxu0 %v182
      %v1040 = vpop.f32.mrf.mxu0
      %v1041 = vadd.f32 %v836, %v1040
      %v1042 = vpop.f32.mrf.mxu0
      %1043 = vmatprep.mubr.f32.mxu0 %v190
      %1044 = vmatmul.mubr.f32.gmra.mxu0 %v189
      %v1045 = vpop.f32.mrf.mxu0
      %v1046 = vadd.f32 %v841, %v1045
      %v1047 = vpop.f32.mrf.mxu0
      %1048 = vmatprep.mubr.f32.mxu0 %v197
      %1049 = vmatmul.mubr.f32.gmra.mxu0 %v196
      %v1050 = vpop.f32.mrf.mxu0
      %v1051 = vadd.f32 %v846, %v1050
      %v1052 = vpop.f32.mrf.mxu0
      %1053 = vmatprep.mubr.f32.mxu0 %v204
      %1054 = vmatmul.mubr.f32.gmra.mxu0 %v203
      %v1055 = vpop.f32.mrf.mxu0
      %v1056 = vadd.f32 %v851, %v1055
      %v1057 = vpop.f32.mrf.mxu0
      %1058 = vmatprep.mubr.f32.mxu0 %v211
      %1059 = vmatmul.mubr.f32.gmra.mxu0 %v210
      %v1060 = vpop.f32.mrf.mxu0
      %v1061 = vadd.f32 %v856, %v1060
      %v1062 = vpop.f32.mrf.mxu0
      %1063 = vmatprep.mubr.f32.mxu0 %v218
      %1064 = vmatmul.mubr.f32.gmra.mxu0 %v217
      %v1065 = vpop.f32.mrf.mxu0
      %v1066 = vadd.f32 %v861, %v1065
      %v1067 = vpop.f32.mrf.mxu0
      %1068 = vmatprep.mubr.f32.mxu0 %v225
      %1069 = vmatmul.mubr.f32.gmra.mxu0 %v224
      %v1070 = vpop.f32.mrf.mxu0
      %v1071 = vadd.f32 %v866, %v1070
      %v1072 = vpop.f32.mrf.mxu0
      %1073 = vmatprep.mubr.f32.mxu0 %v232
      %1074 = vmatmul.mubr.f32.gmra.mxu0 %v231
      %v1075 = vpop.f32.mrf.mxu0
      %v1076 = vadd.f32 %v871, %v1075
      %v1077 = vpop.f32.mrf.mxu0
      %1078 = vmatprep.mubr.f32.mxu0 %v239
      %1079 = vmatmul.mubr.f32.gmra.mxu0 %v238
      %v1080 = vpop.f32.mrf.mxu0
      %v1081 = vadd.f32 %v876, %v1080
      %v1082 = vpop.f32.mrf.mxu0
      %1083 = vmatprep.mubr.f32.mxu0 %v246
      %1084 = vmatmul.mubr.f32.gmra.mxu0 %v245
      %v1085 = vpop.f32.mrf.mxu0
      %v1086 = vadd.f32 %v881, %v1085
      %v1087 = vpop.f32.mrf.mxu0
      %1088 = vmatprep.mubr.f32.mxu0 %v253
      %1089 = vmatmul.mubr.f32.gmra.mxu0 %v252
      %v1090 = vpop.f32.mrf.mxu0
      %v1091 = vadd.f32 %v886, %v1090
      %v1092 = vpop.f32.mrf.mxu0
      %1093 = vmatprep.mubr.f32.mxu0 %v260
      %1094 = vmatmul.mubr.f32.gmra.mxu0 %v259
      %v1095 = vpop.f32.mrf.mxu0
      %v1096 = vadd.f32 %v891, %v1095
      %v1097 = vpop.f32.mrf.mxu0
      %1098 = vmatprep.mubr.f32.mxu0 %v267
      %1099 = vmatmul.mubr.f32.gmra.mxu0 %v266
      %v1100 = vpop.f32.mrf.mxu0
      %v1101 = vadd.f32 %v896, %v1100
      %v1102 = vpop.f32.mrf.mxu0
      %1103 = vmatprep.mubr.f32.mxu0 %v274
      %1104 = vmatmul.mubr.f32.gmra.mxu0 %v273
      %v1105 = vpop.f32.mrf.mxu0
      %v1106 = vadd.f32 %v901, %v1105
      %v1107 = vpop.f32.mrf.mxu0
      %1108 = vmatprep.mubr.f32.mxu0 %v281
      %1109 = vmatmul.mubr.f32.gmra.mxu0 %v280
      %v1110 = vpop.f32.mrf.mxu0
      %v1111 = vadd.f32 %v906, %v1110
      %v1112 = vpop.f32.mrf.mxu0
      %1113 = vmatprep.mubr.f32.mxu0 %v288
      %1114 = vmatmul.mubr.f32.gmra.mxu0 %v287
      %v1115 = vpop.f32.mrf.mxu0
      %v1116 = vadd.f32 %v911, %v1115
      %v1117 = vpop.f32.mrf.mxu0
      %1118 = vmatprep.mubr.f32.mxu0 %v295
      %1119 = vmatmul.mubr.f32.gmra.mxu0 %v294
      %v1120 = vpop.f32.mrf.mxu0
      %v1121 = vadd.f32 %v916, %v1120
      %v1122 = vpop.f32.mrf.mxu0
      %1123 = vmatprep.mubr.f32.mxu0 %v302
      %1124 = vmatmul.mubr.f32.gmra.mxu0 %v301
      %v1125 = vpop.f32.mrf.mxu0
      %v1126 = vadd.f32 %v921, %v1125
      %v1127 = vpop.f32.mrf.mxu0
      %1128 = vmatprep.mubr.f32.mxu0 %v309
      %1129 = vmatmul.mubr.f32.gmra.mxu0 %v308
      %v1130 = vpop.f32.mrf.mxu0
      %v1131 = vadd.f32 %v926, %v1130
      %v1132 = vpop.f32.mrf.mxu0
      %1133 = vmatprep.mubr.f32.mxu0 %v316
      %1134 = vmatmul.mubr.f32.gmra.mxu0 %v315
      %v1135 = vpop.f32.mrf.mxu0
      %v1136 = vadd.f32 %v931, %v1135
      %v1137 = vpop.f32.mrf.mxu0
      %1138 = vmatprep.mubr.f32.mxu0 %v323
      %1139 = vmatmul.mubr.f32.gmra.mxu0 %v322
      %v1140 = vpop.f32.mrf.mxu0
      %v1141 = vadd.f32 %v936, %v1140
      %v1142 = vpop.f32.mrf.mxu0
      %1143 = vmatprep.mubr.f32.mxu0 %v330
      %1144 = vmatmul.mubr.f32.gmra.mxu0 %v329
      %v1145 = vpop.f32.mrf.mxu0
      %v1146 = vadd.f32 %v941, %v1145
      %v1147 = vpop.f32.mrf.mxu0
      %1148 = vmatprep.mubr.f32.mxu0 %v337
      %1149 = vmatmul.mubr.f32.gmra.mxu0 %v336
      %v1150 = vpop.f32.mrf.mxu0
      %v1151 = vadd.f32 %v946, %v1150
      %v1152 = vpop.f32.mrf.mxu0
      %1153 = vmatprep.mubr.f32.mxu0 %v344
      %1154 = vmatmul.mubr.f32.gmra.mxu0 %v343
      %v1155 = vpop.f32.mrf.mxu0
      %v1156 = vadd.f32 %v951, %v1155
      %v1157 = vpop.f32.mrf.mxu0
      %1158 = vmatprep.mubr.f32.mxu0 %v351
      %1159 = vmatmul.mubr.f32.gmra.mxu0 %v350
      %v1160 = vpop.f32.mrf.mxu0
      %v1161 = vadd.f32 %v956, %v1160
      %v1162 = vpop.f32.mrf.mxu0
      %1163 = vmatprep.mubr.f32.mxu0 %v358
      %1164 = vmatmul.mubr.f32.gmra.mxu0 %v357
      %v1165 = vpop.f32.mrf.mxu0
      %v1166 = vadd.f32 %v961, %v1165
      %v1167 = vpop.f32.mrf.mxu0
      %1168 = vmatprep.mubr.f32.mxu0 %v365
      %1169 = vmatmul.mubr.f32.gmra.mxu0 %v364
      %v1170 = vpop.f32.mrf.mxu0
      %v1171 = vadd.f32 %v966, %v1170
      %v1172 = vpop.f32.mrf.mxu0
      %1173 = vdwg.mxu0
      %1174 = vmatprep.subr.mxu0 0.0
      %1175 = vmatpush1.msra.mxu0 0.0
      %1176 = vmatprep.subr.mxu0 0.0
      %1177 = vmatpush1.msra.mxu0 0.0
      %1178 = vmatprep.subr.mxu0 0.0
      %1179 = vmatpush1.msra.mxu0 0.0
      %1180 = vmatprep.subr.mxu0 0.0
      %1181 = vmatpush1.msra.mxu0 0.0
      %1182 = vmatprep.subr.mxu0 0.0
      %1183 = vmatpush1.msra.mxu0 0.0
      %1184 = vmatprep.subr.mxu0 0.0
      %1185 = vmatpush1.msra.mxu0 0.0
      %1186 = vmatprep.subr.mxu0 0.0
      %1187 = vmatpush1.msra.mxu0 0.0
      %1188 = vmatprep.subr.mxu0 0.0
      %1189 = vmatpush1.msra.mxu0 0.0
      %1190 = vmatprep.subr.mxu0 0.0
      %1191 = vmatpush1.msra.mxu0 0.0
      %1192 = vmatprep.subr.mxu0 0.0
      %1193 = vmatpush1.msra.mxu0 0.0
      %1194 = vmatprep.subr.mxu0 0.0
      %1195 = vmatpush1.msra.mxu0 0.0
      %1196 = vmatprep.subr.mxu0 0.0
      %1197 = vmatpush1.msra.mxu0 0.0
      %1198 = vmatprep.subr.mxu0 0.0
      %1199 = vmatpush1.msra.mxu0 %v466
      %1200 = vmatprep.subr.mxu0 0.0
      %1201 = vmatpush1.msra.mxu0 %v465
      %1202 = vmatprep.subr.mxu0 0.0
      %1203 = vmatpush1.msra.mxu0 %v464
      %1204 = vmatprep.subr.mxu0 0.0
      %1205 = vmatpush1.msra.mxu0 %v463
      %1206 = vmatprep.subr.mxu0 0.0
      %1207 = vmatpush2.msra.mxu0 0.0
      %1208 = vmatprep.subr.mxu0 0.0
      %1209 = vmatpush2.msra.mxu0 0.0
      %1210 = vmatprep.subr.mxu0 0.0
      %1211 = vmatpush2.msra.mxu0 0.0
      %1212 = vmatprep.subr.mxu0 0.0
      %1213 = vmatpush2.msra.mxu0 0.0
      %1214 = vmatprep.subr.mxu0 0.0
      %1215 = vmatpush2.msra.mxu0 0.0
      %1216 = vmatprep.subr.mxu0 0.0
      %1217 = vmatpush2.msra.mxu0 0.0
      %1218 = vmatprep.subr.mxu0 0.0
      %1219 = vmatpush2.msra.mxu0 0.0
      %1220 = vmatprep.subr.mxu0 0.0
      %1221 = vmatpush2.msra.mxu0 0.0
      %1222 = vmatprep.subr.mxu0 0.0
      %1223 = vmatpush2.msra.mxu0 0.0
      %1224 = vmatprep.subr.mxu0 0.0
      %1225 = vmatpush2.msra.mxu0 0.0
      %1226 = vmatprep.subr.mxu0 0.0
      %1227 = vmatpush2.msra.mxu0 0.0
      %1228 = vmatprep.subr.mxu0 0.0
      %1229 = vmatpush2.msra.mxu0 0.0
      %1230 = vmatprep.subr.mxu0 0.0
      %1231 = vmatpush2.msra.mxu0 0.0
      %1232 = vmatprep.subr.mxu0 0.0
      %1233 = vmatpush2.msra.mxu0 0.0
      %1234 = vmatprep.subr.mxu0 0.0
      %1235 = vmatpush2.msra.mxu0 0.0
      %1236 = vmatprep.subr.mxu0 0.0
      %1237 = vmatpush2.msra.mxu0 0.0
      %1238 = vmatprep.mubr.f32.mxu0 0.0
      %1239 = vmatmul.mubr.f32.gmra.mxu0 %v476
      %v1240 = vpop.f32.mrf.mxu0
      %v1241 = vadd.f32 %v1036, %v1240
      %v1242 = vpop.f32.mrf.mxu0
      %1243 = vmatprep.mubr.f32.mxu0 0.0
      %1244 = vmatmul.mubr.f32.gmra.mxu0 %v479
      %v1245 = vpop.f32.mrf.mxu0
      %v1246 = vadd.f32 %v1041, %v1245
      %v1247 = vpop.f32.mrf.mxu0
      %1248 = vmatprep.mubr.f32.mxu0 0.0
      %1249 = vmatmul.mubr.f32.gmra.mxu0 %v482
      %v1250 = vpop.f32.mrf.mxu0
      %v1251 = vadd.f32 %v1046, %v1250
      %v1252 = vpop.f32.mrf.mxu0
      %1253 = vmatprep.mubr.f32.mxu0 0.0
      %1254 = vmatmul.mubr.f32.gmra.mxu0 %v485
      %v1255 = vpop.f32.mrf.mxu0
      %v1256 = vadd.f32 %v1051, %v1255
      %v1257 = vpop.f32.mrf.mxu0
      %1258 = vmatprep.mubr.f32.mxu0 0.0
      %1259 = vmatmul.mubr.f32.gmra.mxu0 %v488
      %v1260 = vpop.f32.mrf.mxu0
      %v1261 = vadd.f32 %v1056, %v1260
      %v1262 = vpop.f32.mrf.mxu0
      %1263 = vmatprep.mubr.f32.mxu0 0.0
      %1264 = vmatmul.mubr.f32.gmra.mxu0 %v491
      %v1265 = vpop.f32.mrf.mxu0
      %v1266 = vadd.f32 %v1061, %v1265
      %v1267 = vpop.f32.mrf.mxu0
      %1268 = vmatprep.mubr.f32.mxu0 0.0
      %1269 = vmatmul.mubr.f32.gmra.mxu0 %v494
      %v1270 = vpop.f32.mrf.mxu0
      %v1271 = vadd.f32 %v1066, %v1270
      %v1272 = vpop.f32.mrf.mxu0
      %1273 = vmatprep.mubr.f32.mxu0 0.0
      %1274 = vmatmul.mubr.f32.gmra.mxu0 %v497
      %v1275 = vpop.f32.mrf.mxu0
      %v1276 = vadd.f32 %v1071, %v1275
      %v1277 = vpop.f32.mrf.mxu0
      %1278 = vmatprep.mubr.f32.mxu0 0.0
      %1279 = vmatmul.mubr.f32.gmra.mxu0 %v500
      %v1280 = vpop.f32.mrf.mxu0
      %v1281 = vadd.f32 %v1076, %v1280
      %v1282 = vpop.f32.mrf.mxu0
      %1283 = vmatprep.mubr.f32.mxu0 0.0
      %1284 = vmatmul.mubr.f32.gmra.mxu0 %v503
      %v1285 = vpop.f32.mrf.mxu0
      %v1286 = vadd.f32 %v1081, %v1285
      %v1287 = vpop.f32.mrf.mxu0
      %1288 = vmatprep.mubr.f32.mxu0 0.0
      %1289 = vmatmul.mubr.f32.gmra.mxu0 %v506
      %v1290 = vpop.f32.mrf.mxu0
      %v1291 = vadd.f32 %v1086, %v1290
      %v1292 = vpop.f32.mrf.mxu0
      %1293 = vmatprep.mubr.f32.mxu0 0.0
      %1294 = vmatmul.mubr.f32.gmra.mxu0 %v509
      %v1295 = vpop.f32.mrf.mxu0
      %v1296 = vadd.f32 %v1091, %v1295
      %v1297 = vpop.f32.mrf.mxu0
      %1298 = vmatprep.mubr.f32.mxu0 0.0
      %1299 = vmatmul.mubr.f32.gmra.mxu0 %v512
      %v1300 = vpop.f32.mrf.mxu0
      %v1301 = vadd.f32 %v1096, %v1300
      %v1302 = vpop.f32.mrf.mxu0
      %1303 = vmatprep.mubr.f32.mxu0 0.0
      %1304 = vmatmul.mubr.f32.gmra.mxu0 %v515
      %v1305 = vpop.f32.mrf.mxu0
      %v1306 = vadd.f32 %v1101, %v1305
      %v1307 = vpop.f32.mrf.mxu0
      %1308 = vmatprep.mubr.f32.mxu0 0.0
      %1309 = vmatmul.mubr.f32.gmra.mxu0 %v518
      %v1310 = vpop.f32.mrf.mxu0
      %v1311 = vadd.f32 %v1106, %v1310
      %v1312 = vpop.f32.mrf.mxu0
      %1313 = vmatprep.mubr.f32.mxu0 0.0
      %1314 = vmatmul.mubr.f32.gmra.mxu0 %v521
      %v1315 = vpop.f32.mrf.mxu0
      %v1316 = vadd.f32 %v1111, %v1315
      %v1317 = vpop.f32.mrf.mxu0
      %1318 = vmatprep.mubr.f32.mxu0 0.0
      %1319 = vmatmul.mubr.f32.gmra.mxu0 %v524
      %v1320 = vpop.f32.mrf.mxu0
      %v1321 = vadd.f32 %v1116, %v1320
      %v1322 = vpop.f32.mrf.mxu0
      %1323 = vmatprep.mubr.f32.mxu0 0.0
      %1324 = vmatmul.mubr.f32.gmra.mxu0 %v527
      %v1325 = vpop.f32.mrf.mxu0
      %v1326 = vadd.f32 %v1121, %v1325
      %v1327 = vpop.f32.mrf.mxu0
      %1328 = vmatprep.mubr.f32.mxu0 0.0
      %1329 = vmatmul.mubr.f32.gmra.mxu0 %v530
      %v1330 = vpop.f32.mrf.mxu0
      %v1331 = vadd.f32 %v1126, %v1330
      %v1332 = vpop.f32.mrf.mxu0
      %1333 = vmatprep.mubr.f32.mxu0 0.0
      %1334 = vmatmul.mubr.f32.gmra.mxu0 %v533
      %v1335 = vpop.f32.mrf.mxu0
      %v1336 = vadd.f32 %v1131, %v1335
      %v1337 = vpop.f32.mrf.mxu0
      %1338 = vmatprep.mubr.f32.mxu0 0.0
      %1339 = vmatmul.mubr.f32.gmra.mxu0 %v536
      %v1340 = vpop.f32.mrf.mxu0
      %v1341 = vadd.f32 %v1136, %v1340
      %v1342 = vpop.f32.mrf.mxu0
      %1343 = vmatprep.mubr.f32.mxu0 0.0
      %1344 = vmatmul.mubr.f32.gmra.mxu0 %v539
      %v1345 = vpop.f32.mrf.mxu0
      %v1346 = vadd.f32 %v1141, %v1345
      %v1347 = vpop.f32.mrf.mxu0
      %1348 = vmatprep.mubr.f32.mxu0 0.0
      %1349 = vmatmul.mubr.f32.gmra.mxu0 %v542
      %v1350 = vpop.f32.mrf.mxu0
      %v1351 = vadd.f32 %v1146, %v1350
      %v1352 = vpop.f32.mrf.mxu0
      %1353 = vmatprep.mubr.f32.mxu0 0.0
      %1354 = vmatmul.mubr.f32.gmra.mxu0 %v545
      %v1355 = vpop.f32.mrf.mxu0
      %v1356 = vadd.f32 %v1151, %v1355
      %v1357 = vpop.f32.mrf.mxu0
      %1358 = vmatprep.mubr.f32.mxu0 0.0
      %1359 = vmatmul.mubr.f32.gmra.mxu0 %v548
      %v1360 = vpop.f32.mrf.mxu0
      %v1361 = vadd.f32 %v1156, %v1360
      %v1362 = vpop.f32.mrf.mxu0
      %1363 = vmatprep.mubr.f32.mxu0 0.0
      %1364 = vmatmul.mubr.f32.gmra.mxu0 %v551
      %v1365 = vpop.f32.mrf.mxu0
      %v1366 = vadd.f32 %v1161, %v1365
      %v1367 = vpop.f32.mrf.mxu0
      %1368 = vmatprep.mubr.f32.mxu0 0.0
      %1369 = vmatmul.mubr.f32.gmra.mxu0 %v554
      %v1370 = vpop.f32.mrf.mxu0
      %v1371 = vadd.f32 %v1166, %v1370
      %v1372 = vpop.f32.mrf.mxu0
      %1373 = vmatprep.mubr.f32.mxu0 0.0
      %1374 = vmatmul.mubr.f32.gmra.mxu0 %v557
      %v1375 = vpop.f32.mrf.mxu0
      %v1376 = vadd.f32 %v1171, %v1375
      %v1377 = vpop.f32.mrf.mxu0
      %1378 = vdwg.mxu0
      %v1379 = vmax.f32 %v1241, 0.0
      %v1380 = vmax.f32 %v1246, 0.0
      %v1381 = vmax.f32 %v1251, 0.0
      %v1382 = vmax.f32 %v1256, 0.0
      %v1383 = vmax.f32 %v1261, 0.0
      %v1384 = vmax.f32 %v1266, 0.0
      %v1385 = vmax.f32 %v1271, 0.0
      %v1386 = vmax.f32 %v1276, 0.0
      %v1387 = vmax.f32 %v1281, 0.0
      %v1388 = vmax.f32 %v1286, 0.0
      %v1389 = vmax.f32 %v1291, 0.0
      %v1390 = vmax.f32 %v1296, 0.0
      %v1391 = vmax.f32 %v1301, 0.0
      %v1392 = vmax.f32 %v1306, 0.0
      %v1393 = vmax.f32 %v1311, 0.0
      %v1394 = vmax.f32 %v1316, 0.0
      %v1395 = vmax.f32 %v1321, 0.0
      %v1396 = vmax.f32 %v1326, 0.0
      %v1397 = vmax.f32 %v1331, 0.0
      %v1398 = vmax.f32 %v1336, 0.0
      %v1399 = vmax.f32 %v1341, 0.0
      %v1400 = vmax.f32 %v1346, 0.0
      %v1401 = vmax.f32 %v1351, 0.0
      %v1402 = vmax.f32 %v1356, 0.0
      %v1403 = vmax.f32 %v1361, 0.0
      %v1404 = vmax.f32 %v1366, 0.0
      %v1405 = vmax.f32 %v1371, 0.0
      %v1406 = vmax.f32 %v1376, 0.0
      %v1407 = vmax.f32 %v1379, %v1386
      %v1408 = vmax.f32 %v1380, %v1387
      %v1409 = vmax.f32 %v1381, %v1388
      %v1410 = vmax.f32 %v1382, %v1389
      %v1411 = vmax.f32 %v1383, %v1390
      %v1412 = vmax.f32 %v1384, %v1391
      %v1413 = vmax.f32 %v1385, %v1392
      %v1414 = vmax.f32 %v1393, %v1400
      %v1415 = vmax.f32 %v1394, %v1401
      %v1416 = vmax.f32 %v1395, %v1402
      %v1417 = vmax.f32 %v1396, %v1403
      %v1418 = vmax.f32 %v1397, %v1404
      %v1419 = vmax.f32 %v1398, %v1405
      %v1420 = vmax.f32 %v1399, %v1406
      %v1421 = vmax.f32 %v1407, %v1414
      %v1422 = vmax.f32 %v1408, %v1415
      %v1423 = vmax.f32 %v1409, %v1416
      %v1424 = vmax.f32 %v1410, %v1417
      %v1425 = vmax.f32 %v1411, %v1418
      %v1426 = vmax.f32 %v1412, %v1419
      %v1427 = vmax.f32 %v1413, %v1420
      %1428 = vst.msk [vmem:[%s170] sm:$0xff] %vm474, %v1421
      %1429 = vst.msk [vmem:[%s170 + $0x8] sm:$0xff] %vm474, %v1422
      %1430 = vst.msk [vmem:[%s170 + $0x10] sm:$0xff] %vm474, %v1423
      %1431 = vst.msk [vmem:[%s170 + $0x18] sm:$0xff] %vm474, %v1424
      %1432 = vst.msk [vmem:[%s170 + $0x20] sm:$0xff] %vm474, %v1425
      %1433 = vst.msk [vmem:[%s170 + $0x28] sm:$0xff] %vm474, %v1426
      %1434 = vst.msk [vmem:[%s170 + $0x30] sm:$0xff] %vm474, %v1427
      %p1435 = scmp.lt.s32.totalorder %s14, 1
      %s1436 = scalar_select %p1435, %s14, 1
      %s1437 = smul.addr %s1436, 7
      %s1438 = smul.addr %s1437, 8
      %s1439 = scalar_lea.vmem %s3, %s1438
      // Predicated region
      $region33: #{cnn_forward.6} parent=31 // pred_check
        %p1440 = pneg %p100
      $region34: #{cnn_forward.6} parent=31 // pred_check_branch
        %1442 = sbr.rel (%p1440) target = $region36
      $region35: #{cnn_forward.6} parent=31 // pred_region
        _
      $region36: #{cnn_forward.6} parent=31 // pred_fallthru
        _
    $region32: #{cnn_forward.6} parent=5 // pred_fallthru
      _
    %p1443 = scmp.le.s32.totalorder 2, %s9
    // Predicated region
    $region37: #{cnn_forward.6} parent=5 // pred_check
      %p1444 = pneg %p1443
    $region38: #{cnn_forward.6} parent=5 // pred_check_branch
      %1446 = sbr.rel (%p1444) target = $region40
    $region39: #{cnn_forward.6} parent=5 // pred_region
      %s1447 = ssub.s32 %s9, 2
      // Predicated region
      $region41: #{cnn_forward.6} parent=39 // pred_check
        %p1448 = pneg %p106
      $region42: #{cnn_forward.6} parent=39 // pred_check_branch
        %1450 = sbr.rel (%p1448) target = $region44
      $region43: #{cnn_forward.6} parent=39 // pred_region
        %p1451 = scmp.lt.s32.totalorder %s15, 1
        %s1452 = scalar_select %p1451, %s15, 1
        %s1453 = smul.addr %s1452, 7
        %s1454 = smul.addr %s1453, 8
        %s1455 = scalar_lea.vmem %s3, %s1454
      $region44: #{cnn_forward.6} parent=39 // pred_fallthru
        _
    $region40: #{cnn_forward.6} parent=5 // pred_fallthru
      _
  $region6: #{cnn_forward.6} parent=0 // loop_footer
    %s13 = sadd.s32 1, %s9
  $region7: #{cnn_forward.6} parent=0 // loop_footer_branch
    %8 = sbr.rel target = $region3
  $region8: #{cnn_forward.6} parent=0 // loop_exit
    _

// kernel: cnn_forward.7
$region0: #{cnn_forward.7}
  #allocation0 [shape = 'u32[]', space=smem, size = 0x4, offset = 0x4, fixed_abs, tag = 'smem constant byte address 0x4 - core index']
  #allocation1 [shape = 'u32[144,128]{1,0:T(1,128)}', space=vmem, size = 0x12000, scoped, tag = 'internal scratch']
  %s0 = inlined_call_operand.vmem [shape: f32[2,1568], index: 0, kind: input, shape index: {}]
  %s1 = inlined_call_operand.vmem [shape: f32[1568,128], index: 1, kind: input, shape index: {}]
  %s2 = inlined_call_operand.vmem [shape: f32[1,128], index: 2, kind: input, shape index: {}]
  %s3 = inlined_call_operand.hbm [shape: f32[2,128], index: 3, kind: output, shape index: {}]
  %s4 = sld [smem:[#allocation0]]
  $region22: #{cnn_forward.7} parent=0
    _
  %s6 = ssub.s32 1, %s4
  %s7 = scalar_select 0, %s6, %s4
  $region1: #{cnn_forward.7} parent=0
    #allocation2 [shape = 'u8[1024]{0}', space=vmem, size = 0x400, scoped, tag = 'output window, operand 0, single buffered']
    #allocation3 [shape = 's32[1]{0}', space=sflag, size = 0x4, scoped, tag = 'scoped memory for cnn_forward.7']
    %8 = vsyncpa [#allocation3], 0
    // Predicated region
    $region2: #{cnn_forward.7} parent=1 // pred_check
      _
    $region3: #{cnn_forward.7} parent=1 // pred_check_branch
      %10 = sbr.rel (0) target = $region5
    $region4: #{cnn_forward.7} parent=1 // pred_region
      _
    $region5: #{cnn_forward.7} parent=1 // pred_fallthru
      _
    // Predicated region
    $region6: #{cnn_forward.7} parent=1 // pred_check
      _
    $region7: #{cnn_forward.7} parent=1 // pred_check_branch
      %12 = sbr.rel (0) target = $region9
    $region8: #{cnn_forward.7} parent=1 // pred_region
      _
    $region9: #{cnn_forward.7} parent=1 // pred_fallthru
      _
    // Predicated region
    $region10: #{cnn_forward.7} parent=1 // pred_check
      _
    $region11: #{cnn_forward.7} parent=1 // pred_check_branch
      %14 = sbr.rel (0) target = $region13
    $region12: #{cnn_forward.7} parent=1 // pred_region
      _
    $region13: #{cnn_forward.7} parent=1 // pred_fallthru
      _
    %v15 = vld [vmem:[%s0] sm:$0xff]
    %v16 = vld [vmem:[%s0 + $0x8] sm:$0xff]
    %v17 = vld [vmem:[%s0 + $0x10] sm:$0xff]
    %v18 = vld [vmem:[%s0 + $0x18] sm:$0x3]
    %v19 = vld [vmem:[%s1] sm:$0xff]
    %v20 = vld [vmem:[%s1 + $0x8] sm:$0xff]
    %v21 = vld [vmem:[%s1 + $0x10] sm:$0xff]
    %v22 = vld [vmem:[%s1 + $0x18] sm:$0xff]
    %v23 = vld [vmem:[%s1 + $0x20] sm:$0xff]
    %v24 = vld [vmem:[%s1 + $0x28] sm:$0xff]
    %v25 = vld [vmem:[%s1 + $0x30] sm:$0xff]
    %v26 = vld [vmem:[%s1 + $0x38] sm:$0xff]
    %v27 = vld [vmem:[%s1 + $0x40] sm:$0xff]
    %v28 = vld [vmem:[%s1 + $0x48] sm:$0xff]
    %v29 = vld [vmem:[%s1 + $0x50] sm:$0xff]
    %v30 = vld [vmem:[%s1 + $0x58] sm:$0xff]
    %v31 = vld [vmem:[%s1 + $0x60] sm:$0xff]
    %v32 = vld [vmem:[%s1 + $0x68] sm:$0xff]
    %v33 = vld [vmem:[%s1 + $0x70] sm:$0xff]
    %v34 = vld [vmem:[%s1 + $0x78] sm:$0xff]
    %v35 = vld [vmem:[%s1 + $0x80] sm:$0xff]
    %v36 = vld [vmem:[%s1 + $0x88] sm:$0xff]
    %v37 = vld [vmem:[%s1 + $0x90] sm:$0xff]
    %v38 = vld [vmem:[%s1 + $0x98] sm:$0xff]
    %v39 = vld [vmem:[%s1 + $0xa0] sm:$0xff]
    %v40 = vld [vmem:[%s1 + $0xa8] sm:$0xff]
    %v41 = vld [vmem:[%s1 + $0xb0] sm:$0xff]
    %v42 = vld [vmem:[%s1 + $0xb8] sm:$0xff]
    %v43 = vld [vmem:[%s1 + $0xc0] sm:$0xff]
    %v44 = vld [vmem:[%s1 + $0xc8] sm:$0xff]
    %v45 = vld [vmem:[%s1 + $0xd0] sm:$0xff]
    %v46 = vld [vmem:[%s1 + $0xd8] sm:$0xff]
    %v47 = vld [vmem:[%s1 + $0xe0] sm:$0xff]
    %v48 = vld [vmem:[%s1 + $0xe8] sm:$0xff]
    %v49 = vld [vmem:[%s1 + $0xf0] sm:$0xff]
    %v50 = vld [vmem:[%s1 + $0xf8] sm:$0xff]
    %v51 = vld [vmem:[%s1 + $0x100] sm:$0xff]
    %v52 = vld [vmem:[%s1 + $0x108] sm:$0xff]
    %v53 = vld [vmem:[%s1 + $0x110] sm:$0xff]
    %v54 = vld [vmem:[%s1 + $0x118] sm:$0xff]
    %v55 = vld [vmem:[%s1 + $0x120] sm:$0xff]
    %v56 = vld [vmem:[%s1 + $0x128] sm:$0xff]
    %v57 = vld [vmem:[%s1 + $0x130] sm:$0xff]
    %v58 = vld [vmem:[%s1 + $0x138] sm:$0xff]
    %v59 = vld [vmem:[%s1 + $0x140] sm:$0xff]
    %v60 = vld [vmem:[%s1 + $0x148] sm:$0xff]
    %v61 = vld [vmem:[%s1 + $0x150] sm:$0xff]
    %v62 = vld [vmem:[%s1 + $0x158] sm:$0xff]
    %v63 = vld [vmem:[%s1 + $0x160] sm:$0xff]
    %v64 = vld [vmem:[%s1 + $0x168] sm:$0xff]
    %v65 = vld [vmem:[%s1 + $0x170] sm:$0xff]
    %v66 = vld [vmem:[%s1 + $0x178] sm:$0xff]
    %v67 = vld [vmem:[%s1 + $0x180] sm:$0xff]
    %v68 = vld [vmem:[%s1 + $0x188] sm:$0xff]
    %v69 = vld [vmem:[%s1 + $0x190] sm:$0xff]
    %v70 = vld [vmem:[%s1 + $0x198] sm:$0xff]
    %v71 = vld [vmem:[%s1 + $0x1a0] sm:$0xff]
    %v72 = vld [vmem:[%s1 + $0x1a8] sm:$0xff]
    %v73 = vld [vmem:[%s1 + $0x1b0] sm:$0xff]
    %v74 = vld [vmem:[%s1 + $0x1b8] sm:$0xff]
    %v75 = vld [vmem:[%s1 + $0x1c0] sm:$0xff]
    %v76 = vld [vmem:[%s1 + $0x1c8] sm:$0xff]
    %v77 = vld [vmem:[%s1 + $0x1d0] sm:$0xff]
    %v78 = vld [vmem:[%s1 + $0x1d8] sm:$0xff]
    %v79 = vld [vmem:[%s1 + $0x1e0] sm:$0xff]
    %v80 = vld [vmem:[%s1 + $0x1e8] sm:$0xff]
    %v81 = vld [vmem:[%s1 + $0x1f0] sm:$0xff]
    %v82 = vld [vmem:[%s1 + $0x1f8] sm:$0xff]
    %v83 = vld [vmem:[%s1 + $0x200] sm:$0xff]
    %v84 = vld [vmem:[%s1 + $0x208] sm:$0xff]
    %v85 = vld [vmem:[%s1 + $0x210] sm:$0xff]
    %v86 = vld [vmem:[%s1 + $0x218] sm:$0xff]
    %v87 = vld [vmem:[%s1 + $0x220] sm:$0xff]
    %v88 = vld [vmem:[%s1 + $0x228] sm:$0xff]
    %v89 = vld [vmem:[%s1 + $0x230] sm:$0xff]
    %v90 = vld [vmem:[%s1 + $0x238] sm:$0xff]
    %v91 = vld [vmem:[%s1 + $0x240] sm:$0xff]
    %v92 = vld [vmem:[%s1 + $0x248] sm:$0xff]
    %v93 = vld [vmem:[%s1 + $0x250] sm:$0xff]
    %v94 = vld [vmem:[%s1 + $0x258] sm:$0xff]
    %v95 = vld [vmem:[%s1 + $0x260] sm:$0xff]
    %v96 = vld [vmem:[%s1 + $0x268] sm:$0xff]
    %v97 = vld [vmem:[%s1 + $0x270] sm:$0xff]
    %v98 = vld [vmem:[%s1 + $0x278] sm:$0xff]
    %v99 = vld [vmem:[%s1 + $0x280] sm:$0xff]
    %v100 = vld [vmem:[%s1 + $0x288] sm:$0xff]
    %v101 = vld [vmem:[%s1 + $0x290] sm:$0xff]
    %v102 = vld [vmem:[%s1 + $0x298] sm:$0xff]
    %v103 = vld [vmem:[%s1 + $0x2a0] sm:$0xff]
    %v104 = vld [vmem:[%s1 + $0x2a8] sm:$0xff]
    %v105 = vld [vmem:[%s1 + $0x2b0] sm:$0xff]
    %v106 = vld [vmem:[%s1 + $0x2b8] sm:$0xff]
    %v107 = vld [vmem:[%s1 + $0x2c0] sm:$0xff]
    %v108 = vld [vmem:[%s1 + $0x2c8] sm:$0xff]
    %v109 = vld [vmem:[%s1 + $0x2d0] sm:$0xff]
    %v110 = vld [vmem:[%s1 + $0x2d8] sm:$0xff]
    %v111 = vld [vmem:[%s1 + $0x2e0] sm:$0xff]
    %v112 = vld [vmem:[%s1 + $0x2e8] sm:$0xff]
    %v113 = vld [vmem:[%s1 + $0x2f0] sm:$0xff]
    %v114 = vld [vmem:[%s1 + $0x2f8] sm:$0xff]
    %v115 = vld [vmem:[%s1 + $0x300] sm:$0xff]
    %v116 = vld [vmem:[%s1 + $0x308] sm:$0xff]
    %v117 = vld [vmem:[%s1 + $0x310] sm:$0xff]
    %v118 = vld [vmem:[%s1 + $0x318] sm:$0xff]
    %v119 = vld [vmem:[%s1 + $0x320] sm:$0xff]
    %v120 = vld [vmem:[%s1 + $0x328] sm:$0xff]
    %v121 = vld [vmem:[%s1 + $0x330] sm:$0xff]
    %v122 = vld [vmem:[%s1 + $0x338] sm:$0xff]
    %v123 = vld [vmem:[%s1 + $0x340] sm:$0xff]
    %v124 = vld [vmem:[%s1 + $0x348] sm:$0xff]
    %v125 = vld [vmem:[%s1 + $0x350] sm:$0xff]
    %v126 = vld [vmem:[%s1 + $0x358] sm:$0xff]
    %v127 = vld [vmem:[%s1 + $0x360] sm:$0xff]
    %v128 = vld [vmem:[%s1 + $0x368] sm:$0xff]
    %v129 = vld [vmem:[%s1 + $0x370] sm:$0xff]
    %v130 = vld [vmem:[%s1 + $0x378] sm:$0xff]
    %v131 = vld [vmem:[%s1 + $0x380] sm:$0xff]
    %v132 = vld [vmem:[%s1 + $0x388] sm:$0xff]
    %v133 = vld [vmem:[%s1 + $0x390] sm:$0xff]
    %v134 = vld [vmem:[%s1 + $0x398] sm:$0xff]
    %v135 = vld [vmem:[%s1 + $0x3a0] sm:$0xff]
    %v136 = vld [vmem:[%s1 + $0x3a8] sm:$0xff]
    %v137 = vld [vmem:[%s1 + $0x3b0] sm:$0xff]
    %v138 = vld [vmem:[%s1 + $0x3b8] sm:$0xff]
    %v139 = vld [vmem:[%s1 + $0x3c0] sm:$0xff]
    %v140 = vld [vmem:[%s1 + $0x3c8] sm:$0xff]
    %v141 = vld [vmem:[%s1 + $0x3d0] sm:$0xff]
    %v142 = vld [vmem:[%s1 + $0x3d8] sm:$0xff]
    %v143 = vld [vmem:[%s1 + $0x3e0] sm:$0xff]
    %v144 = vld [vmem:[%s1 + $0x3e8] sm:$0xff]
    %v145 = vld [vmem:[%s1 + $0x3f0] sm:$0xff]
    %v146 = vld [vmem:[%s1 + $0x3f8] sm:$0xff]
    %v147 = vld [vmem:[%s1 + $0x400] sm:$0xff]
    %v148 = vld [vmem:[%s1 + $0x408] sm:$0xff]
    %v149 = vld [vmem:[%s1 + $0x410] sm:$0xff]
    %v150 = vld [vmem:[%s1 + $0x418] sm:$0xff]
    %v151 = vld [vmem:[%s1 + $0x420] sm:$0xff]
    %v152 = vld [vmem:[%s1 + $0x428] sm:$0xff]
    %v153 = vld [vmem:[%s1 + $0x430] sm:$0xff]
    %v154 = vld [vmem:[%s1 + $0x438] sm:$0xff]
    %v155 = vld [vmem:[%s1 + $0x440] sm:$0xff]
    %v156 = vld [vmem:[%s1 + $0x448] sm:$0xff]
    %v157 = vld [vmem:[%s1 + $0x450] sm:$0xff]
    %v158 = vld [vmem:[%s1 + $0x458] sm:$0xff]
    %v159 = vld [vmem:[%s1 + $0x460] sm:$0xff]
    %v160 = vld [vmem:[%s1 + $0x468] sm:$0xff]
    %v161 = vld [vmem:[%s1 + $0x470] sm:$0xff]
    %v162 = vld [vmem:[%s1 + $0x478] sm:$0xff]
    %v163 = vld [vmem:[%s1 + $0x480] sm:$0xff]
    %v164 = vld [vmem:[%s1 + $0x488] sm:$0xff]
    %v165 = vld [vmem:[%s1 + $0x490] sm:$0xff]
    %v166 = vld [vmem:[%s1 + $0x498] sm:$0xff]
    %v167 = vld [vmem:[%s1 + $0x4a0] sm:$0xff]
    %v168 = vld [vmem:[%s1 + $0x4a8] sm:$0xff]
    %v169 = vld [vmem:[%s1 + $0x4b0] sm:$0xff]
    %v170 = vld [vmem:[%s1 + $0x4b8] sm:$0xff]
    %v171 = vld [vmem:[%s1 + $0x4c0] sm:$0xff]
    %v172 = vld [vmem:[%s1 + $0x4c8] sm:$0xff]
    %v173 = vld [vmem:[%s1 + $0x4d0] sm:$0xff]
    %v174 = vld [vmem:[%s1 + $0x4d8] sm:$0xff]
    %v175 = vld [vmem:[%s1 + $0x4e0] sm:$0xff]
    %v176 = vld [vmem:[%s1 + $0x4e8] sm:$0xff]
    %v177 = vld [vmem:[%s1 + $0x4f0] sm:$0xff]
    %v178 = vld [vmem:[%s1 + $0x4f8] sm:$0xff]
    %v179 = vld [vmem:[%s1 + $0x500] sm:$0xff]
    %v180 = vld [vmem:[%s1 + $0x508] sm:$0xff]
    %v181 = vld [vmem:[%s1 + $0x510] sm:$0xff]
    %v182 = vld [vmem:[%s1 + $0x518] sm:$0xff]
    %v183 = vld [vmem:[%s1 + $0x520] sm:$0xff]
    %v184 = vld [vmem:[%s1 + $0x528] sm:$0xff]
    %v185 = vld [vmem:[%s1 + $0x530] sm:$0xff]
    %v186 = vld [vmem:[%s1 + $0x538] sm:$0xff]
    %v187 = vld [vmem:[%s1 + $0x540] sm:$0xff]
    %v188 = vld [vmem:[%s1 + $0x548] sm:$0xff]
    %v189 = vld [vmem:[%s1 + $0x550] sm:$0xff]
    %v190 = vld [vmem:[%s1 + $0x558] sm:$0xff]
    %v191 = vld [vmem:[%s1 + $0x560] sm:$0xff]
    %v192 = vld [vmem:[%s1 + $0x568] sm:$0xff]
    %v193 = vld [vmem:[%s1 + $0x570] sm:$0xff]
    %v194 = vld [vmem:[%s1 + $0x578] sm:$0xff]
    %v195 = vld [vmem:[%s1 + $0x580] sm:$0xff]
    %v196 = vld [vmem:[%s1 + $0x588] sm:$0xff]
    %v197 = vld [vmem:[%s1 + $0x590] sm:$0xff]
    %v198 = vld [vmem:[%s1 + $0x598] sm:$0xff]
    %v199 = vld [vmem:[%s1 + $0x5a0] sm:$0xff]
    %v200 = vld [vmem:[%s1 + $0x5a8] sm:$0xff]
    %v201 = vld [vmem:[%s1 + $0x5b0] sm:$0xff]
    %v202 = vld [vmem:[%s1 + $0x5b8] sm:$0xff]
    %v203 = vld [vmem:[%s1 + $0x5c0] sm:$0xff]
    %v204 = vld [vmem:[%s1 + $0x5c8] sm:$0xff]
    %v205 = vld [vmem:[%s1 + $0x5d0] sm:$0xff]
    %v206 = vld [vmem:[%s1 + $0x5d8] sm:$0xff]
    %v207 = vld [vmem:[%s1 + $0x5e0] sm:$0xff]
    %v208 = vld [vmem:[%s1 + $0x5e8] sm:$0xff]
    %v209 = vld [vmem:[%s1 + $0x5f0] sm:$0xff]
    %v210 = vld [vmem:[%s1 + $0x5f8] sm:$0xff]
    %v211 = vld [vmem:[%s1 + $0x600] sm:$0xff]
    %v212 = vld [vmem:[%s1 + $0x608] sm:$0xff]
    %v213 = vld [vmem:[%s1 + $0x610] sm:$0xff]
    %v214 = vld [vmem:[%s1 + $0x618] sm:$0xff]
    %v215 = vld [vmem:[%s2] sm:$0x1]
    %v217 = vlaneseq
    %v218 = vshrl.u32 %v217, 7
    %v219 = vsub.s32 0, %v218
    %v220 = vrot.slane %v215, %v219
    %v226 = vcombine.high %v15, %v15
    %v228 = vunpack.c.l.s4 1983009808
    %v229 = vunpack.c.0.s8 %v228
    %v230 = vlaneseq
    %v231 = vshrl.u32 %v230, 7
    %v232 = vsub.s32 %v229, %v231
    %v233 = vrot.slane %v15, %v232
    %v235 = vunpack.c.l.s4 1983009808
    %v236 = vunpack.c.0.s8 %v235
    %v237 = vlaneseq
    %v238 = vshrl.u32 %v237, 7
    %v239 = vsub.s32 %v236, %v238
    %v240 = vrot.slane %v226, %v239
    %v241 = vcombine.high %v233, %v233
    %v242 = vcombine.high %v240, %v240
    %v243 = vcombine.high %v16, %v16
    %v245 = vunpack.c.l.s4 1983009808
    %v246 = vunpack.c.0.s8 %v245
    %v247 = vlaneseq
    %v248 = vshrl.u32 %v247, 7
    %v249 = vsub.s32 %v246, %v248
    %v250 = vrot.slane %v16, %v249
    %v252 = vunpack.c.l.s4 1983009808
    %v253 = vunpack.c.0.s8 %v252
    %v254 = vlaneseq
    %v255 = vshrl.u32 %v254, 7
    %v256 = vsub.s32 %v253, %v255
    %v257 = vrot.slane %v243, %v256
    %v258 = vcombine.high %v250, %v250
    %v259 = vcombine.high %v257, %v257
    %v260 = vcombine.high %v17, %v17
    %v262 = vunpack.c.l.s4 1983009808
    %v263 = vunpack.c.0.s8 %v262
    %v264 = vlaneseq
    %v265 = vshrl.u32 %v264, 7
    %v266 = vsub.s32 %v263, %v265
    %v267 = vrot.slane %v17, %v266
    %v269 = vunpack.c.l.s4 1983009808
    %v270 = vunpack.c.0.s8 %v269
    %v271 = vlaneseq
    %v272 = vshrl.u32 %v271, 7
    %v273 = vsub.s32 %v270, %v272
    %v274 = vrot.slane %v260, %v273
    %v275 = vcombine.high %v267, %v267
    %v276 = vcombine.high %v274, %v274
    %v278 = vunpack.c.l.s4 1983009808
    %v279 = vunpack.c.0.s8 %v278
    %v280 = vlaneseq
    %v281 = vshrl.u32 %v280, 7
    %v282 = vsub.s32 %v279, %v281
    %v283 = vrot.slane %v18, %v282
    %vm296 = vcmask 261120
    %v297 = vsel %vm296, %v283, 0
    %299 = vmatprep.subr.mxu0 0.0
    %300 = vmatpush1.msra.mxu0 %v34
    %301 = vmatprep.subr.mxu0 0.0
    %302 = vmatpush1.msra.mxu0 %v33
    %303 = vmatprep.subr.mxu0 0.0
    %304 = vmatpush1.msra.mxu0 %v32
    %305 = vmatprep.subr.mxu0 0.0
    %306 = vmatpush1.msra.mxu0 %v31
    %307 = vmatprep.subr.mxu0 0.0
    %308 = vmatpush1.msra.mxu0 %v30
    %309 = vmatprep.subr.mxu0 0.0
    %310 = vmatpush1.msra.mxu0 %v29
    %311 = vmatprep.subr.mxu0 0.0
    %312 = vmatpush1.msra.mxu0 %v28
    %313 = vmatprep.subr.mxu0 0.0
    %314 = vmatpush1.msra.mxu0 %v27
    %315 = vmatprep.subr.mxu0 0.0
    %316 = vmatpush1.msra.mxu0 %v26
    %317 = vmatprep.subr.mxu0 0.0
    %318 = vmatpush1.msra.mxu0 %v25
    %319 = vmatprep.subr.mxu0 0.0
    %320 = vmatpush1.msra.mxu0 %v24
    %321 = vmatprep.subr.mxu0 0.0
    %322 = vmatpush1.msra.mxu0 %v23
    %323 = vmatprep.subr.mxu0 0.0
    %324 = vmatpush1.msra.mxu0 %v22
    %325 = vmatprep.subr.mxu0 0.0
    %326 = vmatpush1.msra.mxu0 %v21
    %327 = vmatprep.subr.mxu0 0.0
    %328 = vmatpush1.msra.mxu0 %v20
    %329 = vmatprep.subr.mxu0 0.0
    %330 = vmatpush1.msra.mxu0 %v19
    %331 = vmatprep.subr.mxu0 0.0
    %332 = vmatpush2.msra.mxu0 %v50
    %333 = vmatprep.subr.mxu0 0.0
    %334 = vmatpush2.msra.mxu0 %v49
    %335 = vmatprep.subr.mxu0 0.0
    %336 = vmatpush2.msra.mxu0 %v48
    %337 = vmatprep.subr.mxu0 0.0
    %338 = vmatpush2.msra.mxu0 %v47
    %339 = vmatprep.subr.mxu0 0.0
    %340 = vmatpush2.msra.mxu0 %v46
    %341 = vmatprep.subr.mxu0 0.0
    %342 = vmatpush2.msra.mxu0 %v45
    %343 = vmatprep.subr.mxu0 0.0
    %344 = vmatpush2.msra.mxu0 %v44
    %345 = vmatprep.subr.mxu0 0.0
    %346 = vmatpush2.msra.mxu0 %v43
    %347 = vmatprep.subr.mxu0 0.0
    %348 = vmatpush2.msra.mxu0 %v42
    %349 = vmatprep.subr.mxu0 0.0
    %350 = vmatpush2.msra.mxu0 %v41
    %351 = vmatprep.subr.mxu0 0.0
    %352 = vmatpush2.msra.mxu0 %v40
    %353 = vmatprep.subr.mxu0 0.0
    %354 = vmatpush2.msra.mxu0 %v39
    %355 = vmatprep.subr.mxu0 0.0
    %356 = vmatpush2.msra.mxu0 %v38
    %357 = vmatprep.subr.mxu0 0.0
    %358 = vmatpush2.msra.mxu0 %v37
    %359 = vmatprep.subr.mxu0 0.0
    %360 = vmatpush2.msra.mxu0 %v36
    %361 = vmatprep.subr.mxu0 0.0
    %362 = vmatpush2.msra.mxu0 %v35
    %363 = vmatprep.mubr.f32.mxu0 %v241
    %364 = vmatmul.mubr.f32.gmra.mxu0 %v233
    %v365 = vpop.f32.mrf.mxu0
    %v366 = vadd.f32 %v220, %v365
    %v367 = vpop.f32.mrf.mxu0
    %368 = vdwg.mxu0
    %369 = vmatprep.subr.mxu0 0.0
    %370 = vmatpush1.msra.mxu0 %v66
    %371 = vmatprep.subr.mxu0 0.0
    %372 = vmatpush1.msra.mxu0 %v65
    %373 = vmatprep.subr.mxu0 0.0
    %374 = vmatpush1.msra.mxu0 %v64
    %375 = vmatprep.subr.mxu0 0.0
    %376 = vmatpush1.msra.mxu0 %v63
    %377 = vmatprep.subr.mxu0 0.0
    %378 = vmatpush1.msra.mxu0 %v62
    %379 = vmatprep.subr.mxu0 0.0
    %380 = vmatpush1.msra.mxu0 %v61
    %381 = vmatprep.subr.mxu0 0.0
    %382 = vmatpush1.msra.mxu0 %v60
    %383 = vmatprep.subr.mxu0 0.0
    %384 = vmatpush1.msra.mxu0 %v59
    %385 = vmatprep.subr.mxu0 0.0
    %386 = vmatpush1.msra.mxu0 %v58
    %387 = vmatprep.subr.mxu0 0.0
    %388 = vmatpush1.msra.mxu0 %v57
    %389 = vmatprep.subr.mxu0 0.0
    %390 = vmatpush1.msra.mxu0 %v56
    %391 = vmatprep.subr.mxu0 0.0
    %392 = vmatpush1.msra.mxu0 %v55
    %393 = vmatprep.subr.mxu0 0.0
    %394 = vmatpush1.msra.mxu0 %v54
    %395 = vmatprep.subr.mxu0 0.0
    %396 = vmatpush1.msra.mxu0 %v53
    %397 = vmatprep.subr.mxu0 0.0
    %398 = vmatpush1.msra.mxu0 %v52
    %399 = vmatprep.subr.mxu0 0.0
    %400 = vmatpush1.msra.mxu0 %v51
    %401 = vmatprep.subr.mxu0 0.0
    %402 = vmatpush2.msra.mxu0 %v82
    %403 = vmatprep.subr.mxu0 0.0
    %404 = vmatpush2.msra.mxu0 %v81
    %405 = vmatprep.subr.mxu0 0.0
    %406 = vmatpush2.msra.mxu0 %v80
    %407 = vmatprep.subr.mxu0 0.0
    %408 = vmatpush2.msra.mxu0 %v79
    %409 = vmatprep.subr.mxu0 0.0
    %410 = vmatpush2.msra.mxu0 %v78
    %411 = vmatprep.subr.mxu0 0.0
    %412 = vmatpush2.msra.mxu0 %v77
    %413 = vmatprep.subr.mxu0 0.0
    %414 = vmatpush2.msra.mxu0 %v76
    %415 = vmatprep.subr.mxu0 0.0
    %416 = vmatpush2.msra.mxu0 %v75
    %417 = vmatprep.subr.mxu0 0.0
    %418 = vmatpush2.msra.mxu0 %v74
    %419 = vmatprep.subr.mxu0 0.0
    %420 = vmatpush2.msra.mxu0 %v73
    %421 = vmatprep.subr.mxu0 0.0
    %422 = vmatpush2.msra.mxu0 %v72
    %423 = vmatprep.subr.mxu0 0.0
    %424 = vmatpush2.msra.mxu0 %v71
    %425 = vmatprep.subr.mxu0 0.0
    %426 = vmatpush2.msra.mxu0 %v70
    %427 = vmatprep.subr.mxu0 0.0
    %428 = vmatpush2.msra.mxu0 %v69
    %429 = vmatprep.subr.mxu0 0.0
    %430 = vmatpush2.msra.mxu0 %v68
    %431 = vmatprep.subr.mxu0 0.0
    %432 = vmatpush2.msra.mxu0 %v67
    %433 = vmatprep.mubr.f32.mxu0 %v242
    %434 = vmatmul.mubr.f32.gmra.mxu0 %v240
    %v435 = vpop.f32.mrf.mxu0
    %v436 = vadd.f32 %v366, %v435
    %v437 = vpop.f32.mrf.mxu0
    %438 = vdwg.mxu0
    %439 = vmatprep.subr.mxu0 0.0
    %440 = vmatpush1.msra.mxu0 %v98
    %441 = vmatprep.subr.mxu0 0.0
    %442 = vmatpush1.msra.mxu0 %v97
    %443 = vmatprep.subr.mxu0 0.0
    %444 = vmatpush1.msra.mxu0 %v96
    %445 = vmatprep.subr.mxu0 0.0
    %446 = vmatpush1.msra.mxu0 %v95
    %447 = vmatprep.subr.mxu0 0.0
    %448 = vmatpush1.msra.mxu0 %v94
    %449 = vmatprep.subr.mxu0 0.0
    %450 = vmatpush1.msra.mxu0 %v93
    %451 = vmatprep.subr.mxu0 0.0
    %452 = vmatpush1.msra.mxu0 %v92
    %453 = vmatprep.subr.mxu0 0.0
    %454 = vmatpush1.msra.mxu0 %v91
    %455 = vmatprep.subr.mxu0 0.0
    %456 = vmatpush1.msra.mxu0 %v90
    %457 = vmatprep.subr.mxu0 0.0
    %458 = vmatpush1.msra.mxu0 %v89
    %459 = vmatprep.subr.mxu0 0.0
    %460 = vmatpush1.msra.mxu0 %v88
    %461 = vmatprep.subr.mxu0 0.0
    %462 = vmatpush1.msra.mxu0 %v87
    %463 = vmatprep.subr.mxu0 0.0
    %464 = vmatpush1.msra.mxu0 %v86
    %465 = vmatprep.subr.mxu0 0.0
    %466 = vmatpush1.msra.mxu0 %v85
    %467 = vmatprep.subr.mxu0 0.0
    %468 = vmatpush1.msra.mxu0 %v84
    %469 = vmatprep.subr.mxu0 0.0
    %470 = vmatpush1.msra.mxu0 %v83
    %471 = vmatprep.subr.mxu0 0.0
    %472 = vmatpush2.msra.mxu0 %v114
    %473 = vmatprep.subr.mxu0 0.0
    %474 = vmatpush2.msra.mxu0 %v113
    %475 = vmatprep.subr.mxu0 0.0
    %476 = vmatpush2.msra.mxu0 %v112
    %477 = vmatprep.subr.mxu0 0.0
    %478 = vmatpush2.msra.mxu0 %v111
    %479 = vmatprep.subr.mxu0 0.0
    %480 = vmatpush2.msra.mxu0 %v110
    %481 = vmatprep.subr.mxu0 0.0
    %482 = vmatpush2.msra.mxu0 %v109
    %483 = vmatprep.subr.mxu0 0.0
    %484 = vmatpush2.msra.mxu0 %v108
    %485 = vmatprep.subr.mxu0 0.0
    %486 = vmatpush2.msra.mxu0 %v107
    %487 = vmatprep.subr.mxu0 0.0
    %488 = vmatpush2.msra.mxu0 %v106
    %489 = vmatprep.subr.mxu0 0.0
    %490 = vmatpush2.msra.mxu0 %v105
    %491 = vmatprep.subr.mxu0 0.0
    %492 = vmatpush2.msra.mxu0 %v104
    %493 = vmatprep.subr.mxu0 0.0
    %494 = vmatpush2.msra.mxu0 %v103
    %495 = vmatprep.subr.mxu0 0.0
    %496 = vmatpush2.msra.mxu0 %v102
    %497 = vmatprep.subr.mxu0 0.0
    %498 = vmatpush2.msra.mxu0 %v101
    %499 = vmatprep.subr.mxu0 0.0
    %500 = vmatpush2.msra.mxu0 %v100
    %501 = vmatprep.subr.mxu0 0.0
    %502 = vmatpush2.msra.mxu0 %v99
    %503 = vmatprep.mubr.f32.mxu0 %v258
    %504 = vmatmul.mubr.f32.gmra.mxu0 %v250
    %v505 = vpop.f32.mrf.mxu0
    %v506 = vadd.f32 %v436, %v505
    %v507 = vpop.f32.mrf.mxu0
    %508 = vdwg.mxu0
    %509 = vmatprep.subr.mxu0 0.0
    %510 = vmatpush1.msra.mxu0 %v130
    %511 = vmatprep.subr.mxu0 0.0
    %512 = vmatpush1.msra.mxu0 %v129
    %513 = vmatprep.subr.mxu0 0.0
    %514 = vmatpush1.msra.mxu0 %v128
    %515 = vmatprep.subr.mxu0 0.0
    %516 = vmatpush1.msra.mxu0 %v127
    %517 = vmatprep.subr.mxu0 0.0
    %518 = vmatpush1.msra.mxu0 %v126
    %519 = vmatprep.subr.mxu0 0.0
    %520 = vmatpush1.msra.mxu0 %v125
    %521 = vmatprep.subr.mxu0 0.0
    %522 = vmatpush1.msra.mxu0 %v124
    %523 = vmatprep.subr.mxu0 0.0
    %524 = vmatpush1.msra.mxu0 %v123
    %525 = vmatprep.subr.mxu0 0.0
    %526 = vmatpush1.msra.mxu0 %v122
    %527 = vmatprep.subr.mxu0 0.0
    %528 = vmatpush1.msra.mxu0 %v121
    %529 = vmatprep.subr.mxu0 0.0
    %530 = vmatpush1.msra.mxu0 %v120
    %531 = vmatprep.subr.mxu0 0.0
    %532 = vmatpush1.msra.mxu0 %v119
    %533 = vmatprep.subr.mxu0 0.0
    %534 = vmatpush1.msra.mxu0 %v118
    %535 = vmatprep.subr.mxu0 0.0
    %536 = vmatpush1.msra.mxu0 %v117
    %537 = vmatprep.subr.mxu0 0.0
    %538 = vmatpush1.msra.mxu0 %v116
    %539 = vmatprep.subr.mxu0 0.0
    %540 = vmatpush1.msra.mxu0 %v115
    %541 = vmatprep.subr.mxu0 0.0
    %542 = vmatpush2.msra.mxu0 %v146
    %543 = vmatprep.subr.mxu0 0.0
    %544 = vmatpush2.msra.mxu0 %v145
    %545 = vmatprep.subr.mxu0 0.0
    %546 = vmatpush2.msra.mxu0 %v144
    %547 = vmatprep.subr.mxu0 0.0
    %548 = vmatpush2.msra.mxu0 %v143
    %549 = vmatprep.subr.mxu0 0.0
    %550 = vmatpush2.msra.mxu0 %v142
    %551 = vmatprep.subr.mxu0 0.0
    %552 = vmatpush2.msra.mxu0 %v141
    %553 = vmatprep.subr.mxu0 0.0
    %554 = vmatpush2.msra.mxu0 %v140
    %555 = vmatprep.subr.mxu0 0.0
    %556 = vmatpush2.msra.mxu0 %v139
    %557 = vmatprep.subr.mxu0 0.0
    %558 = vmatpush2.msra.mxu0 %v138
    %559 = vmatprep.subr.mxu0 0.0
    %560 = vmatpush2.msra.mxu0 %v137
    %561 = vmatprep.subr.mxu0 0.0
    %562 = vmatpush2.msra.mxu0 %v136
    %563 = vmatprep.subr.mxu0 0.0
    %564 = vmatpush2.msra.mxu0 %v135
    %565 = vmatprep.subr.mxu0 0.0
    %566 = vmatpush2.msra.mxu0 %v134
    %567 = vmatprep.subr.mxu0 0.0
    %568 = vmatpush2.msra.mxu0 %v133
    %569 = vmatprep.subr.mxu0 0.0
    %570 = vmatpush2.msra.mxu0 %v132
    %571 = vmatprep.subr.mxu0 0.0
    %572 = vmatpush2.msra.mxu0 %v131
    %573 = vmatprep.mubr.f32.mxu0 %v259
    %574 = vmatmul.mubr.f32.gmra.mxu0 %v257
    %v575 = vpop.f32.mrf.mxu0
    %v576 = vadd.f32 %v506, %v575
    %v577 = vpop.f32.mrf.mxu0
    %578 = vdwg.mxu0
    %579 = vmatprep.subr.mxu0 0.0
    %580 = vmatpush1.msra.mxu0 %v162
    %581 = vmatprep.subr.mxu0 0.0
    %582 = vmatpush1.msra.mxu0 %v161
    %583 = vmatprep.subr.mxu0 0.0
    %584 = vmatpush1.msra.mxu0 %v160
    %585 = vmatprep.subr.mxu0 0.0
    %586 = vmatpush1.msra.mxu0 %v159
    %587 = vmatprep.subr.mxu0 0.0
    %588 = vmatpush1.msra.mxu0 %v158
    %589 = vmatprep.subr.mxu0 0.0
    %590 = vmatpush1.msra.mxu0 %v157
    %591 = vmatprep.subr.mxu0 0.0
    %592 = vmatpush1.msra.mxu0 %v156
    %593 = vmatprep.subr.mxu0 0.0
    %594 = vmatpush1.msra.mxu0 %v155
    %595 = vmatprep.subr.mxu0 0.0
    %596 = vmatpush1.msra.mxu0 %v154
    %597 = vmatprep.subr.mxu0 0.0
    %598 = vmatpush1.msra.mxu0 %v153
    %599 = vmatprep.subr.mxu0 0.0
    %600 = vmatpush1.msra.mxu0 %v152
    %601 = vmatprep.subr.mxu0 0.0
    %602 = vmatpush1.msra.mxu0 %v151
    %603 = vmatprep.subr.mxu0 0.0
    %604 = vmatpush1.msra.mxu0 %v150
    %605 = vmatprep.subr.mxu0 0.0
    %606 = vmatpush1.msra.mxu0 %v149
    %607 = vmatprep.subr.mxu0 0.0
    %608 = vmatpush1.msra.mxu0 %v148
    %609 = vmatprep.subr.mxu0 0.0
    %610 = vmatpush1.msra.mxu0 %v147
    %611 = vmatprep.subr.mxu0 0.0
    %612 = vmatpush2.msra.mxu0 %v178
    %613 = vmatprep.subr.mxu0 0.0
    %614 = vmatpush2.msra.mxu0 %v177
    %615 = vmatprep.subr.mxu0 0.0
    %616 = vmatpush2.msra.mxu0 %v176
    %617 = vmatprep.subr.mxu0 0.0
    %618 = vmatpush2.msra.mxu0 %v175
    %619 = vmatprep.subr.mxu0 0.0
    %620 = vmatpush2.msra.mxu0 %v174
    %621 = vmatprep.subr.mxu0 0.0
    %622 = vmatpush2.msra.mxu0 %v173
    %623 = vmatprep.subr.mxu0 0.0
    %624 = vmatpush2.msra.mxu0 %v172
    %625 = vmatprep.subr.mxu0 0.0
    %626 = vmatpush2.msra.mxu0 %v171
    %627 = vmatprep.subr.mxu0 0.0
    %628 = vmatpush2.msra.mxu0 %v170
    %629 = vmatprep.subr.mxu0 0.0
    %630 = vmatpush2.msra.mxu0 %v169
    %631 = vmatprep.subr.mxu0 0.0
    %632 = vmatpush2.msra.mxu0 %v168
    %633 = vmatprep.subr.mxu0 0.0
    %634 = vmatpush2.msra.mxu0 %v167
    %635 = vmatprep.subr.mxu0 0.0
    %636 = vmatpush2.msra.mxu0 %v166
    %637 = vmatprep.subr.mxu0 0.0
    %638 = vmatpush2.msra.mxu0 %v165
    %639 = vmatprep.subr.mxu0 0.0
    %640 = vmatpush2.msra.mxu0 %v164
    %641 = vmatprep.subr.mxu0 0.0
    %642 = vmatpush2.msra.mxu0 %v163
    %643 = vmatprep.mubr.f32.mxu0 %v275
    %644 = vmatmul.mubr.f32.gmra.mxu0 %v267
    %v645 = vpop.f32.mrf.mxu0
    %v646 = vadd.f32 %v576, %v645
    %v647 = vpop.f32.mrf.mxu0
    %648 = vdwg.mxu0
    %649 = vmatprep.subr.mxu0 0.0
    %650 = vmatpush1.msra.mxu0 %v194
    %651 = vmatprep.subr.mxu0 0.0
    %652 = vmatpush1.msra.mxu0 %v193
    %653 = vmatprep.subr.mxu0 0.0
    %654 = vmatpush1.msra.mxu0 %v192
    %655 = vmatprep.subr.mxu0 0.0
    %656 = vmatpush1.msra.mxu0 %v191
    %657 = vmatprep.subr.mxu0 0.0
    %658 = vmatpush1.msra.mxu0 %v190
    %659 = vmatprep.subr.mxu0 0.0
    %660 = vmatpush1.msra.mxu0 %v189
    %661 = vmatprep.subr.mxu0 0.0
    %662 = vmatpush1.msra.mxu0 %v188
    %663 = vmatprep.subr.mxu0 0.0
    %664 = vmatpush1.msra.mxu0 %v187
    %665 = vmatprep.subr.mxu0 0.0
    %666 = vmatpush1.msra.mxu0 %v186
    %667 = vmatprep.subr.mxu0 0.0
    %668 = vmatpush1.msra.mxu0 %v185
    %669 = vmatprep.subr.mxu0 0.0
    %670 = vmatpush1.msra.mxu0 %v184
    %671 = vmatprep.subr.mxu0 0.0
    %672 = vmatpush1.msra.mxu0 %v183
    %673 = vmatprep.subr.mxu0 0.0
    %674 = vmatpush1.msra.mxu0 %v182
    %675 = vmatprep.subr.mxu0 0.0
    %676 = vmatpush1.msra.mxu0 %v181
    %677 = vmatprep.subr.mxu0 0.0
    %678 = vmatpush1.msra.mxu0 %v180
    %679 = vmatprep.subr.mxu0 0.0
    %680 = vmatpush1.msra.mxu0 %v179
    %681 = vmatprep.subr.mxu0 0.0
    %682 = vmatpush2.msra.mxu0 %v210
    %683 = vmatprep.subr.mxu0 0.0
    %684 = vmatpush2.msra.mxu0 %v209
    %685 = vmatprep.subr.mxu0 0.0
    %686 = vmatpush2.msra.mxu0 %v208
    %687 = vmatprep.subr.mxu0 0.0
    %688 = vmatpush2.msra.mxu0 %v207
    %689 = vmatprep.subr.mxu0 0.0
    %690 = vmatpush2.msra.mxu0 %v206
    %691 = vmatprep.subr.mxu0 0.0
    %692 = vmatpush2.msra.mxu0 %v205
    %693 = vmatprep.subr.mxu0 0.0
    %694 = vmatpush2.msra.mxu0 %v204
    %695 = vmatprep.subr.mxu0 0.0
    %696 = vmatpush2.msra.mxu0 %v203
    %697 = vmatprep.subr.mxu0 0.0
    %698 = vmatpush2.msra.mxu0 %v202
    %699 = vmatprep.subr.mxu0 0.0
    %700 = vmatpush2.msra.mxu0 %v201
    %701 = vmatprep.subr.mxu0 0.0
    %702 = vmatpush2.msra.mxu0 %v200
    %703 = vmatprep.subr.mxu0 0.0
    %704 = vmatpush2.msra.mxu0 %v199
    %705 = vmatprep.subr.mxu0 0.0
    %706 = vmatpush2.msra.mxu0 %v198
    %707 = vmatprep.subr.mxu0 0.0
    %708 = vmatpush2.msra.mxu0 %v197
    %709 = vmatprep.subr.mxu0 0.0
    %710 = vmatpush2.msra.mxu0 %v196
    %711 = vmatprep.subr.mxu0 0.0
    %712 = vmatpush2.msra.mxu0 %v195
    %713 = vmatprep.mubr.f32.mxu0 %v276
    %714 = vmatmul.mubr.f32.gmra.mxu0 %v274
    %v715 = vpop.f32.mrf.mxu0
    %v716 = vadd.f32 %v646, %v715
    %v717 = vpop.f32.mrf.mxu0
    %718 = vdwg.mxu0
    %719 = vmatprep.subr.mxu0 0.0
    %720 = vmatpush1.msra.mxu0 0.0
    %721 = vmatprep.subr.mxu0 0.0
    %722 = vmatpush1.msra.mxu0 0.0
    %723 = vmatprep.subr.mxu0 0.0
    %724 = vmatpush1.msra.mxu0 0.0
    %725 = vmatprep.subr.mxu0 0.0
    %726 = vmatpush1.msra.mxu0 0.0
    %727 = vmatprep.subr.mxu0 0.0
    %728 = vmatpush1.msra.mxu0 0.0
    %729 = vmatprep.subr.mxu0 0.0
    %730 = vmatpush1.msra.mxu0 0.0
    %731 = vmatprep.subr.mxu0 0.0
    %732 = vmatpush1.msra.mxu0 0.0
    %733 = vmatprep.subr.mxu0 0.0
    %734 = vmatpush1.msra.mxu0 0.0
    %735 = vmatprep.subr.mxu0 0.0
    %736 = vmatpush1.msra.mxu0 0.0
    %737 = vmatprep.subr.mxu0 0.0
    %738 = vmatpush1.msra.mxu0 0.0
    %739 = vmatprep.subr.mxu0 0.0
    %740 = vmatpush1.msra.mxu0 0.0
    %741 = vmatprep.subr.mxu0 0.0
    %742 = vmatpush1.msra.mxu0 0.0
    %743 = vmatprep.subr.mxu0 0.0
    %744 = vmatpush1.msra.mxu0 %v214
    %745 = vmatprep.subr.mxu0 0.0
    %746 = vmatpush1.msra.mxu0 %v213
    %747 = vmatprep.subr.mxu0 0.0
    %748 = vmatpush1.msra.mxu0 %v212
    %749 = vmatprep.subr.mxu0 0.0
    %750 = vmatpush1.msra.mxu0 %v211
    %751 = vmatprep.subr.mxu0 0.0
    %752 = vmatpush2.msra.mxu0 0.0
    %753 = vmatprep.subr.mxu0 0.0
    %754 = vmatpush2.msra.mxu0 0.0
    %755 = vmatprep.subr.mxu0 0.0
    %756 = vmatpush2.msra.mxu0 0.0
    %757 = vmatprep.subr.mxu0 0.0
    %758 = vmatpush2.msra.mxu0 0.0
    %759 = vmatprep.subr.mxu0 0.0
    %760 = vmatpush2.msra.mxu0 0.0
    %761 = vmatprep.subr.mxu0 0.0
    %762 = vmatpush2.msra.mxu0 0.0
    %763 = vmatprep.subr.mxu0 0.0
    %764 = vmatpush2.msra.mxu0 0.0
    %765 = vmatprep.subr.mxu0 0.0
    %766 = vmatpush2.msra.mxu0 0.0
    %767 = vmatprep.subr.mxu0 0.0
    %768 = vmatpush2.msra.mxu0 0.0
    %769 = vmatprep.subr.mxu0 0.0
    %770 = vmatpush2.msra.mxu0 0.0
    %771 = vmatprep.subr.mxu0 0.0
    %772 = vmatpush2.msra.mxu0 0.0
    %773 = vmatprep.subr.mxu0 0.0
    %774 = vmatpush2.msra.mxu0 0.0
    %775 = vmatprep.subr.mxu0 0.0
    %776 = vmatpush2.msra.mxu0 0.0
    %777 = vmatprep.subr.mxu0 0.0
    %778 = vmatpush2.msra.mxu0 0.0
    %779 = vmatprep.subr.mxu0 0.0
    %780 = vmatpush2.msra.mxu0 0.0
    %781 = vmatprep.subr.mxu0 0.0
    %782 = vmatpush2.msra.mxu0 0.0
    %783 = vmatprep.mubr.f32.mxu0 0.0
    %784 = vmatmul.mubr.f32.gmra.mxu0 %v297
    %v785 = vpop.f32.mrf.mxu0
    %v786 = vadd.f32 %v716, %v785
    %v787 = vpop.f32.mrf.mxu0
    %788 = vdwg.mxu0
    %789 = vst [vmem:[#allocation2] sm:$0x3] %v786
    // Predicated region
    $region14: #{cnn_forward.7} parent=1 // pred_check
      _
    $region15: #{cnn_forward.7} parent=1 // pred_check_branch
      %791 = sbr.rel (0) target = $region17
    $region16: #{cnn_forward.7} parent=1 // pred_region
      %s793 = ssub.s32 32, 32
      %794 = vsyncadd [#allocation3], %s793
      %s796 = sshll.u32 [#allocation2], 4
      %s797 = int_to_ptr.vmem [resolvable:$true] %s796
      %799 = dma.vmem_to_hbm [thread:$0]  %s797, 32, %s3, [#allocation3]
    $region17: #{cnn_forward.7} parent=1 // pred_fallthru
      _
    // Predicated region
    $region18: #{cnn_forward.7} parent=1 // pred_check
      _
    $region19: #{cnn_forward.7} parent=1 // pred_check_branch
      %801 = sbr.rel (0) target = $region21
    $region20: #{cnn_forward.7} parent=1 // pred_region
      %802 = dma.done [#allocation3], 32
    $region21: #{cnn_forward.7} parent=1 // pred_fallthru
      _
    %803 = vsyncpa [#allocation3], 1

</llo_original>
